<compile_context>
chip_gen: v6e
topology: v6e:2x2x1
jax: 0.10.0
libtpu: 0.0.40
codegen_flags: <defaults>
</compile_context>

<pallas_src>
import functools
import math

import jax
import jax.numpy as jnp
from jax import lax
from jax.experimental import pallas as pl
from jax.experimental.pallas import tpu as pltpu

D = 768          # fixed by the module: Linear(768, 768), RNN(768, 768, 1)
_EPS2 = 1e-24    # (torch F.normalize eps=1e-12)**2, clamp on the squared norm


def _compiler_params(*semantics):
    return pltpu.CompilerParams(
        dimension_semantics=semantics,
        vmem_limit_bytes=32 * 1024 * 1024,   # explicit; safe on v5e/v6e/v7x
    )


# ---------------------------------------------------------------------------
# Kernel 1: fused speech path
#   per tile:  Z = X_tile @ W_ih + b_rnn   (one MXU GEMM, M = B*tile)
#   then:      h_t = relu(Z[:, t, :] + h_{t-1} @ W_hh),  h_0 = 0
# ---------------------------------------------------------------------------
def _speech_rnn_kernel(x_ref, wih_ref, whh_ref, b_ref, h_ref, *, seq_len, tile):
    s = pl.program_id(0)
    B = x_ref.shape[0]
    Dm = x_ref.shape[2]

    # Bulk input projection for this time tile (minormost dim unchanged, so the
    # (B, tile, D) -> (B*tile, D) reshape is a cheap sublane-aligned collapse
    # for tile % 8 == 0).
    x2 = x_ref[...].reshape(B * tile, Dm).astype(wih_ref.dtype)
    z = (jnp.dot(x2, wih_ref[...], preferred_element_type=jnp.float32)
         + b_ref[...]).reshape(B, tile, Dm)

    def cell(h, zi):
        pre = zi + jnp.dot(h.astype(whh_ref.dtype), whh_ref[...],
                           preferred_element_type=jnp.float32)
        return jnp.maximum(pre, 0.0)          # nonlinearity='relu'

    # First timestep of this tile: peel global t == 0 (h0 == 0 -> skip 0 @ W_hh).
    @pl.when(s == 0)
    def _():
        h_ref[...] = jnp.maximum(z[:, 0, :], 0.0)

    @pl.when(s != 0)
    def _():
        h_ref[...] = cell(h_ref[...], z[:, 0, :])

    h = h_ref[...]
    for i in range(1, tile):                  # static unroll of the tile
        h_new = cell(h, z[:, i, :])
        if seq_len % tile != 0:               # ragged tail tile: skip padded steps
            h_new = jnp.where(s * tile + i < seq_len, h_new, h)
        h = h_new
    h_ref[...] = h                            # h carried in the resident out block
    # TODO(synk): on v5e the per-step h @ W_hh could hold W_hh in MXU weight regs
    # via pltpu.matmul_push_rhs / matmul_acc_lhs instead of jnp.dot per iteration.


def _speech_rnn(speech, w_ih, w_hh, b_rnn):
    B, T, Dm = speech.shape
    tile = T if T <= 32 else 32
    kernel = functools.partial(_speech_rnn_kernel, seq_len=T, tile=tile)
    return pl.pallas_call(
        kernel,
        out_shape=jax.ShapeDtypeStruct((B, Dm), jnp.float32),
        grid_spec=pltpu.PrefetchScalarGridSpec(
            num_scalar_prefetch=0,
            grid=(pl.cdiv(T, tile),),
            in_specs=[pl.BlockSpec((B, tile, Dm), lambda t: (0, t, 0)),
                      pl.BlockSpec((Dm, Dm), lambda t: (0, 0)),
                      pl.BlockSpec((Dm, Dm), lambda t: (0, 0)),
                      pl.BlockSpec((1, Dm), lambda t: (0, 0))],
            out_specs=pl.BlockSpec((B, Dm), lambda t: (0, 0)),
        ),
        compiler_params=_compiler_params("arbitrary"),
    )(speech, w_ih, w_hh, b_rnn)


# ---------------------------------------------------------------------------
# Kernel 2: fused final FCs + L2 normalize (speech head and text head, grid=(G,))
# ---------------------------------------------------------------------------
def _fc_norm_kernel(x_ref, w_ref, b_ref, o_ref):
    y = jnp.dot(x_ref[...].astype(w_ref.dtype), w_ref[...],
                preferred_element_type=jnp.float32) + b_ref[...]
    sq = jnp.sum(y * y, axis=-1, keepdims=True)
    inv = lax.rsqrt(jnp.maximum(sq, _EPS2))   # == 1 / max(||y||_2, 1e-12)
    o_ref[...] = (y * inv).astype(o_ref.dtype)


def _fc_normalize(x, w, b):
    G, B, Dm = x.shape
    return pl.pallas_call(
        _fc_norm_kernel,
        out_shape=jax.ShapeDtypeStruct((G, B, Dm), jnp.float32),
        grid_spec=pltpu.PrefetchScalarGridSpec(
            num_scalar_prefetch=0,
            grid=(G,),
            in_specs=[pl.BlockSpec((None, B, Dm), lambda g: (g, 0, 0)),
                      pl.BlockSpec((None, Dm, Dm), lambda g: (g, 0, 0)),
                      pl.BlockSpec((None, 1, Dm), lambda g: (g, 0, 0))],
            out_specs=pl.BlockSpec((None, B, Dm), lambda g: (g, 0, 0)),
        ),
        compiler_params=_compiler_params("parallel"),
    )(x, w, b)


# ---------------------------------------------------------------------------
# Forward pass (mirrors Feat_Merger.forward: returns (s_feat, t_feat))
# ---------------------------------------------------------------------------
def feat_merger_forward(params, speech=None, text=None):
    s_feat, t_feat, h_n = None, None, None

    if speech is not None:
        h_n = _speech_rnn(speech, params["w_ih"], params["w_hh"], params["b_rnn"])

    if h_n is not None and text is not None and h_n.shape == text.shape:
        # both heads in a single pallas_call (shared grid, parallel on v7x)
        out = _fc_normalize(jnp.stack([h_n, text]), params["w_fc"], params["b_fc"])
        s_feat, t_feat = out[0], out[1]
    else:
        if h_n is not None:
            s_feat = _fc_normalize(h_n[None], params["w_fc"][0:1],
                                   params["b_fc"][0:1])[0]
        if text is not None:
            t_feat = _fc_normalize(text[None], params["w_fc"][1:2],
                                   params["b_fc"][1:2])[0]

    return s_feat, t_feat


def init_params(key, compute_dtype=jnp.bfloat16):
    """PyTorch-style U(-1/sqrt(fan_in), 1/sqrt(fan_in)) init.

    Weights are stored pre-transposed as (D_in, D_out) so kernels compute x @ W,
    and cast to `compute_dtype` (bf16: MXU-native on v6e/v7x, halves weight
    DMA on v5e).  Biases and all elementwise math stay f32.
    """
    bound = 1.0 / math.sqrt(D)
    ks = jax.random.split(key, 8)

    def u(k, shape):
        return jax.random.uniform(k, shape, jnp.float32, -bound, bound)

    w_text, b_text = u(ks[0], (D, D)), u(ks[1], (1, D))
    w_speech, b_speech = u(ks[2], (D, D)), u(ks[3], (1, D))
    w_ih, w_hh = u(ks[4], (D, D)), u(ks[5], (D, D))
    b_rnn = u(ks[6], (1, D)) + u(ks[7], (1, D))          # b_ih + b_hh

    return {
        "w_ih": w_ih.astype(compute_dtype),
        "w_hh": w_hh.astype(compute_dtype),
        "b_rnn": b_rnn,
        # final FCs stacked so both heads share one pallas_call: [speech, text]
        "w_fc": jnp.stack([w_speech, w_text]).astype(compute_dtype),
        "b_fc": jnp.stack([b_speech, b_text]),
    }


def _reference_forward(params, speech, text):
    """Pure-JAX f32 reference (same bf16-quantized weights)."""
    w_ih = params["w_ih"].astype(jnp.float32)
    w_hh = params["w_hh"].astype(jnp.float32)
    w_fc = params["w_fc"].astype(jnp.float32)
    b_fc = params["b_fc"]
    B, T, _ = speech.shape
    h = jnp.zeros((B, D), jnp.float32)
    for t in range(T):
        h = jax.nn.relu(speech[:, t, :] @ w_ih + params["b_rnn"] + h @ w_hh)

    def fc_norm(x, w, b):
        y = x @ w + b
        n = jnp.sqrt(jnp.sum(y * y, axis=-1, keepdims=True))
        return y / jnp.maximum(n, 1e-12)

    return fc_norm(h, w_fc[0], b_fc[0]), fc_norm(text, w_fc[1], b_fc[1])


if __name__ == "__main__":
    key = jax.random.PRNGKey(0)
    kp, ks, kt = jax.random.split(key, 3)

    params = init_params(kp)

    B, T = 2, 8
    speech = jax.random.normal(ks, (B, T, D), jnp.float32)   # (batch, seq, 768)
    text = jax.random.normal(kt, (B, D), jnp.float32)        # (batch, 768)

    fwd = jax.jit(lambda p, s, t: feat_merger_forward(p, speech=s, text=t))
    s_feat, t_feat = fwd(params, speech, text)
    jax.block_until_ready((s_feat, t_feat))

    assert s_feat.shape == (B, D) and t_feat.shape == (B, D)

    s_ref, t_ref = _reference_forward(params, speech, text)
    err = max(float(jnp.max(jnp.abs(s_feat - s_ref))),
              float(jnp.max(jnp.abs(t_feat - t_ref))))
    assert err < 2e-2, f"mismatch vs reference: {err}"

    print("KERNEL_OK")
</pallas_src>

<mosaic_0001>
module attributes {stable_mosaic.version = 11 : i64} {
  func.func @_fc_norm_kernel(%arg0: i32, %arg1: memref<1x2x768xf32, #tpu.memory_space<vmem>>, %arg2: memref<1x768x768xbf16, #tpu.memory_space<vmem>>, %arg3: memref<1x1x768xf32, #tpu.memory_space<vmem>>, %arg4: memref<1x2x768xf32, #tpu.memory_space<vmem>>) attributes {dimension_semantics = [#tpu.dimension_semantics<parallel>], iteration_bounds = array<i64: 2>, scalar_prefetch = 0 : i64, scratch_operands = 0 : i64, tpu.core_type = #tpu.core_type<tc>, window_params = [{transform_indices = @transform_0, window_bounds = array<i64: 1, 2, 768>}, {transform_indices = @transform_1, window_bounds = array<i64: 1, 768, 768>}, {transform_indices = @transform_2, window_bounds = array<i64: 1, 1, 768>}, {transform_indices = @transform_3, window_bounds = array<i64: 1, 2, 768>}]} {
    %c0 = arith.constant 0 : index
    %c0_0 = arith.constant 0 : index
    %c0_1 = arith.constant 0 : index
    %0 = vector.load %arg1[%c0, %c0_0, %c0_1] : memref<1x2x768xf32, #tpu.memory_space<vmem>>, vector<1x2x768xf32>
    %1 = vector.shape_cast %0 : vector<1x2x768xf32> to vector<2x768xf32>
    %2 = arith.truncf %1 : vector<2x768xf32> to vector<2x768xbf16>
    %c0_2 = arith.constant 0 : index
    %c0_3 = arith.constant 0 : index
    %c0_4 = arith.constant 0 : index
    %3 = vector.load %arg2[%c0_2, %c0_3, %c0_4] : memref<1x768x768xbf16, #tpu.memory_space<vmem>>, vector<1x768x768xbf16>
    %4 = vector.shape_cast %3 : vector<1x768x768xbf16> to vector<768x768xbf16>
    %cst = arith.constant dense<0.000000e+00> : vector<2x768xf32>
    %5 = tpu.matmul %2, %4, %cst {dimension_numbers = #tpu.dot_dimension_numbers<[1], [0], [0], [1], [0, 0, 1, 1], [], []>} : vector<2x768xbf16>, vector<768x768xbf16>, vector<2x768xf32> -> vector<2x768xf32>
    %c0_5 = arith.constant 0 : index
    %c0_6 = arith.constant 0 : index
    %c0_7 = arith.constant 0 : index
    %6 = vector.load %arg3[%c0_5, %c0_6, %c0_7] : memref<1x1x768xf32, #tpu.memory_space<vmem>>, vector<1x1x768xf32>
    %7 = vector.shape_cast %6 : vector<1x1x768xf32> to vector<1x768xf32>
    %8 = vector.broadcast %7 : vector<1x768xf32> to vector<2x768xf32>
    %9 = arith.addf %5, %8 : vector<2x768xf32>
    %10 = arith.mulf %9, %9 : vector<2x768xf32>
    %cst_8 = arith.constant dense<0.000000e+00> : vector<2xf32>
    %11 = vector.multi_reduction <add>, %10, %cst_8 [1] : vector<2x768xf32> to vector<2xf32>
    %12 = vector.shape_cast %11 : vector<2xf32> to vector<2x1xf32>
    %cst_9 = arith.constant 1.000000e-24 : f32
    %13 = vector.broadcast %cst_9 : f32 to vector<2x1xf32>
    %14 = arith.maximumf %12, %13 : vector<2x1xf32>
    %15 = math.rsqrt %14 : vector<2x1xf32>
    %16 = vector.broadcast %15 : vector<2x1xf32> to vector<2x768xf32>
    %17 = arith.mulf %9, %16 : vector<2x768xf32>
    %c0_10 = arith.constant 0 : index
    %c0_11 = arith.constant 0 : index
    %c0_12 = arith.constant 0 : index
    %18 = vector.load %arg4[%c0_10, %c0_11, %c0_12] : memref<1x2x768xf32, #tpu.memory_space<vmem>>, vector<1x2x768xf32>
    %19 = vector.shape_cast %18 : vector<1x2x768xf32> to vector<2x768xf32>
    %20 = vector.shape_cast %17 : vector<2x768xf32> to vector<1x2x768xf32>
    tpu.vector_store %arg4[%c0_10, %c0_11, %c0_12], %20 {strides = array<i32>} : memref<1x2x768xf32, #tpu.memory_space<vmem>>, vector<1x2x768xf32>,
    return
  }
  func.func @transform_0(%arg0: i32) -> (i32, i32, i32) {
    %c0_i32 = arith.constant 0 : i32
    %c0_i32_0 = arith.constant 0 : i32
    %c0_i32_1 = arith.constant 0 : i32
    return %arg0, %c0_i32, %c0_i32_0 : i32, i32, i32
  }
  func.func @transform_1(%arg0: i32) -> (i32, i32, i32) {
    %c0_i32 = arith.constant 0 : i32
    %c0_i32_0 = arith.constant 0 : i32
    %c0_i32_1 = arith.constant 0 : i32
    return %arg0, %c0_i32, %c0_i32_0 : i32, i32, i32
  }
  func.func @transform_2(%arg0: i32) -> (i32, i32, i32) {
    %c0_i32 = arith.constant 0 : i32
    %c0_i32_0 = arith.constant 0 : i32
    %c0_i32_1 = arith.constant 0 : i32
    return %arg0, %c0_i32, %c0_i32_0 : i32, i32, i32
  }
  func.func @transform_3(%arg0: i32) -> (i32, i32, i32) {
    %c0_i32 = arith.constant 0 : i32
    %c0_i32_0 = arith.constant 0 : i32
    %c0_i32_1 = arith.constant 0 : i32
    return %arg0, %c0_i32, %c0_i32_0 : i32, i32, i32
  }
}

module attributes {stable_mosaic.version = 11 : i64} {
  func.func @_speech_rnn_kernel(%arg0: i32, %arg1: memref<2x8x768xf32, #tpu.memory_space<vmem>>, %arg2: memref<768x768xbf16, #tpu.memory_space<vmem>>, %arg3: memref<768x768xbf16, #tpu.memory_space<vmem>>, %arg4: memref<1x768xf32, #tpu.memory_space<vmem>>, %arg5: memref<2x768xf32, #tpu.memory_space<vmem>>) attributes {dimension_semantics = [#tpu.dimension_semantics<arbitrary>], iteration_bounds = array<i64: 1>, scalar_prefetch = 0 : i64, scratch_operands = 0 : i64, tpu.core_type = #tpu.core_type<tc>, window_params = [{transform_indices = @transform_0, window_bounds = array<i64: 2, 8, 768>}, {pipeline_mode = #tpu.pipeline_mode<synchronous>, transform_indices = @transform_1, window_bounds = array<i64: 768, 768>}, {pipeline_mode = #tpu.pipeline_mode<synchronous>, transform_indices = @transform_2, window_bounds = array<i64: 768, 768>}, {pipeline_mode = #tpu.pipeline_mode<synchronous>, transform_indices = @transform_3, window_bounds = array<i64: 1, 768>}, {pipeline_mode = #tpu.pipeline_mode<synchronous>, transform_indices = @transform_4, window_bounds = array<i64: 2, 768>}]} {
    %c0 = arith.constant 0 : index
    %c0_0 = arith.constant 0 : index
    %c0_1 = arith.constant 0 : index
    %0 = vector.load %arg1[%c0, %c0_0, %c0_1] : memref<2x8x768xf32, #tpu.memory_space<vmem>>, vector<2x8x768xf32>
    %1 = vector.shape_cast %0 : vector<2x8x768xf32> to vector<16x768xf32>
    %2 = arith.truncf %1 : vector<16x768xf32> to vector<16x768xbf16>
    %c0_2 = arith.constant 0 : index
    %c0_3 = arith.constant 0 : index
    %3 = vector.load %arg2[%c0_2, %c0_3] : memref<768x768xbf16, #tpu.memory_space<vmem>>, vector<768x768xbf16>
    %cst = arith.constant dense<0.000000e+00> : vector<16x768xf32>
    %4 = tpu.matmul %2, %3, %cst {dimension_numbers = #tpu.dot_dimension_numbers<[1], [0], [0], [1], [0, 0, 1, 1], [], []>} : vector<16x768xbf16>, vector<768x768xbf16>, vector<16x768xf32> -> vector<16x768xf32>
    %c0_4 = arith.constant 0 : index
    %c0_5 = arith.constant 0 : index
    %5 = vector.load %arg4[%c0_4, %c0_5] : memref<1x768xf32, #tpu.memory_space<vmem>>, vector<1x768xf32>
    %6 = vector.broadcast %5 : vector<1x768xf32> to vector<16x768xf32>
    %7 = arith.addf %4, %6 : vector<16x768xf32>
    %8 = vector.shape_cast %7 : vector<16x768xf32> to vector<2x8x768xf32>
    %c0_i32 = arith.constant 0 : i32
    %9 = arith.cmpi eq, %arg0, %c0_i32 : i32
    %10 = arith.extui %9 : i1 to i32
    %c0_i32_6 = arith.constant 0 : i32
    %11 = arith.cmpi ne, %10, %c0_i32_6 : i32
    scf.if %11 {
      %73 = vector.extract_strided_slice %8 {offsets = [0, 0, 0], sizes = [2, 1, 768], strides = [1, 1, 1]} : vector<2x8x768xf32> to vector<2x1x768xf32>
      %74 = vector.shape_cast %73 : vector<2x1x768xf32> to vector<2x768xf32>
      %cst_41 = arith.constant 0.000000e+00 : f32
      %75 = vector.broadcast %cst_41 : f32 to vector<2x768xf32>
      %76 = arith.maximumf %74, %75 : vector<2x768xf32>
      %c0_42 = arith.constant 0 : index
      %c0_43 = arith.constant 0 : index
      %77 = vector.load %arg5[%c0_42, %c0_43] : memref<2x768xf32, #tpu.memory_space<vmem>>, vector<2x768xf32>
      tpu.vector_store %arg5[%c0_42, %c0_43], %76 {strides = array<i32>} : memref<2x768xf32, #tpu.memory_space<vmem>>, vector<2x768xf32>,
    } else {
    }
    %c0_i32_7 = arith.constant 0 : i32
    %12 = arith.cmpi ne, %arg0, %c0_i32_7 : i32
    %13 = arith.extui %12 : i1 to i32
    %c0_i32_8 = arith.constant 0 : i32
    %14 = arith.cmpi ne, %13, %c0_i32_8 : i32
    scf.if %14 {
      %c0_41 = arith.constant 0 : index
      %c0_42 = arith.constant 0 : index
      %73 = vector.load %arg5[%c0_41, %c0_42] : memref<2x768xf32, #tpu.memory_space<vmem>>, vector<2x768xf32>
      %74 = vector.extract_strided_slice %8 {offsets = [0, 0, 0], sizes = [2, 1, 768], strides = [1, 1, 1]} : vector<2x8x768xf32> to vector<2x1x768xf32>
      %75 = vector.shape_cast %74 : vector<2x1x768xf32> to vector<2x768xf32>
      %76 = arith.truncf %73 : vector<2x768xf32> to vector<2x768xbf16>
      %c0_43 = arith.constant 0 : index
      %c0_44 = arith.constant 0 : index
      %77 = vector.load %arg3[%c0_43, %c0_44] : memref<768x768xbf16, #tpu.memory_space<vmem>>, vector<768x768xbf16>
      %cst_45 = arith.constant dense<0.000000e+00> : vector<2x768xf32>
      %78 = tpu.matmul %76, %77, %cst_45 {dimension_numbers = #tpu.dot_dimension_numbers<[1], [0], [0], [1], [0, 0, 1, 1], [], []>} : vector<2x768xbf16>, vector<768x768xbf16>, vector<2x768xf32> -> vector<2x768xf32>
      %79 = arith.addf %75, %78 : vector<2x768xf32>
      %cst_46 = arith.constant 0.000000e+00 : f32
      %80 = vector.broadcast %cst_46 : f32 to vector<2x768xf32>
      %81 = arith.maximumf %79, %80 : vector<2x768xf32>
      %c0_47 = arith.constant 0 : index
      %c0_48 = arith.constant 0 : index
      %82 = vector.load %arg5[%c0_47, %c0_48] : memref<2x768xf32, #tpu.memory_space<vmem>>, vector<2x768xf32>
      tpu.vector_store %arg5[%c0_47, %c0_48], %81 {strides = array<i32>} : memref<2x768xf32, #tpu.memory_space<vmem>>, vector<2x768xf32>,
    } else {
    }
    %c0_9 = arith.constant 0 : index
    %c0_10 = arith.constant 0 : index
    %15 = vector.load %arg5[%c0_9, %c0_10] : memref<2x768xf32, #tpu.memory_space<vmem>>, vector<2x768xf32>
    %16 = vector.extract_strided_slice %8 {offsets = [0, 1, 0], sizes = [2, 1, 768], strides = [1, 1, 1]} : vector<2x8x768xf32> to vector<2x1x768xf32>
    %17 = vector.shape_cast %16 : vector<2x1x768xf32> to vector<2x768xf32>
    %18 = arith.truncf %15 : vector<2x768xf32> to vector<2x768xbf16>
    %c0_11 = arith.constant 0 : index
    %c0_12 = arith.constant 0 : index
    %19 = vector.load %arg3[%c0_11, %c0_12] : memref<768x768xbf16, #tpu.memory_space<vmem>>, vector<768x768xbf16>
    %cst_13 = arith.constant dense<0.000000e+00> : vector<2x768xf32>
    %20 = tpu.matmul %18, %19, %cst_13 {dimension_numbers = #tpu.dot_dimension_numbers<[1], [0], [0], [1], [0, 0, 1, 1], [], []>} : vector<2x768xbf16>, vector<768x768xbf16>, vector<2x768xf32> -> vector<2x768xf32>
    %21 = arith.addf %17, %20 : vector<2x768xf32>
    %cst_14 = arith.constant 0.000000e+00 : f32
    %22 = vector.broadcast %cst_14 : f32 to vector<2x768xf32>
    %23 = arith.maximumf %21, %22 : vector<2x768xf32>
    %24 = vector.extract_strided_slice %8 {offsets = [0, 2, 0], sizes = [2, 1, 768], strides = [1, 1, 1]} : vector<2x8x768xf32> to vector<2x1x768xf32>
    %25 = vector.shape_cast %24 : vector<2x1x768xf32> to vector<2x768xf32>
    %26 = arith.truncf %23 : vector<2x768xf32> to vector<2x768xbf16>
    %c0_15 = arith.constant 0 : index
    %c0_16 = arith.constant 0 : index
    %27 = vector.load %arg3[%c0_15, %c0_16] : memref<768x768xbf16, #tpu.memory_space<vmem>>, vector<768x768xbf16>
    %cst_17 = arith.constant dense<0.000000e+00> : vector<2x768xf32>
    %28 = tpu.matmul %26, %27, %cst_17 {dimension_numbers = #tpu.dot_dimension_numbers<[1], [0], [0], [1], [0, 0, 1, 1], [], []>} : vector<2x768xbf16>, vector<768x768xbf16>, vector<2x768xf32> -> vector<2x768xf32>
    %29 = arith.addf %25, %28 : vector<2x768xf32>
    %cst_18 = arith.constant 0.000000e+00 : f32
    %30 = vector.broadcast %cst_18 : f32 to vector<2x768xf32>
    %31 = arith.maximumf %29, %30 : vector<2x768xf32>
    %32 = vector.extract_strided_slice %8 {offsets = [0, 3, 0], sizes = [2, 1, 768], strides = [1, 1, 1]} : vector<2x8x768xf32> to vector<2x1x768xf32>
    %33 = vector.shape_cast %32 : vector<2x1x768xf32> to vector<2x768xf32>
    %34 = arith.truncf %31 : vector<2x768xf32> to vector<2x768xbf16>
    %c0_19 = arith.constant 0 : index
    %c0_20 = arith.constant 0 : index
    %35 = vector.load %arg3[%c0_19, %c0_20] : memref<768x768xbf16, #tpu.memory_space<vmem>>, vector<768x768xbf16>
    %cst_21 = arith.constant dense<0.000000e+00> : vector<2x768xf32>
    %36 = tpu.matmul %34, %35, %cst_21 {dimension_numbers = #tpu.dot_dimension_numbers<[1], [0], [0], [1], [0, 0, 1, 1], [], []>} : vector<2x768xbf16>, vector<768x768xbf16>, vector<2x768xf32> -> vector<2x768xf32>
    %37 = arith.addf %33, %36 : vector<2x768xf32>
    %cst_22 = arith.constant 0.000000e+00 : f32
    %38 = vector.broadcast %cst_22 : f32 to vector<2x768xf32>
    %39 = arith.maximumf %37, %38 : vector<2x768xf32>
    %40 = vector.extract_strided_slice %8 {offsets = [0, 4, 0], sizes = [2, 1, 768], strides = [1, 1, 1]} : vector<2x8x768xf32> to vector<2x1x768xf32>
    %41 = vector.shape_cast %40 : vector<2x1x768xf32> to vector<2x768xf32>
    %42 = arith.truncf %39 : vector<2x768xf32> to vector<2x768xbf16>
    %c0_23 = arith.constant 0 : index
    %c0_24 = arith.constant 0 : index
    %43 = vector.load %arg3[%c0_23, %c0_24] : memref<768x768xbf16, #tpu.memory_space<vmem>>, vector<768x768xbf16>
    %cst_25 = arith.constant dense<0.000000e+00> : vector<2x768xf32>
    %44 = tpu.matmul %42, %43, %cst_25 {dimension_numbers = #tpu.dot_dimension_numbers<[1], [0], [0], [1], [0, 0, 1, 1], [], []>} : vector<2x768xbf16>, vector<768x768xbf16>, vector<2x768xf32> -> vector<2x768xf32>
    %45 = arith.addf %41, %44 : vector<2x768xf32>
    %cst_26 = arith.constant 0.000000e+00 : f32
    %46 = vector.broadcast %cst_26 : f32 to vector<2x768xf32>
    %47 = arith.maximumf %45, %46 : vector<2x768xf32>
    %48 = vector.extract_strided_slice %8 {offsets = [0, 5, 0], sizes = [2, 1, 768], strides = [1, 1, 1]} : vector<2x8x768xf32> to vector<2x1x768xf32>
    %49 = vector.shape_cast %48 : vector<2x1x768xf32> to vector<2x768xf32>
    %50 = arith.truncf %47 : vector<2x768xf32> to vector<2x768xbf16>
    %c0_27 = arith.constant 0 : index
    %c0_28 = arith.constant 0 : index
    %51 = vector.load %arg3[%c0_27, %c0_28] : memref<768x768xbf16, #tpu.memory_space<vmem>>, vector<768x768xbf16>
    %cst_29 = arith.constant dense<0.000000e+00> : vector<2x768xf32>
    %52 = tpu.matmul %50, %51, %cst_29 {dimension_numbers = #tpu.dot_dimension_numbers<[1], [0], [0], [1], [0, 0, 1, 1], [], []>} : vector<2x768xbf16>, vector<768x768xbf16>, vector<2x768xf32> -> vector<2x768xf32>
    %53 = arith.addf %49, %52 : vector<2x768xf32>
    %cst_30 = arith.constant 0.000000e+00 : f32
    %54 = vector.broadcast %cst_30 : f32 to vector<2x768xf32>
    %55 = arith.maximumf %53, %54 : vector<2x768xf32>
    %56 = vector.extract_strided_slice %8 {offsets = [0, 6, 0], sizes = [2, 1, 768], strides = [1, 1, 1]} : vector<2x8x768xf32> to vector<2x1x768xf32>
    %57 = vector.shape_cast %56 : vector<2x1x768xf32> to vector<2x768xf32>
    %58 = arith.truncf %55 : vector<2x768xf32> to vector<2x768xbf16>
    %c0_31 = arith.constant 0 : index
    %c0_32 = arith.constant 0 : index
    %59 = vector.load %arg3[%c0_31, %c0_32] : memref<768x768xbf16, #tpu.memory_space<vmem>>, vector<768x768xbf16>
    %cst_33 = arith.constant dense<0.000000e+00> : vector<2x768xf32>
    %60 = tpu.matmul %58, %59, %cst_33 {dimension_numbers = #tpu.dot_dimension_numbers<[1], [0], [0], [1], [0, 0, 1, 1], [], []>} : vector<2x768xbf16>, vector<768x768xbf16>, vector<2x768xf32> -> vector<2x768xf32>
    %61 = arith.addf %57, %60 : vector<2x768xf32>
    %cst_34 = arith.constant 0.000000e+00 : f32
    %62 = vector.broadcast %cst_34 : f32 to vector<2x768xf32>
    %63 = arith.maximumf %61, %62 : vector<2x768xf32>
    %64 = vector.extract_strided_slice %8 {offsets = [0, 7, 0], sizes = [2, 1, 768], strides = [1, 1, 1]} : vector<2x8x768xf32> to vector<2x1x768xf32>
    %65 = vector.shape_cast %64 : vector<2x1x768xf32> to vector<2x768xf32>
    %66 = arith.truncf %63 : vector<2x768xf32> to vector<2x768xbf16>
    %c0_35 = arith.constant 0 : index
    %c0_36 = arith.constant 0 : index
    %67 = vector.load %arg3[%c0_35, %c0_36] : memref<768x768xbf16, #tpu.memory_space<vmem>>, vector<768x768xbf16>
    %cst_37 = arith.constant dense<0.000000e+00> : vector<2x768xf32>
    %68 = tpu.matmul %66, %67, %cst_37 {dimension_numbers = #tpu.dot_dimension_numbers<[1], [0], [0], [1], [0, 0, 1, 1], [], []>} : vector<2x768xbf16>, vector<768x768xbf16>, vector<2x768xf32> -> vector<2x768xf32>
    %69 = arith.addf %65, %68 : vector<2x768xf32>
    %cst_38 = arith.constant 0.000000e+00 : f32
    %70 = vector.broadcast %cst_38 : f32 to vector<2x768xf32>
    %71 = arith.maximumf %69, %70 : vector<2x768xf32>
    %c0_39 = arith.constant 0 : index
    %c0_40 = arith.constant 0 : index
    %72 = vector.load %arg5[%c0_39, %c0_40] : memref<2x768xf32, #tpu.memory_space<vmem>>, vector<2x768xf32>
    tpu.vector_store %arg5[%c0_39, %c0_40], %71 {strides = array<i32>} : memref<2x768xf32, #tpu.memory_space<vmem>>, vector<2x768xf32>,
    return
  }
  func.func @transform_0(%arg0: i32) -> (i32, i32, i32) {
    %c0_i32 = arith.constant 0 : i32
    %c0_i32_0 = arith.constant 0 : i32
    %c0_i32_1 = arith.constant 0 : i32
    return %c0_i32, %arg0, %c0_i32_0 : i32, i32, i32
  }
  func.func @transform_1(%arg0: i32) -> (i32, i32) {
    %c0_i32 = arith.constant 0 : i32
    %c0_i32_0 = arith.constant 0 : i32
    %c0_i32_1 = arith.constant 0 : i32
    return %c0_i32, %c0_i32_0 : i32, i32
  }
  func.func @transform_2(%arg0: i32) -> (i32, i32) {
    %c0_i32 = arith.constant 0 : i32
    %c0_i32_0 = arith.constant 0 : i32
    %c0_i32_1 = arith.constant 0 : i32
    return %c0_i32, %c0_i32_0 : i32, i32
  }
  func.func @transform_3(%arg0: i32) -> (i32, i32) {
    %c0_i32 = arith.constant 0 : i32
    %c0_i32_0 = arith.constant 0 : i32
    %c0_i32_1 = arith.constant 0 : i32
    return %c0_i32, %c0_i32_0 : i32, i32
  }
  func.func @transform_4(%arg0: i32) -> (i32, i32) {
    %c0_i32 = arith.constant 0 : i32
    %c0_i32_0 = arith.constant 0 : i32
    %c0_i32_1 = arith.constant 0 : i32
    return %c0_i32, %c0_i32_0 : i32, i32
  }
}

</mosaic_0001>

<llo_original>
// kernel: _lambda_.3
$region0: #{_lambda_.3}
  #allocation0 [shape = 'u32[]', space=smem, size = 0x4, offset = 0x4, fixed_abs, tag = 'smem constant byte address 0x4 - core index']
  #allocation1 [shape = 'u32[144,128]{1,0:T(1,128)}', space=vmem, size = 0x12000, scoped, tag = 'internal scratch']
  %s0 = inlined_call_operand.vmem [shape: f32[2,2,768], index: 0, kind: input, shape index: {}]
  %s1 = inlined_call_operand.vmem [shape: bf16[2,768,768], index: 1, kind: input, shape index: {}]
  %s2 = inlined_call_operand.vmem [shape: f32[2,1,768], index: 2, kind: input, shape index: {}]
  %s3 = inlined_call_operand.vmem [shape: f32[2,2,768], index: 3, kind: output, shape index: {}]
  %s4 = sld [smem:[#allocation0]]
  $region45: #{_lambda_.3} parent=0
    _
  %s6 = ssub.s32 1, %s4
  %s7 = scalar_select 0, %s6, %s4
  loop: start=0, step=1, limit=4
  $region2: #{_lambda_.3} parent=0 // loop_pre_header
    _
  $region3: #{_lambda_.3} parent=0 // loop_header
    %s9 = sphi 0, %s13
    %p10 = scmp.ge.s32.totalorder %s9, 4
    %s19 = sphi 0, %s21
    %s22 = sphi 0, %s19
    %s23 = sphi 0, %s22
    %s39 = sphi 0, %s23
    %s45 = sphi 0, %s47
    %s48 = sphi 0, %s45
    %s49 = sphi 0, %s48
    %s65 = sphi 0, %s49
    %s71 = sphi 0, %s73
    %s74 = sphi 0, %s71
    %s75 = sphi 0, %s74
    %s91 = sphi 0, %s75
    %s97 = sphi 0, %s99
    %s100 = sphi 0, %s97
    %s101 = sphi 0, %s100
    %s117 = sphi 0, %s101
  $region4: #{_lambda_.3} parent=0 // loop_header_branch
    %12 = sbr.rel (%p10) target = $region8
  $region5: #{_lambda_.3} parent=0 // loop_body
    %s14 = ssub.s32 %s9, 1
    %s15 = ssub.s32 %s9, 2
    %s16 = sadd.s32 %s9, 1
    %s17 = ssub.s32 %s9, %s16
    %p18 = scmp.eq.s32.totalorder %s17, 0
    %s20 = sadd.s32 %s19, 1
    %s21 = scalar_select %p18, %s19, %s20
    %p24 = pneg %p18
    %p25 = scmp.eq.s32.totalorder %s9, 1
    %p26 = por %p24, %p25
    %p27 = scmp.ne.s32.totalorder %s19, %s22
    %p28 = scmp.eq.s32.totalorder %s9, 0
    %p29 = por %p27, %p28
    %p30 = scmp.ne.s32.totalorder %s19, %s22
    %p31 = scmp.eq.s32.totalorder %s14, 1
    %p32 = por %p30, %p31
    %p33 = scmp.ne.s32.totalorder %s22, %s23
    %p34 = scmp.eq.s32.totalorder %s14, 0
    %p35 = por %p33, %p34
    %p36 = scmp.ne.s32.totalorder %s22, %s23
    %p37 = scmp.eq.s32.totalorder %s15, 1
    %p38 = por %p36, %p37
    %p40 = scmp.ne.s32.totalorder %s23, %s39
    %p41 = scmp.eq.s32.totalorder %s15, 0
    %p42 = por %p40, %p41
    %s43 = ssub.s32 %s9, %s16
    %p44 = scmp.eq.s32.totalorder %s43, 0
    %s46 = sadd.s32 %s45, 1
    %s47 = scalar_select %p44, %s45, %s46
    %p50 = pneg %p44
    %p51 = scmp.eq.s32.totalorder %s9, 1
    %p52 = por %p50, %p51
    %p53 = scmp.ne.s32.totalorder %s45, %s48
    %p54 = scmp.eq.s32.totalorder %s9, 0
    %p55 = por %p53, %p54
    %p56 = scmp.ne.s32.totalorder %s45, %s48
    %p57 = scmp.eq.s32.totalorder %s14, 1
    %p58 = por %p56, %p57
    %p59 = scmp.ne.s32.totalorder %s48, %s49
    %p60 = scmp.eq.s32.totalorder %s14, 0
    %p61 = por %p59, %p60
    %p62 = scmp.ne.s32.totalorder %s48, %s49
    %p63 = scmp.eq.s32.totalorder %s15, 1
    %p64 = por %p62, %p63
    %p66 = scmp.ne.s32.totalorder %s49, %s65
    %p67 = scmp.eq.s32.totalorder %s15, 0
    %p68 = por %p66, %p67
    %s69 = ssub.s32 %s9, %s16
    %p70 = scmp.eq.s32.totalorder %s69, 0
    %s72 = sadd.s32 %s71, 1
    %s73 = scalar_select %p70, %s71, %s72
    %p76 = pneg %p70
    %p77 = scmp.eq.s32.totalorder %s9, 1
    %p78 = por %p76, %p77
    %p79 = scmp.ne.s32.totalorder %s71, %s74
    %p80 = scmp.eq.s32.totalorder %s9, 0
    %p81 = por %p79, %p80
    %p82 = scmp.ne.s32.totalorder %s71, %s74
    %p83 = scmp.eq.s32.totalorder %s14, 1
    %p84 = por %p82, %p83
    %p85 = scmp.ne.s32.totalorder %s74, %s75
    %p86 = scmp.eq.s32.totalorder %s14, 0
    %p87 = por %p85, %p86
    %p88 = scmp.ne.s32.totalorder %s74, %s75
    %p89 = scmp.eq.s32.totalorder %s15, 1
    %p90 = por %p88, %p89
    %p92 = scmp.ne.s32.totalorder %s75, %s91
    %p93 = scmp.eq.s32.totalorder %s15, 0
    %p94 = por %p92, %p93
    %s95 = ssub.s32 %s9, %s16
    %p96 = scmp.eq.s32.totalorder %s95, 0
    %s98 = sadd.s32 %s97, 1
    %s99 = scalar_select %p96, %s97, %s98
    %p102 = pneg %p96
    %p103 = scmp.eq.s32.totalorder %s9, 1
    %p104 = por %p102, %p103
    %p105 = scmp.ne.s32.totalorder %s97, %s100
    %p106 = scmp.eq.s32.totalorder %s9, 0
    %p107 = por %p105, %p106
    %p108 = scmp.ne.s32.totalorder %s97, %s100
    %p109 = scmp.eq.s32.totalorder %s14, 1
    %p110 = por %p108, %p109
    %p111 = scmp.ne.s32.totalorder %s100, %s101
    %p112 = scmp.eq.s32.totalorder %s14, 0
    %p113 = por %p111, %p112
    %p114 = scmp.ne.s32.totalorder %s100, %s101
    %p115 = scmp.eq.s32.totalorder %s15, 1
    %p116 = por %p114, %p115
    %p118 = scmp.ne.s32.totalorder %s101, %s117
    %p119 = scmp.eq.s32.totalorder %s15, 0
    %p120 = por %p118, %p119
    %p121 = scmp.le.s32.totalorder 1, %s9
    %p122 = scmp.lt.s32.totalorder %s9, 3
    %p123 = pnand %p121, %p122
    %p124 = pneg %p123
    // Predicated region
    $region9: #{_lambda_.3} parent=5 // pred_check
      _
    $region10: #{_lambda_.3} parent=5 // pred_check_branch
      %126 = sbr.rel (%p123) target = $region12
    $region11: #{_lambda_.3} parent=5 // pred_region
      %s127 = ssub.s32 %s9, 1
    $region12: #{_lambda_.3} parent=5 // pred_fallthru
      _
    %p128 = scmp.lt.s32.totalorder %s9, 2
    // Predicated region
    $region13: #{_lambda_.3} parent=5 // pred_check
      %p129 = pneg %p128
    $region14: #{_lambda_.3} parent=5 // pred_check_branch
      %131 = sbr.rel (%p129) target = $region16
    $region15: #{_lambda_.3} parent=5 // pred_region
      // Predicated region
      $region17: #{_lambda_.3} parent=15 // pred_check
        %p132 = pneg %p29
      $region18: #{_lambda_.3} parent=15 // pred_check_branch
        %134 = sbr.rel (%p132) target = $region20
      $region19: #{_lambda_.3} parent=15 // pred_region
        %p135 = scmp.lt.s32.totalorder %s9, 1
        %s136 = scalar_select %p135, %s9, 1
        %s137 = smul.addr %s136, 6
        %s138 = smul.addr %s137, 2
        %s139 = scalar_lea.vmem %s0, %s138
      $region20: #{_lambda_.3} parent=15 // pred_fallthru
        _
      // Predicated region
      $region21: #{_lambda_.3} parent=15 // pred_check
        %p140 = pneg %p55
      $region22: #{_lambda_.3} parent=15 // pred_check_branch
        %142 = sbr.rel (%p140) target = $region24
      $region23: #{_lambda_.3} parent=15 // pred_region
        %p143 = scmp.lt.s32.totalorder %s9, 1
        %s144 = scalar_select %p143, %s9, 1
        %s145 = smul.addr %s144, 576
        %s146 = smul.addr %s145, 4
        %s147 = scalar_lea.vmem %s1, %s146
      $region24: #{_lambda_.3} parent=15 // pred_fallthru
        _
      // Predicated region
      $region25: #{_lambda_.3} parent=15 // pred_check
        %p148 = pneg %p81
      $region26: #{_lambda_.3} parent=15 // pred_check_branch
        %150 = sbr.rel (%p148) target = $region28
      $region27: #{_lambda_.3} parent=15 // pred_region
        %p151 = scmp.lt.s32.totalorder %s9, 1
        %s152 = scalar_select %p151, %s9, 1
        %s153 = smul.addr %s152, 6
        %s154 = scalar_lea.vmem %s2, %s153
      $region28: #{_lambda_.3} parent=15 // pred_fallthru
        _
    $region16: #{_lambda_.3} parent=5 // pred_fallthru
      _
    %p155 = scmp.le.s32.totalorder 1, %s9
    %p156 = scmp.lt.s32.totalorder %s9, 3
    %p157 = pnand %p155, %p156
    %p158 = pneg %p157
    // Predicated region
    $region29: #{_lambda_.3} parent=5 // pred_check
      _
    $region30: #{_lambda_.3} parent=5 // pred_check_branch
      %160 = sbr.rel (%p157) target = $region32
    $region31: #{_lambda_.3} parent=5 // pred_region
      %s161 = ssub.s32 %s9, 1
      %p162 = scmp.lt.s32.totalorder %s14, 1
      %s163 = scalar_select %p162, %s14, 1
      %s164 = smul.addr %s163, 6
      %s165 = smul.addr %s164, 2
      %s166 = scalar_lea.vmem %s0, %s165
      %p167 = pneg %p35
      %p168 = pneg %p32
      %p169 = scmp.lt.s32.totalorder %s14, 1
      %s170 = scalar_select %p169, %s14, 1
      %s171 = smul.addr %s170, 576
      %s172 = smul.addr %s171, 4
      %s173 = scalar_lea.vmem %s1, %s172
      %p174 = pneg %p61
      %p175 = pneg %p58
      %p176 = scmp.lt.s32.totalorder %s14, 1
      %s177 = scalar_select %p176, %s14, 1
      %s178 = smul.addr %s177, 6
      %s179 = scalar_lea.vmem %s2, %s178
      %p180 = pneg %p87
      %p181 = pneg %p84
      %p182 = pneg %p113
      %p183 = pneg %p110
      %p184 = scmp.lt.s32.totalorder %s14, 1
      %s185 = scalar_select %p184, %s14, 1
      %s186 = smul.addr %s185, 6
      %s187 = smul.addr %s186, 2
      %s188 = scalar_lea.vmem %s3, %s187
      %p189 = scmp.lt.s32.totalorder %s14, 1
      %s190 = scalar_select %p189, %s14, 1
      %s191 = smul.addr %s190, 6
      %s192 = smul.addr %s191, 2
      %s193 = scalar_lea.vmem %s0, %s192
      %p194 = scmp.lt.s32.totalorder %s14, 1
      %s195 = scalar_select %p194, %s14, 1
      %s196 = smul.addr %s195, 576
      %s197 = smul.addr %s196, 4
      %s198 = scalar_lea.vmem %s1, %s197
      %p199 = scmp.lt.s32.totalorder %s14, 1
      %s200 = scalar_select %p199, %s14, 1
      %s201 = smul.addr %s200, 6
      %s202 = scalar_lea.vmem %s2, %s201
      %p203 = scmp.lt.s32.totalorder %s14, 1
      %s204 = scalar_select %p203, %s14, 1
      %s205 = smul.addr %s204, 6
      %s206 = smul.addr %s205, 2
      %s207 = scalar_lea.vmem %s3, %s206
      %v208 = vld [vmem:[%s193] sm:$0xff]
      %v209 = vld [vmem:[%s193 + $0x8] sm:$0xf]
      %v212 = vcombine.high %v208, %v208
      %v214 = vunpack.c.l.s4 1983009808
      %v215 = vunpack.c.0.s8 %v214
      %v216 = vlaneseq
      %v217 = vshrl.u32 %v216, 7
      %v218 = vsub.s32 %v215, %v217
      %v219 = vrot.slane %v208, %v218
      %v221 = vunpack.c.l.s4 1983009808
      %v222 = vunpack.c.0.s8 %v221
      %v223 = vlaneseq
      %v224 = vshrl.u32 %v223, 7
      %v225 = vsub.s32 %v222, %v224
      %v226 = vrot.slane %v212, %v225
      %v227 = vcombine.high %v219, %v219
      %v228 = vcombine.high %v226, %v226
      %v230 = vunpack.c.l.s4 1983009808
      %v231 = vunpack.c.0.s8 %v230
      %v232 = vlaneseq
      %v233 = vshrl.u32 %v232, 7
      %v234 = vsub.s32 %v231, %v233
      %v235 = vrot.slane %v209, %v234
      %v236 = vcombine.high %v235, %v235
      %v243 = vpack.c.bf16 %v219, %v219
      %v244 = vpack.c.bf16 %v227, %v227
      %v245 = vpack.c.bf16 %v226, %v226
      %v246 = vpack.c.bf16 %v228, %v228
      %v247 = vpack.c.bf16 %v235, %v235
      %v248 = vpack.c.bf16 %v236, %v236
      %v249 = vld [vmem:[%s198] sm:$0xff]
      %v250 = vld [vmem:[%s198 + $0x8] sm:$0xff]
      %v251 = vld [vmem:[%s198 + $0x10] sm:$0xff]
      %v252 = vld [vmem:[%s198 + $0x18] sm:$0xff]
      %v253 = vld [vmem:[%s198 + $0x20] sm:$0xff]
      %v254 = vld [vmem:[%s198 + $0x28] sm:$0xff]
      %v255 = vld [vmem:[%s198 + $0x30] sm:$0xff]
      %v256 = vld [vmem:[%s198 + $0x38] sm:$0xff]
      %v257 = vld [vmem:[%s198 + $0x40] sm:$0xff]
      %v258 = vld [vmem:[%s198 + $0x48] sm:$0xff]
      %v259 = vld [vmem:[%s198 + $0x50] sm:$0xff]
      %v260 = vld [vmem:[%s198 + $0x58] sm:$0xff]
      %v261 = vld [vmem:[%s198 + $0x60] sm:$0xff]
      %v262 = vld [vmem:[%s198 + $0x68] sm:$0xff]
      %v263 = vld [vmem:[%s198 + $0x70] sm:$0xff]
      %v264 = vld [vmem:[%s198 + $0x78] sm:$0xff]
      %v265 = vld [vmem:[%s198 + $0x80] sm:$0xff]
      %v266 = vld [vmem:[%s198 + $0x88] sm:$0xff]
      %v267 = vld [vmem:[%s198 + $0x90] sm:$0xff]
      %v268 = vld [vmem:[%s198 + $0x98] sm:$0xff]
      %v269 = vld [vmem:[%s198 + $0xa0] sm:$0xff]
      %v270 = vld [vmem:[%s198 + $0xa8] sm:$0xff]
      %v271 = vld [vmem:[%s198 + $0xb0] sm:$0xff]
      %v272 = vld [vmem:[%s198 + $0xb8] sm:$0xff]
      %v273 = vld [vmem:[%s198 + $0xc0] sm:$0xff]
      %v274 = vld [vmem:[%s198 + $0xc8] sm:$0xff]
      %v275 = vld [vmem:[%s198 + $0xd0] sm:$0xff]
      %v276 = vld [vmem:[%s198 + $0xd8] sm:$0xff]
      %v277 = vld [vmem:[%s198 + $0xe0] sm:$0xff]
      %v278 = vld [vmem:[%s198 + $0xe8] sm:$0xff]
      %v279 = vld [vmem:[%s198 + $0xf0] sm:$0xff]
      %v280 = vld [vmem:[%s198 + $0xf8] sm:$0xff]
      %v281 = vld [vmem:[%s198 + $0x100] sm:$0xff]
      %v282 = vld [vmem:[%s198 + $0x108] sm:$0xff]
      %v283 = vld [vmem:[%s198 + $0x110] sm:$0xff]
      %v284 = vld [vmem:[%s198 + $0x118] sm:$0xff]
      %v285 = vld [vmem:[%s198 + $0x120] sm:$0xff]
      %v286 = vld [vmem:[%s198 + $0x128] sm:$0xff]
      %v287 = vld [vmem:[%s198 + $0x130] sm:$0xff]
      %v288 = vld [vmem:[%s198 + $0x138] sm:$0xff]
      %v289 = vld [vmem:[%s198 + $0x140] sm:$0xff]
      %v290 = vld [vmem:[%s198 + $0x148] sm:$0xff]
      %v291 = vld [vmem:[%s198 + $0x150] sm:$0xff]
      %v292 = vld [vmem:[%s198 + $0x158] sm:$0xff]
      %v293 = vld [vmem:[%s198 + $0x160] sm:$0xff]
      %v294 = vld [vmem:[%s198 + $0x168] sm:$0xff]
      %v295 = vld [vmem:[%s198 + $0x170] sm:$0xff]
      %v296 = vld [vmem:[%s198 + $0x178] sm:$0xff]
      %v297 = vld [vmem:[%s198 + $0x180] sm:$0xff]
      %v298 = vld [vmem:[%s198 + $0x188] sm:$0xff]
      %v299 = vld [vmem:[%s198 + $0x190] sm:$0xff]
      %v300 = vld [vmem:[%s198 + $0x198] sm:$0xff]
      %v301 = vld [vmem:[%s198 + $0x1a0] sm:$0xff]
      %v302 = vld [vmem:[%s198 + $0x1a8] sm:$0xff]
      %v303 = vld [vmem:[%s198 + $0x1b0] sm:$0xff]
      %v304 = vld [vmem:[%s198 + $0x1b8] sm:$0xff]
      %v305 = vld [vmem:[%s198 + $0x1c0] sm:$0xff]
      %v306 = vld [vmem:[%s198 + $0x1c8] sm:$0xff]
      %v307 = vld [vmem:[%s198 + $0x1d0] sm:$0xff]
      %v308 = vld [vmem:[%s198 + $0x1d8] sm:$0xff]
      %v309 = vld [vmem:[%s198 + $0x1e0] sm:$0xff]
      %v310 = vld [vmem:[%s198 + $0x1e8] sm:$0xff]
      %v311 = vld [vmem:[%s198 + $0x1f0] sm:$0xff]
      %v312 = vld [vmem:[%s198 + $0x1f8] sm:$0xff]
      %v313 = vld [vmem:[%s198 + $0x200] sm:$0xff]
      %v314 = vld [vmem:[%s198 + $0x208] sm:$0xff]
      %v315 = vld [vmem:[%s198 + $0x210] sm:$0xff]
      %v316 = vld [vmem:[%s198 + $0x218] sm:$0xff]
      %v317 = vld [vmem:[%s198 + $0x220] sm:$0xff]
      %v318 = vld [vmem:[%s198 + $0x228] sm:$0xff]
      %v319 = vld [vmem:[%s198 + $0x230] sm:$0xff]
      %v320 = vld [vmem:[%s198 + $0x238] sm:$0xff]
      %v321 = vld [vmem:[%s198 + $0x240] sm:$0xff]
      %v322 = vld [vmem:[%s198 + $0x248] sm:$0xff]
      %v323 = vld [vmem:[%s198 + $0x250] sm:$0xff]
      %v324 = vld [vmem:[%s198 + $0x258] sm:$0xff]
      %v325 = vld [vmem:[%s198 + $0x260] sm:$0xff]
      %v326 = vld [vmem:[%s198 + $0x268] sm:$0xff]
      %v327 = vld [vmem:[%s198 + $0x270] sm:$0xff]
      %v328 = vld [vmem:[%s198 + $0x278] sm:$0xff]
      %v329 = vld [vmem:[%s198 + $0x280] sm:$0xff]
      %v330 = vld [vmem:[%s198 + $0x288] sm:$0xff]
      %v331 = vld [vmem:[%s198 + $0x290] sm:$0xff]
      %v332 = vld [vmem:[%s198 + $0x298] sm:$0xff]
      %v333 = vld [vmem:[%s198 + $0x2a0] sm:$0xff]
      %v334 = vld [vmem:[%s198 + $0x2a8] sm:$0xff]
      %v335 = vld [vmem:[%s198 + $0x2b0] sm:$0xff]
      %v336 = vld [vmem:[%s198 + $0x2b8] sm:$0xff]
      %v337 = vld [vmem:[%s198 + $0x2c0] sm:$0xff]
      %v338 = vld [vmem:[%s198 + $0x2c8] sm:$0xff]
      %v339 = vld [vmem:[%s198 + $0x2d0] sm:$0xff]
      %v340 = vld [vmem:[%s198 + $0x2d8] sm:$0xff]
      %v341 = vld [vmem:[%s198 + $0x2e0] sm:$0xff]
      %v342 = vld [vmem:[%s198 + $0x2e8] sm:$0xff]
      %v343 = vld [vmem:[%s198 + $0x2f0] sm:$0xff]
      %v344 = vld [vmem:[%s198 + $0x2f8] sm:$0xff]
      %v345 = vld [vmem:[%s198 + $0x300] sm:$0xff]
      %v346 = vld [vmem:[%s198 + $0x308] sm:$0xff]
      %v347 = vld [vmem:[%s198 + $0x310] sm:$0xff]
      %v348 = vld [vmem:[%s198 + $0x318] sm:$0xff]
      %v349 = vld [vmem:[%s198 + $0x320] sm:$0xff]
      %v350 = vld [vmem:[%s198 + $0x328] sm:$0xff]
      %v351 = vld [vmem:[%s198 + $0x330] sm:$0xff]
      %v352 = vld [vmem:[%s198 + $0x338] sm:$0xff]
      %v353 = vld [vmem:[%s198 + $0x340] sm:$0xff]
      %v354 = vld [vmem:[%s198 + $0x348] sm:$0xff]
      %v355 = vld [vmem:[%s198 + $0x350] sm:$0xff]
      %v356 = vld [vmem:[%s198 + $0x358] sm:$0xff]
      %v357 = vld [vmem:[%s198 + $0x360] sm:$0xff]
      %v358 = vld [vmem:[%s198 + $0x368] sm:$0xff]
      %v359 = vld [vmem:[%s198 + $0x370] sm:$0xff]
      %v360 = vld [vmem:[%s198 + $0x378] sm:$0xff]
      %v361 = vld [vmem:[%s198 + $0x380] sm:$0xff]
      %v362 = vld [vmem:[%s198 + $0x388] sm:$0xff]
      %v363 = vld [vmem:[%s198 + $0x390] sm:$0xff]
      %v364 = vld [vmem:[%s198 + $0x398] sm:$0xff]
      %v365 = vld [vmem:[%s198 + $0x3a0] sm:$0xff]
      %v366 = vld [vmem:[%s198 + $0x3a8] sm:$0xff]
      %v367 = vld [vmem:[%s198 + $0x3b0] sm:$0xff]
      %v368 = vld [vmem:[%s198 + $0x3b8] sm:$0xff]
      %v369 = vld [vmem:[%s198 + $0x3c0] sm:$0xff]
      %v370 = vld [vmem:[%s198 + $0x3c8] sm:$0xff]
      %v371 = vld [vmem:[%s198 + $0x3d0] sm:$0xff]
      %v372 = vld [vmem:[%s198 + $0x3d8] sm:$0xff]
      %v373 = vld [vmem:[%s198 + $0x3e0] sm:$0xff]
      %v374 = vld [vmem:[%s198 + $0x3e8] sm:$0xff]
      %v375 = vld [vmem:[%s198 + $0x3f0] sm:$0xff]
      %v376 = vld [vmem:[%s198 + $0x3f8] sm:$0xff]
      %v377 = vld [vmem:[%s198 + $0x400] sm:$0xff]
      %v378 = vld [vmem:[%s198 + $0x408] sm:$0xff]
      %v379 = vld [vmem:[%s198 + $0x410] sm:$0xff]
      %v380 = vld [vmem:[%s198 + $0x418] sm:$0xff]
      %v381 = vld [vmem:[%s198 + $0x420] sm:$0xff]
      %v382 = vld [vmem:[%s198 + $0x428] sm:$0xff]
      %v383 = vld [vmem:[%s198 + $0x430] sm:$0xff]
      %v384 = vld [vmem:[%s198 + $0x438] sm:$0xff]
      %v385 = vld [vmem:[%s198 + $0x440] sm:$0xff]
      %v386 = vld [vmem:[%s198 + $0x448] sm:$0xff]
      %v387 = vld [vmem:[%s198 + $0x450] sm:$0xff]
      %v388 = vld [vmem:[%s198 + $0x458] sm:$0xff]
      %v389 = vld [vmem:[%s198 + $0x460] sm:$0xff]
      %v390 = vld [vmem:[%s198 + $0x468] sm:$0xff]
      %v391 = vld [vmem:[%s198 + $0x470] sm:$0xff]
      %v392 = vld [vmem:[%s198 + $0x478] sm:$0xff]
      %v393 = vld [vmem:[%s198 + $0x480] sm:$0xff]
      %v394 = vld [vmem:[%s198 + $0x488] sm:$0xff]
      %v395 = vld [vmem:[%s198 + $0x490] sm:$0xff]
      %v396 = vld [vmem:[%s198 + $0x498] sm:$0xff]
      %v397 = vld [vmem:[%s198 + $0x4a0] sm:$0xff]
      %v398 = vld [vmem:[%s198 + $0x4a8] sm:$0xff]
      %v399 = vld [vmem:[%s198 + $0x4b0] sm:$0xff]
      %v400 = vld [vmem:[%s198 + $0x4b8] sm:$0xff]
      %v401 = vld [vmem:[%s198 + $0x4c0] sm:$0xff]
      %v402 = vld [vmem:[%s198 + $0x4c8] sm:$0xff]
      %v403 = vld [vmem:[%s198 + $0x4d0] sm:$0xff]
      %v404 = vld [vmem:[%s198 + $0x4d8] sm:$0xff]
      %v405 = vld [vmem:[%s198 + $0x4e0] sm:$0xff]
      %v406 = vld [vmem:[%s198 + $0x4e8] sm:$0xff]
      %v407 = vld [vmem:[%s198 + $0x4f0] sm:$0xff]
      %v408 = vld [vmem:[%s198 + $0x4f8] sm:$0xff]
      %v409 = vld [vmem:[%s198 + $0x500] sm:$0xff]
      %v410 = vld [vmem:[%s198 + $0x508] sm:$0xff]
      %v411 = vld [vmem:[%s198 + $0x510] sm:$0xff]
      %v412 = vld [vmem:[%s198 + $0x518] sm:$0xff]
      %v413 = vld [vmem:[%s198 + $0x520] sm:$0xff]
      %v414 = vld [vmem:[%s198 + $0x528] sm:$0xff]
      %v415 = vld [vmem:[%s198 + $0x530] sm:$0xff]
      %v416 = vld [vmem:[%s198 + $0x538] sm:$0xff]
      %v417 = vld [vmem:[%s198 + $0x540] sm:$0xff]
      %v418 = vld [vmem:[%s198 + $0x548] sm:$0xff]
      %v419 = vld [vmem:[%s198 + $0x550] sm:$0xff]
      %v420 = vld [vmem:[%s198 + $0x558] sm:$0xff]
      %v421 = vld [vmem:[%s198 + $0x560] sm:$0xff]
      %v422 = vld [vmem:[%s198 + $0x568] sm:$0xff]
      %v423 = vld [vmem:[%s198 + $0x570] sm:$0xff]
      %v424 = vld [vmem:[%s198 + $0x578] sm:$0xff]
      %v425 = vld [vmem:[%s198 + $0x580] sm:$0xff]
      %v426 = vld [vmem:[%s198 + $0x588] sm:$0xff]
      %v427 = vld [vmem:[%s198 + $0x590] sm:$0xff]
      %v428 = vld [vmem:[%s198 + $0x598] sm:$0xff]
      %v429 = vld [vmem:[%s198 + $0x5a0] sm:$0xff]
      %v430 = vld [vmem:[%s198 + $0x5a8] sm:$0xff]
      %v431 = vld [vmem:[%s198 + $0x5b0] sm:$0xff]
      %v432 = vld [vmem:[%s198 + $0x5b8] sm:$0xff]
      %v433 = vld [vmem:[%s198 + $0x5c0] sm:$0xff]
      %v434 = vld [vmem:[%s198 + $0x5c8] sm:$0xff]
      %v435 = vld [vmem:[%s198 + $0x5d0] sm:$0xff]
      %v436 = vld [vmem:[%s198 + $0x5d8] sm:$0xff]
      %v437 = vld [vmem:[%s198 + $0x5e0] sm:$0xff]
      %v438 = vld [vmem:[%s198 + $0x5e8] sm:$0xff]
      %v439 = vld [vmem:[%s198 + $0x5f0] sm:$0xff]
      %v440 = vld [vmem:[%s198 + $0x5f8] sm:$0xff]
      %v441 = vld [vmem:[%s198 + $0x600] sm:$0xff]
      %v442 = vld [vmem:[%s198 + $0x608] sm:$0xff]
      %v443 = vld [vmem:[%s198 + $0x610] sm:$0xff]
      %v444 = vld [vmem:[%s198 + $0x618] sm:$0xff]
      %v445 = vld [vmem:[%s198 + $0x620] sm:$0xff]
      %v446 = vld [vmem:[%s198 + $0x628] sm:$0xff]
      %v447 = vld [vmem:[%s198 + $0x630] sm:$0xff]
      %v448 = vld [vmem:[%s198 + $0x638] sm:$0xff]
      %v449 = vld [vmem:[%s198 + $0x640] sm:$0xff]
      %v450 = vld [vmem:[%s198 + $0x648] sm:$0xff]
      %v451 = vld [vmem:[%s198 + $0x650] sm:$0xff]
      %v452 = vld [vmem:[%s198 + $0x658] sm:$0xff]
      %v453 = vld [vmem:[%s198 + $0x660] sm:$0xff]
      %v454 = vld [vmem:[%s198 + $0x668] sm:$0xff]
      %v455 = vld [vmem:[%s198 + $0x670] sm:$0xff]
      %v456 = vld [vmem:[%s198 + $0x678] sm:$0xff]
      %v457 = vld [vmem:[%s198 + $0x680] sm:$0xff]
      %v458 = vld [vmem:[%s198 + $0x688] sm:$0xff]
      %v459 = vld [vmem:[%s198 + $0x690] sm:$0xff]
      %v460 = vld [vmem:[%s198 + $0x698] sm:$0xff]
      %v461 = vld [vmem:[%s198 + $0x6a0] sm:$0xff]
      %v462 = vld [vmem:[%s198 + $0x6a8] sm:$0xff]
      %v463 = vld [vmem:[%s198 + $0x6b0] sm:$0xff]
      %v464 = vld [vmem:[%s198 + $0x6b8] sm:$0xff]
      %v465 = vld [vmem:[%s198 + $0x6c0] sm:$0xff]
      %v466 = vld [vmem:[%s198 + $0x6c8] sm:$0xff]
      %v467 = vld [vmem:[%s198 + $0x6d0] sm:$0xff]
      %v468 = vld [vmem:[%s198 + $0x6d8] sm:$0xff]
      %v469 = vld [vmem:[%s198 + $0x6e0] sm:$0xff]
      %v470 = vld [vmem:[%s198 + $0x6e8] sm:$0xff]
      %v471 = vld [vmem:[%s198 + $0x6f0] sm:$0xff]
      %v472 = vld [vmem:[%s198 + $0x6f8] sm:$0xff]
      %v473 = vld [vmem:[%s198 + $0x700] sm:$0xff]
      %v474 = vld [vmem:[%s198 + $0x708] sm:$0xff]
      %v475 = vld [vmem:[%s198 + $0x710] sm:$0xff]
      %v476 = vld [vmem:[%s198 + $0x718] sm:$0xff]
      %v477 = vld [vmem:[%s198 + $0x720] sm:$0xff]
      %v478 = vld [vmem:[%s198 + $0x728] sm:$0xff]
      %v479 = vld [vmem:[%s198 + $0x730] sm:$0xff]
      %v480 = vld [vmem:[%s198 + $0x738] sm:$0xff]
      %v481 = vld [vmem:[%s198 + $0x740] sm:$0xff]
      %v482 = vld [vmem:[%s198 + $0x748] sm:$0xff]
      %v483 = vld [vmem:[%s198 + $0x750] sm:$0xff]
      %v484 = vld [vmem:[%s198 + $0x758] sm:$0xff]
      %v485 = vld [vmem:[%s198 + $0x760] sm:$0xff]
      %v486 = vld [vmem:[%s198 + $0x768] sm:$0xff]
      %v487 = vld [vmem:[%s198 + $0x770] sm:$0xff]
      %v488 = vld [vmem:[%s198 + $0x778] sm:$0xff]
      %v489 = vld [vmem:[%s198 + $0x780] sm:$0xff]
      %v490 = vld [vmem:[%s198 + $0x788] sm:$0xff]
      %v491 = vld [vmem:[%s198 + $0x790] sm:$0xff]
      %v492 = vld [vmem:[%s198 + $0x798] sm:$0xff]
      %v493 = vld [vmem:[%s198 + $0x7a0] sm:$0xff]
      %v494 = vld [vmem:[%s198 + $0x7a8] sm:$0xff]
      %v495 = vld [vmem:[%s198 + $0x7b0] sm:$0xff]
      %v496 = vld [vmem:[%s198 + $0x7b8] sm:$0xff]
      %v497 = vld [vmem:[%s198 + $0x7c0] sm:$0xff]
      %v498 = vld [vmem:[%s198 + $0x7c8] sm:$0xff]
      %v499 = vld [vmem:[%s198 + $0x7d0] sm:$0xff]
      %v500 = vld [vmem:[%s198 + $0x7d8] sm:$0xff]
      %v501 = vld [vmem:[%s198 + $0x7e0] sm:$0xff]
      %v502 = vld [vmem:[%s198 + $0x7e8] sm:$0xff]
      %v503 = vld [vmem:[%s198 + $0x7f0] sm:$0xff]
      %v504 = vld [vmem:[%s198 + $0x7f8] sm:$0xff]
      %v505 = vld [vmem:[%s198 + $0x800] sm:$0xff]
      %v506 = vld [vmem:[%s198 + $0x808] sm:$0xff]
      %v507 = vld [vmem:[%s198 + $0x810] sm:$0xff]
      %v508 = vld [vmem:[%s198 + $0x818] sm:$0xff]
      %v509 = vld [vmem:[%s198 + $0x820] sm:$0xff]
      %v510 = vld [vmem:[%s198 + $0x828] sm:$0xff]
      %v511 = vld [vmem:[%s198 + $0x830] sm:$0xff]
      %v512 = vld [vmem:[%s198 + $0x838] sm:$0xff]
      %v513 = vld [vmem:[%s198 + $0x840] sm:$0xff]
      %v514 = vld [vmem:[%s198 + $0x848] sm:$0xff]
      %v515 = vld [vmem:[%s198 + $0x850] sm:$0xff]
      %v516 = vld [vmem:[%s198 + $0x858] sm:$0xff]
      %v517 = vld [vmem:[%s198 + $0x860] sm:$0xff]
      %v518 = vld [vmem:[%s198 + $0x868] sm:$0xff]
      %v519 = vld [vmem:[%s198 + $0x870] sm:$0xff]
      %v520 = vld [vmem:[%s198 + $0x878] sm:$0xff]
      %v521 = vld [vmem:[%s198 + $0x880] sm:$0xff]
      %v522 = vld [vmem:[%s198 + $0x888] sm:$0xff]
      %v523 = vld [vmem:[%s198 + $0x890] sm:$0xff]
      %v524 = vld [vmem:[%s198 + $0x898] sm:$0xff]
      %v525 = vld [vmem:[%s198 + $0x8a0] sm:$0xff]
      %v526 = vld [vmem:[%s198 + $0x8a8] sm:$0xff]
      %v527 = vld [vmem:[%s198 + $0x8b0] sm:$0xff]
      %v528 = vld [vmem:[%s198 + $0x8b8] sm:$0xff]
      %v529 = vld [vmem:[%s198 + $0x8c0] sm:$0xff]
      %v530 = vld [vmem:[%s198 + $0x8c8] sm:$0xff]
      %v531 = vld [vmem:[%s198 + $0x8d0] sm:$0xff]
      %v532 = vld [vmem:[%s198 + $0x8d8] sm:$0xff]
      %v533 = vld [vmem:[%s198 + $0x8e0] sm:$0xff]
      %v534 = vld [vmem:[%s198 + $0x8e8] sm:$0xff]
      %v535 = vld [vmem:[%s198 + $0x8f0] sm:$0xff]
      %v536 = vld [vmem:[%s198 + $0x8f8] sm:$0xff]
      %v537 = vld [vmem:[%s202] sm:$0x3f]
      %v539 = vlaneseq
      %v540 = vshrl.u32 %v539, 7
      %v541 = vsub.s32 0, %v540
      %v542 = vrot.slane %v537, %v541
      %v543 = vlaneseq
      %v544 = vshrl.u32 %v543, 7
      %v545 = vsub.s32 1, %v544
      %v546 = vrot.slane %v537, %v545
      %v547 = vlaneseq
      %v548 = vshrl.u32 %v547, 7
      %v549 = vsub.s32 2, %v548
      %v550 = vrot.slane %v537, %v549
      %v551 = vlaneseq
      %v552 = vshrl.u32 %v551, 7
      %v553 = vsub.s32 3, %v552
      %v554 = vrot.slane %v537, %v553
      %v555 = vlaneseq
      %v556 = vshrl.u32 %v555, 7
      %v557 = vsub.s32 4, %v556
      %v558 = vrot.slane %v537, %v557
      %v559 = vlaneseq
      %v560 = vshrl.u32 %v559, 7
      %v561 = vsub.s32 5, %v560
      %v562 = vrot.slane %v537, %v561
      %v857 = vunpack.c.l.b16 %v249
      %v858 = vunpack.c.h.b16 %v249
      %v859 = vunpack.c.l.b16 %v250
      %v860 = vunpack.c.h.b16 %v250
      %v861 = vunpack.c.l.b16 %v251
      %v862 = vunpack.c.h.b16 %v251
      %v863 = vunpack.c.l.b16 %v252
      %v864 = vunpack.c.h.b16 %v252
      %v865 = vunpack.c.l.b16 %v253
      %v866 = vunpack.c.h.b16 %v253
      %v867 = vunpack.c.l.b16 %v254
      %v868 = vunpack.c.h.b16 %v254
      %v869 = vunpack.c.l.b16 %v255
      %v870 = vunpack.c.h.b16 %v255
      %v871 = vunpack.c.l.b16 %v256
      %v872 = vunpack.c.h.b16 %v256
      %v873 = vunpack.c.l.b16 %v257
      %v874 = vunpack.c.h.b16 %v257
      %v875 = vunpack.c.l.b16 %v258
      %v876 = vunpack.c.h.b16 %v258
      %v877 = vunpack.c.l.b16 %v259
      %v878 = vunpack.c.h.b16 %v259
      %v879 = vunpack.c.l.b16 %v260
      %v880 = vunpack.c.h.b16 %v260
      %v881 = vunpack.c.l.b16 %v261
      %v882 = vunpack.c.h.b16 %v261
      %v883 = vunpack.c.l.b16 %v262
      %v884 = vunpack.c.h.b16 %v262
      %v885 = vunpack.c.l.b16 %v263
      %v886 = vunpack.c.h.b16 %v263
      %v887 = vunpack.c.l.b16 %v264
      %v888 = vunpack.c.h.b16 %v264
      %v889 = vunpack.c.l.b16 %v265
      %v890 = vunpack.c.h.b16 %v265
      %v891 = vunpack.c.l.b16 %v266
      %v892 = vunpack.c.h.b16 %v266
      %v893 = vunpack.c.l.b16 %v267
      %v894 = vunpack.c.h.b16 %v267
      %v895 = vunpack.c.l.b16 %v268
      %v896 = vunpack.c.h.b16 %v268
      %v897 = vunpack.c.l.b16 %v269
      %v898 = vunpack.c.h.b16 %v269
      %v899 = vunpack.c.l.b16 %v270
      %v900 = vunpack.c.h.b16 %v270
      %v901 = vunpack.c.l.b16 %v271
      %v902 = vunpack.c.h.b16 %v271
      %v903 = vunpack.c.l.b16 %v272
      %v904 = vunpack.c.h.b16 %v272
      %v905 = vunpack.c.l.b16 %v273
      %v906 = vunpack.c.h.b16 %v273
      %v907 = vunpack.c.l.b16 %v274
      %v908 = vunpack.c.h.b16 %v274
      %v909 = vunpack.c.l.b16 %v275
      %v910 = vunpack.c.h.b16 %v275
      %v911 = vunpack.c.l.b16 %v276
      %v912 = vunpack.c.h.b16 %v276
      %v913 = vunpack.c.l.b16 %v277
      %v914 = vunpack.c.h.b16 %v277
      %v915 = vunpack.c.l.b16 %v278
      %v916 = vunpack.c.h.b16 %v278
      %v917 = vunpack.c.l.b16 %v279
      %v918 = vunpack.c.h.b16 %v279
      %v919 = vunpack.c.l.b16 %v280
      %v920 = vunpack.c.h.b16 %v280
      %v921 = vunpack.c.l.b16 %v281
      %v922 = vunpack.c.h.b16 %v281
      %v923 = vunpack.c.l.b16 %v282
      %v924 = vunpack.c.h.b16 %v282
      %v925 = vunpack.c.l.b16 %v283
      %v926 = vunpack.c.h.b16 %v283
      %v927 = vunpack.c.l.b16 %v284
      %v928 = vunpack.c.h.b16 %v284
      %v929 = vunpack.c.l.b16 %v285
      %v930 = vunpack.c.h.b16 %v285
      %v931 = vunpack.c.l.b16 %v286
      %v932 = vunpack.c.h.b16 %v286
      %v933 = vunpack.c.l.b16 %v287
      %v934 = vunpack.c.h.b16 %v287
      %v935 = vunpack.c.l.b16 %v288
      %v936 = vunpack.c.h.b16 %v288
      %v937 = vunpack.c.l.b16 %v289
      %v938 = vunpack.c.h.b16 %v289
      %v939 = vunpack.c.l.b16 %v290
      %v940 = vunpack.c.h.b16 %v290
      %v941 = vunpack.c.l.b16 %v291
      %v942 = vunpack.c.h.b16 %v291
      %v943 = vunpack.c.l.b16 %v292
      %v944 = vunpack.c.h.b16 %v292
      %v945 = vunpack.c.l.b16 %v293
      %v946 = vunpack.c.h.b16 %v293
      %v947 = vunpack.c.l.b16 %v294
      %v948 = vunpack.c.h.b16 %v294
      %v949 = vunpack.c.l.b16 %v295
      %v950 = vunpack.c.h.b16 %v295
      %v951 = vunpack.c.l.b16 %v296
      %v952 = vunpack.c.h.b16 %v296
      %v953 = vunpack.c.l.b16 %v297
      %v954 = vunpack.c.h.b16 %v297
      %v955 = vunpack.c.l.b16 %v298
      %v956 = vunpack.c.h.b16 %v298
      %v957 = vunpack.c.l.b16 %v299
      %v958 = vunpack.c.h.b16 %v299
      %v959 = vunpack.c.l.b16 %v300
      %v960 = vunpack.c.h.b16 %v300
      %v961 = vunpack.c.l.b16 %v301
      %v962 = vunpack.c.h.b16 %v301
      %v963 = vunpack.c.l.b16 %v302
      %v964 = vunpack.c.h.b16 %v302
      %v965 = vunpack.c.l.b16 %v303
      %v966 = vunpack.c.h.b16 %v303
      %v967 = vunpack.c.l.b16 %v304
      %v968 = vunpack.c.h.b16 %v304
      %v969 = vunpack.c.l.b16 %v305
      %v970 = vunpack.c.h.b16 %v305
      %v971 = vunpack.c.l.b16 %v306
      %v972 = vunpack.c.h.b16 %v306
      %v973 = vunpack.c.l.b16 %v307
      %v974 = vunpack.c.h.b16 %v307
      %v975 = vunpack.c.l.b16 %v308
      %v976 = vunpack.c.h.b16 %v308
      %v977 = vunpack.c.l.b16 %v309
      %v978 = vunpack.c.h.b16 %v309
      %v979 = vunpack.c.l.b16 %v310
      %v980 = vunpack.c.h.b16 %v310
      %v981 = vunpack.c.l.b16 %v311
      %v982 = vunpack.c.h.b16 %v311
      %v983 = vunpack.c.l.b16 %v312
      %v984 = vunpack.c.h.b16 %v312
      %v985 = vunpack.c.l.b16 %v313
      %v986 = vunpack.c.h.b16 %v313
      %v987 = vunpack.c.l.b16 %v314
      %v988 = vunpack.c.h.b16 %v314
      %v989 = vunpack.c.l.b16 %v315
      %v990 = vunpack.c.h.b16 %v315
      %v991 = vunpack.c.l.b16 %v316
      %v992 = vunpack.c.h.b16 %v316
      %v993 = vunpack.c.l.b16 %v317
      %v994 = vunpack.c.h.b16 %v317
      %v995 = vunpack.c.l.b16 %v318
      %v996 = vunpack.c.h.b16 %v318
      %v997 = vunpack.c.l.b16 %v319
      %v998 = vunpack.c.h.b16 %v319
      %v999 = vunpack.c.l.b16 %v320
      %v1000 = vunpack.c.h.b16 %v320
      %v1001 = vunpack.c.l.b16 %v321
      %v1002 = vunpack.c.h.b16 %v321
      %v1003 = vunpack.c.l.b16 %v322
      %v1004 = vunpack.c.h.b16 %v322
      %v1005 = vunpack.c.l.b16 %v323
      %v1006 = vunpack.c.h.b16 %v323
      %v1007 = vunpack.c.l.b16 %v324
      %v1008 = vunpack.c.h.b16 %v324
      %v1009 = vunpack.c.l.b16 %v325
      %v1010 = vunpack.c.h.b16 %v325
      %v1011 = vunpack.c.l.b16 %v326
      %v1012 = vunpack.c.h.b16 %v326
      %v1013 = vunpack.c.l.b16 %v327
      %v1014 = vunpack.c.h.b16 %v327
      %v1015 = vunpack.c.l.b16 %v328
      %v1016 = vunpack.c.h.b16 %v328
      %v1017 = vunpack.c.l.b16 %v329
      %v1018 = vunpack.c.h.b16 %v329
      %v1019 = vunpack.c.l.b16 %v330
      %v1020 = vunpack.c.h.b16 %v330
      %v1021 = vunpack.c.l.b16 %v331
      %v1022 = vunpack.c.h.b16 %v331
      %v1023 = vunpack.c.l.b16 %v332
      %v1024 = vunpack.c.h.b16 %v332
      %v1025 = vunpack.c.l.b16 %v333
      %v1026 = vunpack.c.h.b16 %v333
      %v1027 = vunpack.c.l.b16 %v334
      %v1028 = vunpack.c.h.b16 %v334
      %v1029 = vunpack.c.l.b16 %v335
      %v1030 = vunpack.c.h.b16 %v335
      %v1031 = vunpack.c.l.b16 %v336
      %v1032 = vunpack.c.h.b16 %v336
      %v1033 = vunpack.c.l.b16 %v337
      %v1034 = vunpack.c.h.b16 %v337
      %v1035 = vunpack.c.l.b16 %v338
      %v1036 = vunpack.c.h.b16 %v338
      %v1037 = vunpack.c.l.b16 %v339
      %v1038 = vunpack.c.h.b16 %v339
      %v1039 = vunpack.c.l.b16 %v340
      %v1040 = vunpack.c.h.b16 %v340
      %v1041 = vunpack.c.l.b16 %v341
      %v1042 = vunpack.c.h.b16 %v341
      %v1043 = vunpack.c.l.b16 %v342
      %v1044 = vunpack.c.h.b16 %v342
      %v1045 = vunpack.c.l.b16 %v343
      %v1046 = vunpack.c.h.b16 %v343
      %v1047 = vunpack.c.l.b16 %v344
      %v1048 = vunpack.c.h.b16 %v344
      %v1049 = vunpack.c.l.b16 %v345
      %v1050 = vunpack.c.h.b16 %v345
      %v1051 = vunpack.c.l.b16 %v346
      %v1052 = vunpack.c.h.b16 %v346
      %v1053 = vunpack.c.l.b16 %v347
      %v1054 = vunpack.c.h.b16 %v347
      %v1055 = vunpack.c.l.b16 %v348
      %v1056 = vunpack.c.h.b16 %v348
      %v1057 = vunpack.c.l.b16 %v349
      %v1058 = vunpack.c.h.b16 %v349
      %v1059 = vunpack.c.l.b16 %v350
      %v1060 = vunpack.c.h.b16 %v350
      %v1061 = vunpack.c.l.b16 %v351
      %v1062 = vunpack.c.h.b16 %v351
      %v1063 = vunpack.c.l.b16 %v352
      %v1064 = vunpack.c.h.b16 %v352
      %v1065 = vunpack.c.l.b16 %v353
      %v1066 = vunpack.c.h.b16 %v353
      %v1067 = vunpack.c.l.b16 %v354
      %v1068 = vunpack.c.h.b16 %v354
      %v1069 = vunpack.c.l.b16 %v355
      %v1070 = vunpack.c.h.b16 %v355
      %v1071 = vunpack.c.l.b16 %v356
      %v1072 = vunpack.c.h.b16 %v356
      %v1073 = vunpack.c.l.b16 %v357
      %v1074 = vunpack.c.h.b16 %v357
      %v1075 = vunpack.c.l.b16 %v358
      %v1076 = vunpack.c.h.b16 %v358
      %v1077 = vunpack.c.l.b16 %v359
      %v1078 = vunpack.c.h.b16 %v359
      %v1079 = vunpack.c.l.b16 %v360
      %v1080 = vunpack.c.h.b16 %v360
      %v1081 = vunpack.c.l.b16 %v361
      %v1082 = vunpack.c.h.b16 %v361
      %v1083 = vunpack.c.l.b16 %v362
      %v1084 = vunpack.c.h.b16 %v362
      %v1085 = vunpack.c.l.b16 %v363
      %v1086 = vunpack.c.h.b16 %v363
      %v1087 = vunpack.c.l.b16 %v364
      %v1088 = vunpack.c.h.b16 %v364
      %v1089 = vunpack.c.l.b16 %v365
      %v1090 = vunpack.c.h.b16 %v365
      %v1091 = vunpack.c.l.b16 %v366
      %v1092 = vunpack.c.h.b16 %v366
      %v1093 = vunpack.c.l.b16 %v367
      %v1094 = vunpack.c.h.b16 %v367
      %v1095 = vunpack.c.l.b16 %v368
      %v1096 = vunpack.c.h.b16 %v368
      %v1097 = vunpack.c.l.b16 %v369
      %v1098 = vunpack.c.h.b16 %v369
      %v1099 = vunpack.c.l.b16 %v370
      %v1100 = vunpack.c.h.b16 %v370
      %v1101 = vunpack.c.l.b16 %v371
      %v1102 = vunpack.c.h.b16 %v371
      %v1103 = vunpack.c.l.b16 %v372
      %v1104 = vunpack.c.h.b16 %v372
      %v1105 = vunpack.c.l.b16 %v373
      %v1106 = vunpack.c.h.b16 %v373
      %v1107 = vunpack.c.l.b16 %v374
      %v1108 = vunpack.c.h.b16 %v374
      %v1109 = vunpack.c.l.b16 %v375
      %v1110 = vunpack.c.h.b16 %v375
      %v1111 = vunpack.c.l.b16 %v376
      %v1112 = vunpack.c.h.b16 %v376
      %v1113 = vunpack.c.l.b16 %v377
      %v1114 = vunpack.c.h.b16 %v377
      %v1115 = vunpack.c.l.b16 %v378
      %v1116 = vunpack.c.h.b16 %v378
      %v1117 = vunpack.c.l.b16 %v379
      %v1118 = vunpack.c.h.b16 %v379
      %v1119 = vunpack.c.l.b16 %v380
      %v1120 = vunpack.c.h.b16 %v380
      %v1121 = vunpack.c.l.b16 %v381
      %v1122 = vunpack.c.h.b16 %v381
      %v1123 = vunpack.c.l.b16 %v382
      %v1124 = vunpack.c.h.b16 %v382
      %v1125 = vunpack.c.l.b16 %v383
      %v1126 = vunpack.c.h.b16 %v383
      %v1127 = vunpack.c.l.b16 %v384
      %v1128 = vunpack.c.h.b16 %v384
      %v1129 = vunpack.c.l.b16 %v385
      %v1130 = vunpack.c.h.b16 %v385
      %v1131 = vunpack.c.l.b16 %v386
      %v1132 = vunpack.c.h.b16 %v386
      %v1133 = vunpack.c.l.b16 %v387
      %v1134 = vunpack.c.h.b16 %v387
      %v1135 = vunpack.c.l.b16 %v388
      %v1136 = vunpack.c.h.b16 %v388
      %v1137 = vunpack.c.l.b16 %v389
      %v1138 = vunpack.c.h.b16 %v389
      %v1139 = vunpack.c.l.b16 %v390
      %v1140 = vunpack.c.h.b16 %v390
      %v1141 = vunpack.c.l.b16 %v391
      %v1142 = vunpack.c.h.b16 %v391
      %v1143 = vunpack.c.l.b16 %v392
      %v1144 = vunpack.c.h.b16 %v392
      %v1145 = vunpack.c.l.b16 %v393
      %v1146 = vunpack.c.h.b16 %v393
      %v1147 = vunpack.c.l.b16 %v394
      %v1148 = vunpack.c.h.b16 %v394
      %v1149 = vunpack.c.l.b16 %v395
      %v1150 = vunpack.c.h.b16 %v395
      %v1151 = vunpack.c.l.b16 %v396
      %v1152 = vunpack.c.h.b16 %v396
      %v1153 = vunpack.c.l.b16 %v397
      %v1154 = vunpack.c.h.b16 %v397
      %v1155 = vunpack.c.l.b16 %v398
      %v1156 = vunpack.c.h.b16 %v398
      %v1157 = vunpack.c.l.b16 %v399
      %v1158 = vunpack.c.h.b16 %v399
      %v1159 = vunpack.c.l.b16 %v400
      %v1160 = vunpack.c.h.b16 %v400
      %v1161 = vunpack.c.l.b16 %v401
      %v1162 = vunpack.c.h.b16 %v401
      %v1163 = vunpack.c.l.b16 %v402
      %v1164 = vunpack.c.h.b16 %v402
      %v1165 = vunpack.c.l.b16 %v403
      %v1166 = vunpack.c.h.b16 %v403
      %v1167 = vunpack.c.l.b16 %v404
      %v1168 = vunpack.c.h.b16 %v404
      %v1169 = vunpack.c.l.b16 %v405
      %v1170 = vunpack.c.h.b16 %v405
      %v1171 = vunpack.c.l.b16 %v406
      %v1172 = vunpack.c.h.b16 %v406
      %v1173 = vunpack.c.l.b16 %v407
      %v1174 = vunpack.c.h.b16 %v407
      %v1175 = vunpack.c.l.b16 %v408
      %v1176 = vunpack.c.h.b16 %v408
      %v1177 = vunpack.c.l.b16 %v409
      %v1178 = vunpack.c.h.b16 %v409
      %v1179 = vunpack.c.l.b16 %v410
      %v1180 = vunpack.c.h.b16 %v410
      %v1181 = vunpack.c.l.b16 %v411
      %v1182 = vunpack.c.h.b16 %v411
      %v1183 = vunpack.c.l.b16 %v412
      %v1184 = vunpack.c.h.b16 %v412
      %v1185 = vunpack.c.l.b16 %v413
      %v1186 = vunpack.c.h.b16 %v413
      %v1187 = vunpack.c.l.b16 %v414
      %v1188 = vunpack.c.h.b16 %v414
      %v1189 = vunpack.c.l.b16 %v415
      %v1190 = vunpack.c.h.b16 %v415
      %v1191 = vunpack.c.l.b16 %v416
      %v1192 = vunpack.c.h.b16 %v416
      %v1193 = vunpack.c.l.b16 %v417
      %v1194 = vunpack.c.h.b16 %v417
      %v1195 = vunpack.c.l.b16 %v418
      %v1196 = vunpack.c.h.b16 %v418
      %v1197 = vunpack.c.l.b16 %v419
      %v1198 = vunpack.c.h.b16 %v419
      %v1199 = vunpack.c.l.b16 %v420
      %v1200 = vunpack.c.h.b16 %v420
      %v1201 = vunpack.c.l.b16 %v421
      %v1202 = vunpack.c.h.b16 %v421
      %v1203 = vunpack.c.l.b16 %v422
      %v1204 = vunpack.c.h.b16 %v422
      %v1205 = vunpack.c.l.b16 %v423
      %v1206 = vunpack.c.h.b16 %v423
      %v1207 = vunpack.c.l.b16 %v424
      %v1208 = vunpack.c.h.b16 %v424
      %v1209 = vunpack.c.l.b16 %v425
      %v1210 = vunpack.c.h.b16 %v425
      %v1211 = vunpack.c.l.b16 %v426
      %v1212 = vunpack.c.h.b16 %v426
      %v1213 = vunpack.c.l.b16 %v427
      %v1214 = vunpack.c.h.b16 %v427
      %v1215 = vunpack.c.l.b16 %v428
      %v1216 = vunpack.c.h.b16 %v428
      %v1217 = vunpack.c.l.b16 %v429
      %v1218 = vunpack.c.h.b16 %v429
      %v1219 = vunpack.c.l.b16 %v430
      %v1220 = vunpack.c.h.b16 %v430
      %v1221 = vunpack.c.l.b16 %v431
      %v1222 = vunpack.c.h.b16 %v431
      %v1223 = vunpack.c.l.b16 %v432
      %v1224 = vunpack.c.h.b16 %v432
      %v1225 = vunpack.c.l.b16 %v433
      %v1226 = vunpack.c.h.b16 %v433
      %v1227 = vunpack.c.l.b16 %v434
      %v1228 = vunpack.c.h.b16 %v434
      %v1229 = vunpack.c.l.b16 %v435
      %v1230 = vunpack.c.h.b16 %v435
      %v1231 = vunpack.c.l.b16 %v436
      %v1232 = vunpack.c.h.b16 %v436
      %v1233 = vunpack.c.l.b16 %v437
      %v1234 = vunpack.c.h.b16 %v437
      %v1235 = vunpack.c.l.b16 %v438
      %v1236 = vunpack.c.h.b16 %v438
      %v1237 = vunpack.c.l.b16 %v439
      %v1238 = vunpack.c.h.b16 %v439
      %v1239 = vunpack.c.l.b16 %v440
      %v1240 = vunpack.c.h.b16 %v440
      %v1241 = vunpack.c.l.b16 %v441
      %v1242 = vunpack.c.h.b16 %v441
      %v1243 = vunpack.c.l.b16 %v442
      %v1244 = vunpack.c.h.b16 %v442
      %v1245 = vunpack.c.l.b16 %v443
      %v1246 = vunpack.c.h.b16 %v443
      %v1247 = vunpack.c.l.b16 %v444
      %v1248 = vunpack.c.h.b16 %v444
      %v1249 = vunpack.c.l.b16 %v445
      %v1250 = vunpack.c.h.b16 %v445
      %v1251 = vunpack.c.l.b16 %v446
      %v1252 = vunpack.c.h.b16 %v446
      %v1253 = vunpack.c.l.b16 %v447
      %v1254 = vunpack.c.h.b16 %v447
      %v1255 = vunpack.c.l.b16 %v448
      %v1256 = vunpack.c.h.b16 %v448
      %v1257 = vunpack.c.l.b16 %v449
      %v1258 = vunpack.c.h.b16 %v449
      %v1259 = vunpack.c.l.b16 %v450
      %v1260 = vunpack.c.h.b16 %v450
      %v1261 = vunpack.c.l.b16 %v451
      %v1262 = vunpack.c.h.b16 %v451
      %v1263 = vunpack.c.l.b16 %v452
      %v1264 = vunpack.c.h.b16 %v452
      %v1265 = vunpack.c.l.b16 %v453
      %v1266 = vunpack.c.h.b16 %v453
      %v1267 = vunpack.c.l.b16 %v454
      %v1268 = vunpack.c.h.b16 %v454
      %v1269 = vunpack.c.l.b16 %v455
      %v1270 = vunpack.c.h.b16 %v455
      %v1271 = vunpack.c.l.b16 %v456
      %v1272 = vunpack.c.h.b16 %v456
      %v1273 = vunpack.c.l.b16 %v457
      %v1274 = vunpack.c.h.b16 %v457
      %v1275 = vunpack.c.l.b16 %v458
      %v1276 = vunpack.c.h.b16 %v458
      %v1277 = vunpack.c.l.b16 %v459
      %v1278 = vunpack.c.h.b16 %v459
      %v1279 = vunpack.c.l.b16 %v460
      %v1280 = vunpack.c.h.b16 %v460
      %v1281 = vunpack.c.l.b16 %v461
      %v1282 = vunpack.c.h.b16 %v461
      %v1283 = vunpack.c.l.b16 %v462
      %v1284 = vunpack.c.h.b16 %v462
      %v1285 = vunpack.c.l.b16 %v463
      %v1286 = vunpack.c.h.b16 %v463
      %v1287 = vunpack.c.l.b16 %v464
      %v1288 = vunpack.c.h.b16 %v464
      %v1289 = vunpack.c.l.b16 %v465
      %v1290 = vunpack.c.h.b16 %v465
      %v1291 = vunpack.c.l.b16 %v466
      %v1292 = vunpack.c.h.b16 %v466
      %v1293 = vunpack.c.l.b16 %v467
      %v1294 = vunpack.c.h.b16 %v467
      %v1295 = vunpack.c.l.b16 %v468
      %v1296 = vunpack.c.h.b16 %v468
      %v1297 = vunpack.c.l.b16 %v469
      %v1298 = vunpack.c.h.b16 %v469
      %v1299 = vunpack.c.l.b16 %v470
      %v1300 = vunpack.c.h.b16 %v470
      %v1301 = vunpack.c.l.b16 %v471
      %v1302 = vunpack.c.h.b16 %v471
      %v1303 = vunpack.c.l.b16 %v472
      %v1304 = vunpack.c.h.b16 %v472
      %v1305 = vunpack.c.l.b16 %v473
      %v1306 = vunpack.c.h.b16 %v473
      %v1307 = vunpack.c.l.b16 %v474
      %v1308 = vunpack.c.h.b16 %v474
      %v1309 = vunpack.c.l.b16 %v475
      %v1310 = vunpack.c.h.b16 %v475
      %v1311 = vunpack.c.l.b16 %v476
      %v1312 = vunpack.c.h.b16 %v476
      %v1313 = vunpack.c.l.b16 %v477
      %v1314 = vunpack.c.h.b16 %v477
      %v1315 = vunpack.c.l.b16 %v478
      %v1316 = vunpack.c.h.b16 %v478
      %v1317 = vunpack.c.l.b16 %v479
      %v1318 = vunpack.c.h.b16 %v479
      %v1319 = vunpack.c.l.b16 %v480
      %v1320 = vunpack.c.h.b16 %v480
      %v1321 = vunpack.c.l.b16 %v481
      %v1322 = vunpack.c.h.b16 %v481
      %v1323 = vunpack.c.l.b16 %v482
      %v1324 = vunpack.c.h.b16 %v482
      %v1325 = vunpack.c.l.b16 %v483
      %v1326 = vunpack.c.h.b16 %v483
      %v1327 = vunpack.c.l.b16 %v484
      %v1328 = vunpack.c.h.b16 %v484
      %v1329 = vunpack.c.l.b16 %v485
      %v1330 = vunpack.c.h.b16 %v485
      %v1331 = vunpack.c.l.b16 %v486
      %v1332 = vunpack.c.h.b16 %v486
      %v1333 = vunpack.c.l.b16 %v487
      %v1334 = vunpack.c.h.b16 %v487
      %v1335 = vunpack.c.l.b16 %v488
      %v1336 = vunpack.c.h.b16 %v488
      %v1337 = vunpack.c.l.b16 %v489
      %v1338 = vunpack.c.h.b16 %v489
      %v1339 = vunpack.c.l.b16 %v490
      %v1340 = vunpack.c.h.b16 %v490
      %v1341 = vunpack.c.l.b16 %v491
      %v1342 = vunpack.c.h.b16 %v491
      %v1343 = vunpack.c.l.b16 %v492
      %v1344 = vunpack.c.h.b16 %v492
      %v1345 = vunpack.c.l.b16 %v493
      %v1346 = vunpack.c.h.b16 %v493
      %v1347 = vunpack.c.l.b16 %v494
      %v1348 = vunpack.c.h.b16 %v494
      %v1349 = vunpack.c.l.b16 %v495
      %v1350 = vunpack.c.h.b16 %v495
      %v1351 = vunpack.c.l.b16 %v496
      %v1352 = vunpack.c.h.b16 %v496
      %v1353 = vunpack.c.l.b16 %v497
      %v1354 = vunpack.c.h.b16 %v497
      %v1355 = vunpack.c.l.b16 %v498
      %v1356 = vunpack.c.h.b16 %v498
      %v1357 = vunpack.c.l.b16 %v499
      %v1358 = vunpack.c.h.b16 %v499
      %v1359 = vunpack.c.l.b16 %v500
      %v1360 = vunpack.c.h.b16 %v500
      %v1361 = vunpack.c.l.b16 %v501
      %v1362 = vunpack.c.h.b16 %v501
      %v1363 = vunpack.c.l.b16 %v502
      %v1364 = vunpack.c.h.b16 %v502
      %v1365 = vunpack.c.l.b16 %v503
      %v1366 = vunpack.c.h.b16 %v503
      %v1367 = vunpack.c.l.b16 %v504
      %v1368 = vunpack.c.h.b16 %v504
      %v1369 = vunpack.c.l.b16 %v505
      %v1370 = vunpack.c.h.b16 %v505
      %v1371 = vunpack.c.l.b16 %v506
      %v1372 = vunpack.c.h.b16 %v506
      %v1373 = vunpack.c.l.b16 %v507
      %v1374 = vunpack.c.h.b16 %v507
      %v1375 = vunpack.c.l.b16 %v508
      %v1376 = vunpack.c.h.b16 %v508
      %v1377 = vunpack.c.l.b16 %v509
      %v1378 = vunpack.c.h.b16 %v509
      %v1379 = vunpack.c.l.b16 %v510
      %v1380 = vunpack.c.h.b16 %v510
      %v1381 = vunpack.c.l.b16 %v511
      %v1382 = vunpack.c.h.b16 %v511
      %v1383 = vunpack.c.l.b16 %v512
      %v1384 = vunpack.c.h.b16 %v512
      %v1385 = vunpack.c.l.b16 %v513
      %v1386 = vunpack.c.h.b16 %v513
      %v1387 = vunpack.c.l.b16 %v514
      %v1388 = vunpack.c.h.b16 %v514
      %v1389 = vunpack.c.l.b16 %v515
      %v1390 = vunpack.c.h.b16 %v515
      %v1391 = vunpack.c.l.b16 %v516
      %v1392 = vunpack.c.h.b16 %v516
      %v1393 = vunpack.c.l.b16 %v517
      %v1394 = vunpack.c.h.b16 %v517
      %v1395 = vunpack.c.l.b16 %v518
      %v1396 = vunpack.c.h.b16 %v518
      %v1397 = vunpack.c.l.b16 %v519
      %v1398 = vunpack.c.h.b16 %v519
      %v1399 = vunpack.c.l.b16 %v520
      %v1400 = vunpack.c.h.b16 %v520
      %v1401 = vunpack.c.l.b16 %v521
      %v1402 = vunpack.c.h.b16 %v521
      %v1403 = vunpack.c.l.b16 %v522
      %v1404 = vunpack.c.h.b16 %v522
      %v1405 = vunpack.c.l.b16 %v523
      %v1406 = vunpack.c.h.b16 %v523
      %v1407 = vunpack.c.l.b16 %v524
      %v1408 = vunpack.c.h.b16 %v524
      %v1409 = vunpack.c.l.b16 %v525
      %v1410 = vunpack.c.h.b16 %v525
      %v1411 = vunpack.c.l.b16 %v526
      %v1412 = vunpack.c.h.b16 %v526
      %v1413 = vunpack.c.l.b16 %v527
      %v1414 = vunpack.c.h.b16 %v527
      %v1415 = vunpack.c.l.b16 %v528
      %v1416 = vunpack.c.h.b16 %v528
      %v1417 = vunpack.c.l.b16 %v529
      %v1418 = vunpack.c.h.b16 %v529
      %v1419 = vunpack.c.l.b16 %v530
      %v1420 = vunpack.c.h.b16 %v530
      %v1421 = vunpack.c.l.b16 %v531
      %v1422 = vunpack.c.h.b16 %v531
      %v1423 = vunpack.c.l.b16 %v532
      %v1424 = vunpack.c.h.b16 %v532
      %v1425 = vunpack.c.l.b16 %v533
      %v1426 = vunpack.c.h.b16 %v533
      %v1427 = vunpack.c.l.b16 %v534
      %v1428 = vunpack.c.h.b16 %v534
      %v1429 = vunpack.c.l.b16 %v535
      %v1430 = vunpack.c.h.b16 %v535
      %v1431 = vunpack.c.l.b16 %v536
      %v1432 = vunpack.c.h.b16 %v536
      %v1433 = vpack.c.b16 %v863, %v857
      %v1434 = vpack.c.b16 %v864, %v858
      %v1435 = vpack.c.b16 %v865, %v859
      %v1436 = vpack.c.b16 %v866, %v860
      %v1437 = vpack.c.b16 %v867, %v861
      %v1438 = vpack.c.b16 %v868, %v862
      %v1439 = vpack.c.b16 %v875, %v869
      %v1440 = vpack.c.b16 %v876, %v870
      %v1441 = vpack.c.b16 %v877, %v871
      %v1442 = vpack.c.b16 %v878, %v872
      %v1443 = vpack.c.b16 %v879, %v873
      %v1444 = vpack.c.b16 %v880, %v874
      %v1445 = vpack.c.b16 %v887, %v881
      %v1446 = vpack.c.b16 %v888, %v882
      %v1447 = vpack.c.b16 %v889, %v883
      %v1448 = vpack.c.b16 %v890, %v884
      %v1449 = vpack.c.b16 %v891, %v885
      %v1450 = vpack.c.b16 %v892, %v886
      %v1451 = vpack.c.b16 %v899, %v893
      %v1452 = vpack.c.b16 %v900, %v894
      %v1453 = vpack.c.b16 %v901, %v895
      %v1454 = vpack.c.b16 %v902, %v896
      %v1455 = vpack.c.b16 %v903, %v897
      %v1456 = vpack.c.b16 %v904, %v898
      %v1457 = vpack.c.b16 %v911, %v905
      %v1458 = vpack.c.b16 %v912, %v906
      %v1459 = vpack.c.b16 %v913, %v907
      %v1460 = vpack.c.b16 %v914, %v908
      %v1461 = vpack.c.b16 %v915, %v909
      %v1462 = vpack.c.b16 %v916, %v910
      %v1463 = vpack.c.b16 %v923, %v917
      %v1464 = vpack.c.b16 %v924, %v918
      %v1465 = vpack.c.b16 %v925, %v919
      %v1466 = vpack.c.b16 %v926, %v920
      %v1467 = vpack.c.b16 %v927, %v921
      %v1468 = vpack.c.b16 %v928, %v922
      %v1469 = vpack.c.b16 %v935, %v929
      %v1470 = vpack.c.b16 %v936, %v930
      %v1471 = vpack.c.b16 %v937, %v931
      %v1472 = vpack.c.b16 %v938, %v932
      %v1473 = vpack.c.b16 %v939, %v933
      %v1474 = vpack.c.b16 %v940, %v934
      %v1475 = vpack.c.b16 %v947, %v941
      %v1476 = vpack.c.b16 %v948, %v942
      %v1477 = vpack.c.b16 %v949, %v943
      %v1478 = vpack.c.b16 %v950, %v944
      %v1479 = vpack.c.b16 %v951, %v945
      %v1480 = vpack.c.b16 %v952, %v946
      %v1481 = vpack.c.b16 %v959, %v953
      %v1482 = vpack.c.b16 %v960, %v954
      %v1483 = vpack.c.b16 %v961, %v955
      %v1484 = vpack.c.b16 %v962, %v956
      %v1485 = vpack.c.b16 %v963, %v957
      %v1486 = vpack.c.b16 %v964, %v958
      %v1487 = vpack.c.b16 %v971, %v965
      %v1488 = vpack.c.b16 %v972, %v966
      %v1489 = vpack.c.b16 %v973, %v967
      %v1490 = vpack.c.b16 %v974, %v968
      %v1491 = vpack.c.b16 %v975, %v969
      %v1492 = vpack.c.b16 %v976, %v970
      %v1493 = vpack.c.b16 %v983, %v977
      %v1494 = vpack.c.b16 %v984, %v978
      %v1495 = vpack.c.b16 %v985, %v979
      %v1496 = vpack.c.b16 %v986, %v980
      %v1497 = vpack.c.b16 %v987, %v981
      %v1498 = vpack.c.b16 %v988, %v982
      %v1499 = vpack.c.b16 %v995, %v989
      %v1500 = vpack.c.b16 %v996, %v990
      %v1501 = vpack.c.b16 %v997, %v991
      %v1502 = vpack.c.b16 %v998, %v992
      %v1503 = vpack.c.b16 %v999, %v993
      %v1504 = vpack.c.b16 %v1000, %v994
      %v1505 = vpack.c.b16 %v1007, %v1001
      %v1506 = vpack.c.b16 %v1008, %v1002
      %v1507 = vpack.c.b16 %v1009, %v1003
      %v1508 = vpack.c.b16 %v1010, %v1004
      %v1509 = vpack.c.b16 %v1011, %v1005
      %v1510 = vpack.c.b16 %v1012, %v1006
      %v1511 = vpack.c.b16 %v1019, %v1013
      %v1512 = vpack.c.b16 %v1020, %v1014
      %v1513 = vpack.c.b16 %v1021, %v1015
      %v1514 = vpack.c.b16 %v1022, %v1016
      %v1515 = vpack.c.b16 %v1023, %v1017
      %v1516 = vpack.c.b16 %v1024, %v1018
      %v1517 = vpack.c.b16 %v1031, %v1025
      %v1518 = vpack.c.b16 %v1032, %v1026
      %v1519 = vpack.c.b16 %v1033, %v1027
      %v1520 = vpack.c.b16 %v1034, %v1028
      %v1521 = vpack.c.b16 %v1035, %v1029
      %v1522 = vpack.c.b16 %v1036, %v1030
      %v1523 = vpack.c.b16 %v1043, %v1037
      %v1524 = vpack.c.b16 %v1044, %v1038
      %v1525 = vpack.c.b16 %v1045, %v1039
      %v1526 = vpack.c.b16 %v1046, %v1040
      %v1527 = vpack.c.b16 %v1047, %v1041
      %v1528 = vpack.c.b16 %v1048, %v1042
      %v1529 = vpack.c.b16 %v1055, %v1049
      %v1530 = vpack.c.b16 %v1056, %v1050
      %v1531 = vpack.c.b16 %v1057, %v1051
      %v1532 = vpack.c.b16 %v1058, %v1052
      %v1533 = vpack.c.b16 %v1059, %v1053
      %v1534 = vpack.c.b16 %v1060, %v1054
      %v1535 = vpack.c.b16 %v1067, %v1061
      %v1536 = vpack.c.b16 %v1068, %v1062
      %v1537 = vpack.c.b16 %v1069, %v1063
      %v1538 = vpack.c.b16 %v1070, %v1064
      %v1539 = vpack.c.b16 %v1071, %v1065
      %v1540 = vpack.c.b16 %v1072, %v1066
      %v1541 = vpack.c.b16 %v1079, %v1073
      %v1542 = vpack.c.b16 %v1080, %v1074
      %v1543 = vpack.c.b16 %v1081, %v1075
      %v1544 = vpack.c.b16 %v1082, %v1076
      %v1545 = vpack.c.b16 %v1083, %v1077
      %v1546 = vpack.c.b16 %v1084, %v1078
      %v1547 = vpack.c.b16 %v1091, %v1085
      %v1548 = vpack.c.b16 %v1092, %v1086
      %v1549 = vpack.c.b16 %v1093, %v1087
      %v1550 = vpack.c.b16 %v1094, %v1088
      %v1551 = vpack.c.b16 %v1095, %v1089
      %v1552 = vpack.c.b16 %v1096, %v1090
      %v1553 = vpack.c.b16 %v1103, %v1097
      %v1554 = vpack.c.b16 %v1104, %v1098
      %v1555 = vpack.c.b16 %v1105, %v1099
      %v1556 = vpack.c.b16 %v1106, %v1100
      %v1557 = vpack.c.b16 %v1107, %v1101
      %v1558 = vpack.c.b16 %v1108, %v1102
      %v1559 = vpack.c.b16 %v1115, %v1109
      %v1560 = vpack.c.b16 %v1116, %v1110
      %v1561 = vpack.c.b16 %v1117, %v1111
      %v1562 = vpack.c.b16 %v1118, %v1112
      %v1563 = vpack.c.b16 %v1119, %v1113
      %v1564 = vpack.c.b16 %v1120, %v1114
      %v1565 = vpack.c.b16 %v1127, %v1121
      %v1566 = vpack.c.b16 %v1128, %v1122
      %v1567 = vpack.c.b16 %v1129, %v1123
      %v1568 = vpack.c.b16 %v1130, %v1124
      %v1569 = vpack.c.b16 %v1131, %v1125
      %v1570 = vpack.c.b16 %v1132, %v1126
      %v1571 = vpack.c.b16 %v1139, %v1133
      %v1572 = vpack.c.b16 %v1140, %v1134
      %v1573 = vpack.c.b16 %v1141, %v1135
      %v1574 = vpack.c.b16 %v1142, %v1136
      %v1575 = vpack.c.b16 %v1143, %v1137
      %v1576 = vpack.c.b16 %v1144, %v1138
      %v1577 = vpack.c.b16 %v1151, %v1145
      %v1578 = vpack.c.b16 %v1152, %v1146
      %v1579 = vpack.c.b16 %v1153, %v1147
      %v1580 = vpack.c.b16 %v1154, %v1148
      %v1581 = vpack.c.b16 %v1155, %v1149
      %v1582 = vpack.c.b16 %v1156, %v1150
      %v1583 = vpack.c.b16 %v1163, %v1157
      %v1584 = vpack.c.b16 %v1164, %v1158
      %v1585 = vpack.c.b16 %v1165, %v1159
      %v1586 = vpack.c.b16 %v1166, %v1160
      %v1587 = vpack.c.b16 %v1167, %v1161
      %v1588 = vpack.c.b16 %v1168, %v1162
      %v1589 = vpack.c.b16 %v1175, %v1169
      %v1590 = vpack.c.b16 %v1176, %v1170
      %v1591 = vpack.c.b16 %v1177, %v1171
      %v1592 = vpack.c.b16 %v1178, %v1172
      %v1593 = vpack.c.b16 %v1179, %v1173
      %v1594 = vpack.c.b16 %v1180, %v1174
      %v1595 = vpack.c.b16 %v1187, %v1181
      %v1596 = vpack.c.b16 %v1188, %v1182
      %v1597 = vpack.c.b16 %v1189, %v1183
      %v1598 = vpack.c.b16 %v1190, %v1184
      %v1599 = vpack.c.b16 %v1191, %v1185
      %v1600 = vpack.c.b16 %v1192, %v1186
      %v1601 = vpack.c.b16 %v1199, %v1193
      %v1602 = vpack.c.b16 %v1200, %v1194
      %v1603 = vpack.c.b16 %v1201, %v1195
      %v1604 = vpack.c.b16 %v1202, %v1196
      %v1605 = vpack.c.b16 %v1203, %v1197
      %v1606 = vpack.c.b16 %v1204, %v1198
      %v1607 = vpack.c.b16 %v1211, %v1205
      %v1608 = vpack.c.b16 %v1212, %v1206
      %v1609 = vpack.c.b16 %v1213, %v1207
      %v1610 = vpack.c.b16 %v1214, %v1208
      %v1611 = vpack.c.b16 %v1215, %v1209
      %v1612 = vpack.c.b16 %v1216, %v1210
      %v1613 = vpack.c.b16 %v1223, %v1217
      %v1614 = vpack.c.b16 %v1224, %v1218
      %v1615 = vpack.c.b16 %v1225, %v1219
      %v1616 = vpack.c.b16 %v1226, %v1220
      %v1617 = vpack.c.b16 %v1227, %v1221
      %v1618 = vpack.c.b16 %v1228, %v1222
      %v1619 = vpack.c.b16 %v1235, %v1229
      %v1620 = vpack.c.b16 %v1236, %v1230
      %v1621 = vpack.c.b16 %v1237, %v1231
      %v1622 = vpack.c.b16 %v1238, %v1232
      %v1623 = vpack.c.b16 %v1239, %v1233
      %v1624 = vpack.c.b16 %v1240, %v1234
      %v1625 = vpack.c.b16 %v1247, %v1241
      %v1626 = vpack.c.b16 %v1248, %v1242
      %v1627 = vpack.c.b16 %v1249, %v1243
      %v1628 = vpack.c.b16 %v1250, %v1244
      %v1629 = vpack.c.b16 %v1251, %v1245
      %v1630 = vpack.c.b16 %v1252, %v1246
      %v1631 = vpack.c.b16 %v1259, %v1253
      %v1632 = vpack.c.b16 %v1260, %v1254
      %v1633 = vpack.c.b16 %v1261, %v1255
      %v1634 = vpack.c.b16 %v1262, %v1256
      %v1635 = vpack.c.b16 %v1263, %v1257
      %v1636 = vpack.c.b16 %v1264, %v1258
      %v1637 = vpack.c.b16 %v1271, %v1265
      %v1638 = vpack.c.b16 %v1272, %v1266
      %v1639 = vpack.c.b16 %v1273, %v1267
      %v1640 = vpack.c.b16 %v1274, %v1268
      %v1641 = vpack.c.b16 %v1275, %v1269
      %v1642 = vpack.c.b16 %v1276, %v1270
      %v1643 = vpack.c.b16 %v1283, %v1277
      %v1644 = vpack.c.b16 %v1284, %v1278
      %v1645 = vpack.c.b16 %v1285, %v1279
      %v1646 = vpack.c.b16 %v1286, %v1280
      %v1647 = vpack.c.b16 %v1287, %v1281
      %v1648 = vpack.c.b16 %v1288, %v1282
      %v1649 = vpack.c.b16 %v1295, %v1289
      %v1650 = vpack.c.b16 %v1296, %v1290
      %v1651 = vpack.c.b16 %v1297, %v1291
      %v1652 = vpack.c.b16 %v1298, %v1292
      %v1653 = vpack.c.b16 %v1299, %v1293
      %v1654 = vpack.c.b16 %v1300, %v1294
      %v1655 = vpack.c.b16 %v1307, %v1301
      %v1656 = vpack.c.b16 %v1308, %v1302
      %v1657 = vpack.c.b16 %v1309, %v1303
      %v1658 = vpack.c.b16 %v1310, %v1304
      %v1659 = vpack.c.b16 %v1311, %v1305
      %v1660 = vpack.c.b16 %v1312, %v1306
      %v1661 = vpack.c.b16 %v1319, %v1313
      %v1662 = vpack.c.b16 %v1320, %v1314
      %v1663 = vpack.c.b16 %v1321, %v1315
      %v1664 = vpack.c.b16 %v1322, %v1316
      %v1665 = vpack.c.b16 %v1323, %v1317
      %v1666 = vpack.c.b16 %v1324, %v1318
      %v1667 = vpack.c.b16 %v1331, %v1325
      %v1668 = vpack.c.b16 %v1332, %v1326
      %v1669 = vpack.c.b16 %v1333, %v1327
      %v1670 = vpack.c.b16 %v1334, %v1328
      %v1671 = vpack.c.b16 %v1335, %v1329
      %v1672 = vpack.c.b16 %v1336, %v1330
      %v1673 = vpack.c.b16 %v1343, %v1337
      %v1674 = vpack.c.b16 %v1344, %v1338
      %v1675 = vpack.c.b16 %v1345, %v1339
      %v1676 = vpack.c.b16 %v1346, %v1340
      %v1677 = vpack.c.b16 %v1347, %v1341
      %v1678 = vpack.c.b16 %v1348, %v1342
      %v1679 = vpack.c.b16 %v1355, %v1349
      %v1680 = vpack.c.b16 %v1356, %v1350
      %v1681 = vpack.c.b16 %v1357, %v1351
      %v1682 = vpack.c.b16 %v1358, %v1352
      %v1683 = vpack.c.b16 %v1359, %v1353
      %v1684 = vpack.c.b16 %v1360, %v1354
      %v1685 = vpack.c.b16 %v1367, %v1361
      %v1686 = vpack.c.b16 %v1368, %v1362
      %v1687 = vpack.c.b16 %v1369, %v1363
      %v1688 = vpack.c.b16 %v1370, %v1364
      %v1689 = vpack.c.b16 %v1371, %v1365
      %v1690 = vpack.c.b16 %v1372, %v1366
      %v1691 = vpack.c.b16 %v1379, %v1373
      %v1692 = vpack.c.b16 %v1380, %v1374
      %v1693 = vpack.c.b16 %v1381, %v1375
      %v1694 = vpack.c.b16 %v1382, %v1376
      %v1695 = vpack.c.b16 %v1383, %v1377
      %v1696 = vpack.c.b16 %v1384, %v1378
      %v1697 = vpack.c.b16 %v1391, %v1385
      %v1698 = vpack.c.b16 %v1392, %v1386
      %v1699 = vpack.c.b16 %v1393, %v1387
      %v1700 = vpack.c.b16 %v1394, %v1388
      %v1701 = vpack.c.b16 %v1395, %v1389
      %v1702 = vpack.c.b16 %v1396, %v1390
      %v1703 = vpack.c.b16 %v1403, %v1397
      %v1704 = vpack.c.b16 %v1404, %v1398
      %v1705 = vpack.c.b16 %v1405, %v1399
      %v1706 = vpack.c.b16 %v1406, %v1400
      %v1707 = vpack.c.b16 %v1407, %v1401
      %v1708 = vpack.c.b16 %v1408, %v1402
      %v1709 = vpack.c.b16 %v1415, %v1409
      %v1710 = vpack.c.b16 %v1416, %v1410
      %v1711 = vpack.c.b16 %v1417, %v1411
      %v1712 = vpack.c.b16 %v1418, %v1412
      %v1713 = vpack.c.b16 %v1419, %v1413
      %v1714 = vpack.c.b16 %v1420, %v1414
      %v1715 = vpack.c.b16 %v1427, %v1421
      %v1716 = vpack.c.b16 %v1428, %v1422
      %v1717 = vpack.c.b16 %v1429, %v1423
      %v1718 = vpack.c.b16 %v1430, %v1424
      %v1719 = vpack.c.b16 %v1431, %v1425
      %v1720 = vpack.c.b16 %v1432, %v1426
      %2009 = vmatprep.subr.bf16.mxu0 %v1476
      %2010 = vmatpush1.bf16.msra.mxu0 %v1475
      %2011 = vmatprep.subr.bf16.mxu0 %v1470
      %2012 = vmatpush1.bf16.msra.mxu0 %v1469
      %2013 = vmatprep.subr.bf16.mxu0 %v1464
      %2014 = vmatpush1.bf16.msra.mxu0 %v1463
      %2015 = vmatprep.subr.bf16.mxu0 %v1458
      %2016 = vmatpush1.bf16.msra.mxu0 %v1457
      %2017 = vmatprep.subr.bf16.mxu0 %v1452
      %2018 = vmatpush1.bf16.msra.mxu0 %v1451
      %2019 = vmatprep.subr.bf16.mxu0 %v1446
      %2020 = vmatpush1.bf16.msra.mxu0 %v1445
      %2021 = vmatprep.subr.bf16.mxu0 %v1440
      %2022 = vmatpush1.bf16.msra.mxu0 %v1439
      %2023 = vmatprep.subr.bf16.mxu0 %v1434
      %2024 = vmatpush1.bf16.msra.mxu0 %v1433
      %2025 = vmatprep.subr.bf16.mxu0 %v1524
      %2026 = vmatpush2.bf16.msra.mxu0 %v1523
      %2027 = vmatprep.subr.bf16.mxu0 %v1518
      %2028 = vmatpush2.bf16.msra.mxu0 %v1517
      %2029 = vmatprep.subr.bf16.mxu0 %v1512
      %2030 = vmatpush2.bf16.msra.mxu0 %v1511
      %2031 = vmatprep.subr.bf16.mxu0 %v1506
      %2032 = vmatpush2.bf16.msra.mxu0 %v1505
      %2033 = vmatprep.subr.bf16.mxu0 %v1500
      %2034 = vmatpush2.bf16.msra.mxu0 %v1499
      %2035 = vmatprep.subr.bf16.mxu0 %v1494
      %2036 = vmatpush2.bf16.msra.mxu0 %v1493
      %2037 = vmatprep.subr.bf16.mxu0 %v1488
      %2038 = vmatpush2.bf16.msra.mxu0 %v1487
      %2039 = vmatprep.subr.bf16.mxu0 %v1482
      %2040 = vmatpush2.bf16.msra.mxu0 %v1481
      %2041 = vmatprep.mubr.bf16.mxu0 %v244
      %2042 = vmatmul.mubr.bf16.gmra.mxu0 %v243
      %v2043 = vpop.f32.mrf.mxu0
      %v2044 = vadd.f32 %v542, %v2043
      %v2045 = vpop.f32.mrf.mxu0
      %v2046 = vadd.f32 %v546, %v2045
      %v2047 = vpop.f32.mrf.mxu0
      %v2048 = vpop.f32.mrf.mxu0
      %2049 = vdwg.mxu0
      %2050 = vmatprep.subr.bf16.mxu0 %v1572
      %2051 = vmatpush1.bf16.msra.mxu0 %v1571
      %2052 = vmatprep.subr.bf16.mxu0 %v1566
      %2053 = vmatpush1.bf16.msra.mxu0 %v1565
      %2054 = vmatprep.subr.bf16.mxu0 %v1560
      %2055 = vmatpush1.bf16.msra.mxu0 %v1559
      %2056 = vmatprep.subr.bf16.mxu0 %v1554
      %2057 = vmatpush1.bf16.msra.mxu0 %v1553
      %2058 = vmatprep.subr.bf16.mxu0 %v1548
      %2059 = vmatpush1.bf16.msra.mxu0 %v1547
      %2060 = vmatprep.subr.bf16.mxu0 %v1542
      %2061 = vmatpush1.bf16.msra.mxu0 %v1541
      %2062 = vmatprep.subr.bf16.mxu0 %v1536
      %2063 = vmatpush1.bf16.msra.mxu0 %v1535
      %2064 = vmatprep.subr.bf16.mxu0 %v1530
      %2065 = vmatpush1.bf16.msra.mxu0 %v1529
      %2066 = vmatprep.subr.bf16.mxu0 %v1620
      %2067 = vmatpush2.bf16.msra.mxu0 %v1619
      %2068 = vmatprep.subr.bf16.mxu0 %v1614
      %2069 = vmatpush2.bf16.msra.mxu0 %v1613
      %2070 = vmatprep.subr.bf16.mxu0 %v1608
      %2071 = vmatpush2.bf16.msra.mxu0 %v1607
      %2072 = vmatprep.subr.bf16.mxu0 %v1602
      %2073 = vmatpush2.bf16.msra.mxu0 %v1601
      %2074 = vmatprep.subr.bf16.mxu0 %v1596
      %2075 = vmatpush2.bf16.msra.mxu0 %v1595
      %2076 = vmatprep.subr.bf16.mxu0 %v1590
      %2077 = vmatpush2.bf16.msra.mxu0 %v1589
      %2078 = vmatprep.subr.bf16.mxu0 %v1584
      %2079 = vmatpush2.bf16.msra.mxu0 %v1583
      %2080 = vmatprep.subr.bf16.mxu0 %v1578
      %2081 = vmatpush2.bf16.msra.mxu0 %v1577
      %2082 = vmatprep.mubr.bf16.mxu0 %v246
      %2083 = vmatmul.mubr.bf16.gmra.mxu0 %v245
      %v2084 = vpop.f32.mrf.mxu0
      %v2085 = vadd.f32 %v2044, %v2084
      %v2086 = vpop.f32.mrf.mxu0
      %v2087 = vadd.f32 %v2046, %v2086
      %v2088 = vpop.f32.mrf.mxu0
      %v2089 = vpop.f32.mrf.mxu0
      %2090 = vdwg.mxu0
      %2091 = vmatprep.subr.bf16.mxu0 %v1668
      %2092 = vmatpush1.bf16.msra.mxu0 %v1667
      %2093 = vmatprep.subr.bf16.mxu0 %v1662
      %2094 = vmatpush1.bf16.msra.mxu0 %v1661
      %2095 = vmatprep.subr.bf16.mxu0 %v1656
      %2096 = vmatpush1.bf16.msra.mxu0 %v1655
      %2097 = vmatprep.subr.bf16.mxu0 %v1650
      %2098 = vmatpush1.bf16.msra.mxu0 %v1649
      %2099 = vmatprep.subr.bf16.mxu0 %v1644
      %2100 = vmatpush1.bf16.msra.mxu0 %v1643
      %2101 = vmatprep.subr.bf16.mxu0 %v1638
      %2102 = vmatpush1.bf16.msra.mxu0 %v1637
      %2103 = vmatprep.subr.bf16.mxu0 %v1632
      %2104 = vmatpush1.bf16.msra.mxu0 %v1631
      %2105 = vmatprep.subr.bf16.mxu0 %v1626
      %2106 = vmatpush1.bf16.msra.mxu0 %v1625
      %2107 = vmatprep.subr.bf16.mxu0 %v1716
      %2108 = vmatpush2.bf16.msra.mxu0 %v1715
      %2109 = vmatprep.subr.bf16.mxu0 %v1710
      %2110 = vmatpush2.bf16.msra.mxu0 %v1709
      %2111 = vmatprep.subr.bf16.mxu0 %v1704
      %2112 = vmatpush2.bf16.msra.mxu0 %v1703
      %2113 = vmatprep.subr.bf16.mxu0 %v1698
      %2114 = vmatpush2.bf16.msra.mxu0 %v1697
      %2115 = vmatprep.subr.bf16.mxu0 %v1692
      %2116 = vmatpush2.bf16.msra.mxu0 %v1691
      %2117 = vmatprep.subr.bf16.mxu0 %v1686
      %2118 = vmatpush2.bf16.msra.mxu0 %v1685
      %2119 = vmatprep.subr.bf16.mxu0 %v1680
      %2120 = vmatpush2.bf16.msra.mxu0 %v1679
      %2121 = vmatprep.subr.bf16.mxu0 %v1674
      %2122 = vmatpush2.bf16.msra.mxu0 %v1673
      %2123 = vmatprep.mubr.bf16.mxu0 %v248
      %2124 = vmatmul.mubr.bf16.gmra.mxu0 %v247
      %v2125 = vpop.f32.mrf.mxu0
      %v2126 = vadd.f32 %v2085, %v2125
      %v2127 = vpop.f32.mrf.mxu0
      %v2128 = vadd.f32 %v2087, %v2127
      %v2129 = vpop.f32.mrf.mxu0
      %v2130 = vpop.f32.mrf.mxu0
      %2131 = vdwg.mxu0
      %2132 = vmatprep.subr.bf16.mxu0 %v1478
      %2133 = vmatpush1.bf16.msra.mxu0 %v1477
      %2134 = vmatprep.subr.bf16.mxu0 %v1472
      %2135 = vmatpush1.bf16.msra.mxu0 %v1471
      %2136 = vmatprep.subr.bf16.mxu0 %v1466
      %2137 = vmatpush1.bf16.msra.mxu0 %v1465
      %2138 = vmatprep.subr.bf16.mxu0 %v1460
      %2139 = vmatpush1.bf16.msra.mxu0 %v1459
      %2140 = vmatprep.subr.bf16.mxu0 %v1454
      %2141 = vmatpush1.bf16.msra.mxu0 %v1453
      %2142 = vmatprep.subr.bf16.mxu0 %v1448
      %2143 = vmatpush1.bf16.msra.mxu0 %v1447
      %2144 = vmatprep.subr.bf16.mxu0 %v1442
      %2145 = vmatpush1.bf16.msra.mxu0 %v1441
      %2146 = vmatprep.subr.bf16.mxu0 %v1436
      %2147 = vmatpush1.bf16.msra.mxu0 %v1435
      %2148 = vmatprep.subr.bf16.mxu0 %v1526
      %2149 = vmatpush2.bf16.msra.mxu0 %v1525
      %2150 = vmatprep.subr.bf16.mxu0 %v1520
      %2151 = vmatpush2.bf16.msra.mxu0 %v1519
      %2152 = vmatprep.subr.bf16.mxu0 %v1514
      %2153 = vmatpush2.bf16.msra.mxu0 %v1513
      %2154 = vmatprep.subr.bf16.mxu0 %v1508
      %2155 = vmatpush2.bf16.msra.mxu0 %v1507
      %2156 = vmatprep.subr.bf16.mxu0 %v1502
      %2157 = vmatpush2.bf16.msra.mxu0 %v1501
      %2158 = vmatprep.subr.bf16.mxu0 %v1496
      %2159 = vmatpush2.bf16.msra.mxu0 %v1495
      %2160 = vmatprep.subr.bf16.mxu0 %v1490
      %2161 = vmatpush2.bf16.msra.mxu0 %v1489
      %2162 = vmatprep.subr.bf16.mxu0 %v1484
      %2163 = vmatpush2.bf16.msra.mxu0 %v1483
      %2164 = vmatprep.mubr.bf16.mxu0 %v244
      %2165 = vmatmul.mubr.bf16.gmra.mxu0 %v243
      %v2166 = vpop.f32.mrf.mxu0
      %v2167 = vadd.f32 %v550, %v2166
      %v2168 = vpop.f32.mrf.mxu0
      %v2169 = vadd.f32 %v554, %v2168
      %v2170 = vpop.f32.mrf.mxu0
      %v2171 = vpop.f32.mrf.mxu0
      %2172 = vdwg.mxu0
      %2173 = vmatprep.subr.bf16.mxu0 %v1574
      %2174 = vmatpush1.bf16.msra.mxu0 %v1573
      %2175 = vmatprep.subr.bf16.mxu0 %v1568
      %2176 = vmatpush1.bf16.msra.mxu0 %v1567
      %2177 = vmatprep.subr.bf16.mxu0 %v1562
      %2178 = vmatpush1.bf16.msra.mxu0 %v1561
      %2179 = vmatprep.subr.bf16.mxu0 %v1556
      %2180 = vmatpush1.bf16.msra.mxu0 %v1555
      %2181 = vmatprep.subr.bf16.mxu0 %v1550
      %2182 = vmatpush1.bf16.msra.mxu0 %v1549
      %2183 = vmatprep.subr.bf16.mxu0 %v1544
      %2184 = vmatpush1.bf16.msra.mxu0 %v1543
      %2185 = vmatprep.subr.bf16.mxu0 %v1538
      %2186 = vmatpush1.bf16.msra.mxu0 %v1537
      %2187 = vmatprep.subr.bf16.mxu0 %v1532
      %2188 = vmatpush1.bf16.msra.mxu0 %v1531
      %2189 = vmatprep.subr.bf16.mxu0 %v1622
      %2190 = vmatpush2.bf16.msra.mxu0 %v1621
      %2191 = vmatprep.subr.bf16.mxu0 %v1616
      %2192 = vmatpush2.bf16.msra.mxu0 %v1615
      %2193 = vmatprep.subr.bf16.mxu0 %v1610
      %2194 = vmatpush2.bf16.msra.mxu0 %v1609
      %2195 = vmatprep.subr.bf16.mxu0 %v1604
      %2196 = vmatpush2.bf16.msra.mxu0 %v1603
      %2197 = vmatprep.subr.bf16.mxu0 %v1598
      %2198 = vmatpush2.bf16.msra.mxu0 %v1597
      %2199 = vmatprep.subr.bf16.mxu0 %v1592
      %2200 = vmatpush2.bf16.msra.mxu0 %v1591
      %2201 = vmatprep.subr.bf16.mxu0 %v1586
      %2202 = vmatpush2.bf16.msra.mxu0 %v1585
      %2203 = vmatprep.subr.bf16.mxu0 %v1580
      %2204 = vmatpush2.bf16.msra.mxu0 %v1579
      %2205 = vmatprep.mubr.bf16.mxu0 %v246
      %2206 = vmatmul.mubr.bf16.gmra.mxu0 %v245
      %v2207 = vpop.f32.mrf.mxu0
      %v2208 = vadd.f32 %v2167, %v2207
      %v2209 = vpop.f32.mrf.mxu0
      %v2210 = vadd.f32 %v2169, %v2209
      %v2211 = vpop.f32.mrf.mxu0
      %v2212 = vpop.f32.mrf.mxu0
      %2213 = vdwg.mxu0
      %2214 = vmatprep.subr.bf16.mxu0 %v1670
      %2215 = vmatpush1.bf16.msra.mxu0 %v1669
      %2216 = vmatprep.subr.bf16.mxu0 %v1664
      %2217 = vmatpush1.bf16.msra.mxu0 %v1663
      %2218 = vmatprep.subr.bf16.mxu0 %v1658
      %2219 = vmatpush1.bf16.msra.mxu0 %v1657
      %2220 = vmatprep.subr.bf16.mxu0 %v1652
      %2221 = vmatpush1.bf16.msra.mxu0 %v1651
      %2222 = vmatprep.subr.bf16.mxu0 %v1646
      %2223 = vmatpush1.bf16.msra.mxu0 %v1645
      %2224 = vmatprep.subr.bf16.mxu0 %v1640
      %2225 = vmatpush1.bf16.msra.mxu0 %v1639
      %2226 = vmatprep.subr.bf16.mxu0 %v1634
      %2227 = vmatpush1.bf16.msra.mxu0 %v1633
      %2228 = vmatprep.subr.bf16.mxu0 %v1628
      %2229 = vmatpush1.bf16.msra.mxu0 %v1627
      %2230 = vmatprep.subr.bf16.mxu0 %v1718
      %2231 = vmatpush2.bf16.msra.mxu0 %v1717
      %2232 = vmatprep.subr.bf16.mxu0 %v1712
      %2233 = vmatpush2.bf16.msra.mxu0 %v1711
      %2234 = vmatprep.subr.bf16.mxu0 %v1706
      %2235 = vmatpush2.bf16.msra.mxu0 %v1705
      %2236 = vmatprep.subr.bf16.mxu0 %v1700
      %2237 = vmatpush2.bf16.msra.mxu0 %v1699
      %2238 = vmatprep.subr.bf16.mxu0 %v1694
      %2239 = vmatpush2.bf16.msra.mxu0 %v1693
      %2240 = vmatprep.subr.bf16.mxu0 %v1688
      %2241 = vmatpush2.bf16.msra.mxu0 %v1687
      %2242 = vmatprep.subr.bf16.mxu0 %v1682
      %2243 = vmatpush2.bf16.msra.mxu0 %v1681
      %2244 = vmatprep.subr.bf16.mxu0 %v1676
      %2245 = vmatpush2.bf16.msra.mxu0 %v1675
      %2246 = vmatprep.mubr.bf16.mxu0 %v248
      %2247 = vmatmul.mubr.bf16.gmra.mxu0 %v247
      %v2248 = vpop.f32.mrf.mxu0
      %v2249 = vadd.f32 %v2208, %v2248
      %v2250 = vpop.f32.mrf.mxu0
      %v2251 = vadd.f32 %v2210, %v2250
      %v2252 = vpop.f32.mrf.mxu0
      %v2253 = vpop.f32.mrf.mxu0
      %2254 = vdwg.mxu0
      %2255 = vmatprep.subr.bf16.mxu0 %v1480
      %2256 = vmatpush1.bf16.msra.mxu0 %v1479
      %2257 = vmatprep.subr.bf16.mxu0 %v1474
      %2258 = vmatpush1.bf16.msra.mxu0 %v1473
      %2259 = vmatprep.subr.bf16.mxu0 %v1468
      %2260 = vmatpush1.bf16.msra.mxu0 %v1467
      %2261 = vmatprep.subr.bf16.mxu0 %v1462
      %2262 = vmatpush1.bf16.msra.mxu0 %v1461
      %2263 = vmatprep.subr.bf16.mxu0 %v1456
      %2264 = vmatpush1.bf16.msra.mxu0 %v1455
      %2265 = vmatprep.subr.bf16.mxu0 %v1450
      %2266 = vmatpush1.bf16.msra.mxu0 %v1449
      %2267 = vmatprep.subr.bf16.mxu0 %v1444
      %2268 = vmatpush1.bf16.msra.mxu0 %v1443
      %2269 = vmatprep.subr.bf16.mxu0 %v1438
      %2270 = vmatpush1.bf16.msra.mxu0 %v1437
      %2271 = vmatprep.subr.bf16.mxu0 %v1528
      %2272 = vmatpush2.bf16.msra.mxu0 %v1527
      %2273 = vmatprep.subr.bf16.mxu0 %v1522
      %2274 = vmatpush2.bf16.msra.mxu0 %v1521
      %2275 = vmatprep.subr.bf16.mxu0 %v1516
      %2276 = vmatpush2.bf16.msra.mxu0 %v1515
      %2277 = vmatprep.subr.bf16.mxu0 %v1510
      %2278 = vmatpush2.bf16.msra.mxu0 %v1509
      %2279 = vmatprep.subr.bf16.mxu0 %v1504
      %2280 = vmatpush2.bf16.msra.mxu0 %v1503
      %2281 = vmatprep.subr.bf16.mxu0 %v1498
      %2282 = vmatpush2.bf16.msra.mxu0 %v1497
      %2283 = vmatprep.subr.bf16.mxu0 %v1492
      %2284 = vmatpush2.bf16.msra.mxu0 %v1491
      %2285 = vmatprep.subr.bf16.mxu0 %v1486
      %2286 = vmatpush2.bf16.msra.mxu0 %v1485
      %2287 = vmatprep.mubr.bf16.mxu0 %v244
      %2288 = vmatmul.mubr.bf16.gmra.mxu0 %v243
      %v2289 = vpop.f32.mrf.mxu0
      %v2290 = vadd.f32 %v558, %v2289
      %v2291 = vpop.f32.mrf.mxu0
      %v2292 = vadd.f32 %v562, %v2291
      %v2293 = vpop.f32.mrf.mxu0
      %v2294 = vpop.f32.mrf.mxu0
      %2295 = vdwg.mxu0
      %2296 = vmatprep.subr.bf16.mxu0 %v1576
      %2297 = vmatpush1.bf16.msra.mxu0 %v1575
      %2298 = vmatprep.subr.bf16.mxu0 %v1570
      %2299 = vmatpush1.bf16.msra.mxu0 %v1569
      %2300 = vmatprep.subr.bf16.mxu0 %v1564
      %2301 = vmatpush1.bf16.msra.mxu0 %v1563
      %2302 = vmatprep.subr.bf16.mxu0 %v1558
      %2303 = vmatpush1.bf16.msra.mxu0 %v1557
      %2304 = vmatprep.subr.bf16.mxu0 %v1552
      %2305 = vmatpush1.bf16.msra.mxu0 %v1551
      %2306 = vmatprep.subr.bf16.mxu0 %v1546
      %2307 = vmatpush1.bf16.msra.mxu0 %v1545
      %2308 = vmatprep.subr.bf16.mxu0 %v1540
      %2309 = vmatpush1.bf16.msra.mxu0 %v1539
      %2310 = vmatprep.subr.bf16.mxu0 %v1534
      %2311 = vmatpush1.bf16.msra.mxu0 %v1533
      %2312 = vmatprep.subr.bf16.mxu0 %v1624
      %2313 = vmatpush2.bf16.msra.mxu0 %v1623
      %2314 = vmatprep.subr.bf16.mxu0 %v1618
      %2315 = vmatpush2.bf16.msra.mxu0 %v1617
      %2316 = vmatprep.subr.bf16.mxu0 %v1612
      %2317 = vmatpush2.bf16.msra.mxu0 %v1611
      %2318 = vmatprep.subr.bf16.mxu0 %v1606
      %2319 = vmatpush2.bf16.msra.mxu0 %v1605
      %2320 = vmatprep.subr.bf16.mxu0 %v1600
      %2321 = vmatpush2.bf16.msra.mxu0 %v1599
      %2322 = vmatprep.subr.bf16.mxu0 %v1594
      %2323 = vmatpush2.bf16.msra.mxu0 %v1593
      %2324 = vmatprep.subr.bf16.mxu0 %v1588
      %2325 = vmatpush2.bf16.msra.mxu0 %v1587
      %2326 = vmatprep.subr.bf16.mxu0 %v1582
      %2327 = vmatpush2.bf16.msra.mxu0 %v1581
      %2328 = vmatprep.mubr.bf16.mxu0 %v246
      %2329 = vmatmul.mubr.bf16.gmra.mxu0 %v245
      %v2330 = vpop.f32.mrf.mxu0
      %v2331 = vadd.f32 %v2290, %v2330
      %v2332 = vpop.f32.mrf.mxu0
      %v2333 = vadd.f32 %v2292, %v2332
      %v2334 = vpop.f32.mrf.mxu0
      %v2335 = vpop.f32.mrf.mxu0
      %2336 = vdwg.mxu0
      %2337 = vmatprep.subr.bf16.mxu0 %v1672
      %2338 = vmatpush1.bf16.msra.mxu0 %v1671
      %2339 = vmatprep.subr.bf16.mxu0 %v1666
      %2340 = vmatpush1.bf16.msra.mxu0 %v1665
      %2341 = vmatprep.subr.bf16.mxu0 %v1660
      %2342 = vmatpush1.bf16.msra.mxu0 %v1659
      %2343 = vmatprep.subr.bf16.mxu0 %v1654
      %2344 = vmatpush1.bf16.msra.mxu0 %v1653
      %2345 = vmatprep.subr.bf16.mxu0 %v1648
      %2346 = vmatpush1.bf16.msra.mxu0 %v1647
      %2347 = vmatprep.subr.bf16.mxu0 %v1642
      %2348 = vmatpush1.bf16.msra.mxu0 %v1641
      %2349 = vmatprep.subr.bf16.mxu0 %v1636
      %2350 = vmatpush1.bf16.msra.mxu0 %v1635
      %2351 = vmatprep.subr.bf16.mxu0 %v1630
      %2352 = vmatpush1.bf16.msra.mxu0 %v1629
      %2353 = vmatprep.subr.bf16.mxu0 %v1720
      %2354 = vmatpush2.bf16.msra.mxu0 %v1719
      %2355 = vmatprep.subr.bf16.mxu0 %v1714
      %2356 = vmatpush2.bf16.msra.mxu0 %v1713
      %2357 = vmatprep.subr.bf16.mxu0 %v1708
      %2358 = vmatpush2.bf16.msra.mxu0 %v1707
      %2359 = vmatprep.subr.bf16.mxu0 %v1702
      %2360 = vmatpush2.bf16.msra.mxu0 %v1701
      %2361 = vmatprep.subr.bf16.mxu0 %v1696
      %2362 = vmatpush2.bf16.msra.mxu0 %v1695
      %2363 = vmatprep.subr.bf16.mxu0 %v1690
      %2364 = vmatpush2.bf16.msra.mxu0 %v1689
      %2365 = vmatprep.subr.bf16.mxu0 %v1684
      %2366 = vmatpush2.bf16.msra.mxu0 %v1683
      %2367 = vmatprep.subr.bf16.mxu0 %v1678
      %2368 = vmatpush2.bf16.msra.mxu0 %v1677
      %2369 = vmatprep.mubr.bf16.mxu0 %v248
      %2370 = vmatmul.mubr.bf16.gmra.mxu0 %v247
      %v2371 = vpop.f32.mrf.mxu0
      %v2372 = vadd.f32 %v2331, %v2371
      %v2373 = vpop.f32.mrf.mxu0
      %v2374 = vadd.f32 %v2333, %v2373
      %v2375 = vpop.f32.mrf.mxu0
      %v2376 = vpop.f32.mrf.mxu0
      %2377 = vdwg.mxu0
      %v2378 = vmul.f32 %v2126, %v2126
      %v2379 = vmul.f32 %v2128, %v2128
      %v2380 = vmul.f32 %v2249, %v2249
      %v2381 = vmul.f32 %v2251, %v2251
      %v2382 = vmul.f32 %v2372, %v2372
      %v2383 = vmul.f32 %v2374, %v2374
      %vm2384 = vcmask 1041408
      %v2385 = vsel %vm2384, %v2378, 0.0
      %v2386 = vsel %vm2384, %v2379, 0.0
      %v2387 = vadd.f32 %v2385, %v2386
      %v2388 = vsel %vm2384, %v2380, 0.0
      %v2389 = vadd.f32 %v2387, %v2388
      %v2390 = vsel %vm2384, %v2381, 0.0
      %v2391 = vadd.f32 %v2389, %v2390
      %v2392 = vsel %vm2384, %v2382, 0.0
      %v2393 = vadd.f32 %v2391, %v2392
      %v2394 = vsel %vm2384, %v2383, 0.0
      %v2395 = vadd.f32 %v2393, %v2394
      %2396 = vadd.xlane.f32.xlu0 %v2395
      %v2397 = vpop.xlane.xlu0 %2396
      %v2398 = vmax.f32 %v2397, 1e-24
      %v2399 = vrsqrt.pop %v2398
      %v2400 = vmul.f32 %v2126, %v2399
      %v2401 = vmul.f32 %v2128, %v2399
      %v2402 = vmul.f32 %v2249, %v2399
      %v2403 = vmul.f32 %v2251, %v2399
      %v2404 = vmul.f32 %v2372, %v2399
      %v2405 = vmul.f32 %v2374, %v2399
      %v2412 = vcombine.low %v2400, %v2401
      %v2413 = vcombine.low %v2402, %v2403
      %v2415 = vunpack.c.l.s4 1983009808
      %v2416 = vunpack.c.0.s8 %v2415
      %v2417 = vlaneseq
      %v2418 = vshrl.u32 %v2417, 7
      %v2419 = vsub.s32 %v2416, %v2418
      %v2420 = vrot.slane %v2412, %v2419
      %v2422 = vunpack.c.l.s4 1983009808
      %v2423 = vunpack.c.0.s8 %v2422
      %v2424 = vlaneseq
      %v2425 = vshrl.u32 %v2424, 7
      %v2426 = vsub.s32 %v2423, %v2425
      %v2427 = vrot.slane %v2413, %v2426
      %v2428 = vcombine.low %v2420, %v2427
      %v2429 = vcombine.low %v2404, %v2405
      %v2431 = vunpack.c.l.s4 1983009808
      %v2432 = vunpack.c.0.s8 %v2431
      %v2433 = vlaneseq
      %v2434 = vshrl.u32 %v2433, 7
      %v2435 = vsub.s32 %v2432, %v2434
      %v2436 = vrot.slane %v2429, %v2435
      %2439 = vst [vmem:[%s207] sm:$0xff] %v2428
      %2440 = vst [vmem:[%s207 + $0x8] sm:$0xf] %v2436
      %p2441 = scmp.lt.s32.totalorder %s14, 1
      %s2442 = scalar_select %p2441, %s14, 1
      %s2443 = smul.addr %s2442, 6
      %s2444 = smul.addr %s2443, 2
      %s2445 = scalar_lea.vmem %s3, %s2444
      // Predicated region
      $region33: #{_lambda_.3} parent=31 // pred_check
        %p2446 = pneg %p110
      $region34: #{_lambda_.3} parent=31 // pred_check_branch
        %2448 = sbr.rel (%p2446) target = $region36
      $region35: #{_lambda_.3} parent=31 // pred_region
        _
      $region36: #{_lambda_.3} parent=31 // pred_fallthru
        _
    $region32: #{_lambda_.3} parent=5 // pred_fallthru
      _
    %p2449 = scmp.le.s32.totalorder 2, %s9
    // Predicated region
    $region37: #{_lambda_.3} parent=5 // pred_check
      %p2450 = pneg %p2449
    $region38: #{_lambda_.3} parent=5 // pred_check_branch
      %2452 = sbr.rel (%p2450) target = $region40
    $region39: #{_lambda_.3} parent=5 // pred_region
      %s2453 = ssub.s32 %s9, 2
      // Predicated region
      $region41: #{_lambda_.3} parent=39 // pred_check
        %p2454 = pneg %p116
      $region42: #{_lambda_.3} parent=39 // pred_check_branch
        %2456 = sbr.rel (%p2454) target = $region44
      $region43: #{_lambda_.3} parent=39 // pred_region
        %p2457 = scmp.lt.s32.totalorder %s15, 1
        %s2458 = scalar_select %p2457, %s15, 1
        %s2459 = smul.addr %s2458, 6
        %s2460 = smul.addr %s2459, 2
        %s2461 = scalar_lea.vmem %s3, %s2460
      $region44: #{_lambda_.3} parent=39 // pred_fallthru
        _
    $region40: #{_lambda_.3} parent=5 // pred_fallthru
      _
  $region6: #{_lambda_.3} parent=0 // loop_footer
    %s13 = sadd.s32 1, %s9
  $region7: #{_lambda_.3} parent=0 // loop_footer_branch
    %8 = sbr.rel target = $region3
  $region8: #{_lambda_.3} parent=0 // loop_exit
    _

// kernel: _lambda_.2
$region0: #{_lambda_.2}
  #allocation0 [shape = 'u32[]', space=smem, size = 0x4, offset = 0x4, fixed_abs, tag = 'smem constant byte address 0x4 - core index']
  #allocation1 [shape = 'u32[144,128]{1,0:T(1,128)}', space=vmem, size = 0x12000, scoped, tag = 'internal scratch']
  %s0 = inlined_call_operand.hbm [shape: f32[2,8,768], index: 0, kind: input, shape index: {}]
  %s1 = inlined_call_operand.hbm [shape: bf16[768,768], index: 1, kind: input, shape index: {}]
  %s2 = inlined_call_operand.hbm [shape: bf16[768,768], index: 2, kind: input, shape index: {}]
  %s3 = inlined_call_operand.hbm [shape: f32[1,768], index: 3, kind: input, shape index: {}]
  %s4 = inlined_call_operand.vmem [shape: f32[2,768], index: 4, kind: output, shape index: {}]
  %s5 = sld [smem:[#allocation0]]
  $region50: #{_lambda_.2} parent=0
    _
  %s7 = ssub.s32 1, %s5
  %s8 = scalar_select 0, %s7, %s5
  $region1: #{_lambda_.2} parent=0
    #allocation2 [shape = 'u8[49152]{0}', space=vmem, size = 0xc000, scoped, tag = 'input window, operand 0, single buffered']
    #allocation3 [shape = 's32[1]{0}', space=sflag, size = 0x4, scoped, tag = 'scoped memory for _lambda_.2']
    #allocation4 [shape = 'u8[1179648]{0}', space=vmem, size = 0x120000, scoped, tag = 'input window, operand 1, single buffered']
    #allocation5 [shape = 's32[1]{0}', space=sflag, size = 0x4, scoped, tag = 'scoped memory for _lambda_.2']
    #allocation6 [shape = 'u8[1179648]{0}', space=vmem, size = 0x120000, scoped, tag = 'input window, operand 2, single buffered']
    #allocation7 [shape = 'u8[3072]{0}', space=vmem, size = 0xc00, scoped, tag = 'input window, operand 3, single buffered']
    #allocation8 [shape = 's32[1]{0}', space=sflag, size = 0x4, scoped, tag = 'scoped memory for _lambda_.2']
    %9 = vsyncpa [#allocation3], 0
    %10 = vsyncpa [#allocation5], 0
    %11 = vsyncpa [#allocation8], 0
    // Predicated region
    $region2: #{_lambda_.2} parent=1 // pred_check
      _
    $region3: #{_lambda_.2} parent=1 // pred_check_branch
      %13 = sbr.rel (0) target = $region5
    $region4: #{_lambda_.2} parent=1 // pred_region
      %s15 = ssub.s32 1536, 1536
      %16 = vsyncadd [#allocation3], %s15
      %s17 = sshll.u32 [#allocation2], 4
      %s18 = int_to_ptr.vmem [resolvable:$true] %s17
      %23 = dma.hbm_to_vmem [thread:$0]  %s0, 1536, %s18, [#allocation3], 768, 768, 48
    $region5: #{_lambda_.2} parent=1 // pred_fallthru
      _
    // Predicated region
    $region6: #{_lambda_.2} parent=1 // pred_check
      _
    $region7: #{_lambda_.2} parent=1 // pred_check_branch
      %25 = sbr.rel (0) target = $region9
    $region8: #{_lambda_.2} parent=1 // pred_region
      %s27 = ssub.s32 36864, 36864
      %28 = vsyncadd [#allocation5], %s27
      %s29 = sshll.u32 [#allocation4], 4
      %s30 = int_to_ptr.vmem [resolvable:$true] %s29
      %35 = dma.hbm_to_vmem [thread:$0]  %s1, 36864, %s30, [#allocation5], 384, 384, 24
    $region9: #{_lambda_.2} parent=1 // pred_fallthru
      _
    // Predicated region
    $region10: #{_lambda_.2} parent=1 // pred_check
      _
    $region11: #{_lambda_.2} parent=1 // pred_check_branch
      %37 = sbr.rel (0) target = $region13
    $region12: #{_lambda_.2} parent=1 // pred_region
      %s39 = ssub.s32 36864, 36864
      %40 = vsyncadd [#allocation5], %s39
      %s41 = sshll.u32 [#allocation6], 4
      %s42 = int_to_ptr.vmem [resolvable:$true] %s41
      %47 = dma.hbm_to_vmem [thread:$0]  %s2, 36864, %s42, [#allocation5], 384, 384, 24
    $region13: #{_lambda_.2} parent=1 // pred_fallthru
      _
    // Predicated region
    $region14: #{_lambda_.2} parent=1 // pred_check
      _
    $region15: #{_lambda_.2} parent=1 // pred_check_branch
      %49 = sbr.rel (0) target = $region17
    $region16: #{_lambda_.2} parent=1 // pred_region
      %s51 = ssub.s32 96, 96
      %52 = vsyncadd [#allocation8], %s51
      %s54 = sshll.u32 [#allocation7], 4
      %s55 = int_to_ptr.vmem [resolvable:$true] %s54
      %57 = dma.hbm_to_vmem [thread:$0]  %s3, 96, %s55, [#allocation8]
    $region17: #{_lambda_.2} parent=1 // pred_fallthru
      _
    // Predicated region
    $region18: #{_lambda_.2} parent=1 // pred_check
      _
    $region19: #{_lambda_.2} parent=1 // pred_check_branch
      %59 = sbr.rel (0) target = $region21
    $region20: #{_lambda_.2} parent=1 // pred_region
      %60 = dma.done [#allocation3], 1536
    $region21: #{_lambda_.2} parent=1 // pred_fallthru
      _
    // Predicated region
    $region22: #{_lambda_.2} parent=1 // pred_check
      _
    $region23: #{_lambda_.2} parent=1 // pred_check_branch
      %62 = sbr.rel (0) target = $region25
    $region24: #{_lambda_.2} parent=1 // pred_region
      %63 = dma.done [#allocation5], 36864
    $region25: #{_lambda_.2} parent=1 // pred_fallthru
      _
    // Predicated region
    $region26: #{_lambda_.2} parent=1 // pred_check
      _
    $region27: #{_lambda_.2} parent=1 // pred_check_branch
      %65 = sbr.rel (0) target = $region29
    $region28: #{_lambda_.2} parent=1 // pred_region
      %66 = dma.done [#allocation5], 36864
    $region29: #{_lambda_.2} parent=1 // pred_fallthru
      _
    // Predicated region
    $region30: #{_lambda_.2} parent=1 // pred_check
      _
    $region31: #{_lambda_.2} parent=1 // pred_check_branch
      %68 = sbr.rel (0) target = $region33
    $region32: #{_lambda_.2} parent=1 // pred_region
      %69 = dma.done [#allocation8], 96
    $region33: #{_lambda_.2} parent=1 // pred_fallthru
      _
    %v70 = vld [vmem:[#allocation2] sm:$0xff]
    %v71 = vld [vmem:[#allocation2 + $0x8] sm:$0xff]
    %v72 = vld [vmem:[#allocation2 + $0x10] sm:$0xff]
    %v73 = vld [vmem:[#allocation2 + $0x18] sm:$0xff]
    %v74 = vld [vmem:[#allocation2 + $0x20] sm:$0xff]
    %v75 = vld [vmem:[#allocation2 + $0x28] sm:$0xff]
    %v76 = vld [vmem:[#allocation2 + $0x30] sm:$0xff]
    %v77 = vld [vmem:[#allocation2 + $0x38] sm:$0xff]
    %v78 = vld [vmem:[#allocation2 + $0x40] sm:$0xff]
    %v79 = vld [vmem:[#allocation2 + $0x48] sm:$0xff]
    %v80 = vld [vmem:[#allocation2 + $0x50] sm:$0xff]
    %v81 = vld [vmem:[#allocation2 + $0x58] sm:$0xff]
    %v82 = vpack.c.bf16 %v76, %v70
    %v83 = vpack.c.bf16 %v77, %v71
    %v84 = vpack.c.bf16 %v78, %v72
    %v85 = vpack.c.bf16 %v79, %v73
    %v86 = vpack.c.bf16 %v80, %v74
    %v87 = vpack.c.bf16 %v81, %v75
    %v88 = vld [vmem:[#allocation4] sm:$0xff]
    %v89 = vld [vmem:[#allocation4 + $0x8] sm:$0xff]
    %v90 = vld [vmem:[#allocation4 + $0x10] sm:$0xff]
    %v91 = vld [vmem:[#allocation4 + $0x18] sm:$0xff]
    %v92 = vld [vmem:[#allocation4 + $0x20] sm:$0xff]
    %v93 = vld [vmem:[#allocation4 + $0x28] sm:$0xff]
    %v94 = vld [vmem:[#allocation4 + $0x30] sm:$0xff]
    %v95 = vld [vmem:[#allocation4 + $0x38] sm:$0xff]
    %v96 = vld [vmem:[#allocation4 + $0x40] sm:$0xff]
    %v97 = vld [vmem:[#allocation4 + $0x48] sm:$0xff]
    %v98 = vld [vmem:[#allocation4 + $0x50] sm:$0xff]
    %v99 = vld [vmem:[#allocation4 + $0x58] sm:$0xff]
    %v100 = vld [vmem:[#allocation4 + $0x60] sm:$0xff]
    %v101 = vld [vmem:[#allocation4 + $0x68] sm:$0xff]
    %v102 = vld [vmem:[#allocation4 + $0x70] sm:$0xff]
    %v103 = vld [vmem:[#allocation4 + $0x78] sm:$0xff]
    %v104 = vld [vmem:[#allocation4 + $0x80] sm:$0xff]
    %v105 = vld [vmem:[#allocation4 + $0x88] sm:$0xff]
    %v106 = vld [vmem:[#allocation4 + $0x90] sm:$0xff]
    %v107 = vld [vmem:[#allocation4 + $0x98] sm:$0xff]
    %v108 = vld [vmem:[#allocation4 + $0xa0] sm:$0xff]
    %v109 = vld [vmem:[#allocation4 + $0xa8] sm:$0xff]
    %v110 = vld [vmem:[#allocation4 + $0xb0] sm:$0xff]
    %v111 = vld [vmem:[#allocation4 + $0xb8] sm:$0xff]
    %v112 = vld [vmem:[#allocation4 + $0xc0] sm:$0xff]
    %v113 = vld [vmem:[#allocation4 + $0xc8] sm:$0xff]
    %v114 = vld [vmem:[#allocation4 + $0xd0] sm:$0xff]
    %v115 = vld [vmem:[#allocation4 + $0xd8] sm:$0xff]
    %v116 = vld [vmem:[#allocation4 + $0xe0] sm:$0xff]
    %v117 = vld [vmem:[#allocation4 + $0xe8] sm:$0xff]
    %v118 = vld [vmem:[#allocation4 + $0xf0] sm:$0xff]
    %v119 = vld [vmem:[#allocation4 + $0xf8] sm:$0xff]
    %v120 = vld [vmem:[#allocation4 + $0x100] sm:$0xff]
    %v121 = vld [vmem:[#allocation4 + $0x108] sm:$0xff]
    %v122 = vld [vmem:[#allocation4 + $0x110] sm:$0xff]
    %v123 = vld [vmem:[#allocation4 + $0x118] sm:$0xff]
    %v124 = vld [vmem:[#allocation4 + $0x120] sm:$0xff]
    %v125 = vld [vmem:[#allocation4 + $0x128] sm:$0xff]
    %v126 = vld [vmem:[#allocation4 + $0x130] sm:$0xff]
    %v127 = vld [vmem:[#allocation4 + $0x138] sm:$0xff]
    %v128 = vld [vmem:[#allocation4 + $0x140] sm:$0xff]
    %v129 = vld [vmem:[#allocation4 + $0x148] sm:$0xff]
    %v130 = vld [vmem:[#allocation4 + $0x150] sm:$0xff]
    %v131 = vld [vmem:[#allocation4 + $0x158] sm:$0xff]
    %v132 = vld [vmem:[#allocation4 + $0x160] sm:$0xff]
    %v133 = vld [vmem:[#allocation4 + $0x168] sm:$0xff]
    %v134 = vld [vmem:[#allocation4 + $0x170] sm:$0xff]
    %v135 = vld [vmem:[#allocation4 + $0x178] sm:$0xff]
    %v136 = vld [vmem:[#allocation4 + $0x180] sm:$0xff]
    %v137 = vld [vmem:[#allocation4 + $0x188] sm:$0xff]
    %v138 = vld [vmem:[#allocation4 + $0x190] sm:$0xff]
    %v139 = vld [vmem:[#allocation4 + $0x198] sm:$0xff]
    %v140 = vld [vmem:[#allocation4 + $0x1a0] sm:$0xff]
    %v141 = vld [vmem:[#allocation4 + $0x1a8] sm:$0xff]
    %v142 = vld [vmem:[#allocation4 + $0x1b0] sm:$0xff]
    %v143 = vld [vmem:[#allocation4 + $0x1b8] sm:$0xff]
    %v144 = vld [vmem:[#allocation4 + $0x1c0] sm:$0xff]
    %v145 = vld [vmem:[#allocation4 + $0x1c8] sm:$0xff]
    %v146 = vld [vmem:[#allocation4 + $0x1d0] sm:$0xff]
    %v147 = vld [vmem:[#allocation4 + $0x1d8] sm:$0xff]
    %v148 = vld [vmem:[#allocation4 + $0x1e0] sm:$0xff]
    %v149 = vld [vmem:[#allocation4 + $0x1e8] sm:$0xff]
    %v150 = vld [vmem:[#allocation4 + $0x1f0] sm:$0xff]
    %v151 = vld [vmem:[#allocation4 + $0x1f8] sm:$0xff]
    %v152 = vld [vmem:[#allocation4 + $0x200] sm:$0xff]
    %v153 = vld [vmem:[#allocation4 + $0x208] sm:$0xff]
    %v154 = vld [vmem:[#allocation4 + $0x210] sm:$0xff]
    %v155 = vld [vmem:[#allocation4 + $0x218] sm:$0xff]
    %v156 = vld [vmem:[#allocation4 + $0x220] sm:$0xff]
    %v157 = vld [vmem:[#allocation4 + $0x228] sm:$0xff]
    %v158 = vld [vmem:[#allocation4 + $0x230] sm:$0xff]
    %v159 = vld [vmem:[#allocation4 + $0x238] sm:$0xff]
    %v160 = vld [vmem:[#allocation4 + $0x240] sm:$0xff]
    %v161 = vld [vmem:[#allocation4 + $0x248] sm:$0xff]
    %v162 = vld [vmem:[#allocation4 + $0x250] sm:$0xff]
    %v163 = vld [vmem:[#allocation4 + $0x258] sm:$0xff]
    %v164 = vld [vmem:[#allocation4 + $0x260] sm:$0xff]
    %v165 = vld [vmem:[#allocation4 + $0x268] sm:$0xff]
    %v166 = vld [vmem:[#allocation4 + $0x270] sm:$0xff]
    %v167 = vld [vmem:[#allocation4 + $0x278] sm:$0xff]
    %v168 = vld [vmem:[#allocation4 + $0x280] sm:$0xff]
    %v169 = vld [vmem:[#allocation4 + $0x288] sm:$0xff]
    %v170 = vld [vmem:[#allocation4 + $0x290] sm:$0xff]
    %v171 = vld [vmem:[#allocation4 + $0x298] sm:$0xff]
    %v172 = vld [vmem:[#allocation4 + $0x2a0] sm:$0xff]
    %v173 = vld [vmem:[#allocation4 + $0x2a8] sm:$0xff]
    %v174 = vld [vmem:[#allocation4 + $0x2b0] sm:$0xff]
    %v175 = vld [vmem:[#allocation4 + $0x2b8] sm:$0xff]
    %v176 = vld [vmem:[#allocation4 + $0x2c0] sm:$0xff]
    %v177 = vld [vmem:[#allocation4 + $0x2c8] sm:$0xff]
    %v178 = vld [vmem:[#allocation4 + $0x2d0] sm:$0xff]
    %v179 = vld [vmem:[#allocation4 + $0x2d8] sm:$0xff]
    %v180 = vld [vmem:[#allocation4 + $0x2e0] sm:$0xff]
    %v181 = vld [vmem:[#allocation4 + $0x2e8] sm:$0xff]
    %v182 = vld [vmem:[#allocation4 + $0x2f0] sm:$0xff]
    %v183 = vld [vmem:[#allocation4 + $0x2f8] sm:$0xff]
    %v184 = vld [vmem:[#allocation4 + $0x300] sm:$0xff]
    %v185 = vld [vmem:[#allocation4 + $0x308] sm:$0xff]
    %v186 = vld [vmem:[#allocation4 + $0x310] sm:$0xff]
    %v187 = vld [vmem:[#allocation4 + $0x318] sm:$0xff]
    %v188 = vld [vmem:[#allocation4 + $0x320] sm:$0xff]
    %v189 = vld [vmem:[#allocation4 + $0x328] sm:$0xff]
    %v190 = vld [vmem:[#allocation4 + $0x330] sm:$0xff]
    %v191 = vld [vmem:[#allocation4 + $0x338] sm:$0xff]
    %v192 = vld [vmem:[#allocation4 + $0x340] sm:$0xff]
    %v193 = vld [vmem:[#allocation4 + $0x348] sm:$0xff]
    %v194 = vld [vmem:[#allocation4 + $0x350] sm:$0xff]
    %v195 = vld [vmem:[#allocation4 + $0x358] sm:$0xff]
    %v196 = vld [vmem:[#allocation4 + $0x360] sm:$0xff]
    %v197 = vld [vmem:[#allocation4 + $0x368] sm:$0xff]
    %v198 = vld [vmem:[#allocation4 + $0x370] sm:$0xff]
    %v199 = vld [vmem:[#allocation4 + $0x378] sm:$0xff]
    %v200 = vld [vmem:[#allocation4 + $0x380] sm:$0xff]
    %v201 = vld [vmem:[#allocation4 + $0x388] sm:$0xff]
    %v202 = vld [vmem:[#allocation4 + $0x390] sm:$0xff]
    %v203 = vld [vmem:[#allocation4 + $0x398] sm:$0xff]
    %v204 = vld [vmem:[#allocation4 + $0x3a0] sm:$0xff]
    %v205 = vld [vmem:[#allocation4 + $0x3a8] sm:$0xff]
    %v206 = vld [vmem:[#allocation4 + $0x3b0] sm:$0xff]
    %v207 = vld [vmem:[#allocation4 + $0x3b8] sm:$0xff]
    %v208 = vld [vmem:[#allocation4 + $0x3c0] sm:$0xff]
    %v209 = vld [vmem:[#allocation4 + $0x3c8] sm:$0xff]
    %v210 = vld [vmem:[#allocation4 + $0x3d0] sm:$0xff]
    %v211 = vld [vmem:[#allocation4 + $0x3d8] sm:$0xff]
    %v212 = vld [vmem:[#allocation4 + $0x3e0] sm:$0xff]
    %v213 = vld [vmem:[#allocation4 + $0x3e8] sm:$0xff]
    %v214 = vld [vmem:[#allocation4 + $0x3f0] sm:$0xff]
    %v215 = vld [vmem:[#allocation4 + $0x3f8] sm:$0xff]
    %v216 = vld [vmem:[#allocation4 + $0x400] sm:$0xff]
    %v217 = vld [vmem:[#allocation4 + $0x408] sm:$0xff]
    %v218 = vld [vmem:[#allocation4 + $0x410] sm:$0xff]
    %v219 = vld [vmem:[#allocation4 + $0x418] sm:$0xff]
    %v220 = vld [vmem:[#allocation4 + $0x420] sm:$0xff]
    %v221 = vld [vmem:[#allocation4 + $0x428] sm:$0xff]
    %v222 = vld [vmem:[#allocation4 + $0x430] sm:$0xff]
    %v223 = vld [vmem:[#allocation4 + $0x438] sm:$0xff]
    %v224 = vld [vmem:[#allocation4 + $0x440] sm:$0xff]
    %v225 = vld [vmem:[#allocation4 + $0x448] sm:$0xff]
    %v226 = vld [vmem:[#allocation4 + $0x450] sm:$0xff]
    %v227 = vld [vmem:[#allocation4 + $0x458] sm:$0xff]
    %v228 = vld [vmem:[#allocation4 + $0x460] sm:$0xff]
    %v229 = vld [vmem:[#allocation4 + $0x468] sm:$0xff]
    %v230 = vld [vmem:[#allocation4 + $0x470] sm:$0xff]
    %v231 = vld [vmem:[#allocation4 + $0x478] sm:$0xff]
    %v232 = vld [vmem:[#allocation4 + $0x480] sm:$0xff]
    %v233 = vld [vmem:[#allocation4 + $0x488] sm:$0xff]
    %v234 = vld [vmem:[#allocation4 + $0x490] sm:$0xff]
    %v235 = vld [vmem:[#allocation4 + $0x498] sm:$0xff]
    %v236 = vld [vmem:[#allocation4 + $0x4a0] sm:$0xff]
    %v237 = vld [vmem:[#allocation4 + $0x4a8] sm:$0xff]
    %v238 = vld [vmem:[#allocation4 + $0x4b0] sm:$0xff]
    %v239 = vld [vmem:[#allocation4 + $0x4b8] sm:$0xff]
    %v240 = vld [vmem:[#allocation4 + $0x4c0] sm:$0xff]
    %v241 = vld [vmem:[#allocation4 + $0x4c8] sm:$0xff]
    %v242 = vld [vmem:[#allocation4 + $0x4d0] sm:$0xff]
    %v243 = vld [vmem:[#allocation4 + $0x4d8] sm:$0xff]
    %v244 = vld [vmem:[#allocation4 + $0x4e0] sm:$0xff]
    %v245 = vld [vmem:[#allocation4 + $0x4e8] sm:$0xff]
    %v246 = vld [vmem:[#allocation4 + $0x4f0] sm:$0xff]
    %v247 = vld [vmem:[#allocation4 + $0x4f8] sm:$0xff]
    %v248 = vld [vmem:[#allocation4 + $0x500] sm:$0xff]
    %v249 = vld [vmem:[#allocation4 + $0x508] sm:$0xff]
    %v250 = vld [vmem:[#allocation4 + $0x510] sm:$0xff]
    %v251 = vld [vmem:[#allocation4 + $0x518] sm:$0xff]
    %v252 = vld [vmem:[#allocation4 + $0x520] sm:$0xff]
    %v253 = vld [vmem:[#allocation4 + $0x528] sm:$0xff]
    %v254 = vld [vmem:[#allocation4 + $0x530] sm:$0xff]
    %v255 = vld [vmem:[#allocation4 + $0x538] sm:$0xff]
    %v256 = vld [vmem:[#allocation4 + $0x540] sm:$0xff]
    %v257 = vld [vmem:[#allocation4 + $0x548] sm:$0xff]
    %v258 = vld [vmem:[#allocation4 + $0x550] sm:$0xff]
    %v259 = vld [vmem:[#allocation4 + $0x558] sm:$0xff]
    %v260 = vld [vmem:[#allocation4 + $0x560] sm:$0xff]
    %v261 = vld [vmem:[#allocation4 + $0x568] sm:$0xff]
    %v262 = vld [vmem:[#allocation4 + $0x570] sm:$0xff]
    %v263 = vld [vmem:[#allocation4 + $0x578] sm:$0xff]
    %v264 = vld [vmem:[#allocation4 + $0x580] sm:$0xff]
    %v265 = vld [vmem:[#allocation4 + $0x588] sm:$0xff]
    %v266 = vld [vmem:[#allocation4 + $0x590] sm:$0xff]
    %v267 = vld [vmem:[#allocation4 + $0x598] sm:$0xff]
    %v268 = vld [vmem:[#allocation4 + $0x5a0] sm:$0xff]
    %v269 = vld [vmem:[#allocation4 + $0x5a8] sm:$0xff]
    %v270 = vld [vmem:[#allocation4 + $0x5b0] sm:$0xff]
    %v271 = vld [vmem:[#allocation4 + $0x5b8] sm:$0xff]
    %v272 = vld [vmem:[#allocation4 + $0x5c0] sm:$0xff]
    %v273 = vld [vmem:[#allocation4 + $0x5c8] sm:$0xff]
    %v274 = vld [vmem:[#allocation4 + $0x5d0] sm:$0xff]
    %v275 = vld [vmem:[#allocation4 + $0x5d8] sm:$0xff]
    %v276 = vld [vmem:[#allocation4 + $0x5e0] sm:$0xff]
    %v277 = vld [vmem:[#allocation4 + $0x5e8] sm:$0xff]
    %v278 = vld [vmem:[#allocation4 + $0x5f0] sm:$0xff]
    %v279 = vld [vmem:[#allocation4 + $0x5f8] sm:$0xff]
    %v280 = vld [vmem:[#allocation4 + $0x600] sm:$0xff]
    %v281 = vld [vmem:[#allocation4 + $0x608] sm:$0xff]
    %v282 = vld [vmem:[#allocation4 + $0x610] sm:$0xff]
    %v283 = vld [vmem:[#allocation4 + $0x618] sm:$0xff]
    %v284 = vld [vmem:[#allocation4 + $0x620] sm:$0xff]
    %v285 = vld [vmem:[#allocation4 + $0x628] sm:$0xff]
    %v286 = vld [vmem:[#allocation4 + $0x630] sm:$0xff]
    %v287 = vld [vmem:[#allocation4 + $0x638] sm:$0xff]
    %v288 = vld [vmem:[#allocation4 + $0x640] sm:$0xff]
    %v289 = vld [vmem:[#allocation4 + $0x648] sm:$0xff]
    %v290 = vld [vmem:[#allocation4 + $0x650] sm:$0xff]
    %v291 = vld [vmem:[#allocation4 + $0x658] sm:$0xff]
    %v292 = vld [vmem:[#allocation4 + $0x660] sm:$0xff]
    %v293 = vld [vmem:[#allocation4 + $0x668] sm:$0xff]
    %v294 = vld [vmem:[#allocation4 + $0x670] sm:$0xff]
    %v295 = vld [vmem:[#allocation4 + $0x678] sm:$0xff]
    %v296 = vld [vmem:[#allocation4 + $0x680] sm:$0xff]
    %v297 = vld [vmem:[#allocation4 + $0x688] sm:$0xff]
    %v298 = vld [vmem:[#allocation4 + $0x690] sm:$0xff]
    %v299 = vld [vmem:[#allocation4 + $0x698] sm:$0xff]
    %v300 = vld [vmem:[#allocation4 + $0x6a0] sm:$0xff]
    %v301 = vld [vmem:[#allocation4 + $0x6a8] sm:$0xff]
    %v302 = vld [vmem:[#allocation4 + $0x6b0] sm:$0xff]
    %v303 = vld [vmem:[#allocation4 + $0x6b8] sm:$0xff]
    %v304 = vld [vmem:[#allocation4 + $0x6c0] sm:$0xff]
    %v305 = vld [vmem:[#allocation4 + $0x6c8] sm:$0xff]
    %v306 = vld [vmem:[#allocation4 + $0x6d0] sm:$0xff]
    %v307 = vld [vmem:[#allocation4 + $0x6d8] sm:$0xff]
    %v308 = vld [vmem:[#allocation4 + $0x6e0] sm:$0xff]
    %v309 = vld [vmem:[#allocation4 + $0x6e8] sm:$0xff]
    %v310 = vld [vmem:[#allocation4 + $0x6f0] sm:$0xff]
    %v311 = vld [vmem:[#allocation4 + $0x6f8] sm:$0xff]
    %v312 = vld [vmem:[#allocation4 + $0x700] sm:$0xff]
    %v313 = vld [vmem:[#allocation4 + $0x708] sm:$0xff]
    %v314 = vld [vmem:[#allocation4 + $0x710] sm:$0xff]
    %v315 = vld [vmem:[#allocation4 + $0x718] sm:$0xff]
    %v316 = vld [vmem:[#allocation4 + $0x720] sm:$0xff]
    %v317 = vld [vmem:[#allocation4 + $0x728] sm:$0xff]
    %v318 = vld [vmem:[#allocation4 + $0x730] sm:$0xff]
    %v319 = vld [vmem:[#allocation4 + $0x738] sm:$0xff]
    %v320 = vld [vmem:[#allocation4 + $0x740] sm:$0xff]
    %v321 = vld [vmem:[#allocation4 + $0x748] sm:$0xff]
    %v322 = vld [vmem:[#allocation4 + $0x750] sm:$0xff]
    %v323 = vld [vmem:[#allocation4 + $0x758] sm:$0xff]
    %v324 = vld [vmem:[#allocation4 + $0x760] sm:$0xff]
    %v325 = vld [vmem:[#allocation4 + $0x768] sm:$0xff]
    %v326 = vld [vmem:[#allocation4 + $0x770] sm:$0xff]
    %v327 = vld [vmem:[#allocation4 + $0x778] sm:$0xff]
    %v328 = vld [vmem:[#allocation4 + $0x780] sm:$0xff]
    %v329 = vld [vmem:[#allocation4 + $0x788] sm:$0xff]
    %v330 = vld [vmem:[#allocation4 + $0x790] sm:$0xff]
    %v331 = vld [vmem:[#allocation4 + $0x798] sm:$0xff]
    %v332 = vld [vmem:[#allocation4 + $0x7a0] sm:$0xff]
    %v333 = vld [vmem:[#allocation4 + $0x7a8] sm:$0xff]
    %v334 = vld [vmem:[#allocation4 + $0x7b0] sm:$0xff]
    %v335 = vld [vmem:[#allocation4 + $0x7b8] sm:$0xff]
    %v336 = vld [vmem:[#allocation4 + $0x7c0] sm:$0xff]
    %v337 = vld [vmem:[#allocation4 + $0x7c8] sm:$0xff]
    %v338 = vld [vmem:[#allocation4 + $0x7d0] sm:$0xff]
    %v339 = vld [vmem:[#allocation4 + $0x7d8] sm:$0xff]
    %v340 = vld [vmem:[#allocation4 + $0x7e0] sm:$0xff]
    %v341 = vld [vmem:[#allocation4 + $0x7e8] sm:$0xff]
    %v342 = vld [vmem:[#allocation4 + $0x7f0] sm:$0xff]
    %v343 = vld [vmem:[#allocation4 + $0x7f8] sm:$0xff]
    %v344 = vld [vmem:[#allocation4 + $0x800] sm:$0xff]
    %v345 = vld [vmem:[#allocation4 + $0x808] sm:$0xff]
    %v346 = vld [vmem:[#allocation4 + $0x810] sm:$0xff]
    %v347 = vld [vmem:[#allocation4 + $0x818] sm:$0xff]
    %v348 = vld [vmem:[#allocation4 + $0x820] sm:$0xff]
    %v349 = vld [vmem:[#allocation4 + $0x828] sm:$0xff]
    %v350 = vld [vmem:[#allocation4 + $0x830] sm:$0xff]
    %v351 = vld [vmem:[#allocation4 + $0x838] sm:$0xff]
    %v352 = vld [vmem:[#allocation4 + $0x840] sm:$0xff]
    %v353 = vld [vmem:[#allocation4 + $0x848] sm:$0xff]
    %v354 = vld [vmem:[#allocation4 + $0x850] sm:$0xff]
    %v355 = vld [vmem:[#allocation4 + $0x858] sm:$0xff]
    %v356 = vld [vmem:[#allocation4 + $0x860] sm:$0xff]
    %v357 = vld [vmem:[#allocation4 + $0x868] sm:$0xff]
    %v358 = vld [vmem:[#allocation4 + $0x870] sm:$0xff]
    %v359 = vld [vmem:[#allocation4 + $0x878] sm:$0xff]
    %v360 = vld [vmem:[#allocation4 + $0x880] sm:$0xff]
    %v361 = vld [vmem:[#allocation4 + $0x888] sm:$0xff]
    %v362 = vld [vmem:[#allocation4 + $0x890] sm:$0xff]
    %v363 = vld [vmem:[#allocation4 + $0x898] sm:$0xff]
    %v364 = vld [vmem:[#allocation4 + $0x8a0] sm:$0xff]
    %v365 = vld [vmem:[#allocation4 + $0x8a8] sm:$0xff]
    %v366 = vld [vmem:[#allocation4 + $0x8b0] sm:$0xff]
    %v367 = vld [vmem:[#allocation4 + $0x8b8] sm:$0xff]
    %v368 = vld [vmem:[#allocation4 + $0x8c0] sm:$0xff]
    %v369 = vld [vmem:[#allocation4 + $0x8c8] sm:$0xff]
    %v370 = vld [vmem:[#allocation4 + $0x8d0] sm:$0xff]
    %v371 = vld [vmem:[#allocation4 + $0x8d8] sm:$0xff]
    %v372 = vld [vmem:[#allocation4 + $0x8e0] sm:$0xff]
    %v373 = vld [vmem:[#allocation4 + $0x8e8] sm:$0xff]
    %v374 = vld [vmem:[#allocation4 + $0x8f0] sm:$0xff]
    %v375 = vld [vmem:[#allocation4 + $0x8f8] sm:$0xff]
    %v376 = vld [vmem:[#allocation7] sm:$0x3f]
    %v378 = vlaneseq
    %v379 = vshrl.u32 %v378, 7
    %v380 = vsub.s32 0, %v379
    %v381 = vrot.slane %v376, %v380
    %v382 = vlaneseq
    %v383 = vshrl.u32 %v382, 7
    %v384 = vsub.s32 1, %v383
    %v385 = vrot.slane %v376, %v384
    %v386 = vlaneseq
    %v387 = vshrl.u32 %v386, 7
    %v388 = vsub.s32 2, %v387
    %v389 = vrot.slane %v376, %v388
    %v390 = vlaneseq
    %v391 = vshrl.u32 %v390, 7
    %v392 = vsub.s32 3, %v391
    %v393 = vrot.slane %v376, %v392
    %v394 = vlaneseq
    %v395 = vshrl.u32 %v394, 7
    %v396 = vsub.s32 4, %v395
    %v397 = vrot.slane %v376, %v396
    %v398 = vlaneseq
    %v399 = vshrl.u32 %v398, 7
    %v400 = vsub.s32 5, %v399
    %v401 = vrot.slane %v376, %v400
    %v696 = vunpack.c.l.b16 %v88
    %v697 = vunpack.c.h.b16 %v88
    %v698 = vunpack.c.l.b16 %v89
    %v699 = vunpack.c.h.b16 %v89
    %v700 = vunpack.c.l.b16 %v90
    %v701 = vunpack.c.h.b16 %v90
    %v702 = vunpack.c.l.b16 %v91
    %v703 = vunpack.c.h.b16 %v91
    %v704 = vunpack.c.l.b16 %v92
    %v705 = vunpack.c.h.b16 %v92
    %v706 = vunpack.c.l.b16 %v93
    %v707 = vunpack.c.h.b16 %v93
    %v708 = vunpack.c.l.b16 %v94
    %v709 = vunpack.c.h.b16 %v94
    %v710 = vunpack.c.l.b16 %v95
    %v711 = vunpack.c.h.b16 %v95
    %v712 = vunpack.c.l.b16 %v96
    %v713 = vunpack.c.h.b16 %v96
    %v714 = vunpack.c.l.b16 %v97
    %v715 = vunpack.c.h.b16 %v97
    %v716 = vunpack.c.l.b16 %v98
    %v717 = vunpack.c.h.b16 %v98
    %v718 = vunpack.c.l.b16 %v99
    %v719 = vunpack.c.h.b16 %v99
    %v720 = vunpack.c.l.b16 %v100
    %v721 = vunpack.c.h.b16 %v100
    %v722 = vunpack.c.l.b16 %v101
    %v723 = vunpack.c.h.b16 %v101
    %v724 = vunpack.c.l.b16 %v102
    %v725 = vunpack.c.h.b16 %v102
    %v726 = vunpack.c.l.b16 %v103
    %v727 = vunpack.c.h.b16 %v103
    %v728 = vunpack.c.l.b16 %v104
    %v729 = vunpack.c.h.b16 %v104
    %v730 = vunpack.c.l.b16 %v105
    %v731 = vunpack.c.h.b16 %v105
    %v732 = vunpack.c.l.b16 %v106
    %v733 = vunpack.c.h.b16 %v106
    %v734 = vunpack.c.l.b16 %v107
    %v735 = vunpack.c.h.b16 %v107
    %v736 = vunpack.c.l.b16 %v108
    %v737 = vunpack.c.h.b16 %v108
    %v738 = vunpack.c.l.b16 %v109
    %v739 = vunpack.c.h.b16 %v109
    %v740 = vunpack.c.l.b16 %v110
    %v741 = vunpack.c.h.b16 %v110
    %v742 = vunpack.c.l.b16 %v111
    %v743 = vunpack.c.h.b16 %v111
    %v744 = vunpack.c.l.b16 %v112
    %v745 = vunpack.c.h.b16 %v112
    %v746 = vunpack.c.l.b16 %v113
    %v747 = vunpack.c.h.b16 %v113
    %v748 = vunpack.c.l.b16 %v114
    %v749 = vunpack.c.h.b16 %v114
    %v750 = vunpack.c.l.b16 %v115
    %v751 = vunpack.c.h.b16 %v115
    %v752 = vunpack.c.l.b16 %v116
    %v753 = vunpack.c.h.b16 %v116
    %v754 = vunpack.c.l.b16 %v117
    %v755 = vunpack.c.h.b16 %v117
    %v756 = vunpack.c.l.b16 %v118
    %v757 = vunpack.c.h.b16 %v118
    %v758 = vunpack.c.l.b16 %v119
    %v759 = vunpack.c.h.b16 %v119
    %v760 = vunpack.c.l.b16 %v120
    %v761 = vunpack.c.h.b16 %v120
    %v762 = vunpack.c.l.b16 %v121
    %v763 = vunpack.c.h.b16 %v121
    %v764 = vunpack.c.l.b16 %v122
    %v765 = vunpack.c.h.b16 %v122
    %v766 = vunpack.c.l.b16 %v123
    %v767 = vunpack.c.h.b16 %v123
    %v768 = vunpack.c.l.b16 %v124
    %v769 = vunpack.c.h.b16 %v124
    %v770 = vunpack.c.l.b16 %v125
    %v771 = vunpack.c.h.b16 %v125
    %v772 = vunpack.c.l.b16 %v126
    %v773 = vunpack.c.h.b16 %v126
    %v774 = vunpack.c.l.b16 %v127
    %v775 = vunpack.c.h.b16 %v127
    %v776 = vunpack.c.l.b16 %v128
    %v777 = vunpack.c.h.b16 %v128
    %v778 = vunpack.c.l.b16 %v129
    %v779 = vunpack.c.h.b16 %v129
    %v780 = vunpack.c.l.b16 %v130
    %v781 = vunpack.c.h.b16 %v130
    %v782 = vunpack.c.l.b16 %v131
    %v783 = vunpack.c.h.b16 %v131
    %v784 = vunpack.c.l.b16 %v132
    %v785 = vunpack.c.h.b16 %v132
    %v786 = vunpack.c.l.b16 %v133
    %v787 = vunpack.c.h.b16 %v133
    %v788 = vunpack.c.l.b16 %v134
    %v789 = vunpack.c.h.b16 %v134
    %v790 = vunpack.c.l.b16 %v135
    %v791 = vunpack.c.h.b16 %v135
    %v792 = vunpack.c.l.b16 %v136
    %v793 = vunpack.c.h.b16 %v136
    %v794 = vunpack.c.l.b16 %v137
    %v795 = vunpack.c.h.b16 %v137
    %v796 = vunpack.c.l.b16 %v138
    %v797 = vunpack.c.h.b16 %v138
    %v798 = vunpack.c.l.b16 %v139
    %v799 = vunpack.c.h.b16 %v139
    %v800 = vunpack.c.l.b16 %v140
    %v801 = vunpack.c.h.b16 %v140
    %v802 = vunpack.c.l.b16 %v141
    %v803 = vunpack.c.h.b16 %v141
    %v804 = vunpack.c.l.b16 %v142
    %v805 = vunpack.c.h.b16 %v142
    %v806 = vunpack.c.l.b16 %v143
    %v807 = vunpack.c.h.b16 %v143
    %v808 = vunpack.c.l.b16 %v144
    %v809 = vunpack.c.h.b16 %v144
    %v810 = vunpack.c.l.b16 %v145
    %v811 = vunpack.c.h.b16 %v145
    %v812 = vunpack.c.l.b16 %v146
    %v813 = vunpack.c.h.b16 %v146
    %v814 = vunpack.c.l.b16 %v147
    %v815 = vunpack.c.h.b16 %v147
    %v816 = vunpack.c.l.b16 %v148
    %v817 = vunpack.c.h.b16 %v148
    %v818 = vunpack.c.l.b16 %v149
    %v819 = vunpack.c.h.b16 %v149
    %v820 = vunpack.c.l.b16 %v150
    %v821 = vunpack.c.h.b16 %v150
    %v822 = vunpack.c.l.b16 %v151
    %v823 = vunpack.c.h.b16 %v151
    %v824 = vunpack.c.l.b16 %v152
    %v825 = vunpack.c.h.b16 %v152
    %v826 = vunpack.c.l.b16 %v153
    %v827 = vunpack.c.h.b16 %v153
    %v828 = vunpack.c.l.b16 %v154
    %v829 = vunpack.c.h.b16 %v154
    %v830 = vunpack.c.l.b16 %v155
    %v831 = vunpack.c.h.b16 %v155
    %v832 = vunpack.c.l.b16 %v156
    %v833 = vunpack.c.h.b16 %v156
    %v834 = vunpack.c.l.b16 %v157
    %v835 = vunpack.c.h.b16 %v157
    %v836 = vunpack.c.l.b16 %v158
    %v837 = vunpack.c.h.b16 %v158
    %v838 = vunpack.c.l.b16 %v159
    %v839 = vunpack.c.h.b16 %v159
    %v840 = vunpack.c.l.b16 %v160
    %v841 = vunpack.c.h.b16 %v160
    %v842 = vunpack.c.l.b16 %v161
    %v843 = vunpack.c.h.b16 %v161
    %v844 = vunpack.c.l.b16 %v162
    %v845 = vunpack.c.h.b16 %v162
    %v846 = vunpack.c.l.b16 %v163
    %v847 = vunpack.c.h.b16 %v163
    %v848 = vunpack.c.l.b16 %v164
    %v849 = vunpack.c.h.b16 %v164
    %v850 = vunpack.c.l.b16 %v165
    %v851 = vunpack.c.h.b16 %v165
    %v852 = vunpack.c.l.b16 %v166
    %v853 = vunpack.c.h.b16 %v166
    %v854 = vunpack.c.l.b16 %v167
    %v855 = vunpack.c.h.b16 %v167
    %v856 = vunpack.c.l.b16 %v168
    %v857 = vunpack.c.h.b16 %v168
    %v858 = vunpack.c.l.b16 %v169
    %v859 = vunpack.c.h.b16 %v169
    %v860 = vunpack.c.l.b16 %v170
    %v861 = vunpack.c.h.b16 %v170
    %v862 = vunpack.c.l.b16 %v171
    %v863 = vunpack.c.h.b16 %v171
    %v864 = vunpack.c.l.b16 %v172
    %v865 = vunpack.c.h.b16 %v172
    %v866 = vunpack.c.l.b16 %v173
    %v867 = vunpack.c.h.b16 %v173
    %v868 = vunpack.c.l.b16 %v174
    %v869 = vunpack.c.h.b16 %v174
    %v870 = vunpack.c.l.b16 %v175
    %v871 = vunpack.c.h.b16 %v175
    %v872 = vunpack.c.l.b16 %v176
    %v873 = vunpack.c.h.b16 %v176
    %v874 = vunpack.c.l.b16 %v177
    %v875 = vunpack.c.h.b16 %v177
    %v876 = vunpack.c.l.b16 %v178
    %v877 = vunpack.c.h.b16 %v178
    %v878 = vunpack.c.l.b16 %v179
    %v879 = vunpack.c.h.b16 %v179
    %v880 = vunpack.c.l.b16 %v180
    %v881 = vunpack.c.h.b16 %v180
    %v882 = vunpack.c.l.b16 %v181
    %v883 = vunpack.c.h.b16 %v181
    %v884 = vunpack.c.l.b16 %v182
    %v885 = vunpack.c.h.b16 %v182
    %v886 = vunpack.c.l.b16 %v183
    %v887 = vunpack.c.h.b16 %v183
    %v888 = vunpack.c.l.b16 %v184
    %v889 = vunpack.c.h.b16 %v184
    %v890 = vunpack.c.l.b16 %v185
    %v891 = vunpack.c.h.b16 %v185
    %v892 = vunpack.c.l.b16 %v186
    %v893 = vunpack.c.h.b16 %v186
    %v894 = vunpack.c.l.b16 %v187
    %v895 = vunpack.c.h.b16 %v187
    %v896 = vunpack.c.l.b16 %v188
    %v897 = vunpack.c.h.b16 %v188
    %v898 = vunpack.c.l.b16 %v189
    %v899 = vunpack.c.h.b16 %v189
    %v900 = vunpack.c.l.b16 %v190
    %v901 = vunpack.c.h.b16 %v190
    %v902 = vunpack.c.l.b16 %v191
    %v903 = vunpack.c.h.b16 %v191
    %v904 = vunpack.c.l.b16 %v192
    %v905 = vunpack.c.h.b16 %v192
    %v906 = vunpack.c.l.b16 %v193
    %v907 = vunpack.c.h.b16 %v193
    %v908 = vunpack.c.l.b16 %v194
    %v909 = vunpack.c.h.b16 %v194
    %v910 = vunpack.c.l.b16 %v195
    %v911 = vunpack.c.h.b16 %v195
    %v912 = vunpack.c.l.b16 %v196
    %v913 = vunpack.c.h.b16 %v196
    %v914 = vunpack.c.l.b16 %v197
    %v915 = vunpack.c.h.b16 %v197
    %v916 = vunpack.c.l.b16 %v198
    %v917 = vunpack.c.h.b16 %v198
    %v918 = vunpack.c.l.b16 %v199
    %v919 = vunpack.c.h.b16 %v199
    %v920 = vunpack.c.l.b16 %v200
    %v921 = vunpack.c.h.b16 %v200
    %v922 = vunpack.c.l.b16 %v201
    %v923 = vunpack.c.h.b16 %v201
    %v924 = vunpack.c.l.b16 %v202
    %v925 = vunpack.c.h.b16 %v202
    %v926 = vunpack.c.l.b16 %v203
    %v927 = vunpack.c.h.b16 %v203
    %v928 = vunpack.c.l.b16 %v204
    %v929 = vunpack.c.h.b16 %v204
    %v930 = vunpack.c.l.b16 %v205
    %v931 = vunpack.c.h.b16 %v205
    %v932 = vunpack.c.l.b16 %v206
    %v933 = vunpack.c.h.b16 %v206
    %v934 = vunpack.c.l.b16 %v207
    %v935 = vunpack.c.h.b16 %v207
    %v936 = vunpack.c.l.b16 %v208
    %v937 = vunpack.c.h.b16 %v208
    %v938 = vunpack.c.l.b16 %v209
    %v939 = vunpack.c.h.b16 %v209
    %v940 = vunpack.c.l.b16 %v210
    %v941 = vunpack.c.h.b16 %v210
    %v942 = vunpack.c.l.b16 %v211
    %v943 = vunpack.c.h.b16 %v211
    %v944 = vunpack.c.l.b16 %v212
    %v945 = vunpack.c.h.b16 %v212
    %v946 = vunpack.c.l.b16 %v213
    %v947 = vunpack.c.h.b16 %v213
    %v948 = vunpack.c.l.b16 %v214
    %v949 = vunpack.c.h.b16 %v214
    %v950 = vunpack.c.l.b16 %v215
    %v951 = vunpack.c.h.b16 %v215
    %v952 = vunpack.c.l.b16 %v216
    %v953 = vunpack.c.h.b16 %v216
    %v954 = vunpack.c.l.b16 %v217
    %v955 = vunpack.c.h.b16 %v217
    %v956 = vunpack.c.l.b16 %v218
    %v957 = vunpack.c.h.b16 %v218
    %v958 = vunpack.c.l.b16 %v219
    %v959 = vunpack.c.h.b16 %v219
    %v960 = vunpack.c.l.b16 %v220
    %v961 = vunpack.c.h.b16 %v220
    %v962 = vunpack.c.l.b16 %v221
    %v963 = vunpack.c.h.b16 %v221
    %v964 = vunpack.c.l.b16 %v222
    %v965 = vunpack.c.h.b16 %v222
    %v966 = vunpack.c.l.b16 %v223
    %v967 = vunpack.c.h.b16 %v223
    %v968 = vunpack.c.l.b16 %v224
    %v969 = vunpack.c.h.b16 %v224
    %v970 = vunpack.c.l.b16 %v225
    %v971 = vunpack.c.h.b16 %v225
    %v972 = vunpack.c.l.b16 %v226
    %v973 = vunpack.c.h.b16 %v226
    %v974 = vunpack.c.l.b16 %v227
    %v975 = vunpack.c.h.b16 %v227
    %v976 = vunpack.c.l.b16 %v228
    %v977 = vunpack.c.h.b16 %v228
    %v978 = vunpack.c.l.b16 %v229
    %v979 = vunpack.c.h.b16 %v229
    %v980 = vunpack.c.l.b16 %v230
    %v981 = vunpack.c.h.b16 %v230
    %v982 = vunpack.c.l.b16 %v231
    %v983 = vunpack.c.h.b16 %v231
    %v984 = vunpack.c.l.b16 %v232
    %v985 = vunpack.c.h.b16 %v232
    %v986 = vunpack.c.l.b16 %v233
    %v987 = vunpack.c.h.b16 %v233
    %v988 = vunpack.c.l.b16 %v234
    %v989 = vunpack.c.h.b16 %v234
    %v990 = vunpack.c.l.b16 %v235
    %v991 = vunpack.c.h.b16 %v235
    %v992 = vunpack.c.l.b16 %v236
    %v993 = vunpack.c.h.b16 %v236
    %v994 = vunpack.c.l.b16 %v237
    %v995 = vunpack.c.h.b16 %v237
    %v996 = vunpack.c.l.b16 %v238
    %v997 = vunpack.c.h.b16 %v238
    %v998 = vunpack.c.l.b16 %v239
    %v999 = vunpack.c.h.b16 %v239
    %v1000 = vunpack.c.l.b16 %v240
    %v1001 = vunpack.c.h.b16 %v240
    %v1002 = vunpack.c.l.b16 %v241
    %v1003 = vunpack.c.h.b16 %v241
    %v1004 = vunpack.c.l.b16 %v242
    %v1005 = vunpack.c.h.b16 %v242
    %v1006 = vunpack.c.l.b16 %v243
    %v1007 = vunpack.c.h.b16 %v243
    %v1008 = vunpack.c.l.b16 %v244
    %v1009 = vunpack.c.h.b16 %v244
    %v1010 = vunpack.c.l.b16 %v245
    %v1011 = vunpack.c.h.b16 %v245
    %v1012 = vunpack.c.l.b16 %v246
    %v1013 = vunpack.c.h.b16 %v246
    %v1014 = vunpack.c.l.b16 %v247
    %v1015 = vunpack.c.h.b16 %v247
    %v1016 = vunpack.c.l.b16 %v248
    %v1017 = vunpack.c.h.b16 %v248
    %v1018 = vunpack.c.l.b16 %v249
    %v1019 = vunpack.c.h.b16 %v249
    %v1020 = vunpack.c.l.b16 %v250
    %v1021 = vunpack.c.h.b16 %v250
    %v1022 = vunpack.c.l.b16 %v251
    %v1023 = vunpack.c.h.b16 %v251
    %v1024 = vunpack.c.l.b16 %v252
    %v1025 = vunpack.c.h.b16 %v252
    %v1026 = vunpack.c.l.b16 %v253
    %v1027 = vunpack.c.h.b16 %v253
    %v1028 = vunpack.c.l.b16 %v254
    %v1029 = vunpack.c.h.b16 %v254
    %v1030 = vunpack.c.l.b16 %v255
    %v1031 = vunpack.c.h.b16 %v255
    %v1032 = vunpack.c.l.b16 %v256
    %v1033 = vunpack.c.h.b16 %v256
    %v1034 = vunpack.c.l.b16 %v257
    %v1035 = vunpack.c.h.b16 %v257
    %v1036 = vunpack.c.l.b16 %v258
    %v1037 = vunpack.c.h.b16 %v258
    %v1038 = vunpack.c.l.b16 %v259
    %v1039 = vunpack.c.h.b16 %v259
    %v1040 = vunpack.c.l.b16 %v260
    %v1041 = vunpack.c.h.b16 %v260
    %v1042 = vunpack.c.l.b16 %v261
    %v1043 = vunpack.c.h.b16 %v261
    %v1044 = vunpack.c.l.b16 %v262
    %v1045 = vunpack.c.h.b16 %v262
    %v1046 = vunpack.c.l.b16 %v263
    %v1047 = vunpack.c.h.b16 %v263
    %v1048 = vunpack.c.l.b16 %v264
    %v1049 = vunpack.c.h.b16 %v264
    %v1050 = vunpack.c.l.b16 %v265
    %v1051 = vunpack.c.h.b16 %v265
    %v1052 = vunpack.c.l.b16 %v266
    %v1053 = vunpack.c.h.b16 %v266
    %v1054 = vunpack.c.l.b16 %v267
    %v1055 = vunpack.c.h.b16 %v267
    %v1056 = vunpack.c.l.b16 %v268
    %v1057 = vunpack.c.h.b16 %v268
    %v1058 = vunpack.c.l.b16 %v269
    %v1059 = vunpack.c.h.b16 %v269
    %v1060 = vunpack.c.l.b16 %v270
    %v1061 = vunpack.c.h.b16 %v270
    %v1062 = vunpack.c.l.b16 %v271
    %v1063 = vunpack.c.h.b16 %v271
    %v1064 = vunpack.c.l.b16 %v272
    %v1065 = vunpack.c.h.b16 %v272
    %v1066 = vunpack.c.l.b16 %v273
    %v1067 = vunpack.c.h.b16 %v273
    %v1068 = vunpack.c.l.b16 %v274
    %v1069 = vunpack.c.h.b16 %v274
    %v1070 = vunpack.c.l.b16 %v275
    %v1071 = vunpack.c.h.b16 %v275
    %v1072 = vunpack.c.l.b16 %v276
    %v1073 = vunpack.c.h.b16 %v276
    %v1074 = vunpack.c.l.b16 %v277
    %v1075 = vunpack.c.h.b16 %v277
    %v1076 = vunpack.c.l.b16 %v278
    %v1077 = vunpack.c.h.b16 %v278
    %v1078 = vunpack.c.l.b16 %v279
    %v1079 = vunpack.c.h.b16 %v279
    %v1080 = vunpack.c.l.b16 %v280
    %v1081 = vunpack.c.h.b16 %v280
    %v1082 = vunpack.c.l.b16 %v281
    %v1083 = vunpack.c.h.b16 %v281
    %v1084 = vunpack.c.l.b16 %v282
    %v1085 = vunpack.c.h.b16 %v282
    %v1086 = vunpack.c.l.b16 %v283
    %v1087 = vunpack.c.h.b16 %v283
    %v1088 = vunpack.c.l.b16 %v284
    %v1089 = vunpack.c.h.b16 %v284
    %v1090 = vunpack.c.l.b16 %v285
    %v1091 = vunpack.c.h.b16 %v285
    %v1092 = vunpack.c.l.b16 %v286
    %v1093 = vunpack.c.h.b16 %v286
    %v1094 = vunpack.c.l.b16 %v287
    %v1095 = vunpack.c.h.b16 %v287
    %v1096 = vunpack.c.l.b16 %v288
    %v1097 = vunpack.c.h.b16 %v288
    %v1098 = vunpack.c.l.b16 %v289
    %v1099 = vunpack.c.h.b16 %v289
    %v1100 = vunpack.c.l.b16 %v290
    %v1101 = vunpack.c.h.b16 %v290
    %v1102 = vunpack.c.l.b16 %v291
    %v1103 = vunpack.c.h.b16 %v291
    %v1104 = vunpack.c.l.b16 %v292
    %v1105 = vunpack.c.h.b16 %v292
    %v1106 = vunpack.c.l.b16 %v293
    %v1107 = vunpack.c.h.b16 %v293
    %v1108 = vunpack.c.l.b16 %v294
    %v1109 = vunpack.c.h.b16 %v294
    %v1110 = vunpack.c.l.b16 %v295
    %v1111 = vunpack.c.h.b16 %v295
    %v1112 = vunpack.c.l.b16 %v296
    %v1113 = vunpack.c.h.b16 %v296
    %v1114 = vunpack.c.l.b16 %v297
    %v1115 = vunpack.c.h.b16 %v297
    %v1116 = vunpack.c.l.b16 %v298
    %v1117 = vunpack.c.h.b16 %v298
    %v1118 = vunpack.c.l.b16 %v299
    %v1119 = vunpack.c.h.b16 %v299
    %v1120 = vunpack.c.l.b16 %v300
    %v1121 = vunpack.c.h.b16 %v300
    %v1122 = vunpack.c.l.b16 %v301
    %v1123 = vunpack.c.h.b16 %v301
    %v1124 = vunpack.c.l.b16 %v302
    %v1125 = vunpack.c.h.b16 %v302
    %v1126 = vunpack.c.l.b16 %v303
    %v1127 = vunpack.c.h.b16 %v303
    %v1128 = vunpack.c.l.b16 %v304
    %v1129 = vunpack.c.h.b16 %v304
    %v1130 = vunpack.c.l.b16 %v305
    %v1131 = vunpack.c.h.b16 %v305
    %v1132 = vunpack.c.l.b16 %v306
    %v1133 = vunpack.c.h.b16 %v306
    %v1134 = vunpack.c.l.b16 %v307
    %v1135 = vunpack.c.h.b16 %v307
    %v1136 = vunpack.c.l.b16 %v308
    %v1137 = vunpack.c.h.b16 %v308
    %v1138 = vunpack.c.l.b16 %v309
    %v1139 = vunpack.c.h.b16 %v309
    %v1140 = vunpack.c.l.b16 %v310
    %v1141 = vunpack.c.h.b16 %v310
    %v1142 = vunpack.c.l.b16 %v311
    %v1143 = vunpack.c.h.b16 %v311
    %v1144 = vunpack.c.l.b16 %v312
    %v1145 = vunpack.c.h.b16 %v312
    %v1146 = vunpack.c.l.b16 %v313
    %v1147 = vunpack.c.h.b16 %v313
    %v1148 = vunpack.c.l.b16 %v314
    %v1149 = vunpack.c.h.b16 %v314
    %v1150 = vunpack.c.l.b16 %v315
    %v1151 = vunpack.c.h.b16 %v315
    %v1152 = vunpack.c.l.b16 %v316
    %v1153 = vunpack.c.h.b16 %v316
    %v1154 = vunpack.c.l.b16 %v317
    %v1155 = vunpack.c.h.b16 %v317
    %v1156 = vunpack.c.l.b16 %v318
    %v1157 = vunpack.c.h.b16 %v318
    %v1158 = vunpack.c.l.b16 %v319
    %v1159 = vunpack.c.h.b16 %v319
    %v1160 = vunpack.c.l.b16 %v320
    %v1161 = vunpack.c.h.b16 %v320
    %v1162 = vunpack.c.l.b16 %v321
    %v1163 = vunpack.c.h.b16 %v321
    %v1164 = vunpack.c.l.b16 %v322
    %v1165 = vunpack.c.h.b16 %v322
    %v1166 = vunpack.c.l.b16 %v323
    %v1167 = vunpack.c.h.b16 %v323
    %v1168 = vunpack.c.l.b16 %v324
    %v1169 = vunpack.c.h.b16 %v324
    %v1170 = vunpack.c.l.b16 %v325
    %v1171 = vunpack.c.h.b16 %v325
    %v1172 = vunpack.c.l.b16 %v326
    %v1173 = vunpack.c.h.b16 %v326
    %v1174 = vunpack.c.l.b16 %v327
    %v1175 = vunpack.c.h.b16 %v327
    %v1176 = vunpack.c.l.b16 %v328
    %v1177 = vunpack.c.h.b16 %v328
    %v1178 = vunpack.c.l.b16 %v329
    %v1179 = vunpack.c.h.b16 %v329
    %v1180 = vunpack.c.l.b16 %v330
    %v1181 = vunpack.c.h.b16 %v330
    %v1182 = vunpack.c.l.b16 %v331
    %v1183 = vunpack.c.h.b16 %v331
    %v1184 = vunpack.c.l.b16 %v332
    %v1185 = vunpack.c.h.b16 %v332
    %v1186 = vunpack.c.l.b16 %v333
    %v1187 = vunpack.c.h.b16 %v333
    %v1188 = vunpack.c.l.b16 %v334
    %v1189 = vunpack.c.h.b16 %v334
    %v1190 = vunpack.c.l.b16 %v335
    %v1191 = vunpack.c.h.b16 %v335
    %v1192 = vunpack.c.l.b16 %v336
    %v1193 = vunpack.c.h.b16 %v336
    %v1194 = vunpack.c.l.b16 %v337
    %v1195 = vunpack.c.h.b16 %v337
    %v1196 = vunpack.c.l.b16 %v338
    %v1197 = vunpack.c.h.b16 %v338
    %v1198 = vunpack.c.l.b16 %v339
    %v1199 = vunpack.c.h.b16 %v339
    %v1200 = vunpack.c.l.b16 %v340
    %v1201 = vunpack.c.h.b16 %v340
    %v1202 = vunpack.c.l.b16 %v341
    %v1203 = vunpack.c.h.b16 %v341
    %v1204 = vunpack.c.l.b16 %v342
    %v1205 = vunpack.c.h.b16 %v342
    %v1206 = vunpack.c.l.b16 %v343
    %v1207 = vunpack.c.h.b16 %v343
    %v1208 = vunpack.c.l.b16 %v344
    %v1209 = vunpack.c.h.b16 %v344
    %v1210 = vunpack.c.l.b16 %v345
    %v1211 = vunpack.c.h.b16 %v345
    %v1212 = vunpack.c.l.b16 %v346
    %v1213 = vunpack.c.h.b16 %v346
    %v1214 = vunpack.c.l.b16 %v347
    %v1215 = vunpack.c.h.b16 %v347
    %v1216 = vunpack.c.l.b16 %v348
    %v1217 = vunpack.c.h.b16 %v348
    %v1218 = vunpack.c.l.b16 %v349
    %v1219 = vunpack.c.h.b16 %v349
    %v1220 = vunpack.c.l.b16 %v350
    %v1221 = vunpack.c.h.b16 %v350
    %v1222 = vunpack.c.l.b16 %v351
    %v1223 = vunpack.c.h.b16 %v351
    %v1224 = vunpack.c.l.b16 %v352
    %v1225 = vunpack.c.h.b16 %v352
    %v1226 = vunpack.c.l.b16 %v353
    %v1227 = vunpack.c.h.b16 %v353
    %v1228 = vunpack.c.l.b16 %v354
    %v1229 = vunpack.c.h.b16 %v354
    %v1230 = vunpack.c.l.b16 %v355
    %v1231 = vunpack.c.h.b16 %v355
    %v1232 = vunpack.c.l.b16 %v356
    %v1233 = vunpack.c.h.b16 %v356
    %v1234 = vunpack.c.l.b16 %v357
    %v1235 = vunpack.c.h.b16 %v357
    %v1236 = vunpack.c.l.b16 %v358
    %v1237 = vunpack.c.h.b16 %v358
    %v1238 = vunpack.c.l.b16 %v359
    %v1239 = vunpack.c.h.b16 %v359
    %v1240 = vunpack.c.l.b16 %v360
    %v1241 = vunpack.c.h.b16 %v360
    %v1242 = vunpack.c.l.b16 %v361
    %v1243 = vunpack.c.h.b16 %v361
    %v1244 = vunpack.c.l.b16 %v362
    %v1245 = vunpack.c.h.b16 %v362
    %v1246 = vunpack.c.l.b16 %v363
    %v1247 = vunpack.c.h.b16 %v363
    %v1248 = vunpack.c.l.b16 %v364
    %v1249 = vunpack.c.h.b16 %v364
    %v1250 = vunpack.c.l.b16 %v365
    %v1251 = vunpack.c.h.b16 %v365
    %v1252 = vunpack.c.l.b16 %v366
    %v1253 = vunpack.c.h.b16 %v366
    %v1254 = vunpack.c.l.b16 %v367
    %v1255 = vunpack.c.h.b16 %v367
    %v1256 = vunpack.c.l.b16 %v368
    %v1257 = vunpack.c.h.b16 %v368
    %v1258 = vunpack.c.l.b16 %v369
    %v1259 = vunpack.c.h.b16 %v369
    %v1260 = vunpack.c.l.b16 %v370
    %v1261 = vunpack.c.h.b16 %v370
    %v1262 = vunpack.c.l.b16 %v371
    %v1263 = vunpack.c.h.b16 %v371
    %v1264 = vunpack.c.l.b16 %v372
    %v1265 = vunpack.c.h.b16 %v372
    %v1266 = vunpack.c.l.b16 %v373
    %v1267 = vunpack.c.h.b16 %v373
    %v1268 = vunpack.c.l.b16 %v374
    %v1269 = vunpack.c.h.b16 %v374
    %v1270 = vunpack.c.l.b16 %v375
    %v1271 = vunpack.c.h.b16 %v375
    %v1272 = vpack.c.b16 %v702, %v696
    %v1273 = vpack.c.b16 %v703, %v697
    %v1274 = vpack.c.b16 %v704, %v698
    %v1275 = vpack.c.b16 %v705, %v699
    %v1276 = vpack.c.b16 %v706, %v700
    %v1277 = vpack.c.b16 %v707, %v701
    %v1278 = vpack.c.b16 %v714, %v708
    %v1279 = vpack.c.b16 %v715, %v709
    %v1280 = vpack.c.b16 %v716, %v710
    %v1281 = vpack.c.b16 %v717, %v711
    %v1282 = vpack.c.b16 %v718, %v712
    %v1283 = vpack.c.b16 %v719, %v713
    %v1284 = vpack.c.b16 %v726, %v720
    %v1285 = vpack.c.b16 %v727, %v721
    %v1286 = vpack.c.b16 %v728, %v722
    %v1287 = vpack.c.b16 %v729, %v723
    %v1288 = vpack.c.b16 %v730, %v724
    %v1289 = vpack.c.b16 %v731, %v725
    %v1290 = vpack.c.b16 %v738, %v732
    %v1291 = vpack.c.b16 %v739, %v733
    %v1292 = vpack.c.b16 %v740, %v734
    %v1293 = vpack.c.b16 %v741, %v735
    %v1294 = vpack.c.b16 %v742, %v736
    %v1295 = vpack.c.b16 %v743, %v737
    %v1296 = vpack.c.b16 %v750, %v744
    %v1297 = vpack.c.b16 %v751, %v745
    %v1298 = vpack.c.b16 %v752, %v746
    %v1299 = vpack.c.b16 %v753, %v747
    %v1300 = vpack.c.b16 %v754, %v748
    %v1301 = vpack.c.b16 %v755, %v749
    %v1302 = vpack.c.b16 %v762, %v756
    %v1303 = vpack.c.b16 %v763, %v757
    %v1304 = vpack.c.b16 %v764, %v758
    %v1305 = vpack.c.b16 %v765, %v759
    %v1306 = vpack.c.b16 %v766, %v760
    %v1307 = vpack.c.b16 %v767, %v761
    %v1308 = vpack.c.b16 %v774, %v768
    %v1309 = vpack.c.b16 %v775, %v769
    %v1310 = vpack.c.b16 %v776, %v770
    %v1311 = vpack.c.b16 %v777, %v771
    %v1312 = vpack.c.b16 %v778, %v772
    %v1313 = vpack.c.b16 %v779, %v773
    %v1314 = vpack.c.b16 %v786, %v780
    %v1315 = vpack.c.b16 %v787, %v781
    %v1316 = vpack.c.b16 %v788, %v782
    %v1317 = vpack.c.b16 %v789, %v783
    %v1318 = vpack.c.b16 %v790, %v784
    %v1319 = vpack.c.b16 %v791, %v785
    %v1320 = vpack.c.b16 %v798, %v792
    %v1321 = vpack.c.b16 %v799, %v793
    %v1322 = vpack.c.b16 %v800, %v794
    %v1323 = vpack.c.b16 %v801, %v795
    %v1324 = vpack.c.b16 %v802, %v796
    %v1325 = vpack.c.b16 %v803, %v797
    %v1326 = vpack.c.b16 %v810, %v804
    %v1327 = vpack.c.b16 %v811, %v805
    %v1328 = vpack.c.b16 %v812, %v806
    %v1329 = vpack.c.b16 %v813, %v807
    %v1330 = vpack.c.b16 %v814, %v808
    %v1331 = vpack.c.b16 %v815, %v809
    %v1332 = vpack.c.b16 %v822, %v816
    %v1333 = vpack.c.b16 %v823, %v817
    %v1334 = vpack.c.b16 %v824, %v818
    %v1335 = vpack.c.b16 %v825, %v819
    %v1336 = vpack.c.b16 %v826, %v820
    %v1337 = vpack.c.b16 %v827, %v821
    %v1338 = vpack.c.b16 %v834, %v828
    %v1339 = vpack.c.b16 %v835, %v829
    %v1340 = vpack.c.b16 %v836, %v830
    %v1341 = vpack.c.b16 %v837, %v831
    %v1342 = vpack.c.b16 %v838, %v832
    %v1343 = vpack.c.b16 %v839, %v833
    %v1344 = vpack.c.b16 %v846, %v840
    %v1345 = vpack.c.b16 %v847, %v841
    %v1346 = vpack.c.b16 %v848, %v842
    %v1347 = vpack.c.b16 %v849, %v843
    %v1348 = vpack.c.b16 %v850, %v844
    %v1349 = vpack.c.b16 %v851, %v845
    %v1350 = vpack.c.b16 %v858, %v852
    %v1351 = vpack.c.b16 %v859, %v853
    %v1352 = vpack.c.b16 %v860, %v854
    %v1353 = vpack.c.b16 %v861, %v855
    %v1354 = vpack.c.b16 %v862, %v856
    %v1355 = vpack.c.b16 %v863, %v857
    %v1356 = vpack.c.b16 %v870, %v864
    %v1357 = vpack.c.b16 %v871, %v865
    %v1358 = vpack.c.b16 %v872, %v866
    %v1359 = vpack.c.b16 %v873, %v867
    %v1360 = vpack.c.b16 %v874, %v868
    %v1361 = vpack.c.b16 %v875, %v869
    %v1362 = vpack.c.b16 %v882, %v876
    %v1363 = vpack.c.b16 %v883, %v877
    %v1364 = vpack.c.b16 %v884, %v878
    %v1365 = vpack.c.b16 %v885, %v879
    %v1366 = vpack.c.b16 %v886, %v880
    %v1367 = vpack.c.b16 %v887, %v881
    %v1368 = vpack.c.b16 %v894, %v888
    %v1369 = vpack.c.b16 %v895, %v889
    %v1370 = vpack.c.b16 %v896, %v890
    %v1371 = vpack.c.b16 %v897, %v891
    %v1372 = vpack.c.b16 %v898, %v892
    %v1373 = vpack.c.b16 %v899, %v893
    %v1374 = vpack.c.b16 %v906, %v900
    %v1375 = vpack.c.b16 %v907, %v901
    %v1376 = vpack.c.b16 %v908, %v902
    %v1377 = vpack.c.b16 %v909, %v903
    %v1378 = vpack.c.b16 %v910, %v904
    %v1379 = vpack.c.b16 %v911, %v905
    %v1380 = vpack.c.b16 %v918, %v912
    %v1381 = vpack.c.b16 %v919, %v913
    %v1382 = vpack.c.b16 %v920, %v914
    %v1383 = vpack.c.b16 %v921, %v915
    %v1384 = vpack.c.b16 %v922, %v916
    %v1385 = vpack.c.b16 %v923, %v917
    %v1386 = vpack.c.b16 %v930, %v924
    %v1387 = vpack.c.b16 %v931, %v925
    %v1388 = vpack.c.b16 %v932, %v926
    %v1389 = vpack.c.b16 %v933, %v927
    %v1390 = vpack.c.b16 %v934, %v928
    %v1391 = vpack.c.b16 %v935, %v929
    %v1392 = vpack.c.b16 %v942, %v936
    %v1393 = vpack.c.b16 %v943, %v937
    %v1394 = vpack.c.b16 %v944, %v938
    %v1395 = vpack.c.b16 %v945, %v939
    %v1396 = vpack.c.b16 %v946, %v940
    %v1397 = vpack.c.b16 %v947, %v941
    %v1398 = vpack.c.b16 %v954, %v948
    %v1399 = vpack.c.b16 %v955, %v949
    %v1400 = vpack.c.b16 %v956, %v950
    %v1401 = vpack.c.b16 %v957, %v951
    %v1402 = vpack.c.b16 %v958, %v952
    %v1403 = vpack.c.b16 %v959, %v953
    %v1404 = vpack.c.b16 %v966, %v960
    %v1405 = vpack.c.b16 %v967, %v961
    %v1406 = vpack.c.b16 %v968, %v962
    %v1407 = vpack.c.b16 %v969, %v963
    %v1408 = vpack.c.b16 %v970, %v964
    %v1409 = vpack.c.b16 %v971, %v965
    %v1410 = vpack.c.b16 %v978, %v972
    %v1411 = vpack.c.b16 %v979, %v973
    %v1412 = vpack.c.b16 %v980, %v974
    %v1413 = vpack.c.b16 %v981, %v975
    %v1414 = vpack.c.b16 %v982, %v976
    %v1415 = vpack.c.b16 %v983, %v977
    %v1416 = vpack.c.b16 %v990, %v984
    %v1417 = vpack.c.b16 %v991, %v985
    %v1418 = vpack.c.b16 %v992, %v986
    %v1419 = vpack.c.b16 %v993, %v987
    %v1420 = vpack.c.b16 %v994, %v988
    %v1421 = vpack.c.b16 %v995, %v989
    %v1422 = vpack.c.b16 %v1002, %v996
    %v1423 = vpack.c.b16 %v1003, %v997
    %v1424 = vpack.c.b16 %v1004, %v998
    %v1425 = vpack.c.b16 %v1005, %v999
    %v1426 = vpack.c.b16 %v1006, %v1000
    %v1427 = vpack.c.b16 %v1007, %v1001
    %v1428 = vpack.c.b16 %v1014, %v1008
    %v1429 = vpack.c.b16 %v1015, %v1009
    %v1430 = vpack.c.b16 %v1016, %v1010
    %v1431 = vpack.c.b16 %v1017, %v1011
    %v1432 = vpack.c.b16 %v1018, %v1012
    %v1433 = vpack.c.b16 %v1019, %v1013
    %v1434 = vpack.c.b16 %v1026, %v1020
    %v1435 = vpack.c.b16 %v1027, %v1021
    %v1436 = vpack.c.b16 %v1028, %v1022
    %v1437 = vpack.c.b16 %v1029, %v1023
    %v1438 = vpack.c.b16 %v1030, %v1024
    %v1439 = vpack.c.b16 %v1031, %v1025
    %v1440 = vpack.c.b16 %v1038, %v1032
    %v1441 = vpack.c.b16 %v1039, %v1033
    %v1442 = vpack.c.b16 %v1040, %v1034
    %v1443 = vpack.c.b16 %v1041, %v1035
    %v1444 = vpack.c.b16 %v1042, %v1036
    %v1445 = vpack.c.b16 %v1043, %v1037
    %v1446 = vpack.c.b16 %v1050, %v1044
    %v1447 = vpack.c.b16 %v1051, %v1045
    %v1448 = vpack.c.b16 %v1052, %v1046
    %v1449 = vpack.c.b16 %v1053, %v1047
    %v1450 = vpack.c.b16 %v1054, %v1048
    %v1451 = vpack.c.b16 %v1055, %v1049
    %v1452 = vpack.c.b16 %v1062, %v1056
    %v1453 = vpack.c.b16 %v1063, %v1057
    %v1454 = vpack.c.b16 %v1064, %v1058
    %v1455 = vpack.c.b16 %v1065, %v1059
    %v1456 = vpack.c.b16 %v1066, %v1060
    %v1457 = vpack.c.b16 %v1067, %v1061
    %v1458 = vpack.c.b16 %v1074, %v1068
    %v1459 = vpack.c.b16 %v1075, %v1069
    %v1460 = vpack.c.b16 %v1076, %v1070
    %v1461 = vpack.c.b16 %v1077, %v1071
    %v1462 = vpack.c.b16 %v1078, %v1072
    %v1463 = vpack.c.b16 %v1079, %v1073
    %v1464 = vpack.c.b16 %v1086, %v1080
    %v1465 = vpack.c.b16 %v1087, %v1081
    %v1466 = vpack.c.b16 %v1088, %v1082
    %v1467 = vpack.c.b16 %v1089, %v1083
    %v1468 = vpack.c.b16 %v1090, %v1084
    %v1469 = vpack.c.b16 %v1091, %v1085
    %v1470 = vpack.c.b16 %v1098, %v1092
    %v1471 = vpack.c.b16 %v1099, %v1093
    %v1472 = vpack.c.b16 %v1100, %v1094
    %v1473 = vpack.c.b16 %v1101, %v1095
    %v1474 = vpack.c.b16 %v1102, %v1096
    %v1475 = vpack.c.b16 %v1103, %v1097
    %v1476 = vpack.c.b16 %v1110, %v1104
    %v1477 = vpack.c.b16 %v1111, %v1105
    %v1478 = vpack.c.b16 %v1112, %v1106
    %v1479 = vpack.c.b16 %v1113, %v1107
    %v1480 = vpack.c.b16 %v1114, %v1108
    %v1481 = vpack.c.b16 %v1115, %v1109
    %v1482 = vpack.c.b16 %v1122, %v1116
    %v1483 = vpack.c.b16 %v1123, %v1117
    %v1484 = vpack.c.b16 %v1124, %v1118
    %v1485 = vpack.c.b16 %v1125, %v1119
    %v1486 = vpack.c.b16 %v1126, %v1120
    %v1487 = vpack.c.b16 %v1127, %v1121
    %v1488 = vpack.c.b16 %v1134, %v1128
    %v1489 = vpack.c.b16 %v1135, %v1129
    %v1490 = vpack.c.b16 %v1136, %v1130
    %v1491 = vpack.c.b16 %v1137, %v1131
    %v1492 = vpack.c.b16 %v1138, %v1132
    %v1493 = vpack.c.b16 %v1139, %v1133
    %v1494 = vpack.c.b16 %v1146, %v1140
    %v1495 = vpack.c.b16 %v1147, %v1141
    %v1496 = vpack.c.b16 %v1148, %v1142
    %v1497 = vpack.c.b16 %v1149, %v1143
    %v1498 = vpack.c.b16 %v1150, %v1144
    %v1499 = vpack.c.b16 %v1151, %v1145
    %v1500 = vpack.c.b16 %v1158, %v1152
    %v1501 = vpack.c.b16 %v1159, %v1153
    %v1502 = vpack.c.b16 %v1160, %v1154
    %v1503 = vpack.c.b16 %v1161, %v1155
    %v1504 = vpack.c.b16 %v1162, %v1156
    %v1505 = vpack.c.b16 %v1163, %v1157
    %v1506 = vpack.c.b16 %v1170, %v1164
    %v1507 = vpack.c.b16 %v1171, %v1165
    %v1508 = vpack.c.b16 %v1172, %v1166
    %v1509 = vpack.c.b16 %v1173, %v1167
    %v1510 = vpack.c.b16 %v1174, %v1168
    %v1511 = vpack.c.b16 %v1175, %v1169
    %v1512 = vpack.c.b16 %v1182, %v1176
    %v1513 = vpack.c.b16 %v1183, %v1177
    %v1514 = vpack.c.b16 %v1184, %v1178
    %v1515 = vpack.c.b16 %v1185, %v1179
    %v1516 = vpack.c.b16 %v1186, %v1180
    %v1517 = vpack.c.b16 %v1187, %v1181
    %v1518 = vpack.c.b16 %v1194, %v1188
    %v1519 = vpack.c.b16 %v1195, %v1189
    %v1520 = vpack.c.b16 %v1196, %v1190
    %v1521 = vpack.c.b16 %v1197, %v1191
    %v1522 = vpack.c.b16 %v1198, %v1192
    %v1523 = vpack.c.b16 %v1199, %v1193
    %v1524 = vpack.c.b16 %v1206, %v1200
    %v1525 = vpack.c.b16 %v1207, %v1201
    %v1526 = vpack.c.b16 %v1208, %v1202
    %v1527 = vpack.c.b16 %v1209, %v1203
    %v1528 = vpack.c.b16 %v1210, %v1204
    %v1529 = vpack.c.b16 %v1211, %v1205
    %v1530 = vpack.c.b16 %v1218, %v1212
    %v1531 = vpack.c.b16 %v1219, %v1213
    %v1532 = vpack.c.b16 %v1220, %v1214
    %v1533 = vpack.c.b16 %v1221, %v1215
    %v1534 = vpack.c.b16 %v1222, %v1216
    %v1535 = vpack.c.b16 %v1223, %v1217
    %v1536 = vpack.c.b16 %v1230, %v1224
    %v1537 = vpack.c.b16 %v1231, %v1225
    %v1538 = vpack.c.b16 %v1232, %v1226
    %v1539 = vpack.c.b16 %v1233, %v1227
    %v1540 = vpack.c.b16 %v1234, %v1228
    %v1541 = vpack.c.b16 %v1235, %v1229
    %v1542 = vpack.c.b16 %v1242, %v1236
    %v1543 = vpack.c.b16 %v1243, %v1237
    %v1544 = vpack.c.b16 %v1244, %v1238
    %v1545 = vpack.c.b16 %v1245, %v1239
    %v1546 = vpack.c.b16 %v1246, %v1240
    %v1547 = vpack.c.b16 %v1247, %v1241
    %v1548 = vpack.c.b16 %v1254, %v1248
    %v1549 = vpack.c.b16 %v1255, %v1249
    %v1550 = vpack.c.b16 %v1256, %v1250
    %v1551 = vpack.c.b16 %v1257, %v1251
    %v1552 = vpack.c.b16 %v1258, %v1252
    %v1553 = vpack.c.b16 %v1259, %v1253
    %v1554 = vpack.c.b16 %v1266, %v1260
    %v1555 = vpack.c.b16 %v1267, %v1261
    %v1556 = vpack.c.b16 %v1268, %v1262
    %v1557 = vpack.c.b16 %v1269, %v1263
    %v1558 = vpack.c.b16 %v1270, %v1264
    %v1559 = vpack.c.b16 %v1271, %v1265
    %1848 = vmatprep.subr.bf16.mxu0 %v1315
    %1849 = vmatpush1.bf16.msra.mxu0 %v1314
    %1850 = vmatprep.subr.bf16.mxu0 %v1309
    %1851 = vmatpush1.bf16.msra.mxu0 %v1308
    %1852 = vmatprep.subr.bf16.mxu0 %v1303
    %1853 = vmatpush1.bf16.msra.mxu0 %v1302
    %1854 = vmatprep.subr.bf16.mxu0 %v1297
    %1855 = vmatpush1.bf16.msra.mxu0 %v1296
    %1856 = vmatprep.subr.bf16.mxu0 %v1291
    %1857 = vmatpush1.bf16.msra.mxu0 %v1290
    %1858 = vmatprep.subr.bf16.mxu0 %v1285
    %1859 = vmatpush1.bf16.msra.mxu0 %v1284
    %1860 = vmatprep.subr.bf16.mxu0 %v1279
    %1861 = vmatpush1.bf16.msra.mxu0 %v1278
    %1862 = vmatprep.subr.bf16.mxu0 %v1273
    %1863 = vmatpush1.bf16.msra.mxu0 %v1272
    %1864 = vmatprep.subr.bf16.mxu0 %v1363
    %1865 = vmatpush2.bf16.msra.mxu0 %v1362
    %1866 = vmatprep.subr.bf16.mxu0 %v1357
    %1867 = vmatpush2.bf16.msra.mxu0 %v1356
    %1868 = vmatprep.subr.bf16.mxu0 %v1351
    %1869 = vmatpush2.bf16.msra.mxu0 %v1350
    %1870 = vmatprep.subr.bf16.mxu0 %v1345
    %1871 = vmatpush2.bf16.msra.mxu0 %v1344
    %1872 = vmatprep.subr.bf16.mxu0 %v1339
    %1873 = vmatpush2.bf16.msra.mxu0 %v1338
    %1874 = vmatprep.subr.bf16.mxu0 %v1333
    %1875 = vmatpush2.bf16.msra.mxu0 %v1332
    %1876 = vmatprep.subr.bf16.mxu0 %v1327
    %1877 = vmatpush2.bf16.msra.mxu0 %v1326
    %1878 = vmatprep.subr.bf16.mxu0 %v1321
    %1879 = vmatpush2.bf16.msra.mxu0 %v1320
    %1880 = vmatprep.mubr.bf16.mxu0 %v83
    %1881 = vmatmul.mubr.bf16.gmra.mxu0 %v82
    %v1882 = vpop.f32.mrf.mxu0
    %v1883 = vadd.f32 %v381, %v1882
    %v1884 = vpop.f32.mrf.mxu0
    %v1885 = vadd.f32 %v385, %v1884
    %v1886 = vpop.f32.mrf.mxu0
    %v1887 = vadd.f32 %v381, %v1886
    %v1888 = vpop.f32.mrf.mxu0
    %v1889 = vadd.f32 %v385, %v1888
    %1890 = vdwg.mxu0
    %1891 = vmatprep.subr.bf16.mxu0 %v1411
    %1892 = vmatpush1.bf16.msra.mxu0 %v1410
    %1893 = vmatprep.subr.bf16.mxu0 %v1405
    %1894 = vmatpush1.bf16.msra.mxu0 %v1404
    %1895 = vmatprep.subr.bf16.mxu0 %v1399
    %1896 = vmatpush1.bf16.msra.mxu0 %v1398
    %1897 = vmatprep.subr.bf16.mxu0 %v1393
    %1898 = vmatpush1.bf16.msra.mxu0 %v1392
    %1899 = vmatprep.subr.bf16.mxu0 %v1387
    %1900 = vmatpush1.bf16.msra.mxu0 %v1386
    %1901 = vmatprep.subr.bf16.mxu0 %v1381
    %1902 = vmatpush1.bf16.msra.mxu0 %v1380
    %1903 = vmatprep.subr.bf16.mxu0 %v1375
    %1904 = vmatpush1.bf16.msra.mxu0 %v1374
    %1905 = vmatprep.subr.bf16.mxu0 %v1369
    %1906 = vmatpush1.bf16.msra.mxu0 %v1368
    %1907 = vmatprep.subr.bf16.mxu0 %v1459
    %1908 = vmatpush2.bf16.msra.mxu0 %v1458
    %1909 = vmatprep.subr.bf16.mxu0 %v1453
    %1910 = vmatpush2.bf16.msra.mxu0 %v1452
    %1911 = vmatprep.subr.bf16.mxu0 %v1447
    %1912 = vmatpush2.bf16.msra.mxu0 %v1446
    %1913 = vmatprep.subr.bf16.mxu0 %v1441
    %1914 = vmatpush2.bf16.msra.mxu0 %v1440
    %1915 = vmatprep.subr.bf16.mxu0 %v1435
    %1916 = vmatpush2.bf16.msra.mxu0 %v1434
    %1917 = vmatprep.subr.bf16.mxu0 %v1429
    %1918 = vmatpush2.bf16.msra.mxu0 %v1428
    %1919 = vmatprep.subr.bf16.mxu0 %v1423
    %1920 = vmatpush2.bf16.msra.mxu0 %v1422
    %1921 = vmatprep.subr.bf16.mxu0 %v1417
    %1922 = vmatpush2.bf16.msra.mxu0 %v1416
    %1923 = vmatprep.mubr.bf16.mxu0 %v85
    %1924 = vmatmul.mubr.bf16.gmra.mxu0 %v84
    %v1925 = vpop.f32.mrf.mxu0
    %v1926 = vadd.f32 %v1883, %v1925
    %v1927 = vpop.f32.mrf.mxu0
    %v1928 = vadd.f32 %v1885, %v1927
    %v1929 = vpop.f32.mrf.mxu0
    %v1930 = vadd.f32 %v1887, %v1929
    %v1931 = vpop.f32.mrf.mxu0
    %v1932 = vadd.f32 %v1889, %v1931
    %1933 = vdwg.mxu0
    %1934 = vmatprep.subr.bf16.mxu0 %v1507
    %1935 = vmatpush1.bf16.msra.mxu0 %v1506
    %1936 = vmatprep.subr.bf16.mxu0 %v1501
    %1937 = vmatpush1.bf16.msra.mxu0 %v1500
    %1938 = vmatprep.subr.bf16.mxu0 %v1495
    %1939 = vmatpush1.bf16.msra.mxu0 %v1494
    %1940 = vmatprep.subr.bf16.mxu0 %v1489
    %1941 = vmatpush1.bf16.msra.mxu0 %v1488
    %1942 = vmatprep.subr.bf16.mxu0 %v1483
    %1943 = vmatpush1.bf16.msra.mxu0 %v1482
    %1944 = vmatprep.subr.bf16.mxu0 %v1477
    %1945 = vmatpush1.bf16.msra.mxu0 %v1476
    %1946 = vmatprep.subr.bf16.mxu0 %v1471
    %1947 = vmatpush1.bf16.msra.mxu0 %v1470
    %1948 = vmatprep.subr.bf16.mxu0 %v1465
    %1949 = vmatpush1.bf16.msra.mxu0 %v1464
    %1950 = vmatprep.subr.bf16.mxu0 %v1555
    %1951 = vmatpush2.bf16.msra.mxu0 %v1554
    %1952 = vmatprep.subr.bf16.mxu0 %v1549
    %1953 = vmatpush2.bf16.msra.mxu0 %v1548
    %1954 = vmatprep.subr.bf16.mxu0 %v1543
    %1955 = vmatpush2.bf16.msra.mxu0 %v1542
    %1956 = vmatprep.subr.bf16.mxu0 %v1537
    %1957 = vmatpush2.bf16.msra.mxu0 %v1536
    %1958 = vmatprep.subr.bf16.mxu0 %v1531
    %1959 = vmatpush2.bf16.msra.mxu0 %v1530
    %1960 = vmatprep.subr.bf16.mxu0 %v1525
    %1961 = vmatpush2.bf16.msra.mxu0 %v1524
    %1962 = vmatprep.subr.bf16.mxu0 %v1519
    %1963 = vmatpush2.bf16.msra.mxu0 %v1518
    %1964 = vmatprep.subr.bf16.mxu0 %v1513
    %1965 = vmatpush2.bf16.msra.mxu0 %v1512
    %1966 = vmatprep.mubr.bf16.mxu0 %v87
    %1967 = vmatmul.mubr.bf16.gmra.mxu0 %v86
    %v1968 = vpop.f32.mrf.mxu0
    %v1969 = vadd.f32 %v1926, %v1968
    %v1970 = vpop.f32.mrf.mxu0
    %v1971 = vadd.f32 %v1928, %v1970
    %v1972 = vpop.f32.mrf.mxu0
    %v1973 = vadd.f32 %v1930, %v1972
    %v1974 = vpop.f32.mrf.mxu0
    %v1975 = vadd.f32 %v1932, %v1974
    %1976 = vdwg.mxu0
    %1977 = vmatprep.subr.bf16.mxu0 %v1317
    %1978 = vmatpush1.bf16.msra.mxu0 %v1316
    %1979 = vmatprep.subr.bf16.mxu0 %v1311
    %1980 = vmatpush1.bf16.msra.mxu0 %v1310
    %1981 = vmatprep.subr.bf16.mxu0 %v1305
    %1982 = vmatpush1.bf16.msra.mxu0 %v1304
    %1983 = vmatprep.subr.bf16.mxu0 %v1299
    %1984 = vmatpush1.bf16.msra.mxu0 %v1298
    %1985 = vmatprep.subr.bf16.mxu0 %v1293
    %1986 = vmatpush1.bf16.msra.mxu0 %v1292
    %1987 = vmatprep.subr.bf16.mxu0 %v1287
    %1988 = vmatpush1.bf16.msra.mxu0 %v1286
    %1989 = vmatprep.subr.bf16.mxu0 %v1281
    %1990 = vmatpush1.bf16.msra.mxu0 %v1280
    %1991 = vmatprep.subr.bf16.mxu0 %v1275
    %1992 = vmatpush1.bf16.msra.mxu0 %v1274
    %1993 = vmatprep.subr.bf16.mxu0 %v1365
    %1994 = vmatpush2.bf16.msra.mxu0 %v1364
    %1995 = vmatprep.subr.bf16.mxu0 %v1359
    %1996 = vmatpush2.bf16.msra.mxu0 %v1358
    %1997 = vmatprep.subr.bf16.mxu0 %v1353
    %1998 = vmatpush2.bf16.msra.mxu0 %v1352
    %1999 = vmatprep.subr.bf16.mxu0 %v1347
    %2000 = vmatpush2.bf16.msra.mxu0 %v1346
    %2001 = vmatprep.subr.bf16.mxu0 %v1341
    %2002 = vmatpush2.bf16.msra.mxu0 %v1340
    %2003 = vmatprep.subr.bf16.mxu0 %v1335
    %2004 = vmatpush2.bf16.msra.mxu0 %v1334
    %2005 = vmatprep.subr.bf16.mxu0 %v1329
    %2006 = vmatpush2.bf16.msra.mxu0 %v1328
    %2007 = vmatprep.subr.bf16.mxu0 %v1323
    %2008 = vmatpush2.bf16.msra.mxu0 %v1322
    %2009 = vmatprep.mubr.bf16.mxu0 %v83
    %2010 = vmatmul.mubr.bf16.gmra.mxu0 %v82
    %v2011 = vpop.f32.mrf.mxu0
    %v2012 = vadd.f32 %v389, %v2011
    %v2013 = vpop.f32.mrf.mxu0
    %v2014 = vadd.f32 %v393, %v2013
    %v2015 = vpop.f32.mrf.mxu0
    %v2016 = vadd.f32 %v389, %v2015
    %v2017 = vpop.f32.mrf.mxu0
    %v2018 = vadd.f32 %v393, %v2017
    %2019 = vdwg.mxu0
    %2020 = vmatprep.subr.bf16.mxu0 %v1413
    %2021 = vmatpush1.bf16.msra.mxu0 %v1412
    %2022 = vmatprep.subr.bf16.mxu0 %v1407
    %2023 = vmatpush1.bf16.msra.mxu0 %v1406
    %2024 = vmatprep.subr.bf16.mxu0 %v1401
    %2025 = vmatpush1.bf16.msra.mxu0 %v1400
    %2026 = vmatprep.subr.bf16.mxu0 %v1395
    %2027 = vmatpush1.bf16.msra.mxu0 %v1394
    %2028 = vmatprep.subr.bf16.mxu0 %v1389
    %2029 = vmatpush1.bf16.msra.mxu0 %v1388
    %2030 = vmatprep.subr.bf16.mxu0 %v1383
    %2031 = vmatpush1.bf16.msra.mxu0 %v1382
    %2032 = vmatprep.subr.bf16.mxu0 %v1377
    %2033 = vmatpush1.bf16.msra.mxu0 %v1376
    %2034 = vmatprep.subr.bf16.mxu0 %v1371
    %2035 = vmatpush1.bf16.msra.mxu0 %v1370
    %2036 = vmatprep.subr.bf16.mxu0 %v1461
    %2037 = vmatpush2.bf16.msra.mxu0 %v1460
    %2038 = vmatprep.subr.bf16.mxu0 %v1455
    %2039 = vmatpush2.bf16.msra.mxu0 %v1454
    %2040 = vmatprep.subr.bf16.mxu0 %v1449
    %2041 = vmatpush2.bf16.msra.mxu0 %v1448
    %2042 = vmatprep.subr.bf16.mxu0 %v1443
    %2043 = vmatpush2.bf16.msra.mxu0 %v1442
    %2044 = vmatprep.subr.bf16.mxu0 %v1437
    %2045 = vmatpush2.bf16.msra.mxu0 %v1436
    %2046 = vmatprep.subr.bf16.mxu0 %v1431
    %2047 = vmatpush2.bf16.msra.mxu0 %v1430
    %2048 = vmatprep.subr.bf16.mxu0 %v1425
    %2049 = vmatpush2.bf16.msra.mxu0 %v1424
    %2050 = vmatprep.subr.bf16.mxu0 %v1419
    %2051 = vmatpush2.bf16.msra.mxu0 %v1418
    %2052 = vmatprep.mubr.bf16.mxu0 %v85
    %2053 = vmatmul.mubr.bf16.gmra.mxu0 %v84
    %v2054 = vpop.f32.mrf.mxu0
    %v2055 = vadd.f32 %v2012, %v2054
    %v2056 = vpop.f32.mrf.mxu0
    %v2057 = vadd.f32 %v2014, %v2056
    %v2058 = vpop.f32.mrf.mxu0
    %v2059 = vadd.f32 %v2016, %v2058
    %v2060 = vpop.f32.mrf.mxu0
    %v2061 = vadd.f32 %v2018, %v2060
    %2062 = vdwg.mxu0
    %2063 = vmatprep.subr.bf16.mxu0 %v1509
    %2064 = vmatpush1.bf16.msra.mxu0 %v1508
    %2065 = vmatprep.subr.bf16.mxu0 %v1503
    %2066 = vmatpush1.bf16.msra.mxu0 %v1502
    %2067 = vmatprep.subr.bf16.mxu0 %v1497
    %2068 = vmatpush1.bf16.msra.mxu0 %v1496
    %2069 = vmatprep.subr.bf16.mxu0 %v1491
    %2070 = vmatpush1.bf16.msra.mxu0 %v1490
    %2071 = vmatprep.subr.bf16.mxu0 %v1485
    %2072 = vmatpush1.bf16.msra.mxu0 %v1484
    %2073 = vmatprep.subr.bf16.mxu0 %v1479
    %2074 = vmatpush1.bf16.msra.mxu0 %v1478
    %2075 = vmatprep.subr.bf16.mxu0 %v1473
    %2076 = vmatpush1.bf16.msra.mxu0 %v1472
    %2077 = vmatprep.subr.bf16.mxu0 %v1467
    %2078 = vmatpush1.bf16.msra.mxu0 %v1466
    %2079 = vmatprep.subr.bf16.mxu0 %v1557
    %2080 = vmatpush2.bf16.msra.mxu0 %v1556
    %2081 = vmatprep.subr.bf16.mxu0 %v1551
    %2082 = vmatpush2.bf16.msra.mxu0 %v1550
    %2083 = vmatprep.subr.bf16.mxu0 %v1545
    %2084 = vmatpush2.bf16.msra.mxu0 %v1544
    %2085 = vmatprep.subr.bf16.mxu0 %v1539
    %2086 = vmatpush2.bf16.msra.mxu0 %v1538
    %2087 = vmatprep.subr.bf16.mxu0 %v1533
    %2088 = vmatpush2.bf16.msra.mxu0 %v1532
    %2089 = vmatprep.subr.bf16.mxu0 %v1527
    %2090 = vmatpush2.bf16.msra.mxu0 %v1526
    %2091 = vmatprep.subr.bf16.mxu0 %v1521
    %2092 = vmatpush2.bf16.msra.mxu0 %v1520
    %2093 = vmatprep.subr.bf16.mxu0 %v1515
    %2094 = vmatpush2.bf16.msra.mxu0 %v1514
    %2095 = vmatprep.mubr.bf16.mxu0 %v87
    %2096 = vmatmul.mubr.bf16.gmra.mxu0 %v86
    %v2097 = vpop.f32.mrf.mxu0
    %v2098 = vadd.f32 %v2055, %v2097
    %v2099 = vpop.f32.mrf.mxu0
    %v2100 = vadd.f32 %v2057, %v2099
    %v2101 = vpop.f32.mrf.mxu0
    %v2102 = vadd.f32 %v2059, %v2101
    %v2103 = vpop.f32.mrf.mxu0
    %v2104 = vadd.f32 %v2061, %v2103
    %2105 = vdwg.mxu0
    %2106 = vmatprep.subr.bf16.mxu0 %v1319
    %2107 = vmatpush1.bf16.msra.mxu0 %v1318
    %2108 = vmatprep.subr.bf16.mxu0 %v1313
    %2109 = vmatpush1.bf16.msra.mxu0 %v1312
    %2110 = vmatprep.subr.bf16.mxu0 %v1307
    %2111 = vmatpush1.bf16.msra.mxu0 %v1306
    %2112 = vmatprep.subr.bf16.mxu0 %v1301
    %2113 = vmatpush1.bf16.msra.mxu0 %v1300
    %2114 = vmatprep.subr.bf16.mxu0 %v1295
    %2115 = vmatpush1.bf16.msra.mxu0 %v1294
    %2116 = vmatprep.subr.bf16.mxu0 %v1289
    %2117 = vmatpush1.bf16.msra.mxu0 %v1288
    %2118 = vmatprep.subr.bf16.mxu0 %v1283
    %2119 = vmatpush1.bf16.msra.mxu0 %v1282
    %2120 = vmatprep.subr.bf16.mxu0 %v1277
    %2121 = vmatpush1.bf16.msra.mxu0 %v1276
    %2122 = vmatprep.subr.bf16.mxu0 %v1367
    %2123 = vmatpush2.bf16.msra.mxu0 %v1366
    %2124 = vmatprep.subr.bf16.mxu0 %v1361
    %2125 = vmatpush2.bf16.msra.mxu0 %v1360
    %2126 = vmatprep.subr.bf16.mxu0 %v1355
    %2127 = vmatpush2.bf16.msra.mxu0 %v1354
    %2128 = vmatprep.subr.bf16.mxu0 %v1349
    %2129 = vmatpush2.bf16.msra.mxu0 %v1348
    %2130 = vmatprep.subr.bf16.mxu0 %v1343
    %2131 = vmatpush2.bf16.msra.mxu0 %v1342
    %2132 = vmatprep.subr.bf16.mxu0 %v1337
    %2133 = vmatpush2.bf16.msra.mxu0 %v1336
    %2134 = vmatprep.subr.bf16.mxu0 %v1331
    %2135 = vmatpush2.bf16.msra.mxu0 %v1330
    %2136 = vmatprep.subr.bf16.mxu0 %v1325
    %2137 = vmatpush2.bf16.msra.mxu0 %v1324
    %2138 = vmatprep.mubr.bf16.mxu0 %v83
    %2139 = vmatmul.mubr.bf16.gmra.mxu0 %v82
    %v2140 = vpop.f32.mrf.mxu0
    %v2141 = vadd.f32 %v397, %v2140
    %v2142 = vpop.f32.mrf.mxu0
    %v2143 = vadd.f32 %v401, %v2142
    %v2144 = vpop.f32.mrf.mxu0
    %v2145 = vadd.f32 %v397, %v2144
    %v2146 = vpop.f32.mrf.mxu0
    %v2147 = vadd.f32 %v401, %v2146
    %2148 = vdwg.mxu0
    %2149 = vmatprep.subr.bf16.mxu0 %v1415
    %2150 = vmatpush1.bf16.msra.mxu0 %v1414
    %2151 = vmatprep.subr.bf16.mxu0 %v1409
    %2152 = vmatpush1.bf16.msra.mxu0 %v1408
    %2153 = vmatprep.subr.bf16.mxu0 %v1403
    %2154 = vmatpush1.bf16.msra.mxu0 %v1402
    %2155 = vmatprep.subr.bf16.mxu0 %v1397
    %2156 = vmatpush1.bf16.msra.mxu0 %v1396
    %2157 = vmatprep.subr.bf16.mxu0 %v1391
    %2158 = vmatpush1.bf16.msra.mxu0 %v1390
    %2159 = vmatprep.subr.bf16.mxu0 %v1385
    %2160 = vmatpush1.bf16.msra.mxu0 %v1384
    %2161 = vmatprep.subr.bf16.mxu0 %v1379
    %2162 = vmatpush1.bf16.msra.mxu0 %v1378
    %2163 = vmatprep.subr.bf16.mxu0 %v1373
    %2164 = vmatpush1.bf16.msra.mxu0 %v1372
    %2165 = vmatprep.subr.bf16.mxu0 %v1463
    %2166 = vmatpush2.bf16.msra.mxu0 %v1462
    %2167 = vmatprep.subr.bf16.mxu0 %v1457
    %2168 = vmatpush2.bf16.msra.mxu0 %v1456
    %2169 = vmatprep.subr.bf16.mxu0 %v1451
    %2170 = vmatpush2.bf16.msra.mxu0 %v1450
    %2171 = vmatprep.subr.bf16.mxu0 %v1445
    %2172 = vmatpush2.bf16.msra.mxu0 %v1444
    %2173 = vmatprep.subr.bf16.mxu0 %v1439
    %2174 = vmatpush2.bf16.msra.mxu0 %v1438
    %2175 = vmatprep.subr.bf16.mxu0 %v1433
    %2176 = vmatpush2.bf16.msra.mxu0 %v1432
    %2177 = vmatprep.subr.bf16.mxu0 %v1427
    %2178 = vmatpush2.bf16.msra.mxu0 %v1426
    %2179 = vmatprep.subr.bf16.mxu0 %v1421
    %2180 = vmatpush2.bf16.msra.mxu0 %v1420
    %2181 = vmatprep.mubr.bf16.mxu0 %v85
    %2182 = vmatmul.mubr.bf16.gmra.mxu0 %v84
    %v2183 = vpop.f32.mrf.mxu0
    %v2184 = vadd.f32 %v2141, %v2183
    %v2185 = vpop.f32.mrf.mxu0
    %v2186 = vadd.f32 %v2143, %v2185
    %v2187 = vpop.f32.mrf.mxu0
    %v2188 = vadd.f32 %v2145, %v2187
    %v2189 = vpop.f32.mrf.mxu0
    %v2190 = vadd.f32 %v2147, %v2189
    %2191 = vdwg.mxu0
    %2192 = vmatprep.subr.bf16.mxu0 %v1511
    %2193 = vmatpush1.bf16.msra.mxu0 %v1510
    %2194 = vmatprep.subr.bf16.mxu0 %v1505
    %2195 = vmatpush1.bf16.msra.mxu0 %v1504
    %2196 = vmatprep.subr.bf16.mxu0 %v1499
    %2197 = vmatpush1.bf16.msra.mxu0 %v1498
    %2198 = vmatprep.subr.bf16.mxu0 %v1493
    %2199 = vmatpush1.bf16.msra.mxu0 %v1492
    %2200 = vmatprep.subr.bf16.mxu0 %v1487
    %2201 = vmatpush1.bf16.msra.mxu0 %v1486
    %2202 = vmatprep.subr.bf16.mxu0 %v1481
    %2203 = vmatpush1.bf16.msra.mxu0 %v1480
    %2204 = vmatprep.subr.bf16.mxu0 %v1475
    %2205 = vmatpush1.bf16.msra.mxu0 %v1474
    %2206 = vmatprep.subr.bf16.mxu0 %v1469
    %2207 = vmatpush1.bf16.msra.mxu0 %v1468
    %2208 = vmatprep.subr.bf16.mxu0 %v1559
    %2209 = vmatpush2.bf16.msra.mxu0 %v1558
    %2210 = vmatprep.subr.bf16.mxu0 %v1553
    %2211 = vmatpush2.bf16.msra.mxu0 %v1552
    %2212 = vmatprep.subr.bf16.mxu0 %v1547
    %2213 = vmatpush2.bf16.msra.mxu0 %v1546
    %2214 = vmatprep.subr.bf16.mxu0 %v1541
    %2215 = vmatpush2.bf16.msra.mxu0 %v1540
    %2216 = vmatprep.subr.bf16.mxu0 %v1535
    %2217 = vmatpush2.bf16.msra.mxu0 %v1534
    %2218 = vmatprep.subr.bf16.mxu0 %v1529
    %2219 = vmatpush2.bf16.msra.mxu0 %v1528
    %2220 = vmatprep.subr.bf16.mxu0 %v1523
    %2221 = vmatpush2.bf16.msra.mxu0 %v1522
    %2222 = vmatprep.subr.bf16.mxu0 %v1517
    %2223 = vmatpush2.bf16.msra.mxu0 %v1516
    %2224 = vmatprep.mubr.bf16.mxu0 %v87
    %2225 = vmatmul.mubr.bf16.gmra.mxu0 %v86
    %v2226 = vpop.f32.mrf.mxu0
    %v2227 = vadd.f32 %v2184, %v2226
    %v2228 = vpop.f32.mrf.mxu0
    %v2229 = vadd.f32 %v2186, %v2228
    %v2230 = vpop.f32.mrf.mxu0
    %v2231 = vadd.f32 %v2188, %v2230
    %v2232 = vpop.f32.mrf.mxu0
    %v2233 = vadd.f32 %v2190, %v2232
    %2234 = vdwg.mxu0
    %p2235 = scmp.eq.s32.totalorder 0, 0
    // Predicated region
    $region34: #{_lambda_.2} parent=1 // pred_check
      %p2236 = pneg %p2235
    $region35: #{_lambda_.2} parent=1 // pred_check_branch
      %2238 = sbr.rel (%p2236) target = $region37
    $region36: #{_lambda_.2} parent=1 // pred_region
      %v2239 = vmax.f32 %v1969, 0.0
      %v2240 = vmax.f32 %v1971, 0.0
      %v2241 = vmax.f32 %v2098, 0.0
      %v2242 = vmax.f32 %v2100, 0.0
      %v2243 = vmax.f32 %v2227, 0.0
      %v2244 = vmax.f32 %v2229, 0.0
      %v2245 = vmax.f32 %v1973, 0.0
      %v2246 = vmax.f32 %v1975, 0.0
      %v2247 = vmax.f32 %v2102, 0.0
      %v2248 = vmax.f32 %v2104, 0.0
      %v2249 = vmax.f32 %v2231, 0.0
      %v2250 = vmax.f32 %v2233, 0.0
      %v2263 = vcombine.low %v2239, %v2240
      %v2264 = vcombine.low %v2241, %v2242
      %v2266 = vunpack.c.l.s4 1983009808
      %v2267 = vunpack.c.0.s8 %v2266
      %v2268 = vlaneseq
      %v2269 = vshrl.u32 %v2268, 7
      %v2270 = vsub.s32 %v2267, %v2269
      %v2271 = vrot.slane %v2263, %v2270
      %v2273 = vunpack.c.l.s4 1983009808
      %v2274 = vunpack.c.0.s8 %v2273
      %v2275 = vlaneseq
      %v2276 = vshrl.u32 %v2275, 7
      %v2277 = vsub.s32 %v2274, %v2276
      %v2278 = vrot.slane %v2264, %v2277
      %v2279 = vcombine.low %v2271, %v2278
      %v2280 = vcombine.low %v2243, %v2244
      %v2282 = vunpack.c.l.s4 1983009808
      %v2283 = vunpack.c.0.s8 %v2282
      %v2284 = vlaneseq
      %v2285 = vshrl.u32 %v2284, 7
      %v2286 = vsub.s32 %v2283, %v2285
      %v2287 = vrot.slane %v2280, %v2286
      %v2288 = vcombine.low %v2245, %v2246
      %v2289 = vcombine.low %v2247, %v2248
      %v2291 = vunpack.c.l.s4 1983009808
      %v2292 = vunpack.c.0.s8 %v2291
      %v2293 = vlaneseq
      %v2294 = vshrl.u32 %v2293, 7
      %v2295 = vsub.s32 %v2292, %v2294
      %v2296 = vrot.slane %v2288, %v2295
      %v2298 = vunpack.c.l.s4 1983009808
      %v2299 = vunpack.c.0.s8 %v2298
      %v2300 = vlaneseq
      %v2301 = vshrl.u32 %v2300, 7
      %v2302 = vsub.s32 %v2299, %v2301
      %v2303 = vrot.slane %v2289, %v2302
      %v2304 = vcombine.low %v2296, %v2303
      %v2305 = vcombine.low %v2249, %v2250
      %v2307 = vunpack.c.l.s4 1983009808
      %v2308 = vunpack.c.0.s8 %v2307
      %v2309 = vlaneseq
      %v2310 = vshrl.u32 %v2309, 7
      %v2311 = vsub.s32 %v2308, %v2310
      %v2312 = vrot.slane %v2305, %v2311
      %vm2313 = vcmask 1044484
      %v2314 = vsel %vm2313, %v2279, %v2279
      %vm2315 = vcmask 1046534
      %v2316 = vsel %vm2315, %v2279, %v2314
      %v2317 = vrot.slane %v2304, 7
      %vm2318 = vcmask 1041409
      %v2319 = vsel %vm2318, %v2317, %v2316
      %vm2320 = vcmask 1043459
      %v2321 = vsel %vm2320, %v2317, %v2319
      %vm2322 = vcmask 1045509
      %v2323 = vsel %vm2322, %v2317, %v2321
      %vm2324 = vcmask 1047559
      %v2325 = vsel %vm2324, %v2317, %v2323
      %v2326 = vsel %vm2313, %v2287, %v2287
      %v2327 = vsel %vm2315, %v2287, %v2326
      %v2328 = vrot.slane %v2312, 7
      %v2329 = vsel %vm2318, %v2328, %v2327
      %v2330 = vsel %vm2320, %v2328, %v2329
      %v2331 = vsel %vm2322, %v2328, %v2330
      %v2332 = vsel %vm2324, %v2328, %v2331
      %2335 = vst [vmem:[%s4] sm:$0xff] %v2325
      %2336 = vst [vmem:[%s4 + $0x8] sm:$0xf] %v2332
    $region37: #{_lambda_.2} parent=1 // pred_fallthru
      _
    %p2337 = scmp.ne.s32.totalorder 0, 0
    // Predicated region
    $region38: #{_lambda_.2} parent=1 // pred_check
      %p2338 = pneg %p2337
    $region39: #{_lambda_.2} parent=1 // pred_check_branch
      %2340 = sbr.rel (%p2338) target = $region41
    $region40: #{_lambda_.2} parent=1 // pred_region
      %v2341 = vld [vmem:[%s4] sm:$0xff]
      %v2342 = vld [vmem:[%s4 + $0x8] sm:$0xf]
      %v2345 = vcombine.high %v2341, %v2341
      %v2347 = vunpack.c.l.s4 1983009808
      %v2348 = vunpack.c.0.s8 %v2347
      %v2349 = vlaneseq
      %v2350 = vshrl.u32 %v2349, 7
      %v2351 = vsub.s32 %v2348, %v2350
      %v2352 = vrot.slane %v2341, %v2351
      %v2354 = vunpack.c.l.s4 1983009808
      %v2355 = vunpack.c.0.s8 %v2354
      %v2356 = vlaneseq
      %v2357 = vshrl.u32 %v2356, 7
      %v2358 = vsub.s32 %v2355, %v2357
      %v2359 = vrot.slane %v2345, %v2358
      %v2360 = vcombine.high %v2352, %v2352
      %v2361 = vcombine.high %v2359, %v2359
      %v2363 = vunpack.c.l.s4 1983009808
      %v2364 = vunpack.c.0.s8 %v2363
      %v2365 = vlaneseq
      %v2366 = vshrl.u32 %v2365, 7
      %v2367 = vsub.s32 %v2364, %v2366
      %v2368 = vrot.slane %v2342, %v2367
      %v2369 = vcombine.high %v2368, %v2368
      %v2376 = vpack.c.bf16 %v2352, %v2352
      %v2377 = vpack.c.bf16 %v2360, %v2360
      %v2378 = vpack.c.bf16 %v2359, %v2359
      %v2379 = vpack.c.bf16 %v2361, %v2361
      %v2380 = vpack.c.bf16 %v2368, %v2368
      %v2381 = vpack.c.bf16 %v2369, %v2369
      %v2382 = vld [vmem:[#allocation6] sm:$0xff]
      %v2383 = vld [vmem:[#allocation6 + $0x8] sm:$0xff]
      %v2384 = vld [vmem:[#allocation6 + $0x10] sm:$0xff]
      %v2385 = vld [vmem:[#allocation6 + $0x18] sm:$0xff]
      %v2386 = vld [vmem:[#allocation6 + $0x20] sm:$0xff]
      %v2387 = vld [vmem:[#allocation6 + $0x28] sm:$0xff]
      %v2388 = vld [vmem:[#allocation6 + $0x30] sm:$0xff]
      %v2389 = vld [vmem:[#allocation6 + $0x38] sm:$0xff]
      %v2390 = vld [vmem:[#allocation6 + $0x40] sm:$0xff]
      %v2391 = vld [vmem:[#allocation6 + $0x48] sm:$0xff]
      %v2392 = vld [vmem:[#allocation6 + $0x50] sm:$0xff]
      %v2393 = vld [vmem:[#allocation6 + $0x58] sm:$0xff]
      %v2394 = vld [vmem:[#allocation6 + $0x60] sm:$0xff]
      %v2395 = vld [vmem:[#allocation6 + $0x68] sm:$0xff]
      %v2396 = vld [vmem:[#allocation6 + $0x70] sm:$0xff]
      %v2397 = vld [vmem:[#allocation6 + $0x78] sm:$0xff]
      %v2398 = vld [vmem:[#allocation6 + $0x80] sm:$0xff]
      %v2399 = vld [vmem:[#allocation6 + $0x88] sm:$0xff]
      %v2400 = vld [vmem:[#allocation6 + $0x90] sm:$0xff]
      %v2401 = vld [vmem:[#allocation6 + $0x98] sm:$0xff]
      %v2402 = vld [vmem:[#allocation6 + $0xa0] sm:$0xff]
      %v2403 = vld [vmem:[#allocation6 + $0xa8] sm:$0xff]
      %v2404 = vld [vmem:[#allocation6 + $0xb0] sm:$0xff]
      %v2405 = vld [vmem:[#allocation6 + $0xb8] sm:$0xff]
      %v2406 = vld [vmem:[#allocation6 + $0xc0] sm:$0xff]
      %v2407 = vld [vmem:[#allocation6 + $0xc8] sm:$0xff]
      %v2408 = vld [vmem:[#allocation6 + $0xd0] sm:$0xff]
      %v2409 = vld [vmem:[#allocation6 + $0xd8] sm:$0xff]
      %v2410 = vld [vmem:[#allocation6 + $0xe0] sm:$0xff]
      %v2411 = vld [vmem:[#allocation6 + $0xe8] sm:$0xff]
      %v2412 = vld [vmem:[#allocation6 + $0xf0] sm:$0xff]
      %v2413 = vld [vmem:[#allocation6 + $0xf8] sm:$0xff]
      %v2414 = vld [vmem:[#allocation6 + $0x100] sm:$0xff]
      %v2415 = vld [vmem:[#allocation6 + $0x108] sm:$0xff]
      %v2416 = vld [vmem:[#allocation6 + $0x110] sm:$0xff]
      %v2417 = vld [vmem:[#allocation6 + $0x118] sm:$0xff]
      %v2418 = vld [vmem:[#allocation6 + $0x120] sm:$0xff]
      %v2419 = vld [vmem:[#allocation6 + $0x128] sm:$0xff]
      %v2420 = vld [vmem:[#allocation6 + $0x130] sm:$0xff]
      %v2421 = vld [vmem:[#allocation6 + $0x138] sm:$0xff]
      %v2422 = vld [vmem:[#allocation6 + $0x140] sm:$0xff]
      %v2423 = vld [vmem:[#allocation6 + $0x148] sm:$0xff]
      %v2424 = vld [vmem:[#allocation6 + $0x150] sm:$0xff]
      %v2425 = vld [vmem:[#allocation6 + $0x158] sm:$0xff]
      %v2426 = vld [vmem:[#allocation6 + $0x160] sm:$0xff]
      %v2427 = vld [vmem:[#allocation6 + $0x168] sm:$0xff]
      %v2428 = vld [vmem:[#allocation6 + $0x170] sm:$0xff]
      %v2429 = vld [vmem:[#allocation6 + $0x178] sm:$0xff]
      %v2430 = vld [vmem:[#allocation6 + $0x180] sm:$0xff]
      %v2431 = vld [vmem:[#allocation6 + $0x188] sm:$0xff]
      %v2432 = vld [vmem:[#allocation6 + $0x190] sm:$0xff]
      %v2433 = vld [vmem:[#allocation6 + $0x198] sm:$0xff]
      %v2434 = vld [vmem:[#allocation6 + $0x1a0] sm:$0xff]
      %v2435 = vld [vmem:[#allocation6 + $0x1a8] sm:$0xff]
      %v2436 = vld [vmem:[#allocation6 + $0x1b0] sm:$0xff]
      %v2437 = vld [vmem:[#allocation6 + $0x1b8] sm:$0xff]
      %v2438 = vld [vmem:[#allocation6 + $0x1c0] sm:$0xff]
      %v2439 = vld [vmem:[#allocation6 + $0x1c8] sm:$0xff]
      %v2440 = vld [vmem:[#allocation6 + $0x1d0] sm:$0xff]
      %v2441 = vld [vmem:[#allocation6 + $0x1d8] sm:$0xff]
      %v2442 = vld [vmem:[#allocation6 + $0x1e0] sm:$0xff]
      %v2443 = vld [vmem:[#allocation6 + $0x1e8] sm:$0xff]
      %v2444 = vld [vmem:[#allocation6 + $0x1f0] sm:$0xff]
      %v2445 = vld [vmem:[#allocation6 + $0x1f8] sm:$0xff]
      %v2446 = vld [vmem:[#allocation6 + $0x200] sm:$0xff]
      %v2447 = vld [vmem:[#allocation6 + $0x208] sm:$0xff]
      %v2448 = vld [vmem:[#allocation6 + $0x210] sm:$0xff]
      %v2449 = vld [vmem:[#allocation6 + $0x218] sm:$0xff]
      %v2450 = vld [vmem:[#allocation6 + $0x220] sm:$0xff]
      %v2451 = vld [vmem:[#allocation6 + $0x228] sm:$0xff]
      %v2452 = vld [vmem:[#allocation6 + $0x230] sm:$0xff]
      %v2453 = vld [vmem:[#allocation6 + $0x238] sm:$0xff]
      %v2454 = vld [vmem:[#allocation6 + $0x240] sm:$0xff]
      %v2455 = vld [vmem:[#allocation6 + $0x248] sm:$0xff]
      %v2456 = vld [vmem:[#allocation6 + $0x250] sm:$0xff]
      %v2457 = vld [vmem:[#allocation6 + $0x258] sm:$0xff]
      %v2458 = vld [vmem:[#allocation6 + $0x260] sm:$0xff]
      %v2459 = vld [vmem:[#allocation6 + $0x268] sm:$0xff]
      %v2460 = vld [vmem:[#allocation6 + $0x270] sm:$0xff]
      %v2461 = vld [vmem:[#allocation6 + $0x278] sm:$0xff]
      %v2462 = vld [vmem:[#allocation6 + $0x280] sm:$0xff]
      %v2463 = vld [vmem:[#allocation6 + $0x288] sm:$0xff]
      %v2464 = vld [vmem:[#allocation6 + $0x290] sm:$0xff]
      %v2465 = vld [vmem:[#allocation6 + $0x298] sm:$0xff]
      %v2466 = vld [vmem:[#allocation6 + $0x2a0] sm:$0xff]
      %v2467 = vld [vmem:[#allocation6 + $0x2a8] sm:$0xff]
      %v2468 = vld [vmem:[#allocation6 + $0x2b0] sm:$0xff]
      %v2469 = vld [vmem:[#allocation6 + $0x2b8] sm:$0xff]
      %v2470 = vld [vmem:[#allocation6 + $0x2c0] sm:$0xff]
      %v2471 = vld [vmem:[#allocation6 + $0x2c8] sm:$0xff]
      %v2472 = vld [vmem:[#allocation6 + $0x2d0] sm:$0xff]
      %v2473 = vld [vmem:[#allocation6 + $0x2d8] sm:$0xff]
      %v2474 = vld [vmem:[#allocation6 + $0x2e0] sm:$0xff]
      %v2475 = vld [vmem:[#allocation6 + $0x2e8] sm:$0xff]
      %v2476 = vld [vmem:[#allocation6 + $0x2f0] sm:$0xff]
      %v2477 = vld [vmem:[#allocation6 + $0x2f8] sm:$0xff]
      %v2478 = vld [vmem:[#allocation6 + $0x300] sm:$0xff]
      %v2479 = vld [vmem:[#allocation6 + $0x308] sm:$0xff]
      %v2480 = vld [vmem:[#allocation6 + $0x310] sm:$0xff]
      %v2481 = vld [vmem:[#allocation6 + $0x318] sm:$0xff]
      %v2482 = vld [vmem:[#allocation6 + $0x320] sm:$0xff]
      %v2483 = vld [vmem:[#allocation6 + $0x328] sm:$0xff]
      %v2484 = vld [vmem:[#allocation6 + $0x330] sm:$0xff]
      %v2485 = vld [vmem:[#allocation6 + $0x338] sm:$0xff]
      %v2486 = vld [vmem:[#allocation6 + $0x340] sm:$0xff]
      %v2487 = vld [vmem:[#allocation6 + $0x348] sm:$0xff]
      %v2488 = vld [vmem:[#allocation6 + $0x350] sm:$0xff]
      %v2489 = vld [vmem:[#allocation6 + $0x358] sm:$0xff]
      %v2490 = vld [vmem:[#allocation6 + $0x360] sm:$0xff]
      %v2491 = vld [vmem:[#allocation6 + $0x368] sm:$0xff]
      %v2492 = vld [vmem:[#allocation6 + $0x370] sm:$0xff]
      %v2493 = vld [vmem:[#allocation6 + $0x378] sm:$0xff]
      %v2494 = vld [vmem:[#allocation6 + $0x380] sm:$0xff]
      %v2495 = vld [vmem:[#allocation6 + $0x388] sm:$0xff]
      %v2496 = vld [vmem:[#allocation6 + $0x390] sm:$0xff]
      %v2497 = vld [vmem:[#allocation6 + $0x398] sm:$0xff]
      %v2498 = vld [vmem:[#allocation6 + $0x3a0] sm:$0xff]
      %v2499 = vld [vmem:[#allocation6 + $0x3a8] sm:$0xff]
      %v2500 = vld [vmem:[#allocation6 + $0x3b0] sm:$0xff]
      %v2501 = vld [vmem:[#allocation6 + $0x3b8] sm:$0xff]
      %v2502 = vld [vmem:[#allocation6 + $0x3c0] sm:$0xff]
      %v2503 = vld [vmem:[#allocation6 + $0x3c8] sm:$0xff]
      %v2504 = vld [vmem:[#allocation6 + $0x3d0] sm:$0xff]
      %v2505 = vld [vmem:[#allocation6 + $0x3d8] sm:$0xff]
      %v2506 = vld [vmem:[#allocation6 + $0x3e0] sm:$0xff]
      %v2507 = vld [vmem:[#allocation6 + $0x3e8] sm:$0xff]
      %v2508 = vld [vmem:[#allocation6 + $0x3f0] sm:$0xff]
      %v2509 = vld [vmem:[#allocation6 + $0x3f8] sm:$0xff]
      %v2510 = vld [vmem:[#allocation6 + $0x400] sm:$0xff]
      %v2511 = vld [vmem:[#allocation6 + $0x408] sm:$0xff]
      %v2512 = vld [vmem:[#allocation6 + $0x410] sm:$0xff]
      %v2513 = vld [vmem:[#allocation6 + $0x418] sm:$0xff]
      %v2514 = vld [vmem:[#allocation6 + $0x420] sm:$0xff]
      %v2515 = vld [vmem:[#allocation6 + $0x428] sm:$0xff]
      %v2516 = vld [vmem:[#allocation6 + $0x430] sm:$0xff]
      %v2517 = vld [vmem:[#allocation6 + $0x438] sm:$0xff]
      %v2518 = vld [vmem:[#allocation6 + $0x440] sm:$0xff]
      %v2519 = vld [vmem:[#allocation6 + $0x448] sm:$0xff]
      %v2520 = vld [vmem:[#allocation6 + $0x450] sm:$0xff]
      %v2521 = vld [vmem:[#allocation6 + $0x458] sm:$0xff]
      %v2522 = vld [vmem:[#allocation6 + $0x460] sm:$0xff]
      %v2523 = vld [vmem:[#allocation6 + $0x468] sm:$0xff]
      %v2524 = vld [vmem:[#allocation6 + $0x470] sm:$0xff]
      %v2525 = vld [vmem:[#allocation6 + $0x478] sm:$0xff]
      %v2526 = vld [vmem:[#allocation6 + $0x480] sm:$0xff]
      %v2527 = vld [vmem:[#allocation6 + $0x488] sm:$0xff]
      %v2528 = vld [vmem:[#allocation6 + $0x490] sm:$0xff]
      %v2529 = vld [vmem:[#allocation6 + $0x498] sm:$0xff]
      %v2530 = vld [vmem:[#allocation6 + $0x4a0] sm:$0xff]
      %v2531 = vld [vmem:[#allocation6 + $0x4a8] sm:$0xff]
      %v2532 = vld [vmem:[#allocation6 + $0x4b0] sm:$0xff]
      %v2533 = vld [vmem:[#allocation6 + $0x4b8] sm:$0xff]
      %v2534 = vld [vmem:[#allocation6 + $0x4c0] sm:$0xff]
      %v2535 = vld [vmem:[#allocation6 + $0x4c8] sm:$0xff]
      %v2536 = vld [vmem:[#allocation6 + $0x4d0] sm:$0xff]
      %v2537 = vld [vmem:[#allocation6 + $0x4d8] sm:$0xff]
      %v2538 = vld [vmem:[#allocation6 + $0x4e0] sm:$0xff]
      %v2539 = vld [vmem:[#allocation6 + $0x4e8] sm:$0xff]
      %v2540 = vld [vmem:[#allocation6 + $0x4f0] sm:$0xff]
      %v2541 = vld [vmem:[#allocation6 + $0x4f8] sm:$0xff]
      %v2542 = vld [vmem:[#allocation6 + $0x500] sm:$0xff]
      %v2543 = vld [vmem:[#allocation6 + $0x508] sm:$0xff]
      %v2544 = vld [vmem:[#allocation6 + $0x510] sm:$0xff]
      %v2545 = vld [vmem:[#allocation6 + $0x518] sm:$0xff]
      %v2546 = vld [vmem:[#allocation6 + $0x520] sm:$0xff]
      %v2547 = vld [vmem:[#allocation6 + $0x528] sm:$0xff]
      %v2548 = vld [vmem:[#allocation6 + $0x530] sm:$0xff]
      %v2549 = vld [vmem:[#allocation6 + $0x538] sm:$0xff]
      %v2550 = vld [vmem:[#allocation6 + $0x540] sm:$0xff]
      %v2551 = vld [vmem:[#allocation6 + $0x548] sm:$0xff]
      %v2552 = vld [vmem:[#allocation6 + $0x550] sm:$0xff]
      %v2553 = vld [vmem:[#allocation6 + $0x558] sm:$0xff]
      %v2554 = vld [vmem:[#allocation6 + $0x560] sm:$0xff]
      %v2555 = vld [vmem:[#allocation6 + $0x568] sm:$0xff]
      %v2556 = vld [vmem:[#allocation6 + $0x570] sm:$0xff]
      %v2557 = vld [vmem:[#allocation6 + $0x578] sm:$0xff]
      %v2558 = vld [vmem:[#allocation6 + $0x580] sm:$0xff]
      %v2559 = vld [vmem:[#allocation6 + $0x588] sm:$0xff]
      %v2560 = vld [vmem:[#allocation6 + $0x590] sm:$0xff]
      %v2561 = vld [vmem:[#allocation6 + $0x598] sm:$0xff]
      %v2562 = vld [vmem:[#allocation6 + $0x5a0] sm:$0xff]
      %v2563 = vld [vmem:[#allocation6 + $0x5a8] sm:$0xff]
      %v2564 = vld [vmem:[#allocation6 + $0x5b0] sm:$0xff]
      %v2565 = vld [vmem:[#allocation6 + $0x5b8] sm:$0xff]
      %v2566 = vld [vmem:[#allocation6 + $0x5c0] sm:$0xff]
      %v2567 = vld [vmem:[#allocation6 + $0x5c8] sm:$0xff]
      %v2568 = vld [vmem:[#allocation6 + $0x5d0] sm:$0xff]
      %v2569 = vld [vmem:[#allocation6 + $0x5d8] sm:$0xff]
      %v2570 = vld [vmem:[#allocation6 + $0x5e0] sm:$0xff]
      %v2571 = vld [vmem:[#allocation6 + $0x5e8] sm:$0xff]
      %v2572 = vld [vmem:[#allocation6 + $0x5f0] sm:$0xff]
      %v2573 = vld [vmem:[#allocation6 + $0x5f8] sm:$0xff]
      %v2574 = vld [vmem:[#allocation6 + $0x600] sm:$0xff]
      %v2575 = vld [vmem:[#allocation6 + $0x608] sm:$0xff]
      %v2576 = vld [vmem:[#allocation6 + $0x610] sm:$0xff]
      %v2577 = vld [vmem:[#allocation6 + $0x618] sm:$0xff]
      %v2578 = vld [vmem:[#allocation6 + $0x620] sm:$0xff]
      %v2579 = vld [vmem:[#allocation6 + $0x628] sm:$0xff]
      %v2580 = vld [vmem:[#allocation6 + $0x630] sm:$0xff]
      %v2581 = vld [vmem:[#allocation6 + $0x638] sm:$0xff]
      %v2582 = vld [vmem:[#allocation6 + $0x640] sm:$0xff]
      %v2583 = vld [vmem:[#allocation6 + $0x648] sm:$0xff]
      %v2584 = vld [vmem:[#allocation6 + $0x650] sm:$0xff]
      %v2585 = vld [vmem:[#allocation6 + $0x658] sm:$0xff]
      %v2586 = vld [vmem:[#allocation6 + $0x660] sm:$0xff]
      %v2587 = vld [vmem:[#allocation6 + $0x668] sm:$0xff]
      %v2588 = vld [vmem:[#allocation6 + $0x670] sm:$0xff]
      %v2589 = vld [vmem:[#allocation6 + $0x678] sm:$0xff]
      %v2590 = vld [vmem:[#allocation6 + $0x680] sm:$0xff]
      %v2591 = vld [vmem:[#allocation6 + $0x688] sm:$0xff]
      %v2592 = vld [vmem:[#allocation6 + $0x690] sm:$0xff]
      %v2593 = vld [vmem:[#allocation6 + $0x698] sm:$0xff]
      %v2594 = vld [vmem:[#allocation6 + $0x6a0] sm:$0xff]
      %v2595 = vld [vmem:[#allocation6 + $0x6a8] sm:$0xff]
      %v2596 = vld [vmem:[#allocation6 + $0x6b0] sm:$0xff]
      %v2597 = vld [vmem:[#allocation6 + $0x6b8] sm:$0xff]
      %v2598 = vld [vmem:[#allocation6 + $0x6c0] sm:$0xff]
      %v2599 = vld [vmem:[#allocation6 + $0x6c8] sm:$0xff]
      %v2600 = vld [vmem:[#allocation6 + $0x6d0] sm:$0xff]
      %v2601 = vld [vmem:[#allocation6 + $0x6d8] sm:$0xff]
      %v2602 = vld [vmem:[#allocation6 + $0x6e0] sm:$0xff]
      %v2603 = vld [vmem:[#allocation6 + $0x6e8] sm:$0xff]
      %v2604 = vld [vmem:[#allocation6 + $0x6f0] sm:$0xff]
      %v2605 = vld [vmem:[#allocation6 + $0x6f8] sm:$0xff]
      %v2606 = vld [vmem:[#allocation6 + $0x700] sm:$0xff]
      %v2607 = vld [vmem:[#allocation6 + $0x708] sm:$0xff]
      %v2608 = vld [vmem:[#allocation6 + $0x710] sm:$0xff]
      %v2609 = vld [vmem:[#allocation6 + $0x718] sm:$0xff]
      %v2610 = vld [vmem:[#allocation6 + $0x720] sm:$0xff]
      %v2611 = vld [vmem:[#allocation6 + $0x728] sm:$0xff]
      %v2612 = vld [vmem:[#allocation6 + $0x730] sm:$0xff]
      %v2613 = vld [vmem:[#allocation6 + $0x738] sm:$0xff]
      %v2614 = vld [vmem:[#allocation6 + $0x740] sm:$0xff]
      %v2615 = vld [vmem:[#allocation6 + $0x748] sm:$0xff]
      %v2616 = vld [vmem:[#allocation6 + $0x750] sm:$0xff]
      %v2617 = vld [vmem:[#allocation6 + $0x758] sm:$0xff]
      %v2618 = vld [vmem:[#allocation6 + $0x760] sm:$0xff]
      %v2619 = vld [vmem:[#allocation6 + $0x768] sm:$0xff]
      %v2620 = vld [vmem:[#allocation6 + $0x770] sm:$0xff]
      %v2621 = vld [vmem:[#allocation6 + $0x778] sm:$0xff]
      %v2622 = vld [vmem:[#allocation6 + $0x780] sm:$0xff]
      %v2623 = vld [vmem:[#allocation6 + $0x788] sm:$0xff]
      %v2624 = vld [vmem:[#allocation6 + $0x790] sm:$0xff]
      %v2625 = vld [vmem:[#allocation6 + $0x798] sm:$0xff]
      %v2626 = vld [vmem:[#allocation6 + $0x7a0] sm:$0xff]
      %v2627 = vld [vmem:[#allocation6 + $0x7a8] sm:$0xff]
      %v2628 = vld [vmem:[#allocation6 + $0x7b0] sm:$0xff]
      %v2629 = vld [vmem:[#allocation6 + $0x7b8] sm:$0xff]
      %v2630 = vld [vmem:[#allocation6 + $0x7c0] sm:$0xff]
      %v2631 = vld [vmem:[#allocation6 + $0x7c8] sm:$0xff]
      %v2632 = vld [vmem:[#allocation6 + $0x7d0] sm:$0xff]
      %v2633 = vld [vmem:[#allocation6 + $0x7d8] sm:$0xff]
      %v2634 = vld [vmem:[#allocation6 + $0x7e0] sm:$0xff]
      %v2635 = vld [vmem:[#allocation6 + $0x7e8] sm:$0xff]
      %v2636 = vld [vmem:[#allocation6 + $0x7f0] sm:$0xff]
      %v2637 = vld [vmem:[#allocation6 + $0x7f8] sm:$0xff]
      %v2638 = vld [vmem:[#allocation6 + $0x800] sm:$0xff]
      %v2639 = vld [vmem:[#allocation6 + $0x808] sm:$0xff]
      %v2640 = vld [vmem:[#allocation6 + $0x810] sm:$0xff]
      %v2641 = vld [vmem:[#allocation6 + $0x818] sm:$0xff]
      %v2642 = vld [vmem:[#allocation6 + $0x820] sm:$0xff]
      %v2643 = vld [vmem:[#allocation6 + $0x828] sm:$0xff]
      %v2644 = vld [vmem:[#allocation6 + $0x830] sm:$0xff]
      %v2645 = vld [vmem:[#allocation6 + $0x838] sm:$0xff]
      %v2646 = vld [vmem:[#allocation6 + $0x840] sm:$0xff]
      %v2647 = vld [vmem:[#allocation6 + $0x848] sm:$0xff]
      %v2648 = vld [vmem:[#allocation6 + $0x850] sm:$0xff]
      %v2649 = vld [vmem:[#allocation6 + $0x858] sm:$0xff]
      %v2650 = vld [vmem:[#allocation6 + $0x860] sm:$0xff]
      %v2651 = vld [vmem:[#allocation6 + $0x868] sm:$0xff]
      %v2652 = vld [vmem:[#allocation6 + $0x870] sm:$0xff]
      %v2653 = vld [vmem:[#allocation6 + $0x878] sm:$0xff]
      %v2654 = vld [vmem:[#allocation6 + $0x880] sm:$0xff]
      %v2655 = vld [vmem:[#allocation6 + $0x888] sm:$0xff]
      %v2656 = vld [vmem:[#allocation6 + $0x890] sm:$0xff]
      %v2657 = vld [vmem:[#allocation6 + $0x898] sm:$0xff]
      %v2658 = vld [vmem:[#allocation6 + $0x8a0] sm:$0xff]
      %v2659 = vld [vmem:[#allocation6 + $0x8a8] sm:$0xff]
      %v2660 = vld [vmem:[#allocation6 + $0x8b0] sm:$0xff]
      %v2661 = vld [vmem:[#allocation6 + $0x8b8] sm:$0xff]
      %v2662 = vld [vmem:[#allocation6 + $0x8c0] sm:$0xff]
      %v2663 = vld [vmem:[#allocation6 + $0x8c8] sm:$0xff]
      %v2664 = vld [vmem:[#allocation6 + $0x8d0] sm:$0xff]
      %v2665 = vld [vmem:[#allocation6 + $0x8d8] sm:$0xff]
      %v2666 = vld [vmem:[#allocation6 + $0x8e0] sm:$0xff]
      %v2667 = vld [vmem:[#allocation6 + $0x8e8] sm:$0xff]
      %v2668 = vld [vmem:[#allocation6 + $0x8f0] sm:$0xff]
      %v2669 = vld [vmem:[#allocation6 + $0x8f8] sm:$0xff]
      %v2958 = vunpack.c.l.b16 %v2382
      %v2959 = vunpack.c.h.b16 %v2382
      %v2960 = vunpack.c.l.b16 %v2383
      %v2961 = vunpack.c.h.b16 %v2383
      %v2962 = vunpack.c.l.b16 %v2384
      %v2963 = vunpack.c.h.b16 %v2384
      %v2964 = vunpack.c.l.b16 %v2385
      %v2965 = vunpack.c.h.b16 %v2385
      %v2966 = vunpack.c.l.b16 %v2386
      %v2967 = vunpack.c.h.b16 %v2386
      %v2968 = vunpack.c.l.b16 %v2387
      %v2969 = vunpack.c.h.b16 %v2387
      %v2970 = vunpack.c.l.b16 %v2388
      %v2971 = vunpack.c.h.b16 %v2388
      %v2972 = vunpack.c.l.b16 %v2389
      %v2973 = vunpack.c.h.b16 %v2389
      %v2974 = vunpack.c.l.b16 %v2390
      %v2975 = vunpack.c.h.b16 %v2390
      %v2976 = vunpack.c.l.b16 %v2391
      %v2977 = vunpack.c.h.b16 %v2391
      %v2978 = vunpack.c.l.b16 %v2392
      %v2979 = vunpack.c.h.b16 %v2392
      %v2980 = vunpack.c.l.b16 %v2393
      %v2981 = vunpack.c.h.b16 %v2393
      %v2982 = vunpack.c.l.b16 %v2394
      %v2983 = vunpack.c.h.b16 %v2394
      %v2984 = vunpack.c.l.b16 %v2395
      %v2985 = vunpack.c.h.b16 %v2395
      %v2986 = vunpack.c.l.b16 %v2396
      %v2987 = vunpack.c.h.b16 %v2396
      %v2988 = vunpack.c.l.b16 %v2397
      %v2989 = vunpack.c.h.b16 %v2397
      %v2990 = vunpack.c.l.b16 %v2398
      %v2991 = vunpack.c.h.b16 %v2398
      %v2992 = vunpack.c.l.b16 %v2399
      %v2993 = vunpack.c.h.b16 %v2399
      %v2994 = vunpack.c.l.b16 %v2400
      %v2995 = vunpack.c.h.b16 %v2400
      %v2996 = vunpack.c.l.b16 %v2401
      %v2997 = vunpack.c.h.b16 %v2401
      %v2998 = vunpack.c.l.b16 %v2402
      %v2999 = vunpack.c.h.b16 %v2402
      %v3000 = vunpack.c.l.b16 %v2403
      %v3001 = vunpack.c.h.b16 %v2403
      %v3002 = vunpack.c.l.b16 %v2404
      %v3003 = vunpack.c.h.b16 %v2404
      %v3004 = vunpack.c.l.b16 %v2405
      %v3005 = vunpack.c.h.b16 %v2405
      %v3006 = vunpack.c.l.b16 %v2406
      %v3007 = vunpack.c.h.b16 %v2406
      %v3008 = vunpack.c.l.b16 %v2407
      %v3009 = vunpack.c.h.b16 %v2407
      %v3010 = vunpack.c.l.b16 %v2408
      %v3011 = vunpack.c.h.b16 %v2408
      %v3012 = vunpack.c.l.b16 %v2409
      %v3013 = vunpack.c.h.b16 %v2409
      %v3014 = vunpack.c.l.b16 %v2410
      %v3015 = vunpack.c.h.b16 %v2410
      %v3016 = vunpack.c.l.b16 %v2411
      %v3017 = vunpack.c.h.b16 %v2411
      %v3018 = vunpack.c.l.b16 %v2412
      %v3019 = vunpack.c.h.b16 %v2412
      %v3020 = vunpack.c.l.b16 %v2413
      %v3021 = vunpack.c.h.b16 %v2413
      %v3022 = vunpack.c.l.b16 %v2414
      %v3023 = vunpack.c.h.b16 %v2414
      %v3024 = vunpack.c.l.b16 %v2415
      %v3025 = vunpack.c.h.b16 %v2415
      %v3026 = vunpack.c.l.b16 %v2416
      %v3027 = vunpack.c.h.b16 %v2416
      %v3028 = vunpack.c.l.b16 %v2417
      %v3029 = vunpack.c.h.b16 %v2417
      %v3030 = vunpack.c.l.b16 %v2418
      %v3031 = vunpack.c.h.b16 %v2418
      %v3032 = vunpack.c.l.b16 %v2419
      %v3033 = vunpack.c.h.b16 %v2419
      %v3034 = vunpack.c.l.b16 %v2420
      %v3035 = vunpack.c.h.b16 %v2420
      %v3036 = vunpack.c.l.b16 %v2421
      %v3037 = vunpack.c.h.b16 %v2421
      %v3038 = vunpack.c.l.b16 %v2422
      %v3039 = vunpack.c.h.b16 %v2422
      %v3040 = vunpack.c.l.b16 %v2423
      %v3041 = vunpack.c.h.b16 %v2423
      %v3042 = vunpack.c.l.b16 %v2424
      %v3043 = vunpack.c.h.b16 %v2424
      %v3044 = vunpack.c.l.b16 %v2425
      %v3045 = vunpack.c.h.b16 %v2425
      %v3046 = vunpack.c.l.b16 %v2426
      %v3047 = vunpack.c.h.b16 %v2426
      %v3048 = vunpack.c.l.b16 %v2427
      %v3049 = vunpack.c.h.b16 %v2427
      %v3050 = vunpack.c.l.b16 %v2428
      %v3051 = vunpack.c.h.b16 %v2428
      %v3052 = vunpack.c.l.b16 %v2429
      %v3053 = vunpack.c.h.b16 %v2429
      %v3054 = vunpack.c.l.b16 %v2430
      %v3055 = vunpack.c.h.b16 %v2430
      %v3056 = vunpack.c.l.b16 %v2431
      %v3057 = vunpack.c.h.b16 %v2431
      %v3058 = vunpack.c.l.b16 %v2432
      %v3059 = vunpack.c.h.b16 %v2432
      %v3060 = vunpack.c.l.b16 %v2433
      %v3061 = vunpack.c.h.b16 %v2433
      %v3062 = vunpack.c.l.b16 %v2434
      %v3063 = vunpack.c.h.b16 %v2434
      %v3064 = vunpack.c.l.b16 %v2435
      %v3065 = vunpack.c.h.b16 %v2435
      %v3066 = vunpack.c.l.b16 %v2436
      %v3067 = vunpack.c.h.b16 %v2436
      %v3068 = vunpack.c.l.b16 %v2437
      %v3069 = vunpack.c.h.b16 %v2437
      %v3070 = vunpack.c.l.b16 %v2438
      %v3071 = vunpack.c.h.b16 %v2438
      %v3072 = vunpack.c.l.b16 %v2439
      %v3073 = vunpack.c.h.b16 %v2439
      %v3074 = vunpack.c.l.b16 %v2440
      %v3075 = vunpack.c.h.b16 %v2440
      %v3076 = vunpack.c.l.b16 %v2441
      %v3077 = vunpack.c.h.b16 %v2441
      %v3078 = vunpack.c.l.b16 %v2442
      %v3079 = vunpack.c.h.b16 %v2442
      %v3080 = vunpack.c.l.b16 %v2443
      %v3081 = vunpack.c.h.b16 %v2443
      %v3082 = vunpack.c.l.b16 %v2444
      %v3083 = vunpack.c.h.b16 %v2444
      %v3084 = vunpack.c.l.b16 %v2445
      %v3085 = vunpack.c.h.b16 %v2445
      %v3086 = vunpack.c.l.b16 %v2446
      %v3087 = vunpack.c.h.b16 %v2446
      %v3088 = vunpack.c.l.b16 %v2447
      %v3089 = vunpack.c.h.b16 %v2447
      %v3090 = vunpack.c.l.b16 %v2448
      %v3091 = vunpack.c.h.b16 %v2448
      %v3092 = vunpack.c.l.b16 %v2449
      %v3093 = vunpack.c.h.b16 %v2449
      %v3094 = vunpack.c.l.b16 %v2450
      %v3095 = vunpack.c.h.b16 %v2450
      %v3096 = vunpack.c.l.b16 %v2451
      %v3097 = vunpack.c.h.b16 %v2451
      %v3098 = vunpack.c.l.b16 %v2452
      %v3099 = vunpack.c.h.b16 %v2452
      %v3100 = vunpack.c.l.b16 %v2453
      %v3101 = vunpack.c.h.b16 %v2453
      %v3102 = vunpack.c.l.b16 %v2454
      %v3103 = vunpack.c.h.b16 %v2454
      %v3104 = vunpack.c.l.b16 %v2455
      %v3105 = vunpack.c.h.b16 %v2455
      %v3106 = vunpack.c.l.b16 %v2456
      %v3107 = vunpack.c.h.b16 %v2456
      %v3108 = vunpack.c.l.b16 %v2457
      %v3109 = vunpack.c.h.b16 %v2457
      %v3110 = vunpack.c.l.b16 %v2458
      %v3111 = vunpack.c.h.b16 %v2458
      %v3112 = vunpack.c.l.b16 %v2459
      %v3113 = vunpack.c.h.b16 %v2459
      %v3114 = vunpack.c.l.b16 %v2460
      %v3115 = vunpack.c.h.b16 %v2460
      %v3116 = vunpack.c.l.b16 %v2461
      %v3117 = vunpack.c.h.b16 %v2461
      %v3118 = vunpack.c.l.b16 %v2462
      %v3119 = vunpack.c.h.b16 %v2462
      %v3120 = vunpack.c.l.b16 %v2463
      %v3121 = vunpack.c.h.b16 %v2463
      %v3122 = vunpack.c.l.b16 %v2464
      %v3123 = vunpack.c.h.b16 %v2464
      %v3124 = vunpack.c.l.b16 %v2465
      %v3125 = vunpack.c.h.b16 %v2465
      %v3126 = vunpack.c.l.b16 %v2466
      %v3127 = vunpack.c.h.b16 %v2466
      %v3128 = vunpack.c.l.b16 %v2467
      %v3129 = vunpack.c.h.b16 %v2467
      %v3130 = vunpack.c.l.b16 %v2468
      %v3131 = vunpack.c.h.b16 %v2468
      %v3132 = vunpack.c.l.b16 %v2469
      %v3133 = vunpack.c.h.b16 %v2469
      %v3134 = vunpack.c.l.b16 %v2470
      %v3135 = vunpack.c.h.b16 %v2470
      %v3136 = vunpack.c.l.b16 %v2471
      %v3137 = vunpack.c.h.b16 %v2471
      %v3138 = vunpack.c.l.b16 %v2472
      %v3139 = vunpack.c.h.b16 %v2472
      %v3140 = vunpack.c.l.b16 %v2473
      %v3141 = vunpack.c.h.b16 %v2473
      %v3142 = vunpack.c.l.b16 %v2474
      %v3143 = vunpack.c.h.b16 %v2474
      %v3144 = vunpack.c.l.b16 %v2475
      %v3145 = vunpack.c.h.b16 %v2475
      %v3146 = vunpack.c.l.b16 %v2476
      %v3147 = vunpack.c.h.b16 %v2476
      %v3148 = vunpack.c.l.b16 %v2477
      %v3149 = vunpack.c.h.b16 %v2477
      %v3150 = vunpack.c.l.b16 %v2478
      %v3151 = vunpack.c.h.b16 %v2478
      %v3152 = vunpack.c.l.b16 %v2479
      %v3153 = vunpack.c.h.b16 %v2479
      %v3154 = vunpack.c.l.b16 %v2480
      %v3155 = vunpack.c.h.b16 %v2480
      %v3156 = vunpack.c.l.b16 %v2481
      %v3157 = vunpack.c.h.b16 %v2481
      %v3158 = vunpack.c.l.b16 %v2482
      %v3159 = vunpack.c.h.b16 %v2482
      %v3160 = vunpack.c.l.b16 %v2483
      %v3161 = vunpack.c.h.b16 %v2483
      %v3162 = vunpack.c.l.b16 %v2484
      %v3163 = vunpack.c.h.b16 %v2484
      %v3164 = vunpack.c.l.b16 %v2485
      %v3165 = vunpack.c.h.b16 %v2485
      %v3166 = vunpack.c.l.b16 %v2486
      %v3167 = vunpack.c.h.b16 %v2486
      %v3168 = vunpack.c.l.b16 %v2487
      %v3169 = vunpack.c.h.b16 %v2487
      %v3170 = vunpack.c.l.b16 %v2488
      %v3171 = vunpack.c.h.b16 %v2488
      %v3172 = vunpack.c.l.b16 %v2489
      %v3173 = vunpack.c.h.b16 %v2489
      %v3174 = vunpack.c.l.b16 %v2490
      %v3175 = vunpack.c.h.b16 %v2490
      %v3176 = vunpack.c.l.b16 %v2491
      %v3177 = vunpack.c.h.b16 %v2491
      %v3178 = vunpack.c.l.b16 %v2492
      %v3179 = vunpack.c.h.b16 %v2492
      %v3180 = vunpack.c.l.b16 %v2493
      %v3181 = vunpack.c.h.b16 %v2493
      %v3182 = vunpack.c.l.b16 %v2494
      %v3183 = vunpack.c.h.b16 %v2494
      %v3184 = vunpack.c.l.b16 %v2495
      %v3185 = vunpack.c.h.b16 %v2495
      %v3186 = vunpack.c.l.b16 %v2496
      %v3187 = vunpack.c.h.b16 %v2496
      %v3188 = vunpack.c.l.b16 %v2497
      %v3189 = vunpack.c.h.b16 %v2497
      %v3190 = vunpack.c.l.b16 %v2498
      %v3191 = vunpack.c.h.b16 %v2498
      %v3192 = vunpack.c.l.b16 %v2499
      %v3193 = vunpack.c.h.b16 %v2499
      %v3194 = vunpack.c.l.b16 %v2500
      %v3195 = vunpack.c.h.b16 %v2500
      %v3196 = vunpack.c.l.b16 %v2501
      %v3197 = vunpack.c.h.b16 %v2501
      %v3198 = vunpack.c.l.b16 %v2502
      %v3199 = vunpack.c.h.b16 %v2502
      %v3200 = vunpack.c.l.b16 %v2503
      %v3201 = vunpack.c.h.b16 %v2503
      %v3202 = vunpack.c.l.b16 %v2504
      %v3203 = vunpack.c.h.b16 %v2504
      %v3204 = vunpack.c.l.b16 %v2505
      %v3205 = vunpack.c.h.b16 %v2505
      %v3206 = vunpack.c.l.b16 %v2506
      %v3207 = vunpack.c.h.b16 %v2506
      %v3208 = vunpack.c.l.b16 %v2507
      %v3209 = vunpack.c.h.b16 %v2507
      %v3210 = vunpack.c.l.b16 %v2508
      %v3211 = vunpack.c.h.b16 %v2508
      %v3212 = vunpack.c.l.b16 %v2509
      %v3213 = vunpack.c.h.b16 %v2509
      %v3214 = vunpack.c.l.b16 %v2510
      %v3215 = vunpack.c.h.b16 %v2510
      %v3216 = vunpack.c.l.b16 %v2511
      %v3217 = vunpack.c.h.b16 %v2511
      %v3218 = vunpack.c.l.b16 %v2512
      %v3219 = vunpack.c.h.b16 %v2512
      %v3220 = vunpack.c.l.b16 %v2513
      %v3221 = vunpack.c.h.b16 %v2513
      %v3222 = vunpack.c.l.b16 %v2514
      %v3223 = vunpack.c.h.b16 %v2514
      %v3224 = vunpack.c.l.b16 %v2515
      %v3225 = vunpack.c.h.b16 %v2515
      %v3226 = vunpack.c.l.b16 %v2516
      %v3227 = vunpack.c.h.b16 %v2516
      %v3228 = vunpack.c.l.b16 %v2517
      %v3229 = vunpack.c.h.b16 %v2517
      %v3230 = vunpack.c.l.b16 %v2518
      %v3231 = vunpack.c.h.b16 %v2518
      %v3232 = vunpack.c.l.b16 %v2519
      %v3233 = vunpack.c.h.b16 %v2519
      %v3234 = vunpack.c.l.b16 %v2520
      %v3235 = vunpack.c.h.b16 %v2520
      %v3236 = vunpack.c.l.b16 %v2521
      %v3237 = vunpack.c.h.b16 %v2521
      %v3238 = vunpack.c.l.b16 %v2522
      %v3239 = vunpack.c.h.b16 %v2522
      %v3240 = vunpack.c.l.b16 %v2523
      %v3241 = vunpack.c.h.b16 %v2523
      %v3242 = vunpack.c.l.b16 %v2524
      %v3243 = vunpack.c.h.b16 %v2524
      %v3244 = vunpack.c.l.b16 %v2525
      %v3245 = vunpack.c.h.b16 %v2525
      %v3246 = vunpack.c.l.b16 %v2526
      %v3247 = vunpack.c.h.b16 %v2526
      %v3248 = vunpack.c.l.b16 %v2527
      %v3249 = vunpack.c.h.b16 %v2527
      %v3250 = vunpack.c.l.b16 %v2528
      %v3251 = vunpack.c.h.b16 %v2528
      %v3252 = vunpack.c.l.b16 %v2529
      %v3253 = vunpack.c.h.b16 %v2529
      %v3254 = vunpack.c.l.b16 %v2530
      %v3255 = vunpack.c.h.b16 %v2530
      %v3256 = vunpack.c.l.b16 %v2531
      %v3257 = vunpack.c.h.b16 %v2531
      %v3258 = vunpack.c.l.b16 %v2532
      %v3259 = vunpack.c.h.b16 %v2532
      %v3260 = vunpack.c.l.b16 %v2533
      %v3261 = vunpack.c.h.b16 %v2533
      %v3262 = vunpack.c.l.b16 %v2534
      %v3263 = vunpack.c.h.b16 %v2534
      %v3264 = vunpack.c.l.b16 %v2535
      %v3265 = vunpack.c.h.b16 %v2535
      %v3266 = vunpack.c.l.b16 %v2536
      %v3267 = vunpack.c.h.b16 %v2536
      %v3268 = vunpack.c.l.b16 %v2537
      %v3269 = vunpack.c.h.b16 %v2537
      %v3270 = vunpack.c.l.b16 %v2538
      %v3271 = vunpack.c.h.b16 %v2538
      %v3272 = vunpack.c.l.b16 %v2539
      %v3273 = vunpack.c.h.b16 %v2539
      %v3274 = vunpack.c.l.b16 %v2540
      %v3275 = vunpack.c.h.b16 %v2540
      %v3276 = vunpack.c.l.b16 %v2541
      %v3277 = vunpack.c.h.b16 %v2541
      %v3278 = vunpack.c.l.b16 %v2542
      %v3279 = vunpack.c.h.b16 %v2542
      %v3280 = vunpack.c.l.b16 %v2543
      %v3281 = vunpack.c.h.b16 %v2543
      %v3282 = vunpack.c.l.b16 %v2544
      %v3283 = vunpack.c.h.b16 %v2544
      %v3284 = vunpack.c.l.b16 %v2545
      %v3285 = vunpack.c.h.b16 %v2545
      %v3286 = vunpack.c.l.b16 %v2546
      %v3287 = vunpack.c.h.b16 %v2546
      %v3288 = vunpack.c.l.b16 %v2547
      %v3289 = vunpack.c.h.b16 %v2547
      %v3290 = vunpack.c.l.b16 %v2548
      %v3291 = vunpack.c.h.b16 %v2548
      %v3292 = vunpack.c.l.b16 %v2549
      %v3293 = vunpack.c.h.b16 %v2549
      %v3294 = vunpack.c.l.b16 %v2550
      %v3295 = vunpack.c.h.b16 %v2550
      %v3296 = vunpack.c.l.b16 %v2551
      %v3297 = vunpack.c.h.b16 %v2551
      %v3298 = vunpack.c.l.b16 %v2552
      %v3299 = vunpack.c.h.b16 %v2552
      %v3300 = vunpack.c.l.b16 %v2553
      %v3301 = vunpack.c.h.b16 %v2553
      %v3302 = vunpack.c.l.b16 %v2554
      %v3303 = vunpack.c.h.b16 %v2554
      %v3304 = vunpack.c.l.b16 %v2555
      %v3305 = vunpack.c.h.b16 %v2555
      %v3306 = vunpack.c.l.b16 %v2556
      %v3307 = vunpack.c.h.b16 %v2556
      %v3308 = vunpack.c.l.b16 %v2557
      %v3309 = vunpack.c.h.b16 %v2557
      %v3310 = vunpack.c.l.b16 %v2558
      %v3311 = vunpack.c.h.b16 %v2558
      %v3312 = vunpack.c.l.b16 %v2559
      %v3313 = vunpack.c.h.b16 %v2559
      %v3314 = vunpack.c.l.b16 %v2560
      %v3315 = vunpack.c.h.b16 %v2560
      %v3316 = vunpack.c.l.b16 %v2561
      %v3317 = vunpack.c.h.b16 %v2561
      %v3318 = vunpack.c.l.b16 %v2562
      %v3319 = vunpack.c.h.b16 %v2562
      %v3320 = vunpack.c.l.b16 %v2563
      %v3321 = vunpack.c.h.b16 %v2563
      %v3322 = vunpack.c.l.b16 %v2564
      %v3323 = vunpack.c.h.b16 %v2564
      %v3324 = vunpack.c.l.b16 %v2565
      %v3325 = vunpack.c.h.b16 %v2565
      %v3326 = vunpack.c.l.b16 %v2566
      %v3327 = vunpack.c.h.b16 %v2566
      %v3328 = vunpack.c.l.b16 %v2567
      %v3329 = vunpack.c.h.b16 %v2567
      %v3330 = vunpack.c.l.b16 %v2568
      %v3331 = vunpack.c.h.b16 %v2568
      %v3332 = vunpack.c.l.b16 %v2569
      %v3333 = vunpack.c.h.b16 %v2569
      %v3334 = vunpack.c.l.b16 %v2570
      %v3335 = vunpack.c.h.b16 %v2570
      %v3336 = vunpack.c.l.b16 %v2571
      %v3337 = vunpack.c.h.b16 %v2571
      %v3338 = vunpack.c.l.b16 %v2572
      %v3339 = vunpack.c.h.b16 %v2572
      %v3340 = vunpack.c.l.b16 %v2573
      %v3341 = vunpack.c.h.b16 %v2573
      %v3342 = vunpack.c.l.b16 %v2574
      %v3343 = vunpack.c.h.b16 %v2574
      %v3344 = vunpack.c.l.b16 %v2575
      %v3345 = vunpack.c.h.b16 %v2575
      %v3346 = vunpack.c.l.b16 %v2576
      %v3347 = vunpack.c.h.b16 %v2576
      %v3348 = vunpack.c.l.b16 %v2577
      %v3349 = vunpack.c.h.b16 %v2577
      %v3350 = vunpack.c.l.b16 %v2578
      %v3351 = vunpack.c.h.b16 %v2578
      %v3352 = vunpack.c.l.b16 %v2579
      %v3353 = vunpack.c.h.b16 %v2579
      %v3354 = vunpack.c.l.b16 %v2580
      %v3355 = vunpack.c.h.b16 %v2580
      %v3356 = vunpack.c.l.b16 %v2581
      %v3357 = vunpack.c.h.b16 %v2581
      %v3358 = vunpack.c.l.b16 %v2582
      %v3359 = vunpack.c.h.b16 %v2582
      %v3360 = vunpack.c.l.b16 %v2583
      %v3361 = vunpack.c.h.b16 %v2583
      %v3362 = vunpack.c.l.b16 %v2584
      %v3363 = vunpack.c.h.b16 %v2584
      %v3364 = vunpack.c.l.b16 %v2585
      %v3365 = vunpack.c.h.b16 %v2585
      %v3366 = vunpack.c.l.b16 %v2586
      %v3367 = vunpack.c.h.b16 %v2586
      %v3368 = vunpack.c.l.b16 %v2587
      %v3369 = vunpack.c.h.b16 %v2587
      %v3370 = vunpack.c.l.b16 %v2588
      %v3371 = vunpack.c.h.b16 %v2588
      %v3372 = vunpack.c.l.b16 %v2589
      %v3373 = vunpack.c.h.b16 %v2589
      %v3374 = vunpack.c.l.b16 %v2590
      %v3375 = vunpack.c.h.b16 %v2590
      %v3376 = vunpack.c.l.b16 %v2591
      %v3377 = vunpack.c.h.b16 %v2591
      %v3378 = vunpack.c.l.b16 %v2592
      %v3379 = vunpack.c.h.b16 %v2592
      %v3380 = vunpack.c.l.b16 %v2593
      %v3381 = vunpack.c.h.b16 %v2593
      %v3382 = vunpack.c.l.b16 %v2594
      %v3383 = vunpack.c.h.b16 %v2594
      %v3384 = vunpack.c.l.b16 %v2595
      %v3385 = vunpack.c.h.b16 %v2595
      %v3386 = vunpack.c.l.b16 %v2596
      %v3387 = vunpack.c.h.b16 %v2596
      %v3388 = vunpack.c.l.b16 %v2597
      %v3389 = vunpack.c.h.b16 %v2597
      %v3390 = vunpack.c.l.b16 %v2598
      %v3391 = vunpack.c.h.b16 %v2598
      %v3392 = vunpack.c.l.b16 %v2599
      %v3393 = vunpack.c.h.b16 %v2599
      %v3394 = vunpack.c.l.b16 %v2600
      %v3395 = vunpack.c.h.b16 %v2600
      %v3396 = vunpack.c.l.b16 %v2601
      %v3397 = vunpack.c.h.b16 %v2601
      %v3398 = vunpack.c.l.b16 %v2602
      %v3399 = vunpack.c.h.b16 %v2602
      %v3400 = vunpack.c.l.b16 %v2603
      %v3401 = vunpack.c.h.b16 %v2603
      %v3402 = vunpack.c.l.b16 %v2604
      %v3403 = vunpack.c.h.b16 %v2604
      %v3404 = vunpack.c.l.b16 %v2605
      %v3405 = vunpack.c.h.b16 %v2605
      %v3406 = vunpack.c.l.b16 %v2606
      %v3407 = vunpack.c.h.b16 %v2606
      %v3408 = vunpack.c.l.b16 %v2607
      %v3409 = vunpack.c.h.b16 %v2607
      %v3410 = vunpack.c.l.b16 %v2608
      %v3411 = vunpack.c.h.b16 %v2608
      %v3412 = vunpack.c.l.b16 %v2609
      %v3413 = vunpack.c.h.b16 %v2609
      %v3414 = vunpack.c.l.b16 %v2610
      %v3415 = vunpack.c.h.b16 %v2610
      %v3416 = vunpack.c.l.b16 %v2611
      %v3417 = vunpack.c.h.b16 %v2611
      %v3418 = vunpack.c.l.b16 %v2612
      %v3419 = vunpack.c.h.b16 %v2612
      %v3420 = vunpack.c.l.b16 %v2613
      %v3421 = vunpack.c.h.b16 %v2613
      %v3422 = vunpack.c.l.b16 %v2614
      %v3423 = vunpack.c.h.b16 %v2614
      %v3424 = vunpack.c.l.b16 %v2615
      %v3425 = vunpack.c.h.b16 %v2615
      %v3426 = vunpack.c.l.b16 %v2616
      %v3427 = vunpack.c.h.b16 %v2616
      %v3428 = vunpack.c.l.b16 %v2617
      %v3429 = vunpack.c.h.b16 %v2617
      %v3430 = vunpack.c.l.b16 %v2618
      %v3431 = vunpack.c.h.b16 %v2618
      %v3432 = vunpack.c.l.b16 %v2619
      %v3433 = vunpack.c.h.b16 %v2619
      %v3434 = vunpack.c.l.b16 %v2620
      %v3435 = vunpack.c.h.b16 %v2620
      %v3436 = vunpack.c.l.b16 %v2621
      %v3437 = vunpack.c.h.b16 %v2621
      %v3438 = vunpack.c.l.b16 %v2622
      %v3439 = vunpack.c.h.b16 %v2622
      %v3440 = vunpack.c.l.b16 %v2623
      %v3441 = vunpack.c.h.b16 %v2623
      %v3442 = vunpack.c.l.b16 %v2624
      %v3443 = vunpack.c.h.b16 %v2624
      %v3444 = vunpack.c.l.b16 %v2625
      %v3445 = vunpack.c.h.b16 %v2625
      %v3446 = vunpack.c.l.b16 %v2626
      %v3447 = vunpack.c.h.b16 %v2626
      %v3448 = vunpack.c.l.b16 %v2627
      %v3449 = vunpack.c.h.b16 %v2627
      %v3450 = vunpack.c.l.b16 %v2628
      %v3451 = vunpack.c.h.b16 %v2628
      %v3452 = vunpack.c.l.b16 %v2629
      %v3453 = vunpack.c.h.b16 %v2629
      %v3454 = vunpack.c.l.b16 %v2630
      %v3455 = vunpack.c.h.b16 %v2630
      %v3456 = vunpack.c.l.b16 %v2631
      %v3457 = vunpack.c.h.b16 %v2631
      %v3458 = vunpack.c.l.b16 %v2632
      %v3459 = vunpack.c.h.b16 %v2632
      %v3460 = vunpack.c.l.b16 %v2633
      %v3461 = vunpack.c.h.b16 %v2633
      %v3462 = vunpack.c.l.b16 %v2634
      %v3463 = vunpack.c.h.b16 %v2634
      %v3464 = vunpack.c.l.b16 %v2635
      %v3465 = vunpack.c.h.b16 %v2635
      %v3466 = vunpack.c.l.b16 %v2636
      %v3467 = vunpack.c.h.b16 %v2636
      %v3468 = vunpack.c.l.b16 %v2637
      %v3469 = vunpack.c.h.b16 %v2637
      %v3470 = vunpack.c.l.b16 %v2638
      %v3471 = vunpack.c.h.b16 %v2638
      %v3472 = vunpack.c.l.b16 %v2639
      %v3473 = vunpack.c.h.b16 %v2639
      %v3474 = vunpack.c.l.b16 %v2640
      %v3475 = vunpack.c.h.b16 %v2640
      %v3476 = vunpack.c.l.b16 %v2641
      %v3477 = vunpack.c.h.b16 %v2641
      %v3478 = vunpack.c.l.b16 %v2642
      %v3479 = vunpack.c.h.b16 %v2642
      %v3480 = vunpack.c.l.b16 %v2643
      %v3481 = vunpack.c.h.b16 %v2643
      %v3482 = vunpack.c.l.b16 %v2644
      %v3483 = vunpack.c.h.b16 %v2644
      %v3484 = vunpack.c.l.b16 %v2645
      %v3485 = vunpack.c.h.b16 %v2645
      %v3486 = vunpack.c.l.b16 %v2646
      %v3487 = vunpack.c.h.b16 %v2646
      %v3488 = vunpack.c.l.b16 %v2647
      %v3489 = vunpack.c.h.b16 %v2647
      %v3490 = vunpack.c.l.b16 %v2648
      %v3491 = vunpack.c.h.b16 %v2648
      %v3492 = vunpack.c.l.b16 %v2649
      %v3493 = vunpack.c.h.b16 %v2649
      %v3494 = vunpack.c.l.b16 %v2650
      %v3495 = vunpack.c.h.b16 %v2650
      %v3496 = vunpack.c.l.b16 %v2651
      %v3497 = vunpack.c.h.b16 %v2651
      %v3498 = vunpack.c.l.b16 %v2652
      %v3499 = vunpack.c.h.b16 %v2652
      %v3500 = vunpack.c.l.b16 %v2653
      %v3501 = vunpack.c.h.b16 %v2653
      %v3502 = vunpack.c.l.b16 %v2654
      %v3503 = vunpack.c.h.b16 %v2654
      %v3504 = vunpack.c.l.b16 %v2655
      %v3505 = vunpack.c.h.b16 %v2655
      %v3506 = vunpack.c.l.b16 %v2656
      %v3507 = vunpack.c.h.b16 %v2656
      %v3508 = vunpack.c.l.b16 %v2657
      %v3509 = vunpack.c.h.b16 %v2657
      %v3510 = vunpack.c.l.b16 %v2658
      %v3511 = vunpack.c.h.b16 %v2658
      %v3512 = vunpack.c.l.b16 %v2659
      %v3513 = vunpack.c.h.b16 %v2659
      %v3514 = vunpack.c.l.b16 %v2660
      %v3515 = vunpack.c.h.b16 %v2660
      %v3516 = vunpack.c.l.b16 %v2661
      %v3517 = vunpack.c.h.b16 %v2661
      %v3518 = vunpack.c.l.b16 %v2662
      %v3519 = vunpack.c.h.b16 %v2662
      %v3520 = vunpack.c.l.b16 %v2663
      %v3521 = vunpack.c.h.b16 %v2663
      %v3522 = vunpack.c.l.b16 %v2664
      %v3523 = vunpack.c.h.b16 %v2664
      %v3524 = vunpack.c.l.b16 %v2665
      %v3525 = vunpack.c.h.b16 %v2665
      %v3526 = vunpack.c.l.b16 %v2666
      %v3527 = vunpack.c.h.b16 %v2666
      %v3528 = vunpack.c.l.b16 %v2667
      %v3529 = vunpack.c.h.b16 %v2667
      %v3530 = vunpack.c.l.b16 %v2668
      %v3531 = vunpack.c.h.b16 %v2668
      %v3532 = vunpack.c.l.b16 %v2669
      %v3533 = vunpack.c.h.b16 %v2669
      %v3534 = vpack.c.b16 %v2964, %v2958
      %v3535 = vpack.c.b16 %v2965, %v2959
      %v3536 = vpack.c.b16 %v2966, %v2960
      %v3537 = vpack.c.b16 %v2967, %v2961
      %v3538 = vpack.c.b16 %v2968, %v2962
      %v3539 = vpack.c.b16 %v2969, %v2963
      %v3540 = vpack.c.b16 %v2976, %v2970
      %v3541 = vpack.c.b16 %v2977, %v2971
      %v3542 = vpack.c.b16 %v2978, %v2972
      %v3543 = vpack.c.b16 %v2979, %v2973
      %v3544 = vpack.c.b16 %v2980, %v2974
      %v3545 = vpack.c.b16 %v2981, %v2975
      %v3546 = vpack.c.b16 %v2988, %v2982
      %v3547 = vpack.c.b16 %v2989, %v2983
      %v3548 = vpack.c.b16 %v2990, %v2984
      %v3549 = vpack.c.b16 %v2991, %v2985
      %v3550 = vpack.c.b16 %v2992, %v2986
      %v3551 = vpack.c.b16 %v2993, %v2987
      %v3552 = vpack.c.b16 %v3000, %v2994
      %v3553 = vpack.c.b16 %v3001, %v2995
      %v3554 = vpack.c.b16 %v3002, %v2996
      %v3555 = vpack.c.b16 %v3003, %v2997
      %v3556 = vpack.c.b16 %v3004, %v2998
      %v3557 = vpack.c.b16 %v3005, %v2999
      %v3558 = vpack.c.b16 %v3012, %v3006
      %v3559 = vpack.c.b16 %v3013, %v3007
      %v3560 = vpack.c.b16 %v3014, %v3008
      %v3561 = vpack.c.b16 %v3015, %v3009
      %v3562 = vpack.c.b16 %v3016, %v3010
      %v3563 = vpack.c.b16 %v3017, %v3011
      %v3564 = vpack.c.b16 %v3024, %v3018
      %v3565 = vpack.c.b16 %v3025, %v3019
      %v3566 = vpack.c.b16 %v3026, %v3020
      %v3567 = vpack.c.b16 %v3027, %v3021
      %v3568 = vpack.c.b16 %v3028, %v3022
      %v3569 = vpack.c.b16 %v3029, %v3023
      %v3570 = vpack.c.b16 %v3036, %v3030
      %v3571 = vpack.c.b16 %v3037, %v3031
      %v3572 = vpack.c.b16 %v3038, %v3032
      %v3573 = vpack.c.b16 %v3039, %v3033
      %v3574 = vpack.c.b16 %v3040, %v3034
      %v3575 = vpack.c.b16 %v3041, %v3035
      %v3576 = vpack.c.b16 %v3048, %v3042
      %v3577 = vpack.c.b16 %v3049, %v3043
      %v3578 = vpack.c.b16 %v3050, %v3044
      %v3579 = vpack.c.b16 %v3051, %v3045
      %v3580 = vpack.c.b16 %v3052, %v3046
      %v3581 = vpack.c.b16 %v3053, %v3047
      %v3582 = vpack.c.b16 %v3060, %v3054
      %v3583 = vpack.c.b16 %v3061, %v3055
      %v3584 = vpack.c.b16 %v3062, %v3056
      %v3585 = vpack.c.b16 %v3063, %v3057
      %v3586 = vpack.c.b16 %v3064, %v3058
      %v3587 = vpack.c.b16 %v3065, %v3059
      %v3588 = vpack.c.b16 %v3072, %v3066
      %v3589 = vpack.c.b16 %v3073, %v3067
      %v3590 = vpack.c.b16 %v3074, %v3068
      %v3591 = vpack.c.b16 %v3075, %v3069
      %v3592 = vpack.c.b16 %v3076, %v3070
      %v3593 = vpack.c.b16 %v3077, %v3071
      %v3594 = vpack.c.b16 %v3084, %v3078
      %v3595 = vpack.c.b16 %v3085, %v3079
      %v3596 = vpack.c.b16 %v3086, %v3080
      %v3597 = vpack.c.b16 %v3087, %v3081
      %v3598 = vpack.c.b16 %v3088, %v3082
      %v3599 = vpack.c.b16 %v3089, %v3083
      %v3600 = vpack.c.b16 %v3096, %v3090
      %v3601 = vpack.c.b16 %v3097, %v3091
      %v3602 = vpack.c.b16 %v3098, %v3092
      %v3603 = vpack.c.b16 %v3099, %v3093
      %v3604 = vpack.c.b16 %v3100, %v3094
      %v3605 = vpack.c.b16 %v3101, %v3095
      %v3606 = vpack.c.b16 %v3108, %v3102
      %v3607 = vpack.c.b16 %v3109, %v3103
      %v3608 = vpack.c.b16 %v3110, %v3104
      %v3609 = vpack.c.b16 %v3111, %v3105
      %v3610 = vpack.c.b16 %v3112, %v3106
      %v3611 = vpack.c.b16 %v3113, %v3107
      %v3612 = vpack.c.b16 %v3120, %v3114
      %v3613 = vpack.c.b16 %v3121, %v3115
      %v3614 = vpack.c.b16 %v3122, %v3116
      %v3615 = vpack.c.b16 %v3123, %v3117
      %v3616 = vpack.c.b16 %v3124, %v3118
      %v3617 = vpack.c.b16 %v3125, %v3119
      %v3618 = vpack.c.b16 %v3132, %v3126
      %v3619 = vpack.c.b16 %v3133, %v3127
      %v3620 = vpack.c.b16 %v3134, %v3128
      %v3621 = vpack.c.b16 %v3135, %v3129
      %v3622 = vpack.c.b16 %v3136, %v3130
      %v3623 = vpack.c.b16 %v3137, %v3131
      %v3624 = vpack.c.b16 %v3144, %v3138
      %v3625 = vpack.c.b16 %v3145, %v3139
      %v3626 = vpack.c.b16 %v3146, %v3140
      %v3627 = vpack.c.b16 %v3147, %v3141
      %v3628 = vpack.c.b16 %v3148, %v3142
      %v3629 = vpack.c.b16 %v3149, %v3143
      %v3630 = vpack.c.b16 %v3156, %v3150
      %v3631 = vpack.c.b16 %v3157, %v3151
      %v3632 = vpack.c.b16 %v3158, %v3152
      %v3633 = vpack.c.b16 %v3159, %v3153
      %v3634 = vpack.c.b16 %v3160, %v3154
      %v3635 = vpack.c.b16 %v3161, %v3155
      %v3636 = vpack.c.b16 %v3168, %v3162
      %v3637 = vpack.c.b16 %v3169, %v3163
      %v3638 = vpack.c.b16 %v3170, %v3164
      %v3639 = vpack.c.b16 %v3171, %v3165
      %v3640 = vpack.c.b16 %v3172, %v3166
      %v3641 = vpack.c.b16 %v3173, %v3167
      %v3642 = vpack.c.b16 %v3180, %v3174
      %v3643 = vpack.c.b16 %v3181, %v3175
      %v3644 = vpack.c.b16 %v3182, %v3176
      %v3645 = vpack.c.b16 %v3183, %v3177
      %v3646 = vpack.c.b16 %v3184, %v3178
      %v3647 = vpack.c.b16 %v3185, %v3179
      %v3648 = vpack.c.b16 %v3192, %v3186
      %v3649 = vpack.c.b16 %v3193, %v3187
      %v3650 = vpack.c.b16 %v3194, %v3188
      %v3651 = vpack.c.b16 %v3195, %v3189
      %v3652 = vpack.c.b16 %v3196, %v3190
      %v3653 = vpack.c.b16 %v3197, %v3191
      %v3654 = vpack.c.b16 %v3204, %v3198
      %v3655 = vpack.c.b16 %v3205, %v3199
      %v3656 = vpack.c.b16 %v3206, %v3200
      %v3657 = vpack.c.b16 %v3207, %v3201
      %v3658 = vpack.c.b16 %v3208, %v3202
      %v3659 = vpack.c.b16 %v3209, %v3203
      %v3660 = vpack.c.b16 %v3216, %v3210
      %v3661 = vpack.c.b16 %v3217, %v3211
      %v3662 = vpack.c.b16 %v3218, %v3212
      %v3663 = vpack.c.b16 %v3219, %v3213
      %v3664 = vpack.c.b16 %v3220, %v3214
      %v3665 = vpack.c.b16 %v3221, %v3215
      %v3666 = vpack.c.b16 %v3228, %v3222
      %v3667 = vpack.c.b16 %v3229, %v3223
      %v3668 = vpack.c.b16 %v3230, %v3224
      %v3669 = vpack.c.b16 %v3231, %v3225
      %v3670 = vpack.c.b16 %v3232, %v3226
      %v3671 = vpack.c.b16 %v3233, %v3227
      %v3672 = vpack.c.b16 %v3240, %v3234
      %v3673 = vpack.c.b16 %v3241, %v3235
      %v3674 = vpack.c.b16 %v3242, %v3236
      %v3675 = vpack.c.b16 %v3243, %v3237
      %v3676 = vpack.c.b16 %v3244, %v3238
      %v3677 = vpack.c.b16 %v3245, %v3239
      %v3678 = vpack.c.b16 %v3252, %v3246
      %v3679 = vpack.c.b16 %v3253, %v3247
      %v3680 = vpack.c.b16 %v3254, %v3248
      %v3681 = vpack.c.b16 %v3255, %v3249
      %v3682 = vpack.c.b16 %v3256, %v3250
      %v3683 = vpack.c.b16 %v3257, %v3251
      %v3684 = vpack.c.b16 %v3264, %v3258
      %v3685 = vpack.c.b16 %v3265, %v3259
      %v3686 = vpack.c.b16 %v3266, %v3260
      %v3687 = vpack.c.b16 %v3267, %v3261
      %v3688 = vpack.c.b16 %v3268, %v3262
      %v3689 = vpack.c.b16 %v3269, %v3263
      %v3690 = vpack.c.b16 %v3276, %v3270
      %v3691 = vpack.c.b16 %v3277, %v3271
      %v3692 = vpack.c.b16 %v3278, %v3272
      %v3693 = vpack.c.b16 %v3279, %v3273
      %v3694 = vpack.c.b16 %v3280, %v3274
      %v3695 = vpack.c.b16 %v3281, %v3275
      %v3696 = vpack.c.b16 %v3288, %v3282
      %v3697 = vpack.c.b16 %v3289, %v3283
      %v3698 = vpack.c.b16 %v3290, %v3284
      %v3699 = vpack.c.b16 %v3291, %v3285
      %v3700 = vpack.c.b16 %v3292, %v3286
      %v3701 = vpack.c.b16 %v3293, %v3287
      %v3702 = vpack.c.b16 %v3300, %v3294
      %v3703 = vpack.c.b16 %v3301, %v3295
      %v3704 = vpack.c.b16 %v3302, %v3296
      %v3705 = vpack.c.b16 %v3303, %v3297
      %v3706 = vpack.c.b16 %v3304, %v3298
      %v3707 = vpack.c.b16 %v3305, %v3299
      %v3708 = vpack.c.b16 %v3312, %v3306
      %v3709 = vpack.c.b16 %v3313, %v3307
      %v3710 = vpack.c.b16 %v3314, %v3308
      %v3711 = vpack.c.b16 %v3315, %v3309
      %v3712 = vpack.c.b16 %v3316, %v3310
      %v3713 = vpack.c.b16 %v3317, %v3311
      %v3714 = vpack.c.b16 %v3324, %v3318
      %v3715 = vpack.c.b16 %v3325, %v3319
      %v3716 = vpack.c.b16 %v3326, %v3320
      %v3717 = vpack.c.b16 %v3327, %v3321
      %v3718 = vpack.c.b16 %v3328, %v3322
      %v3719 = vpack.c.b16 %v3329, %v3323
      %v3720 = vpack.c.b16 %v3336, %v3330
      %v3721 = vpack.c.b16 %v3337, %v3331
      %v3722 = vpack.c.b16 %v3338, %v3332
      %v3723 = vpack.c.b16 %v3339, %v3333
      %v3724 = vpack.c.b16 %v3340, %v3334
      %v3725 = vpack.c.b16 %v3341, %v3335
      %v3726 = vpack.c.b16 %v3348, %v3342
      %v3727 = vpack.c.b16 %v3349, %v3343
      %v3728 = vpack.c.b16 %v3350, %v3344
      %v3729 = vpack.c.b16 %v3351, %v3345
      %v3730 = vpack.c.b16 %v3352, %v3346
      %v3731 = vpack.c.b16 %v3353, %v3347
      %v3732 = vpack.c.b16 %v3360, %v3354
      %v3733 = vpack.c.b16 %v3361, %v3355
      %v3734 = vpack.c.b16 %v3362, %v3356
      %v3735 = vpack.c.b16 %v3363, %v3357
      %v3736 = vpack.c.b16 %v3364, %v3358
      %v3737 = vpack.c.b16 %v3365, %v3359
      %v3738 = vpack.c.b16 %v3372, %v3366
      %v3739 = vpack.c.b16 %v3373, %v3367
      %v3740 = vpack.c.b16 %v3374, %v3368
      %v3741 = vpack.c.b16 %v3375, %v3369
      %v3742 = vpack.c.b16 %v3376, %v3370
      %v3743 = vpack.c.b16 %v3377, %v3371
      %v3744 = vpack.c.b16 %v3384, %v3378
      %v3745 = vpack.c.b16 %v3385, %v3379
      %v3746 = vpack.c.b16 %v3386, %v3380
      %v3747 = vpack.c.b16 %v3387, %v3381
      %v3748 = vpack.c.b16 %v3388, %v3382
      %v3749 = vpack.c.b16 %v3389, %v3383
      %v3750 = vpack.c.b16 %v3396, %v3390
      %v3751 = vpack.c.b16 %v3397, %v3391
      %v3752 = vpack.c.b16 %v3398, %v3392
      %v3753 = vpack.c.b16 %v3399, %v3393
      %v3754 = vpack.c.b16 %v3400, %v3394
      %v3755 = vpack.c.b16 %v3401, %v3395
      %v3756 = vpack.c.b16 %v3408, %v3402
      %v3757 = vpack.c.b16 %v3409, %v3403
      %v3758 = vpack.c.b16 %v3410, %v3404
      %v3759 = vpack.c.b16 %v3411, %v3405
      %v3760 = vpack.c.b16 %v3412, %v3406
      %v3761 = vpack.c.b16 %v3413, %v3407
      %v3762 = vpack.c.b16 %v3420, %v3414
      %v3763 = vpack.c.b16 %v3421, %v3415
      %v3764 = vpack.c.b16 %v3422, %v3416
      %v3765 = vpack.c.b16 %v3423, %v3417
      %v3766 = vpack.c.b16 %v3424, %v3418
      %v3767 = vpack.c.b16 %v3425, %v3419
      %v3768 = vpack.c.b16 %v3432, %v3426
      %v3769 = vpack.c.b16 %v3433, %v3427
      %v3770 = vpack.c.b16 %v3434, %v3428
      %v3771 = vpack.c.b16 %v3435, %v3429
      %v3772 = vpack.c.b16 %v3436, %v3430
      %v3773 = vpack.c.b16 %v3437, %v3431
      %v3774 = vpack.c.b16 %v3444, %v3438
      %v3775 = vpack.c.b16 %v3445, %v3439
      %v3776 = vpack.c.b16 %v3446, %v3440
      %v3777 = vpack.c.b16 %v3447, %v3441
      %v3778 = vpack.c.b16 %v3448, %v3442
      %v3779 = vpack.c.b16 %v3449, %v3443
      %v3780 = vpack.c.b16 %v3456, %v3450
      %v3781 = vpack.c.b16 %v3457, %v3451
      %v3782 = vpack.c.b16 %v3458, %v3452
      %v3783 = vpack.c.b16 %v3459, %v3453
      %v3784 = vpack.c.b16 %v3460, %v3454
      %v3785 = vpack.c.b16 %v3461, %v3455
      %v3786 = vpack.c.b16 %v3468, %v3462
      %v3787 = vpack.c.b16 %v3469, %v3463
      %v3788 = vpack.c.b16 %v3470, %v3464
      %v3789 = vpack.c.b16 %v3471, %v3465
      %v3790 = vpack.c.b16 %v3472, %v3466
      %v3791 = vpack.c.b16 %v3473, %v3467
      %v3792 = vpack.c.b16 %v3480, %v3474
      %v3793 = vpack.c.b16 %v3481, %v3475
      %v3794 = vpack.c.b16 %v3482, %v3476
      %v3795 = vpack.c.b16 %v3483, %v3477
      %v3796 = vpack.c.b16 %v3484, %v3478
      %v3797 = vpack.c.b16 %v3485, %v3479
      %v3798 = vpack.c.b16 %v3492, %v3486
      %v3799 = vpack.c.b16 %v3493, %v3487
      %v3800 = vpack.c.b16 %v3494, %v3488
      %v3801 = vpack.c.b16 %v3495, %v3489
      %v3802 = vpack.c.b16 %v3496, %v3490
      %v3803 = vpack.c.b16 %v3497, %v3491
      %v3804 = vpack.c.b16 %v3504, %v3498
      %v3805 = vpack.c.b16 %v3505, %v3499
      %v3806 = vpack.c.b16 %v3506, %v3500
      %v3807 = vpack.c.b16 %v3507, %v3501
      %v3808 = vpack.c.b16 %v3508, %v3502
      %v3809 = vpack.c.b16 %v3509, %v3503
      %v3810 = vpack.c.b16 %v3516, %v3510
      %v3811 = vpack.c.b16 %v3517, %v3511
      %v3812 = vpack.c.b16 %v3518, %v3512
      %v3813 = vpack.c.b16 %v3519, %v3513
      %v3814 = vpack.c.b16 %v3520, %v3514
      %v3815 = vpack.c.b16 %v3521, %v3515
      %v3816 = vpack.c.b16 %v3528, %v3522
      %v3817 = vpack.c.b16 %v3529, %v3523
      %v3818 = vpack.c.b16 %v3530, %v3524
      %v3819 = vpack.c.b16 %v3531, %v3525
      %v3820 = vpack.c.b16 %v3532, %v3526
      %v3821 = vpack.c.b16 %v3533, %v3527
      %4110 = vmatprep.subr.bf16.mxu0 %v3577
      %4111 = vmatpush1.bf16.msra.mxu0 %v3576
      %4112 = vmatprep.subr.bf16.mxu0 %v3571
      %4113 = vmatpush1.bf16.msra.mxu0 %v3570
      %4114 = vmatprep.subr.bf16.mxu0 %v3565
      %4115 = vmatpush1.bf16.msra.mxu0 %v3564
      %4116 = vmatprep.subr.bf16.mxu0 %v3559
      %4117 = vmatpush1.bf16.msra.mxu0 %v3558
      %4118 = vmatprep.subr.bf16.mxu0 %v3553
      %4119 = vmatpush1.bf16.msra.mxu0 %v3552
      %4120 = vmatprep.subr.bf16.mxu0 %v3547
      %4121 = vmatpush1.bf16.msra.mxu0 %v3546
      %4122 = vmatprep.subr.bf16.mxu0 %v3541
      %4123 = vmatpush1.bf16.msra.mxu0 %v3540
      %4124 = vmatprep.subr.bf16.mxu0 %v3535
      %4125 = vmatpush1.bf16.msra.mxu0 %v3534
      %4126 = vmatprep.subr.bf16.mxu0 %v3625
      %4127 = vmatpush2.bf16.msra.mxu0 %v3624
      %4128 = vmatprep.subr.bf16.mxu0 %v3619
      %4129 = vmatpush2.bf16.msra.mxu0 %v3618
      %4130 = vmatprep.subr.bf16.mxu0 %v3613
      %4131 = vmatpush2.bf16.msra.mxu0 %v3612
      %4132 = vmatprep.subr.bf16.mxu0 %v3607
      %4133 = vmatpush2.bf16.msra.mxu0 %v3606
      %4134 = vmatprep.subr.bf16.mxu0 %v3601
      %4135 = vmatpush2.bf16.msra.mxu0 %v3600
      %4136 = vmatprep.subr.bf16.mxu0 %v3595
      %4137 = vmatpush2.bf16.msra.mxu0 %v3594
      %4138 = vmatprep.subr.bf16.mxu0 %v3589
      %4139 = vmatpush2.bf16.msra.mxu0 %v3588
      %4140 = vmatprep.subr.bf16.mxu0 %v3583
      %4141 = vmatpush2.bf16.msra.mxu0 %v3582
      %4142 = vmatprep.mubr.bf16.mxu0 %v2377
      %4143 = vmatmul.mubr.bf16.gmra.mxu0 %v2376
      %v4144 = vpop.f32.mrf.mxu0
      %v4145 = vadd.f32 0.0, %v4144
      %v4146 = vpop.f32.mrf.mxu0
      %v4147 = vadd.f32 0.0, %v4146
      %v4148 = vpop.f32.mrf.mxu0
      %v4149 = vpop.f32.mrf.mxu0
      %4150 = vdwg.mxu0
      %4151 = vmatprep.subr.bf16.mxu0 %v3673
      %4152 = vmatpush1.bf16.msra.mxu0 %v3672
      %4153 = vmatprep.subr.bf16.mxu0 %v3667
      %4154 = vmatpush1.bf16.msra.mxu0 %v3666
      %4155 = vmatprep.subr.bf16.mxu0 %v3661
      %4156 = vmatpush1.bf16.msra.mxu0 %v3660
      %4157 = vmatprep.subr.bf16.mxu0 %v3655
      %4158 = vmatpush1.bf16.msra.mxu0 %v3654
      %4159 = vmatprep.subr.bf16.mxu0 %v3649
      %4160 = vmatpush1.bf16.msra.mxu0 %v3648
      %4161 = vmatprep.subr.bf16.mxu0 %v3643
      %4162 = vmatpush1.bf16.msra.mxu0 %v3642
      %4163 = vmatprep.subr.bf16.mxu0 %v3637
      %4164 = vmatpush1.bf16.msra.mxu0 %v3636
      %4165 = vmatprep.subr.bf16.mxu0 %v3631
      %4166 = vmatpush1.bf16.msra.mxu0 %v3630
      %4167 = vmatprep.subr.bf16.mxu0 %v3721
      %4168 = vmatpush2.bf16.msra.mxu0 %v3720
      %4169 = vmatprep.subr.bf16.mxu0 %v3715
      %4170 = vmatpush2.bf16.msra.mxu0 %v3714
      %4171 = vmatprep.subr.bf16.mxu0 %v3709
      %4172 = vmatpush2.bf16.msra.mxu0 %v3708
      %4173 = vmatprep.subr.bf16.mxu0 %v3703
      %4174 = vmatpush2.bf16.msra.mxu0 %v3702
      %4175 = vmatprep.subr.bf16.mxu0 %v3697
      %4176 = vmatpush2.bf16.msra.mxu0 %v3696
      %4177 = vmatprep.subr.bf16.mxu0 %v3691
      %4178 = vmatpush2.bf16.msra.mxu0 %v3690
      %4179 = vmatprep.subr.bf16.mxu0 %v3685
      %4180 = vmatpush2.bf16.msra.mxu0 %v3684
      %4181 = vmatprep.subr.bf16.mxu0 %v3679
      %4182 = vmatpush2.bf16.msra.mxu0 %v3678
      %4183 = vmatprep.mubr.bf16.mxu0 %v2379
      %4184 = vmatmul.mubr.bf16.gmra.mxu0 %v2378
      %v4185 = vpop.f32.mrf.mxu0
      %v4186 = vadd.f32 %v4145, %v4185
      %v4187 = vpop.f32.mrf.mxu0
      %v4188 = vadd.f32 %v4147, %v4187
      %v4189 = vpop.f32.mrf.mxu0
      %v4190 = vpop.f32.mrf.mxu0
      %4191 = vdwg.mxu0
      %4192 = vmatprep.subr.bf16.mxu0 %v3769
      %4193 = vmatpush1.bf16.msra.mxu0 %v3768
      %4194 = vmatprep.subr.bf16.mxu0 %v3763
      %4195 = vmatpush1.bf16.msra.mxu0 %v3762
      %4196 = vmatprep.subr.bf16.mxu0 %v3757
      %4197 = vmatpush1.bf16.msra.mxu0 %v3756
      %4198 = vmatprep.subr.bf16.mxu0 %v3751
      %4199 = vmatpush1.bf16.msra.mxu0 %v3750
      %4200 = vmatprep.subr.bf16.mxu0 %v3745
      %4201 = vmatpush1.bf16.msra.mxu0 %v3744
      %4202 = vmatprep.subr.bf16.mxu0 %v3739
      %4203 = vmatpush1.bf16.msra.mxu0 %v3738
      %4204 = vmatprep.subr.bf16.mxu0 %v3733
      %4205 = vmatpush1.bf16.msra.mxu0 %v3732
      %4206 = vmatprep.subr.bf16.mxu0 %v3727
      %4207 = vmatpush1.bf16.msra.mxu0 %v3726
      %4208 = vmatprep.subr.bf16.mxu0 %v3817
      %4209 = vmatpush2.bf16.msra.mxu0 %v3816
      %4210 = vmatprep.subr.bf16.mxu0 %v3811
      %4211 = vmatpush2.bf16.msra.mxu0 %v3810
      %4212 = vmatprep.subr.bf16.mxu0 %v3805
      %4213 = vmatpush2.bf16.msra.mxu0 %v3804
      %4214 = vmatprep.subr.bf16.mxu0 %v3799
      %4215 = vmatpush2.bf16.msra.mxu0 %v3798
      %4216 = vmatprep.subr.bf16.mxu0 %v3793
      %4217 = vmatpush2.bf16.msra.mxu0 %v3792
      %4218 = vmatprep.subr.bf16.mxu0 %v3787
      %4219 = vmatpush2.bf16.msra.mxu0 %v3786
      %4220 = vmatprep.subr.bf16.mxu0 %v3781
      %4221 = vmatpush2.bf16.msra.mxu0 %v3780
      %4222 = vmatprep.subr.bf16.mxu0 %v3775
      %4223 = vmatpush2.bf16.msra.mxu0 %v3774
      %4224 = vmatprep.mubr.bf16.mxu0 %v2381
      %4225 = vmatmul.mubr.bf16.gmra.mxu0 %v2380
      %v4226 = vpop.f32.mrf.mxu0
      %v4227 = vadd.f32 %v4186, %v4226
      %v4228 = vpop.f32.mrf.mxu0
      %v4229 = vadd.f32 %v4188, %v4228
      %v4230 = vpop.f32.mrf.mxu0
      %v4231 = vpop.f32.mrf.mxu0
      %4232 = vdwg.mxu0
      %4233 = vmatprep.subr.bf16.mxu0 %v3579
      %4234 = vmatpush1.bf16.msra.mxu0 %v3578
      %4235 = vmatprep.subr.bf16.mxu0 %v3573
      %4236 = vmatpush1.bf16.msra.mxu0 %v3572
      %4237 = vmatprep.subr.bf16.mxu0 %v3567
      %4238 = vmatpush1.bf16.msra.mxu0 %v3566
      %4239 = vmatprep.subr.bf16.mxu0 %v3561
      %4240 = vmatpush1.bf16.msra.mxu0 %v3560
      %4241 = vmatprep.subr.bf16.mxu0 %v3555
      %4242 = vmatpush1.bf16.msra.mxu0 %v3554
      %4243 = vmatprep.subr.bf16.mxu0 %v3549
      %4244 = vmatpush1.bf16.msra.mxu0 %v3548
      %4245 = vmatprep.subr.bf16.mxu0 %v3543
      %4246 = vmatpush1.bf16.msra.mxu0 %v3542
      %4247 = vmatprep.subr.bf16.mxu0 %v3537
      %4248 = vmatpush1.bf16.msra.mxu0 %v3536
      %4249 = vmatprep.subr.bf16.mxu0 %v3627
      %4250 = vmatpush2.bf16.msra.mxu0 %v3626
      %4251 = vmatprep.subr.bf16.mxu0 %v3621
      %4252 = vmatpush2.bf16.msra.mxu0 %v3620
      %4253 = vmatprep.subr.bf16.mxu0 %v3615
      %4254 = vmatpush2.bf16.msra.mxu0 %v3614
      %4255 = vmatprep.subr.bf16.mxu0 %v3609
      %4256 = vmatpush2.bf16.msra.mxu0 %v3608
      %4257 = vmatprep.subr.bf16.mxu0 %v3603
      %4258 = vmatpush2.bf16.msra.mxu0 %v3602
      %4259 = vmatprep.subr.bf16.mxu0 %v3597
      %4260 = vmatpush2.bf16.msra.mxu0 %v3596
      %4261 = vmatprep.subr.bf16.mxu0 %v3591
      %4262 = vmatpush2.bf16.msra.mxu0 %v3590
      %4263 = vmatprep.subr.bf16.mxu0 %v3585
      %4264 = vmatpush2.bf16.msra.mxu0 %v3584
      %4265 = vmatprep.mubr.bf16.mxu0 %v2377
      %4266 = vmatmul.mubr.bf16.gmra.mxu0 %v2376
      %v4267 = vpop.f32.mrf.mxu0
      %v4268 = vadd.f32 0.0, %v4267
      %v4269 = vpop.f32.mrf.mxu0
      %v4270 = vadd.f32 0.0, %v4269
      %v4271 = vpop.f32.mrf.mxu0
      %v4272 = vpop.f32.mrf.mxu0
      %4273 = vdwg.mxu0
      %4274 = vmatprep.subr.bf16.mxu0 %v3675
      %4275 = vmatpush1.bf16.msra.mxu0 %v3674
      %4276 = vmatprep.subr.bf16.mxu0 %v3669
      %4277 = vmatpush1.bf16.msra.mxu0 %v3668
      %4278 = vmatprep.subr.bf16.mxu0 %v3663
      %4279 = vmatpush1.bf16.msra.mxu0 %v3662
      %4280 = vmatprep.subr.bf16.mxu0 %v3657
      %4281 = vmatpush1.bf16.msra.mxu0 %v3656
      %4282 = vmatprep.subr.bf16.mxu0 %v3651
      %4283 = vmatpush1.bf16.msra.mxu0 %v3650
      %4284 = vmatprep.subr.bf16.mxu0 %v3645
      %4285 = vmatpush1.bf16.msra.mxu0 %v3644
      %4286 = vmatprep.subr.bf16.mxu0 %v3639
      %4287 = vmatpush1.bf16.msra.mxu0 %v3638
      %4288 = vmatprep.subr.bf16.mxu0 %v3633
      %4289 = vmatpush1.bf16.msra.mxu0 %v3632
      %4290 = vmatprep.subr.bf16.mxu0 %v3723
      %4291 = vmatpush2.bf16.msra.mxu0 %v3722
      %4292 = vmatprep.subr.bf16.mxu0 %v3717
      %4293 = vmatpush2.bf16.msra.mxu0 %v3716
      %4294 = vmatprep.subr.bf16.mxu0 %v3711
      %4295 = vmatpush2.bf16.msra.mxu0 %v3710
      %4296 = vmatprep.subr.bf16.mxu0 %v3705
      %4297 = vmatpush2.bf16.msra.mxu0 %v3704
      %4298 = vmatprep.subr.bf16.mxu0 %v3699
      %4299 = vmatpush2.bf16.msra.mxu0 %v3698
      %4300 = vmatprep.subr.bf16.mxu0 %v3693
      %4301 = vmatpush2.bf16.msra.mxu0 %v3692
      %4302 = vmatprep.subr.bf16.mxu0 %v3687
      %4303 = vmatpush2.bf16.msra.mxu0 %v3686
      %4304 = vmatprep.subr.bf16.mxu0 %v3681
      %4305 = vmatpush2.bf16.msra.mxu0 %v3680
      %4306 = vmatprep.mubr.bf16.mxu0 %v2379
      %4307 = vmatmul.mubr.bf16.gmra.mxu0 %v2378
      %v4308 = vpop.f32.mrf.mxu0
      %v4309 = vadd.f32 %v4268, %v4308
      %v4310 = vpop.f32.mrf.mxu0
      %v4311 = vadd.f32 %v4270, %v4310
      %v4312 = vpop.f32.mrf.mxu0
      %v4313 = vpop.f32.mrf.mxu0
      %4314 = vdwg.mxu0
      %4315 = vmatprep.subr.bf16.mxu0 %v3771
      %4316 = vmatpush1.bf16.msra.mxu0 %v3770
      %4317 = vmatprep.subr.bf16.mxu0 %v3765
      %4318 = vmatpush1.bf16.msra.mxu0 %v3764
      %4319 = vmatprep.subr.bf16.mxu0 %v3759
      %4320 = vmatpush1.bf16.msra.mxu0 %v3758
      %4321 = vmatprep.subr.bf16.mxu0 %v3753
      %4322 = vmatpush1.bf16.msra.mxu0 %v3752
      %4323 = vmatprep.subr.bf16.mxu0 %v3747
      %4324 = vmatpush1.bf16.msra.mxu0 %v3746
      %4325 = vmatprep.subr.bf16.mxu0 %v3741
      %4326 = vmatpush1.bf16.msra.mxu0 %v3740
      %4327 = vmatprep.subr.bf16.mxu0 %v3735
      %4328 = vmatpush1.bf16.msra.mxu0 %v3734
      %4329 = vmatprep.subr.bf16.mxu0 %v3729
      %4330 = vmatpush1.bf16.msra.mxu0 %v3728
      %4331 = vmatprep.subr.bf16.mxu0 %v3819
      %4332 = vmatpush2.bf16.msra.mxu0 %v3818
      %4333 = vmatprep.subr.bf16.mxu0 %v3813
      %4334 = vmatpush2.bf16.msra.mxu0 %v3812
      %4335 = vmatprep.subr.bf16.mxu0 %v3807
      %4336 = vmatpush2.bf16.msra.mxu0 %v3806
      %4337 = vmatprep.subr.bf16.mxu0 %v3801
      %4338 = vmatpush2.bf16.msra.mxu0 %v3800
      %4339 = vmatprep.subr.bf16.mxu0 %v3795
      %4340 = vmatpush2.bf16.msra.mxu0 %v3794
      %4341 = vmatprep.subr.bf16.mxu0 %v3789
      %4342 = vmatpush2.bf16.msra.mxu0 %v3788
      %4343 = vmatprep.subr.bf16.mxu0 %v3783
      %4344 = vmatpush2.bf16.msra.mxu0 %v3782
      %4345 = vmatprep.subr.bf16.mxu0 %v3777
      %4346 = vmatpush2.bf16.msra.mxu0 %v3776
      %4347 = vmatprep.mubr.bf16.mxu0 %v2381
      %4348 = vmatmul.mubr.bf16.gmra.mxu0 %v2380
      %v4349 = vpop.f32.mrf.mxu0
      %v4350 = vadd.f32 %v4309, %v4349
      %v4351 = vpop.f32.mrf.mxu0
      %v4352 = vadd.f32 %v4311, %v4351
      %v4353 = vpop.f32.mrf.mxu0
      %v4354 = vpop.f32.mrf.mxu0
      %4355 = vdwg.mxu0
      %4356 = vmatprep.subr.bf16.mxu0 %v3581
      %4357 = vmatpush1.bf16.msra.mxu0 %v3580
      %4358 = vmatprep.subr.bf16.mxu0 %v3575
      %4359 = vmatpush1.bf16.msra.mxu0 %v3574
      %4360 = vmatprep.subr.bf16.mxu0 %v3569
      %4361 = vmatpush1.bf16.msra.mxu0 %v3568
      %4362 = vmatprep.subr.bf16.mxu0 %v3563
      %4363 = vmatpush1.bf16.msra.mxu0 %v3562
      %4364 = vmatprep.subr.bf16.mxu0 %v3557
      %4365 = vmatpush1.bf16.msra.mxu0 %v3556
      %4366 = vmatprep.subr.bf16.mxu0 %v3551
      %4367 = vmatpush1.bf16.msra.mxu0 %v3550
      %4368 = vmatprep.subr.bf16.mxu0 %v3545
      %4369 = vmatpush1.bf16.msra.mxu0 %v3544
      %4370 = vmatprep.subr.bf16.mxu0 %v3539
      %4371 = vmatpush1.bf16.msra.mxu0 %v3538
      %4372 = vmatprep.subr.bf16.mxu0 %v3629
      %4373 = vmatpush2.bf16.msra.mxu0 %v3628
      %4374 = vmatprep.subr.bf16.mxu0 %v3623
      %4375 = vmatpush2.bf16.msra.mxu0 %v3622
      %4376 = vmatprep.subr.bf16.mxu0 %v3617
      %4377 = vmatpush2.bf16.msra.mxu0 %v3616
      %4378 = vmatprep.subr.bf16.mxu0 %v3611
      %4379 = vmatpush2.bf16.msra.mxu0 %v3610
      %4380 = vmatprep.subr.bf16.mxu0 %v3605
      %4381 = vmatpush2.bf16.msra.mxu0 %v3604
      %4382 = vmatprep.subr.bf16.mxu0 %v3599
      %4383 = vmatpush2.bf16.msra.mxu0 %v3598
      %4384 = vmatprep.subr.bf16.mxu0 %v3593
      %4385 = vmatpush2.bf16.msra.mxu0 %v3592
      %4386 = vmatprep.subr.bf16.mxu0 %v3587
      %4387 = vmatpush2.bf16.msra.mxu0 %v3586
      %4388 = vmatprep.mubr.bf16.mxu0 %v2377
      %4389 = vmatmul.mubr.bf16.gmra.mxu0 %v2376
      %v4390 = vpop.f32.mrf.mxu0
      %v4391 = vadd.f32 0.0, %v4390
      %v4392 = vpop.f32.mrf.mxu0
      %v4393 = vadd.f32 0.0, %v4392
      %v4394 = vpop.f32.mrf.mxu0
      %v4395 = vpop.f32.mrf.mxu0
      %4396 = vdwg.mxu0
      %4397 = vmatprep.subr.bf16.mxu0 %v3677
      %4398 = vmatpush1.bf16.msra.mxu0 %v3676
      %4399 = vmatprep.subr.bf16.mxu0 %v3671
      %4400 = vmatpush1.bf16.msra.mxu0 %v3670
      %4401 = vmatprep.subr.bf16.mxu0 %v3665
      %4402 = vmatpush1.bf16.msra.mxu0 %v3664
      %4403 = vmatprep.subr.bf16.mxu0 %v3659
      %4404 = vmatpush1.bf16.msra.mxu0 %v3658
      %4405 = vmatprep.subr.bf16.mxu0 %v3653
      %4406 = vmatpush1.bf16.msra.mxu0 %v3652
      %4407 = vmatprep.subr.bf16.mxu0 %v3647
      %4408 = vmatpush1.bf16.msra.mxu0 %v3646
      %4409 = vmatprep.subr.bf16.mxu0 %v3641
      %4410 = vmatpush1.bf16.msra.mxu0 %v3640
      %4411 = vmatprep.subr.bf16.mxu0 %v3635
      %4412 = vmatpush1.bf16.msra.mxu0 %v3634
      %4413 = vmatprep.subr.bf16.mxu0 %v3725
      %4414 = vmatpush2.bf16.msra.mxu0 %v3724
      %4415 = vmatprep.subr.bf16.mxu0 %v3719
      %4416 = vmatpush2.bf16.msra.mxu0 %v3718
      %4417 = vmatprep.subr.bf16.mxu0 %v3713
      %4418 = vmatpush2.bf16.msra.mxu0 %v3712
      %4419 = vmatprep.subr.bf16.mxu0 %v3707
      %4420 = vmatpush2.bf16.msra.mxu0 %v3706
      %4421 = vmatprep.subr.bf16.mxu0 %v3701
      %4422 = vmatpush2.bf16.msra.mxu0 %v3700
      %4423 = vmatprep.subr.bf16.mxu0 %v3695
      %4424 = vmatpush2.bf16.msra.mxu0 %v3694
      %4425 = vmatprep.subr.bf16.mxu0 %v3689
      %4426 = vmatpush2.bf16.msra.mxu0 %v3688
      %4427 = vmatprep.subr.bf16.mxu0 %v3683
      %4428 = vmatpush2.bf16.msra.mxu0 %v3682
      %4429 = vmatprep.mubr.bf16.mxu0 %v2379
      %4430 = vmatmul.mubr.bf16.gmra.mxu0 %v2378
      %v4431 = vpop.f32.mrf.mxu0
      %v4432 = vadd.f32 %v4391, %v4431
      %v4433 = vpop.f32.mrf.mxu0
      %v4434 = vadd.f32 %v4393, %v4433
      %v4435 = vpop.f32.mrf.mxu0
      %v4436 = vpop.f32.mrf.mxu0
      %4437 = vdwg.mxu0
      %4438 = vmatprep.subr.bf16.mxu0 %v3773
      %4439 = vmatpush1.bf16.msra.mxu0 %v3772
      %4440 = vmatprep.subr.bf16.mxu0 %v3767
      %4441 = vmatpush1.bf16.msra.mxu0 %v3766
      %4442 = vmatprep.subr.bf16.mxu0 %v3761
      %4443 = vmatpush1.bf16.msra.mxu0 %v3760
      %4444 = vmatprep.subr.bf16.mxu0 %v3755
      %4445 = vmatpush1.bf16.msra.mxu0 %v3754
      %4446 = vmatprep.subr.bf16.mxu0 %v3749
      %4447 = vmatpush1.bf16.msra.mxu0 %v3748
      %4448 = vmatprep.subr.bf16.mxu0 %v3743
      %4449 = vmatpush1.bf16.msra.mxu0 %v3742
      %4450 = vmatprep.subr.bf16.mxu0 %v3737
      %4451 = vmatpush1.bf16.msra.mxu0 %v3736
      %4452 = vmatprep.subr.bf16.mxu0 %v3731
      %4453 = vmatpush1.bf16.msra.mxu0 %v3730
      %4454 = vmatprep.subr.bf16.mxu0 %v3821
      %4455 = vmatpush2.bf16.msra.mxu0 %v3820
      %4456 = vmatprep.subr.bf16.mxu0 %v3815
      %4457 = vmatpush2.bf16.msra.mxu0 %v3814
      %4458 = vmatprep.subr.bf16.mxu0 %v3809
      %4459 = vmatpush2.bf16.msra.mxu0 %v3808
      %4460 = vmatprep.subr.bf16.mxu0 %v3803
      %4461 = vmatpush2.bf16.msra.mxu0 %v3802
      %4462 = vmatprep.subr.bf16.mxu0 %v3797
      %4463 = vmatpush2.bf16.msra.mxu0 %v3796
      %4464 = vmatprep.subr.bf16.mxu0 %v3791
      %4465 = vmatpush2.bf16.msra.mxu0 %v3790
      %4466 = vmatprep.subr.bf16.mxu0 %v3785
      %4467 = vmatpush2.bf16.msra.mxu0 %v3784
      %4468 = vmatprep.subr.bf16.mxu0 %v3779
      %4469 = vmatpush2.bf16.msra.mxu0 %v3778
      %4470 = vmatprep.mubr.bf16.mxu0 %v2381
      %4471 = vmatmul.mubr.bf16.gmra.mxu0 %v2380
      %v4472 = vpop.f32.mrf.mxu0
      %v4473 = vadd.f32 %v4432, %v4472
      %v4474 = vpop.f32.mrf.mxu0
      %v4475 = vadd.f32 %v4434, %v4474
      %v4476 = vpop.f32.mrf.mxu0
      %v4477 = vpop.f32.mrf.mxu0
      %4478 = vdwg.mxu0
      %v4485 = vrot.slane %v4227, 1
      %v4486 = vrot.slane %v4229, 1
      %v4487 = vrot.slane %v4350, 1
      %v4488 = vrot.slane %v4352, 1
      %v4489 = vrot.slane %v4473, 1
      %v4490 = vrot.slane %v4475, 1
      %v4503 = vadd.f32 %v1969, %v4227
      %v4504 = vadd.f32 %v1971, %v4229
      %v4505 = vadd.f32 %v2098, %v4350
      %v4506 = vadd.f32 %v2100, %v4352
      %v4507 = vadd.f32 %v2227, %v4473
      %v4508 = vadd.f32 %v2229, %v4475
      %v4509 = vadd.f32 %v1973, %v4485
      %v4510 = vadd.f32 %v1975, %v4486
      %v4511 = vadd.f32 %v2102, %v4487
      %v4512 = vadd.f32 %v2104, %v4488
      %v4513 = vadd.f32 %v2231, %v4489
      %v4514 = vadd.f32 %v2233, %v4490
      %v4515 = vmax.f32 %v4503, 0.0
      %v4516 = vmax.f32 %v4504, 0.0
      %v4517 = vmax.f32 %v4505, 0.0
      %v4518 = vmax.f32 %v4506, 0.0
      %v4519 = vmax.f32 %v4507, 0.0
      %v4520 = vmax.f32 %v4508, 0.0
      %v4521 = vmax.f32 %v4509, 0.0
      %v4522 = vmax.f32 %v4510, 0.0
      %v4523 = vmax.f32 %v4511, 0.0
      %v4524 = vmax.f32 %v4512, 0.0
      %v4525 = vmax.f32 %v4513, 0.0
      %v4526 = vmax.f32 %v4514, 0.0
      %v4539 = vcombine.low %v4515, %v4516
      %v4540 = vcombine.low %v4517, %v4518
      %v4542 = vunpack.c.l.s4 1983009808
      %v4543 = vunpack.c.0.s8 %v4542
      %v4544 = vlaneseq
      %v4545 = vshrl.u32 %v4544, 7
      %v4546 = vsub.s32 %v4543, %v4545
      %v4547 = vrot.slane %v4539, %v4546
      %v4549 = vunpack.c.l.s4 1983009808
      %v4550 = vunpack.c.0.s8 %v4549
      %v4551 = vlaneseq
      %v4552 = vshrl.u32 %v4551, 7
      %v4553 = vsub.s32 %v4550, %v4552
      %v4554 = vrot.slane %v4540, %v4553
      %v4555 = vcombine.low %v4547, %v4554
      %v4556 = vcombine.low %v4519, %v4520
      %v4558 = vunpack.c.l.s4 1983009808
      %v4559 = vunpack.c.0.s8 %v4558
      %v4560 = vlaneseq
      %v4561 = vshrl.u32 %v4560, 7
      %v4562 = vsub.s32 %v4559, %v4561
      %v4563 = vrot.slane %v4556, %v4562
      %v4564 = vcombine.low %v4521, %v4522
      %v4565 = vcombine.low %v4523, %v4524
      %v4567 = vunpack.c.l.s4 1983009808
      %v4568 = vunpack.c.0.s8 %v4567
      %v4569 = vlaneseq
      %v4570 = vshrl.u32 %v4569, 7
      %v4571 = vsub.s32 %v4568, %v4570
      %v4572 = vrot.slane %v4564, %v4571
      %v4574 = vunpack.c.l.s4 1983009808
      %v4575 = vunpack.c.0.s8 %v4574
      %v4576 = vlaneseq
      %v4577 = vshrl.u32 %v4576, 7
      %v4578 = vsub.s32 %v4575, %v4577
      %v4579 = vrot.slane %v4565, %v4578
      %v4580 = vcombine.low %v4572, %v4579
      %v4581 = vcombine.low %v4525, %v4526
      %v4583 = vunpack.c.l.s4 1983009808
      %v4584 = vunpack.c.0.s8 %v4583
      %v4585 = vlaneseq
      %v4586 = vshrl.u32 %v4585, 7
      %v4587 = vsub.s32 %v4584, %v4586
      %v4588 = vrot.slane %v4581, %v4587
      %vm4589 = vcmask 1044484
      %v4590 = vsel %vm4589, %v4555, %v4555
      %vm4591 = vcmask 1046534
      %v4592 = vsel %vm4591, %v4555, %v4590
      %v4593 = vrot.slane %v4580, 7
      %vm4594 = vcmask 1041409
      %v4595 = vsel %vm4594, %v4593, %v4592
      %vm4596 = vcmask 1043459
      %v4597 = vsel %vm4596, %v4593, %v4595
      %vm4598 = vcmask 1045509
      %v4599 = vsel %vm4598, %v4593, %v4597
      %vm4600 = vcmask 1047559
      %v4601 = vsel %vm4600, %v4593, %v4599
      %v4602 = vsel %vm4589, %v4563, %v4563
      %v4603 = vsel %vm4591, %v4563, %v4602
      %v4604 = vrot.slane %v4588, 7
      %v4605 = vsel %vm4594, %v4604, %v4603
      %v4606 = vsel %vm4596, %v4604, %v4605
      %v4607 = vsel %vm4598, %v4604, %v4606
      %v4608 = vsel %vm4600, %v4604, %v4607
      %4611 = vst [vmem:[%s4] sm:$0xff] %v4601
      %4612 = vst [vmem:[%s4 + $0x8] sm:$0xf] %v4608
    $region41: #{_lambda_.2} parent=1 // pred_fallthru
      _
    %v4613 = vld [vmem:[%s4] sm:$0xff]
    %v4614 = vld [vmem:[%s4 + $0x8] sm:$0xf]
    %v4617 = vcombine.high %v4613, %v4613
    %v4619 = vunpack.c.l.s4 1983009808
    %v4620 = vunpack.c.0.s8 %v4619
    %v4621 = vlaneseq
    %v4622 = vshrl.u32 %v4621, 7
    %v4623 = vsub.s32 %v4620, %v4622
    %v4624 = vrot.slane %v4613, %v4623
    %v4626 = vunpack.c.l.s4 1983009808
    %v4627 = vunpack.c.0.s8 %v4626
    %v4628 = vlaneseq
    %v4629 = vshrl.u32 %v4628, 7
    %v4630 = vsub.s32 %v4627, %v4629
    %v4631 = vrot.slane %v4617, %v4630
    %v4632 = vcombine.high %v4624, %v4624
    %v4633 = vcombine.high %v4631, %v4631
    %v4635 = vunpack.c.l.s4 1983009808
    %v4636 = vunpack.c.0.s8 %v4635
    %v4637 = vlaneseq
    %v4638 = vshrl.u32 %v4637, 7
    %v4639 = vsub.s32 %v4636, %v4638
    %v4640 = vrot.slane %v4614, %v4639
    %v4641 = vcombine.high %v4640, %v4640
    %v4648 = vpack.c.bf16 %v4624, %v4624
    %v4649 = vpack.c.bf16 %v4632, %v4632
    %v4650 = vpack.c.bf16 %v4631, %v4631
    %v4651 = vpack.c.bf16 %v4633, %v4633
    %v4652 = vpack.c.bf16 %v4640, %v4640
    %v4653 = vpack.c.bf16 %v4641, %v4641
    %v4654 = vld [vmem:[#allocation6] sm:$0xff]
    %v4655 = vld [vmem:[#allocation6 + $0x8] sm:$0xff]
    %v4656 = vld [vmem:[#allocation6 + $0x10] sm:$0xff]
    %v4657 = vld [vmem:[#allocation6 + $0x18] sm:$0xff]
    %v4658 = vld [vmem:[#allocation6 + $0x20] sm:$0xff]
    %v4659 = vld [vmem:[#allocation6 + $0x28] sm:$0xff]
    %v4660 = vld [vmem:[#allocation6 + $0x30] sm:$0xff]
    %v4661 = vld [vmem:[#allocation6 + $0x38] sm:$0xff]
    %v4662 = vld [vmem:[#allocation6 + $0x40] sm:$0xff]
    %v4663 = vld [vmem:[#allocation6 + $0x48] sm:$0xff]
    %v4664 = vld [vmem:[#allocation6 + $0x50] sm:$0xff]
    %v4665 = vld [vmem:[#allocation6 + $0x58] sm:$0xff]
    %v4666 = vld [vmem:[#allocation6 + $0x60] sm:$0xff]
    %v4667 = vld [vmem:[#allocation6 + $0x68] sm:$0xff]
    %v4668 = vld [vmem:[#allocation6 + $0x70] sm:$0xff]
    %v4669 = vld [vmem:[#allocation6 + $0x78] sm:$0xff]
    %v4670 = vld [vmem:[#allocation6 + $0x80] sm:$0xff]
    %v4671 = vld [vmem:[#allocation6 + $0x88] sm:$0xff]
    %v4672 = vld [vmem:[#allocation6 + $0x90] sm:$0xff]
    %v4673 = vld [vmem:[#allocation6 + $0x98] sm:$0xff]
    %v4674 = vld [vmem:[#allocation6 + $0xa0] sm:$0xff]
    %v4675 = vld [vmem:[#allocation6 + $0xa8] sm:$0xff]
    %v4676 = vld [vmem:[#allocation6 + $0xb0] sm:$0xff]
    %v4677 = vld [vmem:[#allocation6 + $0xb8] sm:$0xff]
    %v4678 = vld [vmem:[#allocation6 + $0xc0] sm:$0xff]
    %v4679 = vld [vmem:[#allocation6 + $0xc8] sm:$0xff]
    %v4680 = vld [vmem:[#allocation6 + $0xd0] sm:$0xff]
    %v4681 = vld [vmem:[#allocation6 + $0xd8] sm:$0xff]
    %v4682 = vld [vmem:[#allocation6 + $0xe0] sm:$0xff]
    %v4683 = vld [vmem:[#allocation6 + $0xe8] sm:$0xff]
    %v4684 = vld [vmem:[#allocation6 + $0xf0] sm:$0xff]
    %v4685 = vld [vmem:[#allocation6 + $0xf8] sm:$0xff]
    %v4686 = vld [vmem:[#allocation6 + $0x100] sm:$0xff]
    %v4687 = vld [vmem:[#allocation6 + $0x108] sm:$0xff]
    %v4688 = vld [vmem:[#allocation6 + $0x110] sm:$0xff]
    %v4689 = vld [vmem:[#allocation6 + $0x118] sm:$0xff]
    %v4690 = vld [vmem:[#allocation6 + $0x120] sm:$0xff]
    %v4691 = vld [vmem:[#allocation6 + $0x128] sm:$0xff]
    %v4692 = vld [vmem:[#allocation6 + $0x130] sm:$0xff]
    %v4693 = vld [vmem:[#allocation6 + $0x138] sm:$0xff]
    %v4694 = vld [vmem:[#allocation6 + $0x140] sm:$0xff]
    %v4695 = vld [vmem:[#allocation6 + $0x148] sm:$0xff]
    %v4696 = vld [vmem:[#allocation6 + $0x150] sm:$0xff]
    %v4697 = vld [vmem:[#allocation6 + $0x158] sm:$0xff]
    %v4698 = vld [vmem:[#allocation6 + $0x160] sm:$0xff]
    %v4699 = vld [vmem:[#allocation6 + $0x168] sm:$0xff]
    %v4700 = vld [vmem:[#allocation6 + $0x170] sm:$0xff]
    %v4701 = vld [vmem:[#allocation6 + $0x178] sm:$0xff]
    %v4702 = vld [vmem:[#allocation6 + $0x180] sm:$0xff]
    %v4703 = vld [vmem:[#allocation6 + $0x188] sm:$0xff]
    %v4704 = vld [vmem:[#allocation6 + $0x190] sm:$0xff]
    %v4705 = vld [vmem:[#allocation6 + $0x198] sm:$0xff]
    %v4706 = vld [vmem:[#allocation6 + $0x1a0] sm:$0xff]
    %v4707 = vld [vmem:[#allocation6 + $0x1a8] sm:$0xff]
    %v4708 = vld [vmem:[#allocation6 + $0x1b0] sm:$0xff]
    %v4709 = vld [vmem:[#allocation6 + $0x1b8] sm:$0xff]
    %v4710 = vld [vmem:[#allocation6 + $0x1c0] sm:$0xff]
    %v4711 = vld [vmem:[#allocation6 + $0x1c8] sm:$0xff]
    %v4712 = vld [vmem:[#allocation6 + $0x1d0] sm:$0xff]
    %v4713 = vld [vmem:[#allocation6 + $0x1d8] sm:$0xff]
    %v4714 = vld [vmem:[#allocation6 + $0x1e0] sm:$0xff]
    %v4715 = vld [vmem:[#allocation6 + $0x1e8] sm:$0xff]
    %v4716 = vld [vmem:[#allocation6 + $0x1f0] sm:$0xff]
    %v4717 = vld [vmem:[#allocation6 + $0x1f8] sm:$0xff]
    %v4718 = vld [vmem:[#allocation6 + $0x200] sm:$0xff]
    %v4719 = vld [vmem:[#allocation6 + $0x208] sm:$0xff]
    %v4720 = vld [vmem:[#allocation6 + $0x210] sm:$0xff]
    %v4721 = vld [vmem:[#allocation6 + $0x218] sm:$0xff]
    %v4722 = vld [vmem:[#allocation6 + $0x220] sm:$0xff]
    %v4723 = vld [vmem:[#allocation6 + $0x228] sm:$0xff]
    %v4724 = vld [vmem:[#allocation6 + $0x230] sm:$0xff]
    %v4725 = vld [vmem:[#allocation6 + $0x238] sm:$0xff]
    %v4726 = vld [vmem:[#allocation6 + $0x240] sm:$0xff]
    %v4727 = vld [vmem:[#allocation6 + $0x248] sm:$0xff]
    %v4728 = vld [vmem:[#allocation6 + $0x250] sm:$0xff]
    %v4729 = vld [vmem:[#allocation6 + $0x258] sm:$0xff]
    %v4730 = vld [vmem:[#allocation6 + $0x260] sm:$0xff]
    %v4731 = vld [vmem:[#allocation6 + $0x268] sm:$0xff]
    %v4732 = vld [vmem:[#allocation6 + $0x270] sm:$0xff]
    %v4733 = vld [vmem:[#allocation6 + $0x278] sm:$0xff]
    %v4734 = vld [vmem:[#allocation6 + $0x280] sm:$0xff]
    %v4735 = vld [vmem:[#allocation6 + $0x288] sm:$0xff]
    %v4736 = vld [vmem:[#allocation6 + $0x290] sm:$0xff]
    %v4737 = vld [vmem:[#allocation6 + $0x298] sm:$0xff]
    %v4738 = vld [vmem:[#allocation6 + $0x2a0] sm:$0xff]
    %v4739 = vld [vmem:[#allocation6 + $0x2a8] sm:$0xff]
    %v4740 = vld [vmem:[#allocation6 + $0x2b0] sm:$0xff]
    %v4741 = vld [vmem:[#allocation6 + $0x2b8] sm:$0xff]
    %v4742 = vld [vmem:[#allocation6 + $0x2c0] sm:$0xff]
    %v4743 = vld [vmem:[#allocation6 + $0x2c8] sm:$0xff]
    %v4744 = vld [vmem:[#allocation6 + $0x2d0] sm:$0xff]
    %v4745 = vld [vmem:[#allocation6 + $0x2d8] sm:$0xff]
    %v4746 = vld [vmem:[#allocation6 + $0x2e0] sm:$0xff]
    %v4747 = vld [vmem:[#allocation6 + $0x2e8] sm:$0xff]
    %v4748 = vld [vmem:[#allocation6 + $0x2f0] sm:$0xff]
    %v4749 = vld [vmem:[#allocation6 + $0x2f8] sm:$0xff]
    %v4750 = vld [vmem:[#allocation6 + $0x300] sm:$0xff]
    %v4751 = vld [vmem:[#allocation6 + $0x308] sm:$0xff]
    %v4752 = vld [vmem:[#allocation6 + $0x310] sm:$0xff]
    %v4753 = vld [vmem:[#allocation6 + $0x318] sm:$0xff]
    %v4754 = vld [vmem:[#allocation6 + $0x320] sm:$0xff]
    %v4755 = vld [vmem:[#allocation6 + $0x328] sm:$0xff]
    %v4756 = vld [vmem:[#allocation6 + $0x330] sm:$0xff]
    %v4757 = vld [vmem:[#allocation6 + $0x338] sm:$0xff]
    %v4758 = vld [vmem:[#allocation6 + $0x340] sm:$0xff]
    %v4759 = vld [vmem:[#allocation6 + $0x348] sm:$0xff]
    %v4760 = vld [vmem:[#allocation6 + $0x350] sm:$0xff]
    %v4761 = vld [vmem:[#allocation6 + $0x358] sm:$0xff]
    %v4762 = vld [vmem:[#allocation6 + $0x360] sm:$0xff]
    %v4763 = vld [vmem:[#allocation6 + $0x368] sm:$0xff]
    %v4764 = vld [vmem:[#allocation6 + $0x370] sm:$0xff]
    %v4765 = vld [vmem:[#allocation6 + $0x378] sm:$0xff]
    %v4766 = vld [vmem:[#allocation6 + $0x380] sm:$0xff]
    %v4767 = vld [vmem:[#allocation6 + $0x388] sm:$0xff]
    %v4768 = vld [vmem:[#allocation6 + $0x390] sm:$0xff]
    %v4769 = vld [vmem:[#allocation6 + $0x398] sm:$0xff]
    %v4770 = vld [vmem:[#allocation6 + $0x3a0] sm:$0xff]
    %v4771 = vld [vmem:[#allocation6 + $0x3a8] sm:$0xff]
    %v4772 = vld [vmem:[#allocation6 + $0x3b0] sm:$0xff]
    %v4773 = vld [vmem:[#allocation6 + $0x3b8] sm:$0xff]
    %v4774 = vld [vmem:[#allocation6 + $0x3c0] sm:$0xff]
    %v4775 = vld [vmem:[#allocation6 + $0x3c8] sm:$0xff]
    %v4776 = vld [vmem:[#allocation6 + $0x3d0] sm:$0xff]
    %v4777 = vld [vmem:[#allocation6 + $0x3d8] sm:$0xff]
    %v4778 = vld [vmem:[#allocation6 + $0x3e0] sm:$0xff]
    %v4779 = vld [vmem:[#allocation6 + $0x3e8] sm:$0xff]
    %v4780 = vld [vmem:[#allocation6 + $0x3f0] sm:$0xff]
    %v4781 = vld [vmem:[#allocation6 + $0x3f8] sm:$0xff]
    %v4782 = vld [vmem:[#allocation6 + $0x400] sm:$0xff]
    %v4783 = vld [vmem:[#allocation6 + $0x408] sm:$0xff]
    %v4784 = vld [vmem:[#allocation6 + $0x410] sm:$0xff]
    %v4785 = vld [vmem:[#allocation6 + $0x418] sm:$0xff]
    %v4786 = vld [vmem:[#allocation6 + $0x420] sm:$0xff]
    %v4787 = vld [vmem:[#allocation6 + $0x428] sm:$0xff]
    %v4788 = vld [vmem:[#allocation6 + $0x430] sm:$0xff]
    %v4789 = vld [vmem:[#allocation6 + $0x438] sm:$0xff]
    %v4790 = vld [vmem:[#allocation6 + $0x440] sm:$0xff]
    %v4791 = vld [vmem:[#allocation6 + $0x448] sm:$0xff]
    %v4792 = vld [vmem:[#allocation6 + $0x450] sm:$0xff]
    %v4793 = vld [vmem:[#allocation6 + $0x458] sm:$0xff]
    %v4794 = vld [vmem:[#allocation6 + $0x460] sm:$0xff]
    %v4795 = vld [vmem:[#allocation6 + $0x468] sm:$0xff]
    %v4796 = vld [vmem:[#allocation6 + $0x470] sm:$0xff]
    %v4797 = vld [vmem:[#allocation6 + $0x478] sm:$0xff]
    %v4798 = vld [vmem:[#allocation6 + $0x480] sm:$0xff]
    %v4799 = vld [vmem:[#allocation6 + $0x488] sm:$0xff]
    %v4800 = vld [vmem:[#allocation6 + $0x490] sm:$0xff]
    %v4801 = vld [vmem:[#allocation6 + $0x498] sm:$0xff]
    %v4802 = vld [vmem:[#allocation6 + $0x4a0] sm:$0xff]
    %v4803 = vld [vmem:[#allocation6 + $0x4a8] sm:$0xff]
    %v4804 = vld [vmem:[#allocation6 + $0x4b0] sm:$0xff]
    %v4805 = vld [vmem:[#allocation6 + $0x4b8] sm:$0xff]
    %v4806 = vld [vmem:[#allocation6 + $0x4c0] sm:$0xff]
    %v4807 = vld [vmem:[#allocation6 + $0x4c8] sm:$0xff]
    %v4808 = vld [vmem:[#allocation6 + $0x4d0] sm:$0xff]
    %v4809 = vld [vmem:[#allocation6 + $0x4d8] sm:$0xff]
    %v4810 = vld [vmem:[#allocation6 + $0x4e0] sm:$0xff]
    %v4811 = vld [vmem:[#allocation6 + $0x4e8] sm:$0xff]
    %v4812 = vld [vmem:[#allocation6 + $0x4f0] sm:$0xff]
    %v4813 = vld [vmem:[#allocation6 + $0x4f8] sm:$0xff]
    %v4814 = vld [vmem:[#allocation6 + $0x500] sm:$0xff]
    %v4815 = vld [vmem:[#allocation6 + $0x508] sm:$0xff]
    %v4816 = vld [vmem:[#allocation6 + $0x510] sm:$0xff]
    %v4817 = vld [vmem:[#allocation6 + $0x518] sm:$0xff]
    %v4818 = vld [vmem:[#allocation6 + $0x520] sm:$0xff]
    %v4819 = vld [vmem:[#allocation6 + $0x528] sm:$0xff]
    %v4820 = vld [vmem:[#allocation6 + $0x530] sm:$0xff]
    %v4821 = vld [vmem:[#allocation6 + $0x538] sm:$0xff]
    %v4822 = vld [vmem:[#allocation6 + $0x540] sm:$0xff]
    %v4823 = vld [vmem:[#allocation6 + $0x548] sm:$0xff]
    %v4824 = vld [vmem:[#allocation6 + $0x550] sm:$0xff]
    %v4825 = vld [vmem:[#allocation6 + $0x558] sm:$0xff]
    %v4826 = vld [vmem:[#allocation6 + $0x560] sm:$0xff]
    %v4827 = vld [vmem:[#allocation6 + $0x568] sm:$0xff]
    %v4828 = vld [vmem:[#allocation6 + $0x570] sm:$0xff]
    %v4829 = vld [vmem:[#allocation6 + $0x578] sm:$0xff]
    %v4830 = vld [vmem:[#allocation6 + $0x580] sm:$0xff]
    %v4831 = vld [vmem:[#allocation6 + $0x588] sm:$0xff]
    %v4832 = vld [vmem:[#allocation6 + $0x590] sm:$0xff]
    %v4833 = vld [vmem:[#allocation6 + $0x598] sm:$0xff]
    %v4834 = vld [vmem:[#allocation6 + $0x5a0] sm:$0xff]
    %v4835 = vld [vmem:[#allocation6 + $0x5a8] sm:$0xff]
    %v4836 = vld [vmem:[#allocation6 + $0x5b0] sm:$0xff]
    %v4837 = vld [vmem:[#allocation6 + $0x5b8] sm:$0xff]
    %v4838 = vld [vmem:[#allocation6 + $0x5c0] sm:$0xff]
    %v4839 = vld [vmem:[#allocation6 + $0x5c8] sm:$0xff]
    %v4840 = vld [vmem:[#allocation6 + $0x5d0] sm:$0xff]
    %v4841 = vld [vmem:[#allocation6 + $0x5d8] sm:$0xff]
    %v4842 = vld [vmem:[#allocation6 + $0x5e0] sm:$0xff]
    %v4843 = vld [vmem:[#allocation6 + $0x5e8] sm:$0xff]
    %v4844 = vld [vmem:[#allocation6 + $0x5f0] sm:$0xff]
    %v4845 = vld [vmem:[#allocation6 + $0x5f8] sm:$0xff]
    %v4846 = vld [vmem:[#allocation6 + $0x600] sm:$0xff]
    %v4847 = vld [vmem:[#allocation6 + $0x608] sm:$0xff]
    %v4848 = vld [vmem:[#allocation6 + $0x610] sm:$0xff]
    %v4849 = vld [vmem:[#allocation6 + $0x618] sm:$0xff]
    %v4850 = vld [vmem:[#allocation6 + $0x620] sm:$0xff]
    %v4851 = vld [vmem:[#allocation6 + $0x628] sm:$0xff]
    %v4852 = vld [vmem:[#allocation6 + $0x630] sm:$0xff]
    %v4853 = vld [vmem:[#allocation6 + $0x638] sm:$0xff]
    %v4854 = vld [vmem:[#allocation6 + $0x640] sm:$0xff]
    %v4855 = vld [vmem:[#allocation6 + $0x648] sm:$0xff]
    %v4856 = vld [vmem:[#allocation6 + $0x650] sm:$0xff]
    %v4857 = vld [vmem:[#allocation6 + $0x658] sm:$0xff]
    %v4858 = vld [vmem:[#allocation6 + $0x660] sm:$0xff]
    %v4859 = vld [vmem:[#allocation6 + $0x668] sm:$0xff]
    %v4860 = vld [vmem:[#allocation6 + $0x670] sm:$0xff]
    %v4861 = vld [vmem:[#allocation6 + $0x678] sm:$0xff]
    %v4862 = vld [vmem:[#allocation6 + $0x680] sm:$0xff]
    %v4863 = vld [vmem:[#allocation6 + $0x688] sm:$0xff]
    %v4864 = vld [vmem:[#allocation6 + $0x690] sm:$0xff]
    %v4865 = vld [vmem:[#allocation6 + $0x698] sm:$0xff]
    %v4866 = vld [vmem:[#allocation6 + $0x6a0] sm:$0xff]
    %v4867 = vld [vmem:[#allocation6 + $0x6a8] sm:$0xff]
    %v4868 = vld [vmem:[#allocation6 + $0x6b0] sm:$0xff]
    %v4869 = vld [vmem:[#allocation6 + $0x6b8] sm:$0xff]
    %v4870 = vld [vmem:[#allocation6 + $0x6c0] sm:$0xff]
    %v4871 = vld [vmem:[#allocation6 + $0x6c8] sm:$0xff]
    %v4872 = vld [vmem:[#allocation6 + $0x6d0] sm:$0xff]
    %v4873 = vld [vmem:[#allocation6 + $0x6d8] sm:$0xff]
    %v4874 = vld [vmem:[#allocation6 + $0x6e0] sm:$0xff]
    %v4875 = vld [vmem:[#allocation6 + $0x6e8] sm:$0xff]
    %v4876 = vld [vmem:[#allocation6 + $0x6f0] sm:$0xff]
    %v4877 = vld [vmem:[#allocation6 + $0x6f8] sm:$0xff]
    %v4878 = vld [vmem:[#allocation6 + $0x700] sm:$0xff]
    %v4879 = vld [vmem:[#allocation6 + $0x708] sm:$0xff]
    %v4880 = vld [vmem:[#allocation6 + $0x710] sm:$0xff]
    %v4881 = vld [vmem:[#allocation6 + $0x718] sm:$0xff]
    %v4882 = vld [vmem:[#allocation6 + $0x720] sm:$0xff]
    %v4883 = vld [vmem:[#allocation6 + $0x728] sm:$0xff]
    %v4884 = vld [vmem:[#allocation6 + $0x730] sm:$0xff]
    %v4885 = vld [vmem:[#allocation6 + $0x738] sm:$0xff]
    %v4886 = vld [vmem:[#allocation6 + $0x740] sm:$0xff]
    %v4887 = vld [vmem:[#allocation6 + $0x748] sm:$0xff]
    %v4888 = vld [vmem:[#allocation6 + $0x750] sm:$0xff]
    %v4889 = vld [vmem:[#allocation6 + $0x758] sm:$0xff]
    %v4890 = vld [vmem:[#allocation6 + $0x760] sm:$0xff]
    %v4891 = vld [vmem:[#allocation6 + $0x768] sm:$0xff]
    %v4892 = vld [vmem:[#allocation6 + $0x770] sm:$0xff]
    %v4893 = vld [vmem:[#allocation6 + $0x778] sm:$0xff]
    %v4894 = vld [vmem:[#allocation6 + $0x780] sm:$0xff]
    %v4895 = vld [vmem:[#allocation6 + $0x788] sm:$0xff]
    %v4896 = vld [vmem:[#allocation6 + $0x790] sm:$0xff]
    %v4897 = vld [vmem:[#allocation6 + $0x798] sm:$0xff]
    %v4898 = vld [vmem:[#allocation6 + $0x7a0] sm:$0xff]
    %v4899 = vld [vmem:[#allocation6 + $0x7a8] sm:$0xff]
    %v4900 = vld [vmem:[#allocation6 + $0x7b0] sm:$0xff]
    %v4901 = vld [vmem:[#allocation6 + $0x7b8] sm:$0xff]
    %v4902 = vld [vmem:[#allocation6 + $0x7c0] sm:$0xff]
    %v4903 = vld [vmem:[#allocation6 + $0x7c8] sm:$0xff]
    %v4904 = vld [vmem:[#allocation6 + $0x7d0] sm:$0xff]
    %v4905 = vld [vmem:[#allocation6 + $0x7d8] sm:$0xff]
    %v4906 = vld [vmem:[#allocation6 + $0x7e0] sm:$0xff]
    %v4907 = vld [vmem:[#allocation6 + $0x7e8] sm:$0xff]
    %v4908 = vld [vmem:[#allocation6 + $0x7f0] sm:$0xff]
    %v4909 = vld [vmem:[#allocation6 + $0x7f8] sm:$0xff]
    %v4910 = vld [vmem:[#allocation6 + $0x800] sm:$0xff]
    %v4911 = vld [vmem:[#allocation6 + $0x808] sm:$0xff]
    %v4912 = vld [vmem:[#allocation6 + $0x810] sm:$0xff]
    %v4913 = vld [vmem:[#allocation6 + $0x818] sm:$0xff]
    %v4914 = vld [vmem:[#allocation6 + $0x820] sm:$0xff]
    %v4915 = vld [vmem:[#allocation6 + $0x828] sm:$0xff]
    %v4916 = vld [vmem:[#allocation6 + $0x830] sm:$0xff]
    %v4917 = vld [vmem:[#allocation6 + $0x838] sm:$0xff]
    %v4918 = vld [vmem:[#allocation6 + $0x840] sm:$0xff]
    %v4919 = vld [vmem:[#allocation6 + $0x848] sm:$0xff]
    %v4920 = vld [vmem:[#allocation6 + $0x850] sm:$0xff]
    %v4921 = vld [vmem:[#allocation6 + $0x858] sm:$0xff]
    %v4922 = vld [vmem:[#allocation6 + $0x860] sm:$0xff]
    %v4923 = vld [vmem:[#allocation6 + $0x868] sm:$0xff]
    %v4924 = vld [vmem:[#allocation6 + $0x870] sm:$0xff]
    %v4925 = vld [vmem:[#allocation6 + $0x878] sm:$0xff]
    %v4926 = vld [vmem:[#allocation6 + $0x880] sm:$0xff]
    %v4927 = vld [vmem:[#allocation6 + $0x888] sm:$0xff]
    %v4928 = vld [vmem:[#allocation6 + $0x890] sm:$0xff]
    %v4929 = vld [vmem:[#allocation6 + $0x898] sm:$0xff]
    %v4930 = vld [vmem:[#allocation6 + $0x8a0] sm:$0xff]
    %v4931 = vld [vmem:[#allocation6 + $0x8a8] sm:$0xff]
    %v4932 = vld [vmem:[#allocation6 + $0x8b0] sm:$0xff]
    %v4933 = vld [vmem:[#allocation6 + $0x8b8] sm:$0xff]
    %v4934 = vld [vmem:[#allocation6 + $0x8c0] sm:$0xff]
    %v4935 = vld [vmem:[#allocation6 + $0x8c8] sm:$0xff]
    %v4936 = vld [vmem:[#allocation6 + $0x8d0] sm:$0xff]
    %v4937 = vld [vmem:[#allocation6 + $0x8d8] sm:$0xff]
    %v4938 = vld [vmem:[#allocation6 + $0x8e0] sm:$0xff]
    %v4939 = vld [vmem:[#allocation6 + $0x8e8] sm:$0xff]
    %v4940 = vld [vmem:[#allocation6 + $0x8f0] sm:$0xff]
    %v4941 = vld [vmem:[#allocation6 + $0x8f8] sm:$0xff]
    %v5230 = vunpack.c.l.b16 %v4654
    %v5231 = vunpack.c.h.b16 %v4654
    %v5232 = vunpack.c.l.b16 %v4655
    %v5233 = vunpack.c.h.b16 %v4655
    %v5234 = vunpack.c.l.b16 %v4656
    %v5235 = vunpack.c.h.b16 %v4656
    %v5236 = vunpack.c.l.b16 %v4657
    %v5237 = vunpack.c.h.b16 %v4657
    %v5238 = vunpack.c.l.b16 %v4658
    %v5239 = vunpack.c.h.b16 %v4658
    %v5240 = vunpack.c.l.b16 %v4659
    %v5241 = vunpack.c.h.b16 %v4659
    %v5242 = vunpack.c.l.b16 %v4660
    %v5243 = vunpack.c.h.b16 %v4660
    %v5244 = vunpack.c.l.b16 %v4661
    %v5245 = vunpack.c.h.b16 %v4661
    %v5246 = vunpack.c.l.b16 %v4662
    %v5247 = vunpack.c.h.b16 %v4662
    %v5248 = vunpack.c.l.b16 %v4663
    %v5249 = vunpack.c.h.b16 %v4663
    %v5250 = vunpack.c.l.b16 %v4664
    %v5251 = vunpack.c.h.b16 %v4664
    %v5252 = vunpack.c.l.b16 %v4665
    %v5253 = vunpack.c.h.b16 %v4665
    %v5254 = vunpack.c.l.b16 %v4666
    %v5255 = vunpack.c.h.b16 %v4666
    %v5256 = vunpack.c.l.b16 %v4667
    %v5257 = vunpack.c.h.b16 %v4667
    %v5258 = vunpack.c.l.b16 %v4668
    %v5259 = vunpack.c.h.b16 %v4668
    %v5260 = vunpack.c.l.b16 %v4669
    %v5261 = vunpack.c.h.b16 %v4669
    %v5262 = vunpack.c.l.b16 %v4670
    %v5263 = vunpack.c.h.b16 %v4670
    %v5264 = vunpack.c.l.b16 %v4671
    %v5265 = vunpack.c.h.b16 %v4671
    %v5266 = vunpack.c.l.b16 %v4672
    %v5267 = vunpack.c.h.b16 %v4672
    %v5268 = vunpack.c.l.b16 %v4673
    %v5269 = vunpack.c.h.b16 %v4673
    %v5270 = vunpack.c.l.b16 %v4674
    %v5271 = vunpack.c.h.b16 %v4674
    %v5272 = vunpack.c.l.b16 %v4675
    %v5273 = vunpack.c.h.b16 %v4675
    %v5274 = vunpack.c.l.b16 %v4676
    %v5275 = vunpack.c.h.b16 %v4676
    %v5276 = vunpack.c.l.b16 %v4677
    %v5277 = vunpack.c.h.b16 %v4677
    %v5278 = vunpack.c.l.b16 %v4678
    %v5279 = vunpack.c.h.b16 %v4678
    %v5280 = vunpack.c.l.b16 %v4679
    %v5281 = vunpack.c.h.b16 %v4679
    %v5282 = vunpack.c.l.b16 %v4680
    %v5283 = vunpack.c.h.b16 %v4680
    %v5284 = vunpack.c.l.b16 %v4681
    %v5285 = vunpack.c.h.b16 %v4681
    %v5286 = vunpack.c.l.b16 %v4682
    %v5287 = vunpack.c.h.b16 %v4682
    %v5288 = vunpack.c.l.b16 %v4683
    %v5289 = vunpack.c.h.b16 %v4683
    %v5290 = vunpack.c.l.b16 %v4684
    %v5291 = vunpack.c.h.b16 %v4684
    %v5292 = vunpack.c.l.b16 %v4685
    %v5293 = vunpack.c.h.b16 %v4685
    %v5294 = vunpack.c.l.b16 %v4686
    %v5295 = vunpack.c.h.b16 %v4686
    %v5296 = vunpack.c.l.b16 %v4687
    %v5297 = vunpack.c.h.b16 %v4687
    %v5298 = vunpack.c.l.b16 %v4688
    %v5299 = vunpack.c.h.b16 %v4688
    %v5300 = vunpack.c.l.b16 %v4689
    %v5301 = vunpack.c.h.b16 %v4689
    %v5302 = vunpack.c.l.b16 %v4690
    %v5303 = vunpack.c.h.b16 %v4690
    %v5304 = vunpack.c.l.b16 %v4691
    %v5305 = vunpack.c.h.b16 %v4691
    %v5306 = vunpack.c.l.b16 %v4692
    %v5307 = vunpack.c.h.b16 %v4692
    %v5308 = vunpack.c.l.b16 %v4693
    %v5309 = vunpack.c.h.b16 %v4693
    %v5310 = vunpack.c.l.b16 %v4694
    %v5311 = vunpack.c.h.b16 %v4694
    %v5312 = vunpack.c.l.b16 %v4695
    %v5313 = vunpack.c.h.b16 %v4695
    %v5314 = vunpack.c.l.b16 %v4696
    %v5315 = vunpack.c.h.b16 %v4696
    %v5316 = vunpack.c.l.b16 %v4697
    %v5317 = vunpack.c.h.b16 %v4697
    %v5318 = vunpack.c.l.b16 %v4698
    %v5319 = vunpack.c.h.b16 %v4698
    %v5320 = vunpack.c.l.b16 %v4699
    %v5321 = vunpack.c.h.b16 %v4699
    %v5322 = vunpack.c.l.b16 %v4700
    %v5323 = vunpack.c.h.b16 %v4700
    %v5324 = vunpack.c.l.b16 %v4701
    %v5325 = vunpack.c.h.b16 %v4701
    %v5326 = vunpack.c.l.b16 %v4702
    %v5327 = vunpack.c.h.b16 %v4702
    %v5328 = vunpack.c.l.b16 %v4703
    %v5329 = vunpack.c.h.b16 %v4703
    %v5330 = vunpack.c.l.b16 %v4704
    %v5331 = vunpack.c.h.b16 %v4704
    %v5332 = vunpack.c.l.b16 %v4705
    %v5333 = vunpack.c.h.b16 %v4705
    %v5334 = vunpack.c.l.b16 %v4706
    %v5335 = vunpack.c.h.b16 %v4706
    %v5336 = vunpack.c.l.b16 %v4707
    %v5337 = vunpack.c.h.b16 %v4707
    %v5338 = vunpack.c.l.b16 %v4708
    %v5339 = vunpack.c.h.b16 %v4708
    %v5340 = vunpack.c.l.b16 %v4709
    %v5341 = vunpack.c.h.b16 %v4709
    %v5342 = vunpack.c.l.b16 %v4710
    %v5343 = vunpack.c.h.b16 %v4710
    %v5344 = vunpack.c.l.b16 %v4711
    %v5345 = vunpack.c.h.b16 %v4711
    %v5346 = vunpack.c.l.b16 %v4712
    %v5347 = vunpack.c.h.b16 %v4712
    %v5348 = vunpack.c.l.b16 %v4713
    %v5349 = vunpack.c.h.b16 %v4713
    %v5350 = vunpack.c.l.b16 %v4714
    %v5351 = vunpack.c.h.b16 %v4714
    %v5352 = vunpack.c.l.b16 %v4715
    %v5353 = vunpack.c.h.b16 %v4715
    %v5354 = vunpack.c.l.b16 %v4716
    %v5355 = vunpack.c.h.b16 %v4716
    %v5356 = vunpack.c.l.b16 %v4717
    %v5357 = vunpack.c.h.b16 %v4717
    %v5358 = vunpack.c.l.b16 %v4718
    %v5359 = vunpack.c.h.b16 %v4718
    %v5360 = vunpack.c.l.b16 %v4719
    %v5361 = vunpack.c.h.b16 %v4719
    %v5362 = vunpack.c.l.b16 %v4720
    %v5363 = vunpack.c.h.b16 %v4720
    %v5364 = vunpack.c.l.b16 %v4721
    %v5365 = vunpack.c.h.b16 %v4721
    %v5366 = vunpack.c.l.b16 %v4722
    %v5367 = vunpack.c.h.b16 %v4722
    %v5368 = vunpack.c.l.b16 %v4723
    %v5369 = vunpack.c.h.b16 %v4723
    %v5370 = vunpack.c.l.b16 %v4724
    %v5371 = vunpack.c.h.b16 %v4724
    %v5372 = vunpack.c.l.b16 %v4725
    %v5373 = vunpack.c.h.b16 %v4725
    %v5374 = vunpack.c.l.b16 %v4726
    %v5375 = vunpack.c.h.b16 %v4726
    %v5376 = vunpack.c.l.b16 %v4727
    %v5377 = vunpack.c.h.b16 %v4727
    %v5378 = vunpack.c.l.b16 %v4728
    %v5379 = vunpack.c.h.b16 %v4728
    %v5380 = vunpack.c.l.b16 %v4729
    %v5381 = vunpack.c.h.b16 %v4729
    %v5382 = vunpack.c.l.b16 %v4730
    %v5383 = vunpack.c.h.b16 %v4730
    %v5384 = vunpack.c.l.b16 %v4731
    %v5385 = vunpack.c.h.b16 %v4731
    %v5386 = vunpack.c.l.b16 %v4732
    %v5387 = vunpack.c.h.b16 %v4732
    %v5388 = vunpack.c.l.b16 %v4733
    %v5389 = vunpack.c.h.b16 %v4733
    %v5390 = vunpack.c.l.b16 %v4734
    %v5391 = vunpack.c.h.b16 %v4734
    %v5392 = vunpack.c.l.b16 %v4735
    %v5393 = vunpack.c.h.b16 %v4735
    %v5394 = vunpack.c.l.b16 %v4736
    %v5395 = vunpack.c.h.b16 %v4736
    %v5396 = vunpack.c.l.b16 %v4737
    %v5397 = vunpack.c.h.b16 %v4737
    %v5398 = vunpack.c.l.b16 %v4738
    %v5399 = vunpack.c.h.b16 %v4738
    %v5400 = vunpack.c.l.b16 %v4739
    %v5401 = vunpack.c.h.b16 %v4739
    %v5402 = vunpack.c.l.b16 %v4740
    %v5403 = vunpack.c.h.b16 %v4740
    %v5404 = vunpack.c.l.b16 %v4741
    %v5405 = vunpack.c.h.b16 %v4741
    %v5406 = vunpack.c.l.b16 %v4742
    %v5407 = vunpack.c.h.b16 %v4742
    %v5408 = vunpack.c.l.b16 %v4743
    %v5409 = vunpack.c.h.b16 %v4743
    %v5410 = vunpack.c.l.b16 %v4744
    %v5411 = vunpack.c.h.b16 %v4744
    %v5412 = vunpack.c.l.b16 %v4745
    %v5413 = vunpack.c.h.b16 %v4745
    %v5414 = vunpack.c.l.b16 %v4746
    %v5415 = vunpack.c.h.b16 %v4746
    %v5416 = vunpack.c.l.b16 %v4747
    %v5417 = vunpack.c.h.b16 %v4747
    %v5418 = vunpack.c.l.b16 %v4748
    %v5419 = vunpack.c.h.b16 %v4748
    %v5420 = vunpack.c.l.b16 %v4749
    %v5421 = vunpack.c.h.b16 %v4749
    %v5422 = vunpack.c.l.b16 %v4750
    %v5423 = vunpack.c.h.b16 %v4750
    %v5424 = vunpack.c.l.b16 %v4751
    %v5425 = vunpack.c.h.b16 %v4751
    %v5426 = vunpack.c.l.b16 %v4752
    %v5427 = vunpack.c.h.b16 %v4752
    %v5428 = vunpack.c.l.b16 %v4753
    %v5429 = vunpack.c.h.b16 %v4753
    %v5430 = vunpack.c.l.b16 %v4754
    %v5431 = vunpack.c.h.b16 %v4754
    %v5432 = vunpack.c.l.b16 %v4755
    %v5433 = vunpack.c.h.b16 %v4755
    %v5434 = vunpack.c.l.b16 %v4756
    %v5435 = vunpack.c.h.b16 %v4756
    %v5436 = vunpack.c.l.b16 %v4757
    %v5437 = vunpack.c.h.b16 %v4757
    %v5438 = vunpack.c.l.b16 %v4758
    %v5439 = vunpack.c.h.b16 %v4758
    %v5440 = vunpack.c.l.b16 %v4759
    %v5441 = vunpack.c.h.b16 %v4759
    %v5442 = vunpack.c.l.b16 %v4760
    %v5443 = vunpack.c.h.b16 %v4760
    %v5444 = vunpack.c.l.b16 %v4761
    %v5445 = vunpack.c.h.b16 %v4761
    %v5446 = vunpack.c.l.b16 %v4762
    %v5447 = vunpack.c.h.b16 %v4762
    %v5448 = vunpack.c.l.b16 %v4763
    %v5449 = vunpack.c.h.b16 %v4763
    %v5450 = vunpack.c.l.b16 %v4764
    %v5451 = vunpack.c.h.b16 %v4764
    %v5452 = vunpack.c.l.b16 %v4765
    %v5453 = vunpack.c.h.b16 %v4765
    %v5454 = vunpack.c.l.b16 %v4766
    %v5455 = vunpack.c.h.b16 %v4766
    %v5456 = vunpack.c.l.b16 %v4767
    %v5457 = vunpack.c.h.b16 %v4767
    %v5458 = vunpack.c.l.b16 %v4768
    %v5459 = vunpack.c.h.b16 %v4768
    %v5460 = vunpack.c.l.b16 %v4769
    %v5461 = vunpack.c.h.b16 %v4769
    %v5462 = vunpack.c.l.b16 %v4770
    %v5463 = vunpack.c.h.b16 %v4770
    %v5464 = vunpack.c.l.b16 %v4771
    %v5465 = vunpack.c.h.b16 %v4771
    %v5466 = vunpack.c.l.b16 %v4772
    %v5467 = vunpack.c.h.b16 %v4772
    %v5468 = vunpack.c.l.b16 %v4773
    %v5469 = vunpack.c.h.b16 %v4773
    %v5470 = vunpack.c.l.b16 %v4774
    %v5471 = vunpack.c.h.b16 %v4774
    %v5472 = vunpack.c.l.b16 %v4775
    %v5473 = vunpack.c.h.b16 %v4775
    %v5474 = vunpack.c.l.b16 %v4776
    %v5475 = vunpack.c.h.b16 %v4776
    %v5476 = vunpack.c.l.b16 %v4777
    %v5477 = vunpack.c.h.b16 %v4777
    %v5478 = vunpack.c.l.b16 %v4778
    %v5479 = vunpack.c.h.b16 %v4778
    %v5480 = vunpack.c.l.b16 %v4779
    %v5481 = vunpack.c.h.b16 %v4779
    %v5482 = vunpack.c.l.b16 %v4780
    %v5483 = vunpack.c.h.b16 %v4780
    %v5484 = vunpack.c.l.b16 %v4781
    %v5485 = vunpack.c.h.b16 %v4781
    %v5486 = vunpack.c.l.b16 %v4782
    %v5487 = vunpack.c.h.b16 %v4782
    %v5488 = vunpack.c.l.b16 %v4783
    %v5489 = vunpack.c.h.b16 %v4783
    %v5490 = vunpack.c.l.b16 %v4784
    %v5491 = vunpack.c.h.b16 %v4784
    %v5492 = vunpack.c.l.b16 %v4785
    %v5493 = vunpack.c.h.b16 %v4785
    %v5494 = vunpack.c.l.b16 %v4786
    %v5495 = vunpack.c.h.b16 %v4786
    %v5496 = vunpack.c.l.b16 %v4787
    %v5497 = vunpack.c.h.b16 %v4787
    %v5498 = vunpack.c.l.b16 %v4788
    %v5499 = vunpack.c.h.b16 %v4788
    %v5500 = vunpack.c.l.b16 %v4789
    %v5501 = vunpack.c.h.b16 %v4789
    %v5502 = vunpack.c.l.b16 %v4790
    %v5503 = vunpack.c.h.b16 %v4790
    %v5504 = vunpack.c.l.b16 %v4791
    %v5505 = vunpack.c.h.b16 %v4791
    %v5506 = vunpack.c.l.b16 %v4792
    %v5507 = vunpack.c.h.b16 %v4792
    %v5508 = vunpack.c.l.b16 %v4793
    %v5509 = vunpack.c.h.b16 %v4793
    %v5510 = vunpack.c.l.b16 %v4794
    %v5511 = vunpack.c.h.b16 %v4794
    %v5512 = vunpack.c.l.b16 %v4795
    %v5513 = vunpack.c.h.b16 %v4795
    %v5514 = vunpack.c.l.b16 %v4796
    %v5515 = vunpack.c.h.b16 %v4796
    %v5516 = vunpack.c.l.b16 %v4797
    %v5517 = vunpack.c.h.b16 %v4797
    %v5518 = vunpack.c.l.b16 %v4798
    %v5519 = vunpack.c.h.b16 %v4798
    %v5520 = vunpack.c.l.b16 %v4799
    %v5521 = vunpack.c.h.b16 %v4799
    %v5522 = vunpack.c.l.b16 %v4800
    %v5523 = vunpack.c.h.b16 %v4800
    %v5524 = vunpack.c.l.b16 %v4801
    %v5525 = vunpack.c.h.b16 %v4801
    %v5526 = vunpack.c.l.b16 %v4802
    %v5527 = vunpack.c.h.b16 %v4802
    %v5528 = vunpack.c.l.b16 %v4803
    %v5529 = vunpack.c.h.b16 %v4803
    %v5530 = vunpack.c.l.b16 %v4804
    %v5531 = vunpack.c.h.b16 %v4804
    %v5532 = vunpack.c.l.b16 %v4805
    %v5533 = vunpack.c.h.b16 %v4805
    %v5534 = vunpack.c.l.b16 %v4806
    %v5535 = vunpack.c.h.b16 %v4806
    %v5536 = vunpack.c.l.b16 %v4807
    %v5537 = vunpack.c.h.b16 %v4807
    %v5538 = vunpack.c.l.b16 %v4808
    %v5539 = vunpack.c.h.b16 %v4808
    %v5540 = vunpack.c.l.b16 %v4809
    %v5541 = vunpack.c.h.b16 %v4809
    %v5542 = vunpack.c.l.b16 %v4810
    %v5543 = vunpack.c.h.b16 %v4810
    %v5544 = vunpack.c.l.b16 %v4811
    %v5545 = vunpack.c.h.b16 %v4811
    %v5546 = vunpack.c.l.b16 %v4812
    %v5547 = vunpack.c.h.b16 %v4812
    %v5548 = vunpack.c.l.b16 %v4813
    %v5549 = vunpack.c.h.b16 %v4813
    %v5550 = vunpack.c.l.b16 %v4814
    %v5551 = vunpack.c.h.b16 %v4814
    %v5552 = vunpack.c.l.b16 %v4815
    %v5553 = vunpack.c.h.b16 %v4815
    %v5554 = vunpack.c.l.b16 %v4816
    %v5555 = vunpack.c.h.b16 %v4816
    %v5556 = vunpack.c.l.b16 %v4817
    %v5557 = vunpack.c.h.b16 %v4817
    %v5558 = vunpack.c.l.b16 %v4818
    %v5559 = vunpack.c.h.b16 %v4818
    %v5560 = vunpack.c.l.b16 %v4819
    %v5561 = vunpack.c.h.b16 %v4819
    %v5562 = vunpack.c.l.b16 %v4820
    %v5563 = vunpack.c.h.b16 %v4820
    %v5564 = vunpack.c.l.b16 %v4821
    %v5565 = vunpack.c.h.b16 %v4821
    %v5566 = vunpack.c.l.b16 %v4822
    %v5567 = vunpack.c.h.b16 %v4822
    %v5568 = vunpack.c.l.b16 %v4823
    %v5569 = vunpack.c.h.b16 %v4823
    %v5570 = vunpack.c.l.b16 %v4824
    %v5571 = vunpack.c.h.b16 %v4824
    %v5572 = vunpack.c.l.b16 %v4825
    %v5573 = vunpack.c.h.b16 %v4825
    %v5574 = vunpack.c.l.b16 %v4826
    %v5575 = vunpack.c.h.b16 %v4826
    %v5576 = vunpack.c.l.b16 %v4827
    %v5577 = vunpack.c.h.b16 %v4827
    %v5578 = vunpack.c.l.b16 %v4828
    %v5579 = vunpack.c.h.b16 %v4828
    %v5580 = vunpack.c.l.b16 %v4829
    %v5581 = vunpack.c.h.b16 %v4829
    %v5582 = vunpack.c.l.b16 %v4830
    %v5583 = vunpack.c.h.b16 %v4830
    %v5584 = vunpack.c.l.b16 %v4831
    %v5585 = vunpack.c.h.b16 %v4831
    %v5586 = vunpack.c.l.b16 %v4832
    %v5587 = vunpack.c.h.b16 %v4832
    %v5588 = vunpack.c.l.b16 %v4833
    %v5589 = vunpack.c.h.b16 %v4833
    %v5590 = vunpack.c.l.b16 %v4834
    %v5591 = vunpack.c.h.b16 %v4834
    %v5592 = vunpack.c.l.b16 %v4835
    %v5593 = vunpack.c.h.b16 %v4835
    %v5594 = vunpack.c.l.b16 %v4836
    %v5595 = vunpack.c.h.b16 %v4836
    %v5596 = vunpack.c.l.b16 %v4837
    %v5597 = vunpack.c.h.b16 %v4837
    %v5598 = vunpack.c.l.b16 %v4838
    %v5599 = vunpack.c.h.b16 %v4838
    %v5600 = vunpack.c.l.b16 %v4839
    %v5601 = vunpack.c.h.b16 %v4839
    %v5602 = vunpack.c.l.b16 %v4840
    %v5603 = vunpack.c.h.b16 %v4840
    %v5604 = vunpack.c.l.b16 %v4841
    %v5605 = vunpack.c.h.b16 %v4841
    %v5606 = vunpack.c.l.b16 %v4842
    %v5607 = vunpack.c.h.b16 %v4842
    %v5608 = vunpack.c.l.b16 %v4843
    %v5609 = vunpack.c.h.b16 %v4843
    %v5610 = vunpack.c.l.b16 %v4844
    %v5611 = vunpack.c.h.b16 %v4844
    %v5612 = vunpack.c.l.b16 %v4845
    %v5613 = vunpack.c.h.b16 %v4845
    %v5614 = vunpack.c.l.b16 %v4846
    %v5615 = vunpack.c.h.b16 %v4846
    %v5616 = vunpack.c.l.b16 %v4847
    %v5617 = vunpack.c.h.b16 %v4847
    %v5618 = vunpack.c.l.b16 %v4848
    %v5619 = vunpack.c.h.b16 %v4848
    %v5620 = vunpack.c.l.b16 %v4849
    %v5621 = vunpack.c.h.b16 %v4849
    %v5622 = vunpack.c.l.b16 %v4850
    %v5623 = vunpack.c.h.b16 %v4850
    %v5624 = vunpack.c.l.b16 %v4851
    %v5625 = vunpack.c.h.b16 %v4851
    %v5626 = vunpack.c.l.b16 %v4852
    %v5627 = vunpack.c.h.b16 %v4852
    %v5628 = vunpack.c.l.b16 %v4853
    %v5629 = vunpack.c.h.b16 %v4853
    %v5630 = vunpack.c.l.b16 %v4854
    %v5631 = vunpack.c.h.b16 %v4854
    %v5632 = vunpack.c.l.b16 %v4855
    %v5633 = vunpack.c.h.b16 %v4855
    %v5634 = vunpack.c.l.b16 %v4856
    %v5635 = vunpack.c.h.b16 %v4856
    %v5636 = vunpack.c.l.b16 %v4857
    %v5637 = vunpack.c.h.b16 %v4857
    %v5638 = vunpack.c.l.b16 %v4858
    %v5639 = vunpack.c.h.b16 %v4858
    %v5640 = vunpack.c.l.b16 %v4859
    %v5641 = vunpack.c.h.b16 %v4859
    %v5642 = vunpack.c.l.b16 %v4860
    %v5643 = vunpack.c.h.b16 %v4860
    %v5644 = vunpack.c.l.b16 %v4861
    %v5645 = vunpack.c.h.b16 %v4861
    %v5646 = vunpack.c.l.b16 %v4862
    %v5647 = vunpack.c.h.b16 %v4862
    %v5648 = vunpack.c.l.b16 %v4863
    %v5649 = vunpack.c.h.b16 %v4863
    %v5650 = vunpack.c.l.b16 %v4864
    %v5651 = vunpack.c.h.b16 %v4864
    %v5652 = vunpack.c.l.b16 %v4865
    %v5653 = vunpack.c.h.b16 %v4865
    %v5654 = vunpack.c.l.b16 %v4866
    %v5655 = vunpack.c.h.b16 %v4866
    %v5656 = vunpack.c.l.b16 %v4867
    %v5657 = vunpack.c.h.b16 %v4867
    %v5658 = vunpack.c.l.b16 %v4868
    %v5659 = vunpack.c.h.b16 %v4868
    %v5660 = vunpack.c.l.b16 %v4869
    %v5661 = vunpack.c.h.b16 %v4869
    %v5662 = vunpack.c.l.b16 %v4870
    %v5663 = vunpack.c.h.b16 %v4870
    %v5664 = vunpack.c.l.b16 %v4871
    %v5665 = vunpack.c.h.b16 %v4871
    %v5666 = vunpack.c.l.b16 %v4872
    %v5667 = vunpack.c.h.b16 %v4872
    %v5668 = vunpack.c.l.b16 %v4873
    %v5669 = vunpack.c.h.b16 %v4873
    %v5670 = vunpack.c.l.b16 %v4874
    %v5671 = vunpack.c.h.b16 %v4874
    %v5672 = vunpack.c.l.b16 %v4875
    %v5673 = vunpack.c.h.b16 %v4875
    %v5674 = vunpack.c.l.b16 %v4876
    %v5675 = vunpack.c.h.b16 %v4876
    %v5676 = vunpack.c.l.b16 %v4877
    %v5677 = vunpack.c.h.b16 %v4877
    %v5678 = vunpack.c.l.b16 %v4878
    %v5679 = vunpack.c.h.b16 %v4878
    %v5680 = vunpack.c.l.b16 %v4879
    %v5681 = vunpack.c.h.b16 %v4879
    %v5682 = vunpack.c.l.b16 %v4880
    %v5683 = vunpack.c.h.b16 %v4880
    %v5684 = vunpack.c.l.b16 %v4881
    %v5685 = vunpack.c.h.b16 %v4881
    %v5686 = vunpack.c.l.b16 %v4882
    %v5687 = vunpack.c.h.b16 %v4882
    %v5688 = vunpack.c.l.b16 %v4883
    %v5689 = vunpack.c.h.b16 %v4883
    %v5690 = vunpack.c.l.b16 %v4884
    %v5691 = vunpack.c.h.b16 %v4884
    %v5692 = vunpack.c.l.b16 %v4885
    %v5693 = vunpack.c.h.b16 %v4885
    %v5694 = vunpack.c.l.b16 %v4886
    %v5695 = vunpack.c.h.b16 %v4886
    %v5696 = vunpack.c.l.b16 %v4887
    %v5697 = vunpack.c.h.b16 %v4887
    %v5698 = vunpack.c.l.b16 %v4888
    %v5699 = vunpack.c.h.b16 %v4888
    %v5700 = vunpack.c.l.b16 %v4889
    %v5701 = vunpack.c.h.b16 %v4889
    %v5702 = vunpack.c.l.b16 %v4890
    %v5703 = vunpack.c.h.b16 %v4890
    %v5704 = vunpack.c.l.b16 %v4891
    %v5705 = vunpack.c.h.b16 %v4891
    %v5706 = vunpack.c.l.b16 %v4892
    %v5707 = vunpack.c.h.b16 %v4892
    %v5708 = vunpack.c.l.b16 %v4893
    %v5709 = vunpack.c.h.b16 %v4893
    %v5710 = vunpack.c.l.b16 %v4894
    %v5711 = vunpack.c.h.b16 %v4894
    %v5712 = vunpack.c.l.b16 %v4895
    %v5713 = vunpack.c.h.b16 %v4895
    %v5714 = vunpack.c.l.b16 %v4896
    %v5715 = vunpack.c.h.b16 %v4896
    %v5716 = vunpack.c.l.b16 %v4897
    %v5717 = vunpack.c.h.b16 %v4897
    %v5718 = vunpack.c.l.b16 %v4898
    %v5719 = vunpack.c.h.b16 %v4898
    %v5720 = vunpack.c.l.b16 %v4899
    %v5721 = vunpack.c.h.b16 %v4899
    %v5722 = vunpack.c.l.b16 %v4900
    %v5723 = vunpack.c.h.b16 %v4900
    %v5724 = vunpack.c.l.b16 %v4901
    %v5725 = vunpack.c.h.b16 %v4901
    %v5726 = vunpack.c.l.b16 %v4902
    %v5727 = vunpack.c.h.b16 %v4902
    %v5728 = vunpack.c.l.b16 %v4903
    %v5729 = vunpack.c.h.b16 %v4903
    %v5730 = vunpack.c.l.b16 %v4904
    %v5731 = vunpack.c.h.b16 %v4904
    %v5732 = vunpack.c.l.b16 %v4905
    %v5733 = vunpack.c.h.b16 %v4905
    %v5734 = vunpack.c.l.b16 %v4906
    %v5735 = vunpack.c.h.b16 %v4906
    %v5736 = vunpack.c.l.b16 %v4907
    %v5737 = vunpack.c.h.b16 %v4907
    %v5738 = vunpack.c.l.b16 %v4908
    %v5739 = vunpack.c.h.b16 %v4908
    %v5740 = vunpack.c.l.b16 %v4909
    %v5741 = vunpack.c.h.b16 %v4909
    %v5742 = vunpack.c.l.b16 %v4910
    %v5743 = vunpack.c.h.b16 %v4910
    %v5744 = vunpack.c.l.b16 %v4911
    %v5745 = vunpack.c.h.b16 %v4911
    %v5746 = vunpack.c.l.b16 %v4912
    %v5747 = vunpack.c.h.b16 %v4912
    %v5748 = vunpack.c.l.b16 %v4913
    %v5749 = vunpack.c.h.b16 %v4913
    %v5750 = vunpack.c.l.b16 %v4914
    %v5751 = vunpack.c.h.b16 %v4914
    %v5752 = vunpack.c.l.b16 %v4915
    %v5753 = vunpack.c.h.b16 %v4915
    %v5754 = vunpack.c.l.b16 %v4916
    %v5755 = vunpack.c.h.b16 %v4916
    %v5756 = vunpack.c.l.b16 %v4917
    %v5757 = vunpack.c.h.b16 %v4917
    %v5758 = vunpack.c.l.b16 %v4918
    %v5759 = vunpack.c.h.b16 %v4918
    %v5760 = vunpack.c.l.b16 %v4919
    %v5761 = vunpack.c.h.b16 %v4919
    %v5762 = vunpack.c.l.b16 %v4920
    %v5763 = vunpack.c.h.b16 %v4920
    %v5764 = vunpack.c.l.b16 %v4921
    %v5765 = vunpack.c.h.b16 %v4921
    %v5766 = vunpack.c.l.b16 %v4922
    %v5767 = vunpack.c.h.b16 %v4922
    %v5768 = vunpack.c.l.b16 %v4923
    %v5769 = vunpack.c.h.b16 %v4923
    %v5770 = vunpack.c.l.b16 %v4924
    %v5771 = vunpack.c.h.b16 %v4924
    %v5772 = vunpack.c.l.b16 %v4925
    %v5773 = vunpack.c.h.b16 %v4925
    %v5774 = vunpack.c.l.b16 %v4926
    %v5775 = vunpack.c.h.b16 %v4926
    %v5776 = vunpack.c.l.b16 %v4927
    %v5777 = vunpack.c.h.b16 %v4927
    %v5778 = vunpack.c.l.b16 %v4928
    %v5779 = vunpack.c.h.b16 %v4928
    %v5780 = vunpack.c.l.b16 %v4929
    %v5781 = vunpack.c.h.b16 %v4929
    %v5782 = vunpack.c.l.b16 %v4930
    %v5783 = vunpack.c.h.b16 %v4930
    %v5784 = vunpack.c.l.b16 %v4931
    %v5785 = vunpack.c.h.b16 %v4931
    %v5786 = vunpack.c.l.b16 %v4932
    %v5787 = vunpack.c.h.b16 %v4932
    %v5788 = vunpack.c.l.b16 %v4933
    %v5789 = vunpack.c.h.b16 %v4933
    %v5790 = vunpack.c.l.b16 %v4934
    %v5791 = vunpack.c.h.b16 %v4934
    %v5792 = vunpack.c.l.b16 %v4935
    %v5793 = vunpack.c.h.b16 %v4935
    %v5794 = vunpack.c.l.b16 %v4936
    %v5795 = vunpack.c.h.b16 %v4936
    %v5796 = vunpack.c.l.b16 %v4937
    %v5797 = vunpack.c.h.b16 %v4937
    %v5798 = vunpack.c.l.b16 %v4938
    %v5799 = vunpack.c.h.b16 %v4938
    %v5800 = vunpack.c.l.b16 %v4939
    %v5801 = vunpack.c.h.b16 %v4939
    %v5802 = vunpack.c.l.b16 %v4940
    %v5803 = vunpack.c.h.b16 %v4940
    %v5804 = vunpack.c.l.b16 %v4941
    %v5805 = vunpack.c.h.b16 %v4941
    %v5806 = vpack.c.b16 %v5236, %v5230
    %v5807 = vpack.c.b16 %v5237, %v5231
    %v5808 = vpack.c.b16 %v5238, %v5232
    %v5809 = vpack.c.b16 %v5239, %v5233
    %v5810 = vpack.c.b16 %v5240, %v5234
    %v5811 = vpack.c.b16 %v5241, %v5235
    %v5812 = vpack.c.b16 %v5248, %v5242
    %v5813 = vpack.c.b16 %v5249, %v5243
    %v5814 = vpack.c.b16 %v5250, %v5244
    %v5815 = vpack.c.b16 %v5251, %v5245
    %v5816 = vpack.c.b16 %v5252, %v5246
    %v5817 = vpack.c.b16 %v5253, %v5247
    %v5818 = vpack.c.b16 %v5260, %v5254
    %v5819 = vpack.c.b16 %v5261, %v5255
    %v5820 = vpack.c.b16 %v5262, %v5256
    %v5821 = vpack.c.b16 %v5263, %v5257
    %v5822 = vpack.c.b16 %v5264, %v5258
    %v5823 = vpack.c.b16 %v5265, %v5259
    %v5824 = vpack.c.b16 %v5272, %v5266
    %v5825 = vpack.c.b16 %v5273, %v5267
    %v5826 = vpack.c.b16 %v5274, %v5268
    %v5827 = vpack.c.b16 %v5275, %v5269
    %v5828 = vpack.c.b16 %v5276, %v5270
    %v5829 = vpack.c.b16 %v5277, %v5271
    %v5830 = vpack.c.b16 %v5284, %v5278
    %v5831 = vpack.c.b16 %v5285, %v5279
    %v5832 = vpack.c.b16 %v5286, %v5280
    %v5833 = vpack.c.b16 %v5287, %v5281
    %v5834 = vpack.c.b16 %v5288, %v5282
    %v5835 = vpack.c.b16 %v5289, %v5283
    %v5836 = vpack.c.b16 %v5296, %v5290
    %v5837 = vpack.c.b16 %v5297, %v5291
    %v5838 = vpack.c.b16 %v5298, %v5292
    %v5839 = vpack.c.b16 %v5299, %v5293
    %v5840 = vpack.c.b16 %v5300, %v5294
    %v5841 = vpack.c.b16 %v5301, %v5295
    %v5842 = vpack.c.b16 %v5308, %v5302
    %v5843 = vpack.c.b16 %v5309, %v5303
    %v5844 = vpack.c.b16 %v5310, %v5304
    %v5845 = vpack.c.b16 %v5311, %v5305
    %v5846 = vpack.c.b16 %v5312, %v5306
    %v5847 = vpack.c.b16 %v5313, %v5307
    %v5848 = vpack.c.b16 %v5320, %v5314
    %v5849 = vpack.c.b16 %v5321, %v5315
    %v5850 = vpack.c.b16 %v5322, %v5316
    %v5851 = vpack.c.b16 %v5323, %v5317
    %v5852 = vpack.c.b16 %v5324, %v5318
    %v5853 = vpack.c.b16 %v5325, %v5319
    %v5854 = vpack.c.b16 %v5332, %v5326
    %v5855 = vpack.c.b16 %v5333, %v5327
    %v5856 = vpack.c.b16 %v5334, %v5328
    %v5857 = vpack.c.b16 %v5335, %v5329
    %v5858 = vpack.c.b16 %v5336, %v5330
    %v5859 = vpack.c.b16 %v5337, %v5331
    %v5860 = vpack.c.b16 %v5344, %v5338
    %v5861 = vpack.c.b16 %v5345, %v5339
    %v5862 = vpack.c.b16 %v5346, %v5340
    %v5863 = vpack.c.b16 %v5347, %v5341
    %v5864 = vpack.c.b16 %v5348, %v5342
    %v5865 = vpack.c.b16 %v5349, %v5343
    %v5866 = vpack.c.b16 %v5356, %v5350
    %v5867 = vpack.c.b16 %v5357, %v5351
    %v5868 = vpack.c.b16 %v5358, %v5352
    %v5869 = vpack.c.b16 %v5359, %v5353
    %v5870 = vpack.c.b16 %v5360, %v5354
    %v5871 = vpack.c.b16 %v5361, %v5355
    %v5872 = vpack.c.b16 %v5368, %v5362
    %v5873 = vpack.c.b16 %v5369, %v5363
    %v5874 = vpack.c.b16 %v5370, %v5364
    %v5875 = vpack.c.b16 %v5371, %v5365
    %v5876 = vpack.c.b16 %v5372, %v5366
    %v5877 = vpack.c.b16 %v5373, %v5367
    %v5878 = vpack.c.b16 %v5380, %v5374
    %v5879 = vpack.c.b16 %v5381, %v5375
    %v5880 = vpack.c.b16 %v5382, %v5376
    %v5881 = vpack.c.b16 %v5383, %v5377
    %v5882 = vpack.c.b16 %v5384, %v5378
    %v5883 = vpack.c.b16 %v5385, %v5379
    %v5884 = vpack.c.b16 %v5392, %v5386
    %v5885 = vpack.c.b16 %v5393, %v5387
    %v5886 = vpack.c.b16 %v5394, %v5388
    %v5887 = vpack.c.b16 %v5395, %v5389
    %v5888 = vpack.c.b16 %v5396, %v5390
    %v5889 = vpack.c.b16 %v5397, %v5391
    %v5890 = vpack.c.b16 %v5404, %v5398
    %v5891 = vpack.c.b16 %v5405, %v5399
    %v5892 = vpack.c.b16 %v5406, %v5400
    %v5893 = vpack.c.b16 %v5407, %v5401
    %v5894 = vpack.c.b16 %v5408, %v5402
    %v5895 = vpack.c.b16 %v5409, %v5403
    %v5896 = vpack.c.b16 %v5416, %v5410
    %v5897 = vpack.c.b16 %v5417, %v5411
    %v5898 = vpack.c.b16 %v5418, %v5412
    %v5899 = vpack.c.b16 %v5419, %v5413
    %v5900 = vpack.c.b16 %v5420, %v5414
    %v5901 = vpack.c.b16 %v5421, %v5415
    %v5902 = vpack.c.b16 %v5428, %v5422
    %v5903 = vpack.c.b16 %v5429, %v5423
    %v5904 = vpack.c.b16 %v5430, %v5424
    %v5905 = vpack.c.b16 %v5431, %v5425
    %v5906 = vpack.c.b16 %v5432, %v5426
    %v5907 = vpack.c.b16 %v5433, %v5427
    %v5908 = vpack.c.b16 %v5440, %v5434
    %v5909 = vpack.c.b16 %v5441, %v5435
    %v5910 = vpack.c.b16 %v5442, %v5436
    %v5911 = vpack.c.b16 %v5443, %v5437
    %v5912 = vpack.c.b16 %v5444, %v5438
    %v5913 = vpack.c.b16 %v5445, %v5439
    %v5914 = vpack.c.b16 %v5452, %v5446
    %v5915 = vpack.c.b16 %v5453, %v5447
    %v5916 = vpack.c.b16 %v5454, %v5448
    %v5917 = vpack.c.b16 %v5455, %v5449
    %v5918 = vpack.c.b16 %v5456, %v5450
    %v5919 = vpack.c.b16 %v5457, %v5451
    %v5920 = vpack.c.b16 %v5464, %v5458
    %v5921 = vpack.c.b16 %v5465, %v5459
    %v5922 = vpack.c.b16 %v5466, %v5460
    %v5923 = vpack.c.b16 %v5467, %v5461
    %v5924 = vpack.c.b16 %v5468, %v5462
    %v5925 = vpack.c.b16 %v5469, %v5463
    %v5926 = vpack.c.b16 %v5476, %v5470
    %v5927 = vpack.c.b16 %v5477, %v5471
    %v5928 = vpack.c.b16 %v5478, %v5472
    %v5929 = vpack.c.b16 %v5479, %v5473
    %v5930 = vpack.c.b16 %v5480, %v5474
    %v5931 = vpack.c.b16 %v5481, %v5475
    %v5932 = vpack.c.b16 %v5488, %v5482
    %v5933 = vpack.c.b16 %v5489, %v5483
    %v5934 = vpack.c.b16 %v5490, %v5484
    %v5935 = vpack.c.b16 %v5491, %v5485
    %v5936 = vpack.c.b16 %v5492, %v5486
    %v5937 = vpack.c.b16 %v5493, %v5487
    %v5938 = vpack.c.b16 %v5500, %v5494
    %v5939 = vpack.c.b16 %v5501, %v5495
    %v5940 = vpack.c.b16 %v5502, %v5496
    %v5941 = vpack.c.b16 %v5503, %v5497
    %v5942 = vpack.c.b16 %v5504, %v5498
    %v5943 = vpack.c.b16 %v5505, %v5499
    %v5944 = vpack.c.b16 %v5512, %v5506
    %v5945 = vpack.c.b16 %v5513, %v5507
    %v5946 = vpack.c.b16 %v5514, %v5508
    %v5947 = vpack.c.b16 %v5515, %v5509
    %v5948 = vpack.c.b16 %v5516, %v5510
    %v5949 = vpack.c.b16 %v5517, %v5511
    %v5950 = vpack.c.b16 %v5524, %v5518
    %v5951 = vpack.c.b16 %v5525, %v5519
    %v5952 = vpack.c.b16 %v5526, %v5520
    %v5953 = vpack.c.b16 %v5527, %v5521
    %v5954 = vpack.c.b16 %v5528, %v5522
    %v5955 = vpack.c.b16 %v5529, %v5523
    %v5956 = vpack.c.b16 %v5536, %v5530
    %v5957 = vpack.c.b16 %v5537, %v5531
    %v5958 = vpack.c.b16 %v5538, %v5532
    %v5959 = vpack.c.b16 %v5539, %v5533
    %v5960 = vpack.c.b16 %v5540, %v5534
    %v5961 = vpack.c.b16 %v5541, %v5535
    %v5962 = vpack.c.b16 %v5548, %v5542
    %v5963 = vpack.c.b16 %v5549, %v5543
    %v5964 = vpack.c.b16 %v5550, %v5544
    %v5965 = vpack.c.b16 %v5551, %v5545
    %v5966 = vpack.c.b16 %v5552, %v5546
    %v5967 = vpack.c.b16 %v5553, %v5547
    %v5968 = vpack.c.b16 %v5560, %v5554
    %v5969 = vpack.c.b16 %v5561, %v5555
    %v5970 = vpack.c.b16 %v5562, %v5556
    %v5971 = vpack.c.b16 %v5563, %v5557
    %v5972 = vpack.c.b16 %v5564, %v5558
    %v5973 = vpack.c.b16 %v5565, %v5559
    %v5974 = vpack.c.b16 %v5572, %v5566
    %v5975 = vpack.c.b16 %v5573, %v5567
    %v5976 = vpack.c.b16 %v5574, %v5568
    %v5977 = vpack.c.b16 %v5575, %v5569
    %v5978 = vpack.c.b16 %v5576, %v5570
    %v5979 = vpack.c.b16 %v5577, %v5571
    %v5980 = vpack.c.b16 %v5584, %v5578
    %v5981 = vpack.c.b16 %v5585, %v5579
    %v5982 = vpack.c.b16 %v5586, %v5580
    %v5983 = vpack.c.b16 %v5587, %v5581
    %v5984 = vpack.c.b16 %v5588, %v5582
    %v5985 = vpack.c.b16 %v5589, %v5583
    %v5986 = vpack.c.b16 %v5596, %v5590
    %v5987 = vpack.c.b16 %v5597, %v5591
    %v5988 = vpack.c.b16 %v5598, %v5592
    %v5989 = vpack.c.b16 %v5599, %v5593
    %v5990 = vpack.c.b16 %v5600, %v5594
    %v5991 = vpack.c.b16 %v5601, %v5595
    %v5992 = vpack.c.b16 %v5608, %v5602
    %v5993 = vpack.c.b16 %v5609, %v5603
    %v5994 = vpack.c.b16 %v5610, %v5604
    %v5995 = vpack.c.b16 %v5611, %v5605
    %v5996 = vpack.c.b16 %v5612, %v5606
    %v5997 = vpack.c.b16 %v5613, %v5607
    %v5998 = vpack.c.b16 %v5620, %v5614
    %v5999 = vpack.c.b16 %v5621, %v5615
    %v6000 = vpack.c.b16 %v5622, %v5616
    %v6001 = vpack.c.b16 %v5623, %v5617
    %v6002 = vpack.c.b16 %v5624, %v5618
    %v6003 = vpack.c.b16 %v5625, %v5619
    %v6004 = vpack.c.b16 %v5632, %v5626
    %v6005 = vpack.c.b16 %v5633, %v5627
    %v6006 = vpack.c.b16 %v5634, %v5628
    %v6007 = vpack.c.b16 %v5635, %v5629
    %v6008 = vpack.c.b16 %v5636, %v5630
    %v6009 = vpack.c.b16 %v5637, %v5631
    %v6010 = vpack.c.b16 %v5644, %v5638
    %v6011 = vpack.c.b16 %v5645, %v5639
    %v6012 = vpack.c.b16 %v5646, %v5640
    %v6013 = vpack.c.b16 %v5647, %v5641
    %v6014 = vpack.c.b16 %v5648, %v5642
    %v6015 = vpack.c.b16 %v5649, %v5643
    %v6016 = vpack.c.b16 %v5656, %v5650
    %v6017 = vpack.c.b16 %v5657, %v5651
    %v6018 = vpack.c.b16 %v5658, %v5652
    %v6019 = vpack.c.b16 %v5659, %v5653
    %v6020 = vpack.c.b16 %v5660, %v5654
    %v6021 = vpack.c.b16 %v5661, %v5655
    %v6022 = vpack.c.b16 %v5668, %v5662
    %v6023 = vpack.c.b16 %v5669, %v5663
    %v6024 = vpack.c.b16 %v5670, %v5664
    %v6025 = vpack.c.b16 %v5671, %v5665
    %v6026 = vpack.c.b16 %v5672, %v5666
    %v6027 = vpack.c.b16 %v5673, %v5667
    %v6028 = vpack.c.b16 %v5680, %v5674
    %v6029 = vpack.c.b16 %v5681, %v5675
    %v6030 = vpack.c.b16 %v5682, %v5676
    %v6031 = vpack.c.b16 %v5683, %v5677
    %v6032 = vpack.c.b16 %v5684, %v5678
    %v6033 = vpack.c.b16 %v5685, %v5679
    %v6034 = vpack.c.b16 %v5692, %v5686
    %v6035 = vpack.c.b16 %v5693, %v5687
    %v6036 = vpack.c.b16 %v5694, %v5688
    %v6037 = vpack.c.b16 %v5695, %v5689
    %v6038 = vpack.c.b16 %v5696, %v5690
    %v6039 = vpack.c.b16 %v5697, %v5691
    %v6040 = vpack.c.b16 %v5704, %v5698
    %v6041 = vpack.c.b16 %v5705, %v5699
    %v6042 = vpack.c.b16 %v5706, %v5700
    %v6043 = vpack.c.b16 %v5707, %v5701
    %v6044 = vpack.c.b16 %v5708, %v5702
    %v6045 = vpack.c.b16 %v5709, %v5703
    %v6046 = vpack.c.b16 %v5716, %v5710
    %v6047 = vpack.c.b16 %v5717, %v5711
    %v6048 = vpack.c.b16 %v5718, %v5712
    %v6049 = vpack.c.b16 %v5719, %v5713
    %v6050 = vpack.c.b16 %v5720, %v5714
    %v6051 = vpack.c.b16 %v5721, %v5715
    %v6052 = vpack.c.b16 %v5728, %v5722
    %v6053 = vpack.c.b16 %v5729, %v5723
    %v6054 = vpack.c.b16 %v5730, %v5724
    %v6055 = vpack.c.b16 %v5731, %v5725
    %v6056 = vpack.c.b16 %v5732, %v5726
    %v6057 = vpack.c.b16 %v5733, %v5727
    %v6058 = vpack.c.b16 %v5740, %v5734
    %v6059 = vpack.c.b16 %v5741, %v5735
    %v6060 = vpack.c.b16 %v5742, %v5736
    %v6061 = vpack.c.b16 %v5743, %v5737
    %v6062 = vpack.c.b16 %v5744, %v5738
    %v6063 = vpack.c.b16 %v5745, %v5739
    %v6064 = vpack.c.b16 %v5752, %v5746
    %v6065 = vpack.c.b16 %v5753, %v5747
    %v6066 = vpack.c.b16 %v5754, %v5748
    %v6067 = vpack.c.b16 %v5755, %v5749
    %v6068 = vpack.c.b16 %v5756, %v5750
    %v6069 = vpack.c.b16 %v5757, %v5751
    %v6070 = vpack.c.b16 %v5764, %v5758
    %v6071 = vpack.c.b16 %v5765, %v5759
    %v6072 = vpack.c.b16 %v5766, %v5760
    %v6073 = vpack.c.b16 %v5767, %v5761
    %v6074 = vpack.c.b16 %v5768, %v5762
    %v6075 = vpack.c.b16 %v5769, %v5763
    %v6076 = vpack.c.b16 %v5776, %v5770
    %v6077 = vpack.c.b16 %v5777, %v5771
    %v6078 = vpack.c.b16 %v5778, %v5772
    %v6079 = vpack.c.b16 %v5779, %v5773
    %v6080 = vpack.c.b16 %v5780, %v5774
    %v6081 = vpack.c.b16 %v5781, %v5775
    %v6082 = vpack.c.b16 %v5788, %v5782
    %v6083 = vpack.c.b16 %v5789, %v5783
    %v6084 = vpack.c.b16 %v5790, %v5784
    %v6085 = vpack.c.b16 %v5791, %v5785
    %v6086 = vpack.c.b16 %v5792, %v5786
    %v6087 = vpack.c.b16 %v5793, %v5787
    %v6088 = vpack.c.b16 %v5800, %v5794
    %v6089 = vpack.c.b16 %v5801, %v5795
    %v6090 = vpack.c.b16 %v5802, %v5796
    %v6091 = vpack.c.b16 %v5803, %v5797
    %v6092 = vpack.c.b16 %v5804, %v5798
    %v6093 = vpack.c.b16 %v5805, %v5799
    %6382 = vmatprep.subr.bf16.mxu0 %v5849
    %6383 = vmatpush1.bf16.msra.mxu0 %v5848
    %6384 = vmatprep.subr.bf16.mxu0 %v5843
    %6385 = vmatpush1.bf16.msra.mxu0 %v5842
    %6386 = vmatprep.subr.bf16.mxu0 %v5837
    %6387 = vmatpush1.bf16.msra.mxu0 %v5836
    %6388 = vmatprep.subr.bf16.mxu0 %v5831
    %6389 = vmatpush1.bf16.msra.mxu0 %v5830
    %6390 = vmatprep.subr.bf16.mxu0 %v5825
    %6391 = vmatpush1.bf16.msra.mxu0 %v5824
    %6392 = vmatprep.subr.bf16.mxu0 %v5819
    %6393 = vmatpush1.bf16.msra.mxu0 %v5818
    %6394 = vmatprep.subr.bf16.mxu0 %v5813
    %6395 = vmatpush1.bf16.msra.mxu0 %v5812
    %6396 = vmatprep.subr.bf16.mxu0 %v5807
    %6397 = vmatpush1.bf16.msra.mxu0 %v5806
    %6398 = vmatprep.subr.bf16.mxu0 %v5897
    %6399 = vmatpush2.bf16.msra.mxu0 %v5896
    %6400 = vmatprep.subr.bf16.mxu0 %v5891
    %6401 = vmatpush2.bf16.msra.mxu0 %v5890
    %6402 = vmatprep.subr.bf16.mxu0 %v5885
    %6403 = vmatpush2.bf16.msra.mxu0 %v5884
    %6404 = vmatprep.subr.bf16.mxu0 %v5879
    %6405 = vmatpush2.bf16.msra.mxu0 %v5878
    %6406 = vmatprep.subr.bf16.mxu0 %v5873
    %6407 = vmatpush2.bf16.msra.mxu0 %v5872
    %6408 = vmatprep.subr.bf16.mxu0 %v5867
    %6409 = vmatpush2.bf16.msra.mxu0 %v5866
    %6410 = vmatprep.subr.bf16.mxu0 %v5861
    %6411 = vmatpush2.bf16.msra.mxu0 %v5860
    %6412 = vmatprep.subr.bf16.mxu0 %v5855
    %6413 = vmatpush2.bf16.msra.mxu0 %v5854
    %6414 = vmatprep.mubr.bf16.mxu0 %v4649
    %6415 = vmatmul.mubr.bf16.gmra.mxu0 %v4648
    %v6416 = vpop.f32.mrf.mxu0
    %v6417 = vadd.f32 0.0, %v6416
    %v6418 = vpop.f32.mrf.mxu0
    %v6419 = vadd.f32 0.0, %v6418
    %v6420 = vpop.f32.mrf.mxu0
    %v6421 = vpop.f32.mrf.mxu0
    %6422 = vdwg.mxu0
    %6423 = vmatprep.subr.bf16.mxu0 %v5945
    %6424 = vmatpush1.bf16.msra.mxu0 %v5944
    %6425 = vmatprep.subr.bf16.mxu0 %v5939
    %6426 = vmatpush1.bf16.msra.mxu0 %v5938
    %6427 = vmatprep.subr.bf16.mxu0 %v5933
    %6428 = vmatpush1.bf16.msra.mxu0 %v5932
    %6429 = vmatprep.subr.bf16.mxu0 %v5927
    %6430 = vmatpush1.bf16.msra.mxu0 %v5926
    %6431 = vmatprep.subr.bf16.mxu0 %v5921
    %6432 = vmatpush1.bf16.msra.mxu0 %v5920
    %6433 = vmatprep.subr.bf16.mxu0 %v5915
    %6434 = vmatpush1.bf16.msra.mxu0 %v5914
    %6435 = vmatprep.subr.bf16.mxu0 %v5909
    %6436 = vmatpush1.bf16.msra.mxu0 %v5908
    %6437 = vmatprep.subr.bf16.mxu0 %v5903
    %6438 = vmatpush1.bf16.msra.mxu0 %v5902
    %6439 = vmatprep.subr.bf16.mxu0 %v5993
    %6440 = vmatpush2.bf16.msra.mxu0 %v5992
    %6441 = vmatprep.subr.bf16.mxu0 %v5987
    %6442 = vmatpush2.bf16.msra.mxu0 %v5986
    %6443 = vmatprep.subr.bf16.mxu0 %v5981
    %6444 = vmatpush2.bf16.msra.mxu0 %v5980
    %6445 = vmatprep.subr.bf16.mxu0 %v5975
    %6446 = vmatpush2.bf16.msra.mxu0 %v5974
    %6447 = vmatprep.subr.bf16.mxu0 %v5969
    %6448 = vmatpush2.bf16.msra.mxu0 %v5968
    %6449 = vmatprep.subr.bf16.mxu0 %v5963
    %6450 = vmatpush2.bf16.msra.mxu0 %v5962
    %6451 = vmatprep.subr.bf16.mxu0 %v5957
    %6452 = vmatpush2.bf16.msra.mxu0 %v5956
    %6453 = vmatprep.subr.bf16.mxu0 %v5951
    %6454 = vmatpush2.bf16.msra.mxu0 %v5950
    %6455 = vmatprep.mubr.bf16.mxu0 %v4651
    %6456 = vmatmul.mubr.bf16.gmra.mxu0 %v4650
    %v6457 = vpop.f32.mrf.mxu0
    %v6458 = vadd.f32 %v6417, %v6457
    %v6459 = vpop.f32.mrf.mxu0
    %v6460 = vadd.f32 %v6419, %v6459
    %v6461 = vpop.f32.mrf.mxu0
    %v6462 = vpop.f32.mrf.mxu0
    %6463 = vdwg.mxu0
    %6464 = vmatprep.subr.bf16.mxu0 %v6041
    %6465 = vmatpush1.bf16.msra.mxu0 %v6040
    %6466 = vmatprep.subr.bf16.mxu0 %v6035
    %6467 = vmatpush1.bf16.msra.mxu0 %v6034
    %6468 = vmatprep.subr.bf16.mxu0 %v6029
    %6469 = vmatpush1.bf16.msra.mxu0 %v6028
    %6470 = vmatprep.subr.bf16.mxu0 %v6023
    %6471 = vmatpush1.bf16.msra.mxu0 %v6022
    %6472 = vmatprep.subr.bf16.mxu0 %v6017
    %6473 = vmatpush1.bf16.msra.mxu0 %v6016
    %6474 = vmatprep.subr.bf16.mxu0 %v6011
    %6475 = vmatpush1.bf16.msra.mxu0 %v6010
    %6476 = vmatprep.subr.bf16.mxu0 %v6005
    %6477 = vmatpush1.bf16.msra.mxu0 %v6004
    %6478 = vmatprep.subr.bf16.mxu0 %v5999
    %6479 = vmatpush1.bf16.msra.mxu0 %v5998
    %6480 = vmatprep.subr.bf16.mxu0 %v6089
    %6481 = vmatpush2.bf16.msra.mxu0 %v6088
    %6482 = vmatprep.subr.bf16.mxu0 %v6083
    %6483 = vmatpush2.bf16.msra.mxu0 %v6082
    %6484 = vmatprep.subr.bf16.mxu0 %v6077
    %6485 = vmatpush2.bf16.msra.mxu0 %v6076
    %6486 = vmatprep.subr.bf16.mxu0 %v6071
    %6487 = vmatpush2.bf16.msra.mxu0 %v6070
    %6488 = vmatprep.subr.bf16.mxu0 %v6065
    %6489 = vmatpush2.bf16.msra.mxu0 %v6064
    %6490 = vmatprep.subr.bf16.mxu0 %v6059
    %6491 = vmatpush2.bf16.msra.mxu0 %v6058
    %6492 = vmatprep.subr.bf16.mxu0 %v6053
    %6493 = vmatpush2.bf16.msra.mxu0 %v6052
    %6494 = vmatprep.subr.bf16.mxu0 %v6047
    %6495 = vmatpush2.bf16.msra.mxu0 %v6046
    %6496 = vmatprep.mubr.bf16.mxu0 %v4653
    %6497 = vmatmul.mubr.bf16.gmra.mxu0 %v4652
    %v6498 = vpop.f32.mrf.mxu0
    %v6499 = vadd.f32 %v6458, %v6498
    %v6500 = vpop.f32.mrf.mxu0
    %v6501 = vadd.f32 %v6460, %v6500
    %v6502 = vpop.f32.mrf.mxu0
    %v6503 = vpop.f32.mrf.mxu0
    %6504 = vdwg.mxu0
    %6505 = vmatprep.subr.bf16.mxu0 %v5851
    %6506 = vmatpush1.bf16.msra.mxu0 %v5850
    %6507 = vmatprep.subr.bf16.mxu0 %v5845
    %6508 = vmatpush1.bf16.msra.mxu0 %v5844
    %6509 = vmatprep.subr.bf16.mxu0 %v5839
    %6510 = vmatpush1.bf16.msra.mxu0 %v5838
    %6511 = vmatprep.subr.bf16.mxu0 %v5833
    %6512 = vmatpush1.bf16.msra.mxu0 %v5832
    %6513 = vmatprep.subr.bf16.mxu0 %v5827
    %6514 = vmatpush1.bf16.msra.mxu0 %v5826
    %6515 = vmatprep.subr.bf16.mxu0 %v5821
    %6516 = vmatpush1.bf16.msra.mxu0 %v5820
    %6517 = vmatprep.subr.bf16.mxu0 %v5815
    %6518 = vmatpush1.bf16.msra.mxu0 %v5814
    %6519 = vmatprep.subr.bf16.mxu0 %v5809
    %6520 = vmatpush1.bf16.msra.mxu0 %v5808
    %6521 = vmatprep.subr.bf16.mxu0 %v5899
    %6522 = vmatpush2.bf16.msra.mxu0 %v5898
    %6523 = vmatprep.subr.bf16.mxu0 %v5893
    %6524 = vmatpush2.bf16.msra.mxu0 %v5892
    %6525 = vmatprep.subr.bf16.mxu0 %v5887
    %6526 = vmatpush2.bf16.msra.mxu0 %v5886
    %6527 = vmatprep.subr.bf16.mxu0 %v5881
    %6528 = vmatpush2.bf16.msra.mxu0 %v5880
    %6529 = vmatprep.subr.bf16.mxu0 %v5875
    %6530 = vmatpush2.bf16.msra.mxu0 %v5874
    %6531 = vmatprep.subr.bf16.mxu0 %v5869
    %6532 = vmatpush2.bf16.msra.mxu0 %v5868
    %6533 = vmatprep.subr.bf16.mxu0 %v5863
    %6534 = vmatpush2.bf16.msra.mxu0 %v5862
    %6535 = vmatprep.subr.bf16.mxu0 %v5857
    %6536 = vmatpush2.bf16.msra.mxu0 %v5856
    %6537 = vmatprep.mubr.bf16.mxu0 %v4649
    %6538 = vmatmul.mubr.bf16.gmra.mxu0 %v4648
    %v6539 = vpop.f32.mrf.mxu0
    %v6540 = vadd.f32 0.0, %v6539
    %v6541 = vpop.f32.mrf.mxu0
    %v6542 = vadd.f32 0.0, %v6541
    %v6543 = vpop.f32.mrf.mxu0
    %v6544 = vpop.f32.mrf.mxu0
    %6545 = vdwg.mxu0
    %6546 = vmatprep.subr.bf16.mxu0 %v5947
    %6547 = vmatpush1.bf16.msra.mxu0 %v5946
    %6548 = vmatprep.subr.bf16.mxu0 %v5941
    %6549 = vmatpush1.bf16.msra.mxu0 %v5940
    %6550 = vmatprep.subr.bf16.mxu0 %v5935
    %6551 = vmatpush1.bf16.msra.mxu0 %v5934
    %6552 = vmatprep.subr.bf16.mxu0 %v5929
    %6553 = vmatpush1.bf16.msra.mxu0 %v5928
    %6554 = vmatprep.subr.bf16.mxu0 %v5923
    %6555 = vmatpush1.bf16.msra.mxu0 %v5922
    %6556 = vmatprep.subr.bf16.mxu0 %v5917
    %6557 = vmatpush1.bf16.msra.mxu0 %v5916
    %6558 = vmatprep.subr.bf16.mxu0 %v5911
    %6559 = vmatpush1.bf16.msra.mxu0 %v5910
    %6560 = vmatprep.subr.bf16.mxu0 %v5905
    %6561 = vmatpush1.bf16.msra.mxu0 %v5904
    %6562 = vmatprep.subr.bf16.mxu0 %v5995
    %6563 = vmatpush2.bf16.msra.mxu0 %v5994
    %6564 = vmatprep.subr.bf16.mxu0 %v5989
    %6565 = vmatpush2.bf16.msra.mxu0 %v5988
    %6566 = vmatprep.subr.bf16.mxu0 %v5983
    %6567 = vmatpush2.bf16.msra.mxu0 %v5982
    %6568 = vmatprep.subr.bf16.mxu0 %v5977
    %6569 = vmatpush2.bf16.msra.mxu0 %v5976
    %6570 = vmatprep.subr.bf16.mxu0 %v5971
    %6571 = vmatpush2.bf16.msra.mxu0 %v5970
    %6572 = vmatprep.subr.bf16.mxu0 %v5965
    %6573 = vmatpush2.bf16.msra.mxu0 %v5964
    %6574 = vmatprep.subr.bf16.mxu0 %v5959
    %6575 = vmatpush2.bf16.msra.mxu0 %v5958
    %6576 = vmatprep.subr.bf16.mxu0 %v5953
    %6577 = vmatpush2.bf16.msra.mxu0 %v5952
    %6578 = vmatprep.mubr.bf16.mxu0 %v4651
    %6579 = vmatmul.mubr.bf16.gmra.mxu0 %v4650
    %v6580 = vpop.f32.mrf.mxu0
    %v6581 = vadd.f32 %v6540, %v6580
    %v6582 = vpop.f32.mrf.mxu0
    %v6583 = vadd.f32 %v6542, %v6582
    %v6584 = vpop.f32.mrf.mxu0
    %v6585 = vpop.f32.mrf.mxu0
    %6586 = vdwg.mxu0
    %6587 = vmatprep.subr.bf16.mxu0 %v6043
    %6588 = vmatpush1.bf16.msra.mxu0 %v6042
    %6589 = vmatprep.subr.bf16.mxu0 %v6037
    %6590 = vmatpush1.bf16.msra.mxu0 %v6036
    %6591 = vmatprep.subr.bf16.mxu0 %v6031
    %6592 = vmatpush1.bf16.msra.mxu0 %v6030
    %6593 = vmatprep.subr.bf16.mxu0 %v6025
    %6594 = vmatpush1.bf16.msra.mxu0 %v6024
    %6595 = vmatprep.subr.bf16.mxu0 %v6019
    %6596 = vmatpush1.bf16.msra.mxu0 %v6018
    %6597 = vmatprep.subr.bf16.mxu0 %v6013
    %6598 = vmatpush1.bf16.msra.mxu0 %v6012
    %6599 = vmatprep.subr.bf16.mxu0 %v6007
    %6600 = vmatpush1.bf16.msra.mxu0 %v6006
    %6601 = vmatprep.subr.bf16.mxu0 %v6001
    %6602 = vmatpush1.bf16.msra.mxu0 %v6000
    %6603 = vmatprep.subr.bf16.mxu0 %v6091
    %6604 = vmatpush2.bf16.msra.mxu0 %v6090
    %6605 = vmatprep.subr.bf16.mxu0 %v6085
    %6606 = vmatpush2.bf16.msra.mxu0 %v6084
    %6607 = vmatprep.subr.bf16.mxu0 %v6079
    %6608 = vmatpush2.bf16.msra.mxu0 %v6078
    %6609 = vmatprep.subr.bf16.mxu0 %v6073
    %6610 = vmatpush2.bf16.msra.mxu0 %v6072
    %6611 = vmatprep.subr.bf16.mxu0 %v6067
    %6612 = vmatpush2.bf16.msra.mxu0 %v6066
    %6613 = vmatprep.subr.bf16.mxu0 %v6061
    %6614 = vmatpush2.bf16.msra.mxu0 %v6060
    %6615 = vmatprep.subr.bf16.mxu0 %v6055
    %6616 = vmatpush2.bf16.msra.mxu0 %v6054
    %6617 = vmatprep.subr.bf16.mxu0 %v6049
    %6618 = vmatpush2.bf16.msra.mxu0 %v6048
    %6619 = vmatprep.mubr.bf16.mxu0 %v4653
    %6620 = vmatmul.mubr.bf16.gmra.mxu0 %v4652
    %v6621 = vpop.f32.mrf.mxu0
    %v6622 = vadd.f32 %v6581, %v6621
    %v6623 = vpop.f32.mrf.mxu0
    %v6624 = vadd.f32 %v6583, %v6623
    %v6625 = vpop.f32.mrf.mxu0
    %v6626 = vpop.f32.mrf.mxu0
    %6627 = vdwg.mxu0
    %6628 = vmatprep.subr.bf16.mxu0 %v5853
    %6629 = vmatpush1.bf16.msra.mxu0 %v5852
    %6630 = vmatprep.subr.bf16.mxu0 %v5847
    %6631 = vmatpush1.bf16.msra.mxu0 %v5846
    %6632 = vmatprep.subr.bf16.mxu0 %v5841
    %6633 = vmatpush1.bf16.msra.mxu0 %v5840
    %6634 = vmatprep.subr.bf16.mxu0 %v5835
    %6635 = vmatpush1.bf16.msra.mxu0 %v5834
    %6636 = vmatprep.subr.bf16.mxu0 %v5829
    %6637 = vmatpush1.bf16.msra.mxu0 %v5828
    %6638 = vmatprep.subr.bf16.mxu0 %v5823
    %6639 = vmatpush1.bf16.msra.mxu0 %v5822
    %6640 = vmatprep.subr.bf16.mxu0 %v5817
    %6641 = vmatpush1.bf16.msra.mxu0 %v5816
    %6642 = vmatprep.subr.bf16.mxu0 %v5811
    %6643 = vmatpush1.bf16.msra.mxu0 %v5810
    %6644 = vmatprep.subr.bf16.mxu0 %v5901
    %6645 = vmatpush2.bf16.msra.mxu0 %v5900
    %6646 = vmatprep.subr.bf16.mxu0 %v5895
    %6647 = vmatpush2.bf16.msra.mxu0 %v5894
    %6648 = vmatprep.subr.bf16.mxu0 %v5889
    %6649 = vmatpush2.bf16.msra.mxu0 %v5888
    %6650 = vmatprep.subr.bf16.mxu0 %v5883
    %6651 = vmatpush2.bf16.msra.mxu0 %v5882
    %6652 = vmatprep.subr.bf16.mxu0 %v5877
    %6653 = vmatpush2.bf16.msra.mxu0 %v5876
    %6654 = vmatprep.subr.bf16.mxu0 %v5871
    %6655 = vmatpush2.bf16.msra.mxu0 %v5870
    %6656 = vmatprep.subr.bf16.mxu0 %v5865
    %6657 = vmatpush2.bf16.msra.mxu0 %v5864
    %6658 = vmatprep.subr.bf16.mxu0 %v5859
    %6659 = vmatpush2.bf16.msra.mxu0 %v5858
    %6660 = vmatprep.mubr.bf16.mxu0 %v4649
    %6661 = vmatmul.mubr.bf16.gmra.mxu0 %v4648
    %v6662 = vpop.f32.mrf.mxu0
    %v6663 = vadd.f32 0.0, %v6662
    %v6664 = vpop.f32.mrf.mxu0
    %v6665 = vadd.f32 0.0, %v6664
    %v6666 = vpop.f32.mrf.mxu0
    %v6667 = vpop.f32.mrf.mxu0
    %6668 = vdwg.mxu0
    %6669 = vmatprep.subr.bf16.mxu0 %v5949
    %6670 = vmatpush1.bf16.msra.mxu0 %v5948
    %6671 = vmatprep.subr.bf16.mxu0 %v5943
    %6672 = vmatpush1.bf16.msra.mxu0 %v5942
    %6673 = vmatprep.subr.bf16.mxu0 %v5937
    %6674 = vmatpush1.bf16.msra.mxu0 %v5936
    %6675 = vmatprep.subr.bf16.mxu0 %v5931
    %6676 = vmatpush1.bf16.msra.mxu0 %v5930
    %6677 = vmatprep.subr.bf16.mxu0 %v5925
    %6678 = vmatpush1.bf16.msra.mxu0 %v5924
    %6679 = vmatprep.subr.bf16.mxu0 %v5919
    %6680 = vmatpush1.bf16.msra.mxu0 %v5918
    %6681 = vmatprep.subr.bf16.mxu0 %v5913
    %6682 = vmatpush1.bf16.msra.mxu0 %v5912
    %6683 = vmatprep.subr.bf16.mxu0 %v5907
    %6684 = vmatpush1.bf16.msra.mxu0 %v5906
    %6685 = vmatprep.subr.bf16.mxu0 %v5997
    %6686 = vmatpush2.bf16.msra.mxu0 %v5996
    %6687 = vmatprep.subr.bf16.mxu0 %v5991
    %6688 = vmatpush2.bf16.msra.mxu0 %v5990
    %6689 = vmatprep.subr.bf16.mxu0 %v5985
    %6690 = vmatpush2.bf16.msra.mxu0 %v5984
    %6691 = vmatprep.subr.bf16.mxu0 %v5979
    %6692 = vmatpush2.bf16.msra.mxu0 %v5978
    %6693 = vmatprep.subr.bf16.mxu0 %v5973
    %6694 = vmatpush2.bf16.msra.mxu0 %v5972
    %6695 = vmatprep.subr.bf16.mxu0 %v5967
    %6696 = vmatpush2.bf16.msra.mxu0 %v5966
    %6697 = vmatprep.subr.bf16.mxu0 %v5961
    %6698 = vmatpush2.bf16.msra.mxu0 %v5960
    %6699 = vmatprep.subr.bf16.mxu0 %v5955
    %6700 = vmatpush2.bf16.msra.mxu0 %v5954
    %6701 = vmatprep.mubr.bf16.mxu0 %v4651
    %6702 = vmatmul.mubr.bf16.gmra.mxu0 %v4650
    %v6703 = vpop.f32.mrf.mxu0
    %v6704 = vadd.f32 %v6663, %v6703
    %v6705 = vpop.f32.mrf.mxu0
    %v6706 = vadd.f32 %v6665, %v6705
    %v6707 = vpop.f32.mrf.mxu0
    %v6708 = vpop.f32.mrf.mxu0
    %6709 = vdwg.mxu0
    %6710 = vmatprep.subr.bf16.mxu0 %v6045
    %6711 = vmatpush1.bf16.msra.mxu0 %v6044
    %6712 = vmatprep.subr.bf16.mxu0 %v6039
    %6713 = vmatpush1.bf16.msra.mxu0 %v6038
    %6714 = vmatprep.subr.bf16.mxu0 %v6033
    %6715 = vmatpush1.bf16.msra.mxu0 %v6032
    %6716 = vmatprep.subr.bf16.mxu0 %v6027
    %6717 = vmatpush1.bf16.msra.mxu0 %v6026
    %6718 = vmatprep.subr.bf16.mxu0 %v6021
    %6719 = vmatpush1.bf16.msra.mxu0 %v6020
    %6720 = vmatprep.subr.bf16.mxu0 %v6015
    %6721 = vmatpush1.bf16.msra.mxu0 %v6014
    %6722 = vmatprep.subr.bf16.mxu0 %v6009
    %6723 = vmatpush1.bf16.msra.mxu0 %v6008
    %6724 = vmatprep.subr.bf16.mxu0 %v6003
    %6725 = vmatpush1.bf16.msra.mxu0 %v6002
    %6726 = vmatprep.subr.bf16.mxu0 %v6093
    %6727 = vmatpush2.bf16.msra.mxu0 %v6092
    %6728 = vmatprep.subr.bf16.mxu0 %v6087
    %6729 = vmatpush2.bf16.msra.mxu0 %v6086
    %6730 = vmatprep.subr.bf16.mxu0 %v6081
    %6731 = vmatpush2.bf16.msra.mxu0 %v6080
    %6732 = vmatprep.subr.bf16.mxu0 %v6075
    %6733 = vmatpush2.bf16.msra.mxu0 %v6074
    %6734 = vmatprep.subr.bf16.mxu0 %v6069
    %6735 = vmatpush2.bf16.msra.mxu0 %v6068
    %6736 = vmatprep.subr.bf16.mxu0 %v6063
    %6737 = vmatpush2.bf16.msra.mxu0 %v6062
    %6738 = vmatprep.subr.bf16.mxu0 %v6057
    %6739 = vmatpush2.bf16.msra.mxu0 %v6056
    %6740 = vmatprep.subr.bf16.mxu0 %v6051
    %6741 = vmatpush2.bf16.msra.mxu0 %v6050
    %6742 = vmatprep.mubr.bf16.mxu0 %v4653
    %6743 = vmatmul.mubr.bf16.gmra.mxu0 %v4652
    %v6744 = vpop.f32.mrf.mxu0
    %v6745 = vadd.f32 %v6704, %v6744
    %v6746 = vpop.f32.mrf.mxu0
    %v6747 = vadd.f32 %v6706, %v6746
    %v6748 = vpop.f32.mrf.mxu0
    %v6749 = vpop.f32.mrf.mxu0
    %6750 = vdwg.mxu0
    %v6757 = vrot.slane %v6499, 7
    %v6758 = vrot.slane %v6501, 7
    %v6759 = vrot.slane %v6622, 7
    %v6760 = vrot.slane %v6624, 7
    %v6761 = vrot.slane %v6745, 7
    %v6762 = vrot.slane %v6747, 7
    %v6775 = vadd.f32 %v1969, %v6757
    %v6776 = vadd.f32 %v1971, %v6758
    %v6777 = vadd.f32 %v2098, %v6759
    %v6778 = vadd.f32 %v2100, %v6760
    %v6779 = vadd.f32 %v2227, %v6761
    %v6780 = vadd.f32 %v2229, %v6762
    %v6781 = vadd.f32 %v1973, %v6499
    %v6782 = vadd.f32 %v1975, %v6501
    %v6783 = vadd.f32 %v2102, %v6622
    %v6784 = vadd.f32 %v2104, %v6624
    %v6785 = vadd.f32 %v2231, %v6745
    %v6786 = vadd.f32 %v2233, %v6747
    %v6787 = vmax.f32 %v6775, 0.0
    %v6788 = vmax.f32 %v6776, 0.0
    %v6789 = vmax.f32 %v6777, 0.0
    %v6790 = vmax.f32 %v6778, 0.0
    %v6791 = vmax.f32 %v6779, 0.0
    %v6792 = vmax.f32 %v6780, 0.0
    %v6793 = vmax.f32 %v6781, 0.0
    %v6794 = vmax.f32 %v6782, 0.0
    %v6795 = vmax.f32 %v6783, 0.0
    %v6796 = vmax.f32 %v6784, 0.0
    %v6797 = vmax.f32 %v6785, 0.0
    %v6798 = vmax.f32 %v6786, 0.0
    %v6799 = vpack.c.bf16 %v6787, %v6787
    %v6800 = vpack.c.bf16 %v6788, %v6788
    %v6801 = vpack.c.bf16 %v6789, %v6789
    %v6802 = vpack.c.bf16 %v6790, %v6790
    %v6803 = vpack.c.bf16 %v6791, %v6791
    %v6804 = vpack.c.bf16 %v6792, %v6792
    %v6805 = vpack.c.bf16 %v6793, %v6793
    %v6806 = vpack.c.bf16 %v6794, %v6794
    %v6807 = vpack.c.bf16 %v6795, %v6795
    %v6808 = vpack.c.bf16 %v6796, %v6796
    %v6809 = vpack.c.bf16 %v6797, %v6797
    %v6810 = vpack.c.bf16 %v6798, %v6798
    %v6823 = vunpack.c.l.b16 %v6799
    %v6824 = vunpack.c.l.b16 %v6800
    %v6825 = vunpack.c.l.b16 %v6801
    %v6826 = vunpack.c.l.b16 %v6802
    %v6827 = vunpack.c.l.b16 %v6803
    %v6828 = vunpack.c.l.b16 %v6804
    %v6829 = vunpack.c.l.b16 %v6805
    %v6830 = vunpack.c.l.b16 %v6806
    %v6831 = vunpack.c.l.b16 %v6807
    %v6832 = vunpack.c.l.b16 %v6808
    %v6833 = vunpack.c.l.b16 %v6809
    %v6834 = vunpack.c.l.b16 %v6810
    %v6835 = vrot.slane %v6823, 1
    %vm6836 = vcmask 1041409
    %v6837 = vsel %vm6836, %v6829, %v6835
    %v6838 = vrot.slane %v6824, 1
    %v6839 = vsel %vm6836, %v6830, %v6838
    %v6840 = vrot.slane %v6825, 1
    %v6841 = vsel %vm6836, %v6831, %v6840
    %v6842 = vrot.slane %v6826, 1
    %v6843 = vsel %vm6836, %v6832, %v6842
    %v6844 = vrot.slane %v6827, 1
    %v6845 = vsel %vm6836, %v6833, %v6844
    %v6846 = vrot.slane %v6828, 1
    %v6847 = vsel %vm6836, %v6834, %v6846
    %v6848 = vpack.c.b16 %v6837, %v6837
    %v6849 = vpack.c.b16 %v6839, %v6839
    %v6850 = vpack.c.b16 %v6841, %v6841
    %v6851 = vpack.c.b16 %v6843, %v6843
    %v6852 = vpack.c.b16 %v6845, %v6845
    %v6853 = vpack.c.b16 %v6847, %v6847
    %6860 = vmatprep.subr.bf16.mxu0 %v5849
    %6861 = vmatpush1.bf16.msra.mxu0 %v5848
    %6862 = vmatprep.subr.bf16.mxu0 %v5843
    %6863 = vmatpush1.bf16.msra.mxu0 %v5842
    %6864 = vmatprep.subr.bf16.mxu0 %v5837
    %6865 = vmatpush1.bf16.msra.mxu0 %v5836
    %6866 = vmatprep.subr.bf16.mxu0 %v5831
    %6867 = vmatpush1.bf16.msra.mxu0 %v5830
    %6868 = vmatprep.subr.bf16.mxu0 %v5825
    %6869 = vmatpush1.bf16.msra.mxu0 %v5824
    %6870 = vmatprep.subr.bf16.mxu0 %v5819
    %6871 = vmatpush1.bf16.msra.mxu0 %v5818
    %6872 = vmatprep.subr.bf16.mxu0 %v5813
    %6873 = vmatpush1.bf16.msra.mxu0 %v5812
    %6874 = vmatprep.subr.bf16.mxu0 %v5807
    %6875 = vmatpush1.bf16.msra.mxu0 %v5806
    %6876 = vmatprep.subr.bf16.mxu0 %v5897
    %6877 = vmatpush2.bf16.msra.mxu0 %v5896
    %6878 = vmatprep.subr.bf16.mxu0 %v5891
    %6879 = vmatpush2.bf16.msra.mxu0 %v5890
    %6880 = vmatprep.subr.bf16.mxu0 %v5885
    %6881 = vmatpush2.bf16.msra.mxu0 %v5884
    %6882 = vmatprep.subr.bf16.mxu0 %v5879
    %6883 = vmatpush2.bf16.msra.mxu0 %v5878
    %6884 = vmatprep.subr.bf16.mxu0 %v5873
    %6885 = vmatpush2.bf16.msra.mxu0 %v5872
    %6886 = vmatprep.subr.bf16.mxu0 %v5867
    %6887 = vmatpush2.bf16.msra.mxu0 %v5866
    %6888 = vmatprep.subr.bf16.mxu0 %v5861
    %6889 = vmatpush2.bf16.msra.mxu0 %v5860
    %6890 = vmatprep.subr.bf16.mxu0 %v5855
    %6891 = vmatpush2.bf16.msra.mxu0 %v5854
    %6892 = vmatprep.mubr.bf16.mxu0 %v6849
    %6893 = vmatmul.mubr.bf16.gmra.mxu0 %v6848
    %v6894 = vpop.f32.mrf.mxu0
    %v6895 = vadd.f32 0.0, %v6894
    %v6896 = vpop.f32.mrf.mxu0
    %v6897 = vadd.f32 0.0, %v6896
    %v6898 = vpop.f32.mrf.mxu0
    %v6899 = vpop.f32.mrf.mxu0
    %6900 = vdwg.mxu0
    %6901 = vmatprep.subr.bf16.mxu0 %v5945
    %6902 = vmatpush1.bf16.msra.mxu0 %v5944
    %6903 = vmatprep.subr.bf16.mxu0 %v5939
    %6904 = vmatpush1.bf16.msra.mxu0 %v5938
    %6905 = vmatprep.subr.bf16.mxu0 %v5933
    %6906 = vmatpush1.bf16.msra.mxu0 %v5932
    %6907 = vmatprep.subr.bf16.mxu0 %v5927
    %6908 = vmatpush1.bf16.msra.mxu0 %v5926
    %6909 = vmatprep.subr.bf16.mxu0 %v5921
    %6910 = vmatpush1.bf16.msra.mxu0 %v5920
    %6911 = vmatprep.subr.bf16.mxu0 %v5915
    %6912 = vmatpush1.bf16.msra.mxu0 %v5914
    %6913 = vmatprep.subr.bf16.mxu0 %v5909
    %6914 = vmatpush1.bf16.msra.mxu0 %v5908
    %6915 = vmatprep.subr.bf16.mxu0 %v5903
    %6916 = vmatpush1.bf16.msra.mxu0 %v5902
    %6917 = vmatprep.subr.bf16.mxu0 %v5993
    %6918 = vmatpush2.bf16.msra.mxu0 %v5992
    %6919 = vmatprep.subr.bf16.mxu0 %v5987
    %6920 = vmatpush2.bf16.msra.mxu0 %v5986
    %6921 = vmatprep.subr.bf16.mxu0 %v5981
    %6922 = vmatpush2.bf16.msra.mxu0 %v5980
    %6923 = vmatprep.subr.bf16.mxu0 %v5975
    %6924 = vmatpush2.bf16.msra.mxu0 %v5974
    %6925 = vmatprep.subr.bf16.mxu0 %v5969
    %6926 = vmatpush2.bf16.msra.mxu0 %v5968
    %6927 = vmatprep.subr.bf16.mxu0 %v5963
    %6928 = vmatpush2.bf16.msra.mxu0 %v5962
    %6929 = vmatprep.subr.bf16.mxu0 %v5957
    %6930 = vmatpush2.bf16.msra.mxu0 %v5956
    %6931 = vmatprep.subr.bf16.mxu0 %v5951
    %6932 = vmatpush2.bf16.msra.mxu0 %v5950
    %6933 = vmatprep.mubr.bf16.mxu0 %v6851
    %6934 = vmatmul.mubr.bf16.gmra.mxu0 %v6850
    %v6935 = vpop.f32.mrf.mxu0
    %v6936 = vadd.f32 %v6895, %v6935
    %v6937 = vpop.f32.mrf.mxu0
    %v6938 = vadd.f32 %v6897, %v6937
    %v6939 = vpop.f32.mrf.mxu0
    %v6940 = vpop.f32.mrf.mxu0
    %6941 = vdwg.mxu0
    %6942 = vmatprep.subr.bf16.mxu0 %v6041
    %6943 = vmatpush1.bf16.msra.mxu0 %v6040
    %6944 = vmatprep.subr.bf16.mxu0 %v6035
    %6945 = vmatpush1.bf16.msra.mxu0 %v6034
    %6946 = vmatprep.subr.bf16.mxu0 %v6029
    %6947 = vmatpush1.bf16.msra.mxu0 %v6028
    %6948 = vmatprep.subr.bf16.mxu0 %v6023
    %6949 = vmatpush1.bf16.msra.mxu0 %v6022
    %6950 = vmatprep.subr.bf16.mxu0 %v6017
    %6951 = vmatpush1.bf16.msra.mxu0 %v6016
    %6952 = vmatprep.subr.bf16.mxu0 %v6011
    %6953 = vmatpush1.bf16.msra.mxu0 %v6010
    %6954 = vmatprep.subr.bf16.mxu0 %v6005
    %6955 = vmatpush1.bf16.msra.mxu0 %v6004
    %6956 = vmatprep.subr.bf16.mxu0 %v5999
    %6957 = vmatpush1.bf16.msra.mxu0 %v5998
    %6958 = vmatprep.subr.bf16.mxu0 %v6089
    %6959 = vmatpush2.bf16.msra.mxu0 %v6088
    %6960 = vmatprep.subr.bf16.mxu0 %v6083
    %6961 = vmatpush2.bf16.msra.mxu0 %v6082
    %6962 = vmatprep.subr.bf16.mxu0 %v6077
    %6963 = vmatpush2.bf16.msra.mxu0 %v6076
    %6964 = vmatprep.subr.bf16.mxu0 %v6071
    %6965 = vmatpush2.bf16.msra.mxu0 %v6070
    %6966 = vmatprep.subr.bf16.mxu0 %v6065
    %6967 = vmatpush2.bf16.msra.mxu0 %v6064
    %6968 = vmatprep.subr.bf16.mxu0 %v6059
    %6969 = vmatpush2.bf16.msra.mxu0 %v6058
    %6970 = vmatprep.subr.bf16.mxu0 %v6053
    %6971 = vmatpush2.bf16.msra.mxu0 %v6052
    %6972 = vmatprep.subr.bf16.mxu0 %v6047
    %6973 = vmatpush2.bf16.msra.mxu0 %v6046
    %6974 = vmatprep.mubr.bf16.mxu0 %v6853
    %6975 = vmatmul.mubr.bf16.gmra.mxu0 %v6852
    %v6976 = vpop.f32.mrf.mxu0
    %v6977 = vadd.f32 %v6936, %v6976
    %v6978 = vpop.f32.mrf.mxu0
    %v6979 = vadd.f32 %v6938, %v6978
    %v6980 = vpop.f32.mrf.mxu0
    %v6981 = vpop.f32.mrf.mxu0
    %6982 = vdwg.mxu0
    %6983 = vmatprep.subr.bf16.mxu0 %v5851
    %6984 = vmatpush1.bf16.msra.mxu0 %v5850
    %6985 = vmatprep.subr.bf16.mxu0 %v5845
    %6986 = vmatpush1.bf16.msra.mxu0 %v5844
    %6987 = vmatprep.subr.bf16.mxu0 %v5839
    %6988 = vmatpush1.bf16.msra.mxu0 %v5838
    %6989 = vmatprep.subr.bf16.mxu0 %v5833
    %6990 = vmatpush1.bf16.msra.mxu0 %v5832
    %6991 = vmatprep.subr.bf16.mxu0 %v5827
    %6992 = vmatpush1.bf16.msra.mxu0 %v5826
    %6993 = vmatprep.subr.bf16.mxu0 %v5821
    %6994 = vmatpush1.bf16.msra.mxu0 %v5820
    %6995 = vmatprep.subr.bf16.mxu0 %v5815
    %6996 = vmatpush1.bf16.msra.mxu0 %v5814
    %6997 = vmatprep.subr.bf16.mxu0 %v5809
    %6998 = vmatpush1.bf16.msra.mxu0 %v5808
    %6999 = vmatprep.subr.bf16.mxu0 %v5899
    %7000 = vmatpush2.bf16.msra.mxu0 %v5898
    %7001 = vmatprep.subr.bf16.mxu0 %v5893
    %7002 = vmatpush2.bf16.msra.mxu0 %v5892
    %7003 = vmatprep.subr.bf16.mxu0 %v5887
    %7004 = vmatpush2.bf16.msra.mxu0 %v5886
    %7005 = vmatprep.subr.bf16.mxu0 %v5881
    %7006 = vmatpush2.bf16.msra.mxu0 %v5880
    %7007 = vmatprep.subr.bf16.mxu0 %v5875
    %7008 = vmatpush2.bf16.msra.mxu0 %v5874
    %7009 = vmatprep.subr.bf16.mxu0 %v5869
    %7010 = vmatpush2.bf16.msra.mxu0 %v5868
    %7011 = vmatprep.subr.bf16.mxu0 %v5863
    %7012 = vmatpush2.bf16.msra.mxu0 %v5862
    %7013 = vmatprep.subr.bf16.mxu0 %v5857
    %7014 = vmatpush2.bf16.msra.mxu0 %v5856
    %7015 = vmatprep.mubr.bf16.mxu0 %v6849
    %7016 = vmatmul.mubr.bf16.gmra.mxu0 %v6848
    %v7017 = vpop.f32.mrf.mxu0
    %v7018 = vadd.f32 0.0, %v7017
    %v7019 = vpop.f32.mrf.mxu0
    %v7020 = vadd.f32 0.0, %v7019
    %v7021 = vpop.f32.mrf.mxu0
    %v7022 = vpop.f32.mrf.mxu0
    %7023 = vdwg.mxu0
    %7024 = vmatprep.subr.bf16.mxu0 %v5947
    %7025 = vmatpush1.bf16.msra.mxu0 %v5946
    %7026 = vmatprep.subr.bf16.mxu0 %v5941
    %7027 = vmatpush1.bf16.msra.mxu0 %v5940
    %7028 = vmatprep.subr.bf16.mxu0 %v5935
    %7029 = vmatpush1.bf16.msra.mxu0 %v5934
    %7030 = vmatprep.subr.bf16.mxu0 %v5929
    %7031 = vmatpush1.bf16.msra.mxu0 %v5928
    %7032 = vmatprep.subr.bf16.mxu0 %v5923
    %7033 = vmatpush1.bf16.msra.mxu0 %v5922
    %7034 = vmatprep.subr.bf16.mxu0 %v5917
    %7035 = vmatpush1.bf16.msra.mxu0 %v5916
    %7036 = vmatprep.subr.bf16.mxu0 %v5911
    %7037 = vmatpush1.bf16.msra.mxu0 %v5910
    %7038 = vmatprep.subr.bf16.mxu0 %v5905
    %7039 = vmatpush1.bf16.msra.mxu0 %v5904
    %7040 = vmatprep.subr.bf16.mxu0 %v5995
    %7041 = vmatpush2.bf16.msra.mxu0 %v5994
    %7042 = vmatprep.subr.bf16.mxu0 %v5989
    %7043 = vmatpush2.bf16.msra.mxu0 %v5988
    %7044 = vmatprep.subr.bf16.mxu0 %v5983
    %7045 = vmatpush2.bf16.msra.mxu0 %v5982
    %7046 = vmatprep.subr.bf16.mxu0 %v5977
    %7047 = vmatpush2.bf16.msra.mxu0 %v5976
    %7048 = vmatprep.subr.bf16.mxu0 %v5971
    %7049 = vmatpush2.bf16.msra.mxu0 %v5970
    %7050 = vmatprep.subr.bf16.mxu0 %v5965
    %7051 = vmatpush2.bf16.msra.mxu0 %v5964
    %7052 = vmatprep.subr.bf16.mxu0 %v5959
    %7053 = vmatpush2.bf16.msra.mxu0 %v5958
    %7054 = vmatprep.subr.bf16.mxu0 %v5953
    %7055 = vmatpush2.bf16.msra.mxu0 %v5952
    %7056 = vmatprep.mubr.bf16.mxu0 %v6851
    %7057 = vmatmul.mubr.bf16.gmra.mxu0 %v6850
    %v7058 = vpop.f32.mrf.mxu0
    %v7059 = vadd.f32 %v7018, %v7058
    %v7060 = vpop.f32.mrf.mxu0
    %v7061 = vadd.f32 %v7020, %v7060
    %v7062 = vpop.f32.mrf.mxu0
    %v7063 = vpop.f32.mrf.mxu0
    %7064 = vdwg.mxu0
    %7065 = vmatprep.subr.bf16.mxu0 %v6043
    %7066 = vmatpush1.bf16.msra.mxu0 %v6042
    %7067 = vmatprep.subr.bf16.mxu0 %v6037
    %7068 = vmatpush1.bf16.msra.mxu0 %v6036
    %7069 = vmatprep.subr.bf16.mxu0 %v6031
    %7070 = vmatpush1.bf16.msra.mxu0 %v6030
    %7071 = vmatprep.subr.bf16.mxu0 %v6025
    %7072 = vmatpush1.bf16.msra.mxu0 %v6024
    %7073 = vmatprep.subr.bf16.mxu0 %v6019
    %7074 = vmatpush1.bf16.msra.mxu0 %v6018
    %7075 = vmatprep.subr.bf16.mxu0 %v6013
    %7076 = vmatpush1.bf16.msra.mxu0 %v6012
    %7077 = vmatprep.subr.bf16.mxu0 %v6007
    %7078 = vmatpush1.bf16.msra.mxu0 %v6006
    %7079 = vmatprep.subr.bf16.mxu0 %v6001
    %7080 = vmatpush1.bf16.msra.mxu0 %v6000
    %7081 = vmatprep.subr.bf16.mxu0 %v6091
    %7082 = vmatpush2.bf16.msra.mxu0 %v6090
    %7083 = vmatprep.subr.bf16.mxu0 %v6085
    %7084 = vmatpush2.bf16.msra.mxu0 %v6084
    %7085 = vmatprep.subr.bf16.mxu0 %v6079
    %7086 = vmatpush2.bf16.msra.mxu0 %v6078
    %7087 = vmatprep.subr.bf16.mxu0 %v6073
    %7088 = vmatpush2.bf16.msra.mxu0 %v6072
    %7089 = vmatprep.subr.bf16.mxu0 %v6067
    %7090 = vmatpush2.bf16.msra.mxu0 %v6066
    %7091 = vmatprep.subr.bf16.mxu0 %v6061
    %7092 = vmatpush2.bf16.msra.mxu0 %v6060
    %7093 = vmatprep.subr.bf16.mxu0 %v6055
    %7094 = vmatpush2.bf16.msra.mxu0 %v6054
    %7095 = vmatprep.subr.bf16.mxu0 %v6049
    %7096 = vmatpush2.bf16.msra.mxu0 %v6048
    %7097 = vmatprep.mubr.bf16.mxu0 %v6853
    %7098 = vmatmul.mubr.bf16.gmra.mxu0 %v6852
    %v7099 = vpop.f32.mrf.mxu0
    %v7100 = vadd.f32 %v7059, %v7099
    %v7101 = vpop.f32.mrf.mxu0
    %v7102 = vadd.f32 %v7061, %v7101
    %v7103 = vpop.f32.mrf.mxu0
    %v7104 = vpop.f32.mrf.mxu0
    %7105 = vdwg.mxu0
    %7106 = vmatprep.subr.bf16.mxu0 %v5853
    %7107 = vmatpush1.bf16.msra.mxu0 %v5852
    %7108 = vmatprep.subr.bf16.mxu0 %v5847
    %7109 = vmatpush1.bf16.msra.mxu0 %v5846
    %7110 = vmatprep.subr.bf16.mxu0 %v5841
    %7111 = vmatpush1.bf16.msra.mxu0 %v5840
    %7112 = vmatprep.subr.bf16.mxu0 %v5835
    %7113 = vmatpush1.bf16.msra.mxu0 %v5834
    %7114 = vmatprep.subr.bf16.mxu0 %v5829
    %7115 = vmatpush1.bf16.msra.mxu0 %v5828
    %7116 = vmatprep.subr.bf16.mxu0 %v5823
    %7117 = vmatpush1.bf16.msra.mxu0 %v5822
    %7118 = vmatprep.subr.bf16.mxu0 %v5817
    %7119 = vmatpush1.bf16.msra.mxu0 %v5816
    %7120 = vmatprep.subr.bf16.mxu0 %v5811
    %7121 = vmatpush1.bf16.msra.mxu0 %v5810
    %7122 = vmatprep.subr.bf16.mxu0 %v5901
    %7123 = vmatpush2.bf16.msra.mxu0 %v5900
    %7124 = vmatprep.subr.bf16.mxu0 %v5895
    %7125 = vmatpush2.bf16.msra.mxu0 %v5894
    %7126 = vmatprep.subr.bf16.mxu0 %v5889
    %7127 = vmatpush2.bf16.msra.mxu0 %v5888
    %7128 = vmatprep.subr.bf16.mxu0 %v5883
    %7129 = vmatpush2.bf16.msra.mxu0 %v5882
    %7130 = vmatprep.subr.bf16.mxu0 %v5877
    %7131 = vmatpush2.bf16.msra.mxu0 %v5876
    %7132 = vmatprep.subr.bf16.mxu0 %v5871
    %7133 = vmatpush2.bf16.msra.mxu0 %v5870
    %7134 = vmatprep.subr.bf16.mxu0 %v5865
    %7135 = vmatpush2.bf16.msra.mxu0 %v5864
    %7136 = vmatprep.subr.bf16.mxu0 %v5859
    %7137 = vmatpush2.bf16.msra.mxu0 %v5858
    %7138 = vmatprep.mubr.bf16.mxu0 %v6849
    %7139 = vmatmul.mubr.bf16.gmra.mxu0 %v6848
    %v7140 = vpop.f32.mrf.mxu0
    %v7141 = vadd.f32 0.0, %v7140
    %v7142 = vpop.f32.mrf.mxu0
    %v7143 = vadd.f32 0.0, %v7142
    %v7144 = vpop.f32.mrf.mxu0
    %v7145 = vpop.f32.mrf.mxu0
    %7146 = vdwg.mxu0
    %7147 = vmatprep.subr.bf16.mxu0 %v5949
    %7148 = vmatpush1.bf16.msra.mxu0 %v5948
    %7149 = vmatprep.subr.bf16.mxu0 %v5943
    %7150 = vmatpush1.bf16.msra.mxu0 %v5942
    %7151 = vmatprep.subr.bf16.mxu0 %v5937
    %7152 = vmatpush1.bf16.msra.mxu0 %v5936
    %7153 = vmatprep.subr.bf16.mxu0 %v5931
    %7154 = vmatpush1.bf16.msra.mxu0 %v5930
    %7155 = vmatprep.subr.bf16.mxu0 %v5925
    %7156 = vmatpush1.bf16.msra.mxu0 %v5924
    %7157 = vmatprep.subr.bf16.mxu0 %v5919
    %7158 = vmatpush1.bf16.msra.mxu0 %v5918
    %7159 = vmatprep.subr.bf16.mxu0 %v5913
    %7160 = vmatpush1.bf16.msra.mxu0 %v5912
    %7161 = vmatprep.subr.bf16.mxu0 %v5907
    %7162 = vmatpush1.bf16.msra.mxu0 %v5906
    %7163 = vmatprep.subr.bf16.mxu0 %v5997
    %7164 = vmatpush2.bf16.msra.mxu0 %v5996
    %7165 = vmatprep.subr.bf16.mxu0 %v5991
    %7166 = vmatpush2.bf16.msra.mxu0 %v5990
    %7167 = vmatprep.subr.bf16.mxu0 %v5985
    %7168 = vmatpush2.bf16.msra.mxu0 %v5984
    %7169 = vmatprep.subr.bf16.mxu0 %v5979
    %7170 = vmatpush2.bf16.msra.mxu0 %v5978
    %7171 = vmatprep.subr.bf16.mxu0 %v5973
    %7172 = vmatpush2.bf16.msra.mxu0 %v5972
    %7173 = vmatprep.subr.bf16.mxu0 %v5967
    %7174 = vmatpush2.bf16.msra.mxu0 %v5966
    %7175 = vmatprep.subr.bf16.mxu0 %v5961
    %7176 = vmatpush2.bf16.msra.mxu0 %v5960
    %7177 = vmatprep.subr.bf16.mxu0 %v5955
    %7178 = vmatpush2.bf16.msra.mxu0 %v5954
    %7179 = vmatprep.mubr.bf16.mxu0 %v6851
    %7180 = vmatmul.mubr.bf16.gmra.mxu0 %v6850
    %v7181 = vpop.f32.mrf.mxu0
    %v7182 = vadd.f32 %v7141, %v7181
    %v7183 = vpop.f32.mrf.mxu0
    %v7184 = vadd.f32 %v7143, %v7183
    %v7185 = vpop.f32.mrf.mxu0
    %v7186 = vpop.f32.mrf.mxu0
    %7187 = vdwg.mxu0
    %7188 = vmatprep.subr.bf16.mxu0 %v6045
    %7189 = vmatpush1.bf16.msra.mxu0 %v6044
    %7190 = vmatprep.subr.bf16.mxu0 %v6039
    %7191 = vmatpush1.bf16.msra.mxu0 %v6038
    %7192 = vmatprep.subr.bf16.mxu0 %v6033
    %7193 = vmatpush1.bf16.msra.mxu0 %v6032
    %7194 = vmatprep.subr.bf16.mxu0 %v6027
    %7195 = vmatpush1.bf16.msra.mxu0 %v6026
    %7196 = vmatprep.subr.bf16.mxu0 %v6021
    %7197 = vmatpush1.bf16.msra.mxu0 %v6020
    %7198 = vmatprep.subr.bf16.mxu0 %v6015
    %7199 = vmatpush1.bf16.msra.mxu0 %v6014
    %7200 = vmatprep.subr.bf16.mxu0 %v6009
    %7201 = vmatpush1.bf16.msra.mxu0 %v6008
    %7202 = vmatprep.subr.bf16.mxu0 %v6003
    %7203 = vmatpush1.bf16.msra.mxu0 %v6002
    %7204 = vmatprep.subr.bf16.mxu0 %v6093
    %7205 = vmatpush2.bf16.msra.mxu0 %v6092
    %7206 = vmatprep.subr.bf16.mxu0 %v6087
    %7207 = vmatpush2.bf16.msra.mxu0 %v6086
    %7208 = vmatprep.subr.bf16.mxu0 %v6081
    %7209 = vmatpush2.bf16.msra.mxu0 %v6080
    %7210 = vmatprep.subr.bf16.mxu0 %v6075
    %7211 = vmatpush2.bf16.msra.mxu0 %v6074
    %7212 = vmatprep.subr.bf16.mxu0 %v6069
    %7213 = vmatpush2.bf16.msra.mxu0 %v6068
    %7214 = vmatprep.subr.bf16.mxu0 %v6063
    %7215 = vmatpush2.bf16.msra.mxu0 %v6062
    %7216 = vmatprep.subr.bf16.mxu0 %v6057
    %7217 = vmatpush2.bf16.msra.mxu0 %v6056
    %7218 = vmatprep.subr.bf16.mxu0 %v6051
    %7219 = vmatpush2.bf16.msra.mxu0 %v6050
    %7220 = vmatprep.mubr.bf16.mxu0 %v6853
    %7221 = vmatmul.mubr.bf16.gmra.mxu0 %v6852
    %v7222 = vpop.f32.mrf.mxu0
    %v7223 = vadd.f32 %v7182, %v7222
    %v7224 = vpop.f32.mrf.mxu0
    %v7225 = vadd.f32 %v7184, %v7224
    %v7226 = vpop.f32.mrf.mxu0
    %v7227 = vpop.f32.mrf.mxu0
    %7228 = vdwg.mxu0
    %v7235 = vrot.slane %v6977, 6
    %v7236 = vrot.slane %v6979, 6
    %v7237 = vrot.slane %v7100, 6
    %v7238 = vrot.slane %v7102, 6
    %v7239 = vrot.slane %v7223, 6
    %v7240 = vrot.slane %v7225, 6
    %v7241 = vrot.slane %v6977, 7
    %v7242 = vrot.slane %v6979, 7
    %v7243 = vrot.slane %v7100, 7
    %v7244 = vrot.slane %v7102, 7
    %v7245 = vrot.slane %v7223, 7
    %v7246 = vrot.slane %v7225, 7
    %v7259 = vadd.f32 %v1969, %v7235
    %v7260 = vadd.f32 %v1971, %v7236
    %v7261 = vadd.f32 %v2098, %v7237
    %v7262 = vadd.f32 %v2100, %v7238
    %v7263 = vadd.f32 %v2227, %v7239
    %v7264 = vadd.f32 %v2229, %v7240
    %v7265 = vadd.f32 %v1973, %v7241
    %v7266 = vadd.f32 %v1975, %v7242
    %v7267 = vadd.f32 %v2102, %v7243
    %v7268 = vadd.f32 %v2104, %v7244
    %v7269 = vadd.f32 %v2231, %v7245
    %v7270 = vadd.f32 %v2233, %v7246
    %v7271 = vmax.f32 %v7259, 0.0
    %v7272 = vmax.f32 %v7260, 0.0
    %v7273 = vmax.f32 %v7261, 0.0
    %v7274 = vmax.f32 %v7262, 0.0
    %v7275 = vmax.f32 %v7263, 0.0
    %v7276 = vmax.f32 %v7264, 0.0
    %v7277 = vmax.f32 %v7265, 0.0
    %v7278 = vmax.f32 %v7266, 0.0
    %v7279 = vmax.f32 %v7267, 0.0
    %v7280 = vmax.f32 %v7268, 0.0
    %v7281 = vmax.f32 %v7269, 0.0
    %v7282 = vmax.f32 %v7270, 0.0
    %v7283 = vpack.c.bf16 %v7271, %v7271
    %v7284 = vpack.c.bf16 %v7272, %v7272
    %v7285 = vpack.c.bf16 %v7273, %v7273
    %v7286 = vpack.c.bf16 %v7274, %v7274
    %v7287 = vpack.c.bf16 %v7275, %v7275
    %v7288 = vpack.c.bf16 %v7276, %v7276
    %v7289 = vpack.c.bf16 %v7277, %v7277
    %v7290 = vpack.c.bf16 %v7278, %v7278
    %v7291 = vpack.c.bf16 %v7279, %v7279
    %v7292 = vpack.c.bf16 %v7280, %v7280
    %v7293 = vpack.c.bf16 %v7281, %v7281
    %v7294 = vpack.c.bf16 %v7282, %v7282
    %v7307 = vunpack.c.l.b16 %v7283
    %v7308 = vunpack.c.l.b16 %v7284
    %v7309 = vunpack.c.l.b16 %v7285
    %v7310 = vunpack.c.l.b16 %v7286
    %v7311 = vunpack.c.l.b16 %v7287
    %v7312 = vunpack.c.l.b16 %v7288
    %v7313 = vunpack.c.l.b16 %v7289
    %v7314 = vunpack.c.l.b16 %v7290
    %v7315 = vunpack.c.l.b16 %v7291
    %v7316 = vunpack.c.l.b16 %v7292
    %v7317 = vunpack.c.l.b16 %v7293
    %v7318 = vunpack.c.l.b16 %v7294
    %v7319 = vrot.slane %v7307, 2
    %v7320 = vrot.slane %v7313, 1
    %v7321 = vsel %vm6836, %v7320, %v7319
    %v7322 = vrot.slane %v7308, 2
    %v7323 = vrot.slane %v7314, 1
    %v7324 = vsel %vm6836, %v7323, %v7322
    %v7325 = vrot.slane %v7309, 2
    %v7326 = vrot.slane %v7315, 1
    %v7327 = vsel %vm6836, %v7326, %v7325
    %v7328 = vrot.slane %v7310, 2
    %v7329 = vrot.slane %v7316, 1
    %v7330 = vsel %vm6836, %v7329, %v7328
    %v7331 = vrot.slane %v7311, 2
    %v7332 = vrot.slane %v7317, 1
    %v7333 = vsel %vm6836, %v7332, %v7331
    %v7334 = vrot.slane %v7312, 2
    %v7335 = vrot.slane %v7318, 1
    %v7336 = vsel %vm6836, %v7335, %v7334
    %v7337 = vpack.c.b16 %v7321, %v7321
    %v7338 = vpack.c.b16 %v7324, %v7324
    %v7339 = vpack.c.b16 %v7327, %v7327
    %v7340 = vpack.c.b16 %v7330, %v7330
    %v7341 = vpack.c.b16 %v7333, %v7333
    %v7342 = vpack.c.b16 %v7336, %v7336
    %7349 = vmatprep.subr.bf16.mxu0 %v5849
    %7350 = vmatpush1.bf16.msra.mxu0 %v5848
    %7351 = vmatprep.subr.bf16.mxu0 %v5843
    %7352 = vmatpush1.bf16.msra.mxu0 %v5842
    %7353 = vmatprep.subr.bf16.mxu0 %v5837
    %7354 = vmatpush1.bf16.msra.mxu0 %v5836
    %7355 = vmatprep.subr.bf16.mxu0 %v5831
    %7356 = vmatpush1.bf16.msra.mxu0 %v5830
    %7357 = vmatprep.subr.bf16.mxu0 %v5825
    %7358 = vmatpush1.bf16.msra.mxu0 %v5824
    %7359 = vmatprep.subr.bf16.mxu0 %v5819
    %7360 = vmatpush1.bf16.msra.mxu0 %v5818
    %7361 = vmatprep.subr.bf16.mxu0 %v5813
    %7362 = vmatpush1.bf16.msra.mxu0 %v5812
    %7363 = vmatprep.subr.bf16.mxu0 %v5807
    %7364 = vmatpush1.bf16.msra.mxu0 %v5806
    %7365 = vmatprep.subr.bf16.mxu0 %v5897
    %7366 = vmatpush2.bf16.msra.mxu0 %v5896
    %7367 = vmatprep.subr.bf16.mxu0 %v5891
    %7368 = vmatpush2.bf16.msra.mxu0 %v5890
    %7369 = vmatprep.subr.bf16.mxu0 %v5885
    %7370 = vmatpush2.bf16.msra.mxu0 %v5884
    %7371 = vmatprep.subr.bf16.mxu0 %v5879
    %7372 = vmatpush2.bf16.msra.mxu0 %v5878
    %7373 = vmatprep.subr.bf16.mxu0 %v5873
    %7374 = vmatpush2.bf16.msra.mxu0 %v5872
    %7375 = vmatprep.subr.bf16.mxu0 %v5867
    %7376 = vmatpush2.bf16.msra.mxu0 %v5866
    %7377 = vmatprep.subr.bf16.mxu0 %v5861
    %7378 = vmatpush2.bf16.msra.mxu0 %v5860
    %7379 = vmatprep.subr.bf16.mxu0 %v5855
    %7380 = vmatpush2.bf16.msra.mxu0 %v5854
    %7381 = vmatprep.mubr.bf16.mxu0 %v7338
    %7382 = vmatmul.mubr.bf16.gmra.mxu0 %v7337
    %v7383 = vpop.f32.mrf.mxu0
    %v7384 = vadd.f32 0.0, %v7383
    %v7385 = vpop.f32.mrf.mxu0
    %v7386 = vadd.f32 0.0, %v7385
    %v7387 = vpop.f32.mrf.mxu0
    %v7388 = vpop.f32.mrf.mxu0
    %7389 = vdwg.mxu0
    %7390 = vmatprep.subr.bf16.mxu0 %v5945
    %7391 = vmatpush1.bf16.msra.mxu0 %v5944
    %7392 = vmatprep.subr.bf16.mxu0 %v5939
    %7393 = vmatpush1.bf16.msra.mxu0 %v5938
    %7394 = vmatprep.subr.bf16.mxu0 %v5933
    %7395 = vmatpush1.bf16.msra.mxu0 %v5932
    %7396 = vmatprep.subr.bf16.mxu0 %v5927
    %7397 = vmatpush1.bf16.msra.mxu0 %v5926
    %7398 = vmatprep.subr.bf16.mxu0 %v5921
    %7399 = vmatpush1.bf16.msra.mxu0 %v5920
    %7400 = vmatprep.subr.bf16.mxu0 %v5915
    %7401 = vmatpush1.bf16.msra.mxu0 %v5914
    %7402 = vmatprep.subr.bf16.mxu0 %v5909
    %7403 = vmatpush1.bf16.msra.mxu0 %v5908
    %7404 = vmatprep.subr.bf16.mxu0 %v5903
    %7405 = vmatpush1.bf16.msra.mxu0 %v5902
    %7406 = vmatprep.subr.bf16.mxu0 %v5993
    %7407 = vmatpush2.bf16.msra.mxu0 %v5992
    %7408 = vmatprep.subr.bf16.mxu0 %v5987
    %7409 = vmatpush2.bf16.msra.mxu0 %v5986
    %7410 = vmatprep.subr.bf16.mxu0 %v5981
    %7411 = vmatpush2.bf16.msra.mxu0 %v5980
    %7412 = vmatprep.subr.bf16.mxu0 %v5975
    %7413 = vmatpush2.bf16.msra.mxu0 %v5974
    %7414 = vmatprep.subr.bf16.mxu0 %v5969
    %7415 = vmatpush2.bf16.msra.mxu0 %v5968
    %7416 = vmatprep.subr.bf16.mxu0 %v5963
    %7417 = vmatpush2.bf16.msra.mxu0 %v5962
    %7418 = vmatprep.subr.bf16.mxu0 %v5957
    %7419 = vmatpush2.bf16.msra.mxu0 %v5956
    %7420 = vmatprep.subr.bf16.mxu0 %v5951
    %7421 = vmatpush2.bf16.msra.mxu0 %v5950
    %7422 = vmatprep.mubr.bf16.mxu0 %v7340
    %7423 = vmatmul.mubr.bf16.gmra.mxu0 %v7339
    %v7424 = vpop.f32.mrf.mxu0
    %v7425 = vadd.f32 %v7384, %v7424
    %v7426 = vpop.f32.mrf.mxu0
    %v7427 = vadd.f32 %v7386, %v7426
    %v7428 = vpop.f32.mrf.mxu0
    %v7429 = vpop.f32.mrf.mxu0
    %7430 = vdwg.mxu0
    %7431 = vmatprep.subr.bf16.mxu0 %v6041
    %7432 = vmatpush1.bf16.msra.mxu0 %v6040
    %7433 = vmatprep.subr.bf16.mxu0 %v6035
    %7434 = vmatpush1.bf16.msra.mxu0 %v6034
    %7435 = vmatprep.subr.bf16.mxu0 %v6029
    %7436 = vmatpush1.bf16.msra.mxu0 %v6028
    %7437 = vmatprep.subr.bf16.mxu0 %v6023
    %7438 = vmatpush1.bf16.msra.mxu0 %v6022
    %7439 = vmatprep.subr.bf16.mxu0 %v6017
    %7440 = vmatpush1.bf16.msra.mxu0 %v6016
    %7441 = vmatprep.subr.bf16.mxu0 %v6011
    %7442 = vmatpush1.bf16.msra.mxu0 %v6010
    %7443 = vmatprep.subr.bf16.mxu0 %v6005
    %7444 = vmatpush1.bf16.msra.mxu0 %v6004
    %7445 = vmatprep.subr.bf16.mxu0 %v5999
    %7446 = vmatpush1.bf16.msra.mxu0 %v5998
    %7447 = vmatprep.subr.bf16.mxu0 %v6089
    %7448 = vmatpush2.bf16.msra.mxu0 %v6088
    %7449 = vmatprep.subr.bf16.mxu0 %v6083
    %7450 = vmatpush2.bf16.msra.mxu0 %v6082
    %7451 = vmatprep.subr.bf16.mxu0 %v6077
    %7452 = vmatpush2.bf16.msra.mxu0 %v6076
    %7453 = vmatprep.subr.bf16.mxu0 %v6071
    %7454 = vmatpush2.bf16.msra.mxu0 %v6070
    %7455 = vmatprep.subr.bf16.mxu0 %v6065
    %7456 = vmatpush2.bf16.msra.mxu0 %v6064
    %7457 = vmatprep.subr.bf16.mxu0 %v6059
    %7458 = vmatpush2.bf16.msra.mxu0 %v6058
    %7459 = vmatprep.subr.bf16.mxu0 %v6053
    %7460 = vmatpush2.bf16.msra.mxu0 %v6052
    %7461 = vmatprep.subr.bf16.mxu0 %v6047
    %7462 = vmatpush2.bf16.msra.mxu0 %v6046
    %7463 = vmatprep.mubr.bf16.mxu0 %v7342
    %7464 = vmatmul.mubr.bf16.gmra.mxu0 %v7341
    %v7465 = vpop.f32.mrf.mxu0
    %v7466 = vadd.f32 %v7425, %v7465
    %v7467 = vpop.f32.mrf.mxu0
    %v7468 = vadd.f32 %v7427, %v7467
    %v7469 = vpop.f32.mrf.mxu0
    %v7470 = vpop.f32.mrf.mxu0
    %7471 = vdwg.mxu0
    %7472 = vmatprep.subr.bf16.mxu0 %v5851
    %7473 = vmatpush1.bf16.msra.mxu0 %v5850
    %7474 = vmatprep.subr.bf16.mxu0 %v5845
    %7475 = vmatpush1.bf16.msra.mxu0 %v5844
    %7476 = vmatprep.subr.bf16.mxu0 %v5839
    %7477 = vmatpush1.bf16.msra.mxu0 %v5838
    %7478 = vmatprep.subr.bf16.mxu0 %v5833
    %7479 = vmatpush1.bf16.msra.mxu0 %v5832
    %7480 = vmatprep.subr.bf16.mxu0 %v5827
    %7481 = vmatpush1.bf16.msra.mxu0 %v5826
    %7482 = vmatprep.subr.bf16.mxu0 %v5821
    %7483 = vmatpush1.bf16.msra.mxu0 %v5820
    %7484 = vmatprep.subr.bf16.mxu0 %v5815
    %7485 = vmatpush1.bf16.msra.mxu0 %v5814
    %7486 = vmatprep.subr.bf16.mxu0 %v5809
    %7487 = vmatpush1.bf16.msra.mxu0 %v5808
    %7488 = vmatprep.subr.bf16.mxu0 %v5899
    %7489 = vmatpush2.bf16.msra.mxu0 %v5898
    %7490 = vmatprep.subr.bf16.mxu0 %v5893
    %7491 = vmatpush2.bf16.msra.mxu0 %v5892
    %7492 = vmatprep.subr.bf16.mxu0 %v5887
    %7493 = vmatpush2.bf16.msra.mxu0 %v5886
    %7494 = vmatprep.subr.bf16.mxu0 %v5881
    %7495 = vmatpush2.bf16.msra.mxu0 %v5880
    %7496 = vmatprep.subr.bf16.mxu0 %v5875
    %7497 = vmatpush2.bf16.msra.mxu0 %v5874
    %7498 = vmatprep.subr.bf16.mxu0 %v5869
    %7499 = vmatpush2.bf16.msra.mxu0 %v5868
    %7500 = vmatprep.subr.bf16.mxu0 %v5863
    %7501 = vmatpush2.bf16.msra.mxu0 %v5862
    %7502 = vmatprep.subr.bf16.mxu0 %v5857
    %7503 = vmatpush2.bf16.msra.mxu0 %v5856
    %7504 = vmatprep.mubr.bf16.mxu0 %v7338
    %7505 = vmatmul.mubr.bf16.gmra.mxu0 %v7337
    %v7506 = vpop.f32.mrf.mxu0
    %v7507 = vadd.f32 0.0, %v7506
    %v7508 = vpop.f32.mrf.mxu0
    %v7509 = vadd.f32 0.0, %v7508
    %v7510 = vpop.f32.mrf.mxu0
    %v7511 = vpop.f32.mrf.mxu0
    %7512 = vdwg.mxu0
    %7513 = vmatprep.subr.bf16.mxu0 %v5947
    %7514 = vmatpush1.bf16.msra.mxu0 %v5946
    %7515 = vmatprep.subr.bf16.mxu0 %v5941
    %7516 = vmatpush1.bf16.msra.mxu0 %v5940
    %7517 = vmatprep.subr.bf16.mxu0 %v5935
    %7518 = vmatpush1.bf16.msra.mxu0 %v5934
    %7519 = vmatprep.subr.bf16.mxu0 %v5929
    %7520 = vmatpush1.bf16.msra.mxu0 %v5928
    %7521 = vmatprep.subr.bf16.mxu0 %v5923
    %7522 = vmatpush1.bf16.msra.mxu0 %v5922
    %7523 = vmatprep.subr.bf16.mxu0 %v5917
    %7524 = vmatpush1.bf16.msra.mxu0 %v5916
    %7525 = vmatprep.subr.bf16.mxu0 %v5911
    %7526 = vmatpush1.bf16.msra.mxu0 %v5910
    %7527 = vmatprep.subr.bf16.mxu0 %v5905
    %7528 = vmatpush1.bf16.msra.mxu0 %v5904
    %7529 = vmatprep.subr.bf16.mxu0 %v5995
    %7530 = vmatpush2.bf16.msra.mxu0 %v5994
    %7531 = vmatprep.subr.bf16.mxu0 %v5989
    %7532 = vmatpush2.bf16.msra.mxu0 %v5988
    %7533 = vmatprep.subr.bf16.mxu0 %v5983
    %7534 = vmatpush2.bf16.msra.mxu0 %v5982
    %7535 = vmatprep.subr.bf16.mxu0 %v5977
    %7536 = vmatpush2.bf16.msra.mxu0 %v5976
    %7537 = vmatprep.subr.bf16.mxu0 %v5971
    %7538 = vmatpush2.bf16.msra.mxu0 %v5970
    %7539 = vmatprep.subr.bf16.mxu0 %v5965
    %7540 = vmatpush2.bf16.msra.mxu0 %v5964
    %7541 = vmatprep.subr.bf16.mxu0 %v5959
    %7542 = vmatpush2.bf16.msra.mxu0 %v5958
    %7543 = vmatprep.subr.bf16.mxu0 %v5953
    %7544 = vmatpush2.bf16.msra.mxu0 %v5952
    %7545 = vmatprep.mubr.bf16.mxu0 %v7340
    %7546 = vmatmul.mubr.bf16.gmra.mxu0 %v7339
    %v7547 = vpop.f32.mrf.mxu0
    %v7548 = vadd.f32 %v7507, %v7547
    %v7549 = vpop.f32.mrf.mxu0
    %v7550 = vadd.f32 %v7509, %v7549
    %v7551 = vpop.f32.mrf.mxu0
    %v7552 = vpop.f32.mrf.mxu0
    %7553 = vdwg.mxu0
    %7554 = vmatprep.subr.bf16.mxu0 %v6043
    %7555 = vmatpush1.bf16.msra.mxu0 %v6042
    %7556 = vmatprep.subr.bf16.mxu0 %v6037
    %7557 = vmatpush1.bf16.msra.mxu0 %v6036
    %7558 = vmatprep.subr.bf16.mxu0 %v6031
    %7559 = vmatpush1.bf16.msra.mxu0 %v6030
    %7560 = vmatprep.subr.bf16.mxu0 %v6025
    %7561 = vmatpush1.bf16.msra.mxu0 %v6024
    %7562 = vmatprep.subr.bf16.mxu0 %v6019
    %7563 = vmatpush1.bf16.msra.mxu0 %v6018
    %7564 = vmatprep.subr.bf16.mxu0 %v6013
    %7565 = vmatpush1.bf16.msra.mxu0 %v6012
    %7566 = vmatprep.subr.bf16.mxu0 %v6007
    %7567 = vmatpush1.bf16.msra.mxu0 %v6006
    %7568 = vmatprep.subr.bf16.mxu0 %v6001
    %7569 = vmatpush1.bf16.msra.mxu0 %v6000
    %7570 = vmatprep.subr.bf16.mxu0 %v6091
    %7571 = vmatpush2.bf16.msra.mxu0 %v6090
    %7572 = vmatprep.subr.bf16.mxu0 %v6085
    %7573 = vmatpush2.bf16.msra.mxu0 %v6084
    %7574 = vmatprep.subr.bf16.mxu0 %v6079
    %7575 = vmatpush2.bf16.msra.mxu0 %v6078
    %7576 = vmatprep.subr.bf16.mxu0 %v6073
    %7577 = vmatpush2.bf16.msra.mxu0 %v6072
    %7578 = vmatprep.subr.bf16.mxu0 %v6067
    %7579 = vmatpush2.bf16.msra.mxu0 %v6066
    %7580 = vmatprep.subr.bf16.mxu0 %v6061
    %7581 = vmatpush2.bf16.msra.mxu0 %v6060
    %7582 = vmatprep.subr.bf16.mxu0 %v6055
    %7583 = vmatpush2.bf16.msra.mxu0 %v6054
    %7584 = vmatprep.subr.bf16.mxu0 %v6049
    %7585 = vmatpush2.bf16.msra.mxu0 %v6048
    %7586 = vmatprep.mubr.bf16.mxu0 %v7342
    %7587 = vmatmul.mubr.bf16.gmra.mxu0 %v7341
    %v7588 = vpop.f32.mrf.mxu0
    %v7589 = vadd.f32 %v7548, %v7588
    %v7590 = vpop.f32.mrf.mxu0
    %v7591 = vadd.f32 %v7550, %v7590
    %v7592 = vpop.f32.mrf.mxu0
    %v7593 = vpop.f32.mrf.mxu0
    %7594 = vdwg.mxu0
    %7595 = vmatprep.subr.bf16.mxu0 %v5853
    %7596 = vmatpush1.bf16.msra.mxu0 %v5852
    %7597 = vmatprep.subr.bf16.mxu0 %v5847
    %7598 = vmatpush1.bf16.msra.mxu0 %v5846
    %7599 = vmatprep.subr.bf16.mxu0 %v5841
    %7600 = vmatpush1.bf16.msra.mxu0 %v5840
    %7601 = vmatprep.subr.bf16.mxu0 %v5835
    %7602 = vmatpush1.bf16.msra.mxu0 %v5834
    %7603 = vmatprep.subr.bf16.mxu0 %v5829
    %7604 = vmatpush1.bf16.msra.mxu0 %v5828
    %7605 = vmatprep.subr.bf16.mxu0 %v5823
    %7606 = vmatpush1.bf16.msra.mxu0 %v5822
    %7607 = vmatprep.subr.bf16.mxu0 %v5817
    %7608 = vmatpush1.bf16.msra.mxu0 %v5816
    %7609 = vmatprep.subr.bf16.mxu0 %v5811
    %7610 = vmatpush1.bf16.msra.mxu0 %v5810
    %7611 = vmatprep.subr.bf16.mxu0 %v5901
    %7612 = vmatpush2.bf16.msra.mxu0 %v5900
    %7613 = vmatprep.subr.bf16.mxu0 %v5895
    %7614 = vmatpush2.bf16.msra.mxu0 %v5894
    %7615 = vmatprep.subr.bf16.mxu0 %v5889
    %7616 = vmatpush2.bf16.msra.mxu0 %v5888
    %7617 = vmatprep.subr.bf16.mxu0 %v5883
    %7618 = vmatpush2.bf16.msra.mxu0 %v5882
    %7619 = vmatprep.subr.bf16.mxu0 %v5877
    %7620 = vmatpush2.bf16.msra.mxu0 %v5876
    %7621 = vmatprep.subr.bf16.mxu0 %v5871
    %7622 = vmatpush2.bf16.msra.mxu0 %v5870
    %7623 = vmatprep.subr.bf16.mxu0 %v5865
    %7624 = vmatpush2.bf16.msra.mxu0 %v5864
    %7625 = vmatprep.subr.bf16.mxu0 %v5859
    %7626 = vmatpush2.bf16.msra.mxu0 %v5858
    %7627 = vmatprep.mubr.bf16.mxu0 %v7338
    %7628 = vmatmul.mubr.bf16.gmra.mxu0 %v7337
    %v7629 = vpop.f32.mrf.mxu0
    %v7630 = vadd.f32 0.0, %v7629
    %v7631 = vpop.f32.mrf.mxu0
    %v7632 = vadd.f32 0.0, %v7631
    %v7633 = vpop.f32.mrf.mxu0
    %v7634 = vpop.f32.mrf.mxu0
    %7635 = vdwg.mxu0
    %7636 = vmatprep.subr.bf16.mxu0 %v5949
    %7637 = vmatpush1.bf16.msra.mxu0 %v5948
    %7638 = vmatprep.subr.bf16.mxu0 %v5943
    %7639 = vmatpush1.bf16.msra.mxu0 %v5942
    %7640 = vmatprep.subr.bf16.mxu0 %v5937
    %7641 = vmatpush1.bf16.msra.mxu0 %v5936
    %7642 = vmatprep.subr.bf16.mxu0 %v5931
    %7643 = vmatpush1.bf16.msra.mxu0 %v5930
    %7644 = vmatprep.subr.bf16.mxu0 %v5925
    %7645 = vmatpush1.bf16.msra.mxu0 %v5924
    %7646 = vmatprep.subr.bf16.mxu0 %v5919
    %7647 = vmatpush1.bf16.msra.mxu0 %v5918
    %7648 = vmatprep.subr.bf16.mxu0 %v5913
    %7649 = vmatpush1.bf16.msra.mxu0 %v5912
    %7650 = vmatprep.subr.bf16.mxu0 %v5907
    %7651 = vmatpush1.bf16.msra.mxu0 %v5906
    %7652 = vmatprep.subr.bf16.mxu0 %v5997
    %7653 = vmatpush2.bf16.msra.mxu0 %v5996
    %7654 = vmatprep.subr.bf16.mxu0 %v5991
    %7655 = vmatpush2.bf16.msra.mxu0 %v5990
    %7656 = vmatprep.subr.bf16.mxu0 %v5985
    %7657 = vmatpush2.bf16.msra.mxu0 %v5984
    %7658 = vmatprep.subr.bf16.mxu0 %v5979
    %7659 = vmatpush2.bf16.msra.mxu0 %v5978
    %7660 = vmatprep.subr.bf16.mxu0 %v5973
    %7661 = vmatpush2.bf16.msra.mxu0 %v5972
    %7662 = vmatprep.subr.bf16.mxu0 %v5967
    %7663 = vmatpush2.bf16.msra.mxu0 %v5966
    %7664 = vmatprep.subr.bf16.mxu0 %v5961
    %7665 = vmatpush2.bf16.msra.mxu0 %v5960
    %7666 = vmatprep.subr.bf16.mxu0 %v5955
    %7667 = vmatpush2.bf16.msra.mxu0 %v5954
    %7668 = vmatprep.mubr.bf16.mxu0 %v7340
    %7669 = vmatmul.mubr.bf16.gmra.mxu0 %v7339
    %v7670 = vpop.f32.mrf.mxu0
    %v7671 = vadd.f32 %v7630, %v7670
    %v7672 = vpop.f32.mrf.mxu0
    %v7673 = vadd.f32 %v7632, %v7672
    %v7674 = vpop.f32.mrf.mxu0
    %v7675 = vpop.f32.mrf.mxu0
    %7676 = vdwg.mxu0
    %7677 = vmatprep.subr.bf16.mxu0 %v6045
    %7678 = vmatpush1.bf16.msra.mxu0 %v6044
    %7679 = vmatprep.subr.bf16.mxu0 %v6039
    %7680 = vmatpush1.bf16.msra.mxu0 %v6038
    %7681 = vmatprep.subr.bf16.mxu0 %v6033
    %7682 = vmatpush1.bf16.msra.mxu0 %v6032
    %7683 = vmatprep.subr.bf16.mxu0 %v6027
    %7684 = vmatpush1.bf16.msra.mxu0 %v6026
    %7685 = vmatprep.subr.bf16.mxu0 %v6021
    %7686 = vmatpush1.bf16.msra.mxu0 %v6020
    %7687 = vmatprep.subr.bf16.mxu0 %v6015
    %7688 = vmatpush1.bf16.msra.mxu0 %v6014
    %7689 = vmatprep.subr.bf16.mxu0 %v6009
    %7690 = vmatpush1.bf16.msra.mxu0 %v6008
    %7691 = vmatprep.subr.bf16.mxu0 %v6003
    %7692 = vmatpush1.bf16.msra.mxu0 %v6002
    %7693 = vmatprep.subr.bf16.mxu0 %v6093
    %7694 = vmatpush2.bf16.msra.mxu0 %v6092
    %7695 = vmatprep.subr.bf16.mxu0 %v6087
    %7696 = vmatpush2.bf16.msra.mxu0 %v6086
    %7697 = vmatprep.subr.bf16.mxu0 %v6081
    %7698 = vmatpush2.bf16.msra.mxu0 %v6080
    %7699 = vmatprep.subr.bf16.mxu0 %v6075
    %7700 = vmatpush2.bf16.msra.mxu0 %v6074
    %7701 = vmatprep.subr.bf16.mxu0 %v6069
    %7702 = vmatpush2.bf16.msra.mxu0 %v6068
    %7703 = vmatprep.subr.bf16.mxu0 %v6063
    %7704 = vmatpush2.bf16.msra.mxu0 %v6062
    %7705 = vmatprep.subr.bf16.mxu0 %v6057
    %7706 = vmatpush2.bf16.msra.mxu0 %v6056
    %7707 = vmatprep.subr.bf16.mxu0 %v6051
    %7708 = vmatpush2.bf16.msra.mxu0 %v6050
    %7709 = vmatprep.mubr.bf16.mxu0 %v7342
    %7710 = vmatmul.mubr.bf16.gmra.mxu0 %v7341
    %v7711 = vpop.f32.mrf.mxu0
    %v7712 = vadd.f32 %v7671, %v7711
    %v7713 = vpop.f32.mrf.mxu0
    %v7714 = vadd.f32 %v7673, %v7713
    %v7715 = vpop.f32.mrf.mxu0
    %v7716 = vpop.f32.mrf.mxu0
    %7717 = vdwg.mxu0
    %v7724 = vrot.slane %v7466, 5
    %v7725 = vrot.slane %v7468, 5
    %v7726 = vrot.slane %v7589, 5
    %v7727 = vrot.slane %v7591, 5
    %v7728 = vrot.slane %v7712, 5
    %v7729 = vrot.slane %v7714, 5
    %v7730 = vrot.slane %v7466, 6
    %v7731 = vrot.slane %v7468, 6
    %v7732 = vrot.slane %v7589, 6
    %v7733 = vrot.slane %v7591, 6
    %v7734 = vrot.slane %v7712, 6
    %v7735 = vrot.slane %v7714, 6
    %v7748 = vadd.f32 %v1969, %v7724
    %v7749 = vadd.f32 %v1971, %v7725
    %v7750 = vadd.f32 %v2098, %v7726
    %v7751 = vadd.f32 %v2100, %v7727
    %v7752 = vadd.f32 %v2227, %v7728
    %v7753 = vadd.f32 %v2229, %v7729
    %v7754 = vadd.f32 %v1973, %v7730
    %v7755 = vadd.f32 %v1975, %v7731
    %v7756 = vadd.f32 %v2102, %v7732
    %v7757 = vadd.f32 %v2104, %v7733
    %v7758 = vadd.f32 %v2231, %v7734
    %v7759 = vadd.f32 %v2233, %v7735
    %v7760 = vmax.f32 %v7748, 0.0
    %v7761 = vmax.f32 %v7749, 0.0
    %v7762 = vmax.f32 %v7750, 0.0
    %v7763 = vmax.f32 %v7751, 0.0
    %v7764 = vmax.f32 %v7752, 0.0
    %v7765 = vmax.f32 %v7753, 0.0
    %v7766 = vmax.f32 %v7754, 0.0
    %v7767 = vmax.f32 %v7755, 0.0
    %v7768 = vmax.f32 %v7756, 0.0
    %v7769 = vmax.f32 %v7757, 0.0
    %v7770 = vmax.f32 %v7758, 0.0
    %v7771 = vmax.f32 %v7759, 0.0
    %v7772 = vpack.c.bf16 %v7760, %v7760
    %v7773 = vpack.c.bf16 %v7761, %v7761
    %v7774 = vpack.c.bf16 %v7762, %v7762
    %v7775 = vpack.c.bf16 %v7763, %v7763
    %v7776 = vpack.c.bf16 %v7764, %v7764
    %v7777 = vpack.c.bf16 %v7765, %v7765
    %v7778 = vpack.c.bf16 %v7766, %v7766
    %v7779 = vpack.c.bf16 %v7767, %v7767
    %v7780 = vpack.c.bf16 %v7768, %v7768
    %v7781 = vpack.c.bf16 %v7769, %v7769
    %v7782 = vpack.c.bf16 %v7770, %v7770
    %v7783 = vpack.c.bf16 %v7771, %v7771
    %v7796 = vunpack.c.l.b16 %v7772
    %v7797 = vunpack.c.l.b16 %v7773
    %v7798 = vunpack.c.l.b16 %v7774
    %v7799 = vunpack.c.l.b16 %v7775
    %v7800 = vunpack.c.l.b16 %v7776
    %v7801 = vunpack.c.l.b16 %v7777
    %v7802 = vunpack.c.l.b16 %v7778
    %v7803 = vunpack.c.l.b16 %v7779
    %v7804 = vunpack.c.l.b16 %v7780
    %v7805 = vunpack.c.l.b16 %v7781
    %v7806 = vunpack.c.l.b16 %v7782
    %v7807 = vunpack.c.l.b16 %v7783
    %v7808 = vrot.slane %v7796, 3
    %v7809 = vrot.slane %v7802, 2
    %v7810 = vsel %vm6836, %v7809, %v7808
    %v7811 = vrot.slane %v7797, 3
    %v7812 = vrot.slane %v7803, 2
    %v7813 = vsel %vm6836, %v7812, %v7811
    %v7814 = vrot.slane %v7798, 3
    %v7815 = vrot.slane %v7804, 2
    %v7816 = vsel %vm6836, %v7815, %v7814
    %v7817 = vrot.slane %v7799, 3
    %v7818 = vrot.slane %v7805, 2
    %v7819 = vsel %vm6836, %v7818, %v7817
    %v7820 = vrot.slane %v7800, 3
    %v7821 = vrot.slane %v7806, 2
    %v7822 = vsel %vm6836, %v7821, %v7820
    %v7823 = vrot.slane %v7801, 3
    %v7824 = vrot.slane %v7807, 2
    %v7825 = vsel %vm6836, %v7824, %v7823
    %v7826 = vpack.c.b16 %v7810, %v7810
    %v7827 = vpack.c.b16 %v7813, %v7813
    %v7828 = vpack.c.b16 %v7816, %v7816
    %v7829 = vpack.c.b16 %v7819, %v7819
    %v7830 = vpack.c.b16 %v7822, %v7822
    %v7831 = vpack.c.b16 %v7825, %v7825
    %7838 = vmatprep.subr.bf16.mxu0 %v5849
    %7839 = vmatpush1.bf16.msra.mxu0 %v5848
    %7840 = vmatprep.subr.bf16.mxu0 %v5843
    %7841 = vmatpush1.bf16.msra.mxu0 %v5842
    %7842 = vmatprep.subr.bf16.mxu0 %v5837
    %7843 = vmatpush1.bf16.msra.mxu0 %v5836
    %7844 = vmatprep.subr.bf16.mxu0 %v5831
    %7845 = vmatpush1.bf16.msra.mxu0 %v5830
    %7846 = vmatprep.subr.bf16.mxu0 %v5825
    %7847 = vmatpush1.bf16.msra.mxu0 %v5824
    %7848 = vmatprep.subr.bf16.mxu0 %v5819
    %7849 = vmatpush1.bf16.msra.mxu0 %v5818
    %7850 = vmatprep.subr.bf16.mxu0 %v5813
    %7851 = vmatpush1.bf16.msra.mxu0 %v5812
    %7852 = vmatprep.subr.bf16.mxu0 %v5807
    %7853 = vmatpush1.bf16.msra.mxu0 %v5806
    %7854 = vmatprep.subr.bf16.mxu0 %v5897
    %7855 = vmatpush2.bf16.msra.mxu0 %v5896
    %7856 = vmatprep.subr.bf16.mxu0 %v5891
    %7857 = vmatpush2.bf16.msra.mxu0 %v5890
    %7858 = vmatprep.subr.bf16.mxu0 %v5885
    %7859 = vmatpush2.bf16.msra.mxu0 %v5884
    %7860 = vmatprep.subr.bf16.mxu0 %v5879
    %7861 = vmatpush2.bf16.msra.mxu0 %v5878
    %7862 = vmatprep.subr.bf16.mxu0 %v5873
    %7863 = vmatpush2.bf16.msra.mxu0 %v5872
    %7864 = vmatprep.subr.bf16.mxu0 %v5867
    %7865 = vmatpush2.bf16.msra.mxu0 %v5866
    %7866 = vmatprep.subr.bf16.mxu0 %v5861
    %7867 = vmatpush2.bf16.msra.mxu0 %v5860
    %7868 = vmatprep.subr.bf16.mxu0 %v5855
    %7869 = vmatpush2.bf16.msra.mxu0 %v5854
    %7870 = vmatprep.mubr.bf16.mxu0 %v7827
    %7871 = vmatmul.mubr.bf16.gmra.mxu0 %v7826
    %v7872 = vpop.f32.mrf.mxu0
    %v7873 = vadd.f32 0.0, %v7872
    %v7874 = vpop.f32.mrf.mxu0
    %v7875 = vadd.f32 0.0, %v7874
    %v7876 = vpop.f32.mrf.mxu0
    %v7877 = vpop.f32.mrf.mxu0
    %7878 = vdwg.mxu0
    %7879 = vmatprep.subr.bf16.mxu0 %v5945
    %7880 = vmatpush1.bf16.msra.mxu0 %v5944
    %7881 = vmatprep.subr.bf16.mxu0 %v5939
    %7882 = vmatpush1.bf16.msra.mxu0 %v5938
    %7883 = vmatprep.subr.bf16.mxu0 %v5933
    %7884 = vmatpush1.bf16.msra.mxu0 %v5932
    %7885 = vmatprep.subr.bf16.mxu0 %v5927
    %7886 = vmatpush1.bf16.msra.mxu0 %v5926
    %7887 = vmatprep.subr.bf16.mxu0 %v5921
    %7888 = vmatpush1.bf16.msra.mxu0 %v5920
    %7889 = vmatprep.subr.bf16.mxu0 %v5915
    %7890 = vmatpush1.bf16.msra.mxu0 %v5914
    %7891 = vmatprep.subr.bf16.mxu0 %v5909
    %7892 = vmatpush1.bf16.msra.mxu0 %v5908
    %7893 = vmatprep.subr.bf16.mxu0 %v5903
    %7894 = vmatpush1.bf16.msra.mxu0 %v5902
    %7895 = vmatprep.subr.bf16.mxu0 %v5993
    %7896 = vmatpush2.bf16.msra.mxu0 %v5992
    %7897 = vmatprep.subr.bf16.mxu0 %v5987
    %7898 = vmatpush2.bf16.msra.mxu0 %v5986
    %7899 = vmatprep.subr.bf16.mxu0 %v5981
    %7900 = vmatpush2.bf16.msra.mxu0 %v5980
    %7901 = vmatprep.subr.bf16.mxu0 %v5975
    %7902 = vmatpush2.bf16.msra.mxu0 %v5974
    %7903 = vmatprep.subr.bf16.mxu0 %v5969
    %7904 = vmatpush2.bf16.msra.mxu0 %v5968
    %7905 = vmatprep.subr.bf16.mxu0 %v5963
    %7906 = vmatpush2.bf16.msra.mxu0 %v5962
    %7907 = vmatprep.subr.bf16.mxu0 %v5957
    %7908 = vmatpush2.bf16.msra.mxu0 %v5956
    %7909 = vmatprep.subr.bf16.mxu0 %v5951
    %7910 = vmatpush2.bf16.msra.mxu0 %v5950
    %7911 = vmatprep.mubr.bf16.mxu0 %v7829
    %7912 = vmatmul.mubr.bf16.gmra.mxu0 %v7828
    %v7913 = vpop.f32.mrf.mxu0
    %v7914 = vadd.f32 %v7873, %v7913
    %v7915 = vpop.f32.mrf.mxu0
    %v7916 = vadd.f32 %v7875, %v7915
    %v7917 = vpop.f32.mrf.mxu0
    %v7918 = vpop.f32.mrf.mxu0
    %7919 = vdwg.mxu0
    %7920 = vmatprep.subr.bf16.mxu0 %v6041
    %7921 = vmatpush1.bf16.msra.mxu0 %v6040
    %7922 = vmatprep.subr.bf16.mxu0 %v6035
    %7923 = vmatpush1.bf16.msra.mxu0 %v6034
    %7924 = vmatprep.subr.bf16.mxu0 %v6029
    %7925 = vmatpush1.bf16.msra.mxu0 %v6028
    %7926 = vmatprep.subr.bf16.mxu0 %v6023
    %7927 = vmatpush1.bf16.msra.mxu0 %v6022
    %7928 = vmatprep.subr.bf16.mxu0 %v6017
    %7929 = vmatpush1.bf16.msra.mxu0 %v6016
    %7930 = vmatprep.subr.bf16.mxu0 %v6011
    %7931 = vmatpush1.bf16.msra.mxu0 %v6010
    %7932 = vmatprep.subr.bf16.mxu0 %v6005
    %7933 = vmatpush1.bf16.msra.mxu0 %v6004
    %7934 = vmatprep.subr.bf16.mxu0 %v5999
    %7935 = vmatpush1.bf16.msra.mxu0 %v5998
    %7936 = vmatprep.subr.bf16.mxu0 %v6089
    %7937 = vmatpush2.bf16.msra.mxu0 %v6088
    %7938 = vmatprep.subr.bf16.mxu0 %v6083
    %7939 = vmatpush2.bf16.msra.mxu0 %v6082
    %7940 = vmatprep.subr.bf16.mxu0 %v6077
    %7941 = vmatpush2.bf16.msra.mxu0 %v6076
    %7942 = vmatprep.subr.bf16.mxu0 %v6071
    %7943 = vmatpush2.bf16.msra.mxu0 %v6070
    %7944 = vmatprep.subr.bf16.mxu0 %v6065
    %7945 = vmatpush2.bf16.msra.mxu0 %v6064
    %7946 = vmatprep.subr.bf16.mxu0 %v6059
    %7947 = vmatpush2.bf16.msra.mxu0 %v6058
    %7948 = vmatprep.subr.bf16.mxu0 %v6053
    %7949 = vmatpush2.bf16.msra.mxu0 %v6052
    %7950 = vmatprep.subr.bf16.mxu0 %v6047
    %7951 = vmatpush2.bf16.msra.mxu0 %v6046
    %7952 = vmatprep.mubr.bf16.mxu0 %v7831
    %7953 = vmatmul.mubr.bf16.gmra.mxu0 %v7830
    %v7954 = vpop.f32.mrf.mxu0
    %v7955 = vadd.f32 %v7914, %v7954
    %v7956 = vpop.f32.mrf.mxu0
    %v7957 = vadd.f32 %v7916, %v7956
    %v7958 = vpop.f32.mrf.mxu0
    %v7959 = vpop.f32.mrf.mxu0
    %7960 = vdwg.mxu0
    %7961 = vmatprep.subr.bf16.mxu0 %v5851
    %7962 = vmatpush1.bf16.msra.mxu0 %v5850
    %7963 = vmatprep.subr.bf16.mxu0 %v5845
    %7964 = vmatpush1.bf16.msra.mxu0 %v5844
    %7965 = vmatprep.subr.bf16.mxu0 %v5839
    %7966 = vmatpush1.bf16.msra.mxu0 %v5838
    %7967 = vmatprep.subr.bf16.mxu0 %v5833
    %7968 = vmatpush1.bf16.msra.mxu0 %v5832
    %7969 = vmatprep.subr.bf16.mxu0 %v5827
    %7970 = vmatpush1.bf16.msra.mxu0 %v5826
    %7971 = vmatprep.subr.bf16.mxu0 %v5821
    %7972 = vmatpush1.bf16.msra.mxu0 %v5820
    %7973 = vmatprep.subr.bf16.mxu0 %v5815
    %7974 = vmatpush1.bf16.msra.mxu0 %v5814
    %7975 = vmatprep.subr.bf16.mxu0 %v5809
    %7976 = vmatpush1.bf16.msra.mxu0 %v5808
    %7977 = vmatprep.subr.bf16.mxu0 %v5899
    %7978 = vmatpush2.bf16.msra.mxu0 %v5898
    %7979 = vmatprep.subr.bf16.mxu0 %v5893
    %7980 = vmatpush2.bf16.msra.mxu0 %v5892
    %7981 = vmatprep.subr.bf16.mxu0 %v5887
    %7982 = vmatpush2.bf16.msra.mxu0 %v5886
    %7983 = vmatprep.subr.bf16.mxu0 %v5881
    %7984 = vmatpush2.bf16.msra.mxu0 %v5880
    %7985 = vmatprep.subr.bf16.mxu0 %v5875
    %7986 = vmatpush2.bf16.msra.mxu0 %v5874
    %7987 = vmatprep.subr.bf16.mxu0 %v5869
    %7988 = vmatpush2.bf16.msra.mxu0 %v5868
    %7989 = vmatprep.subr.bf16.mxu0 %v5863
    %7990 = vmatpush2.bf16.msra.mxu0 %v5862
    %7991 = vmatprep.subr.bf16.mxu0 %v5857
    %7992 = vmatpush2.bf16.msra.mxu0 %v5856
    %7993 = vmatprep.mubr.bf16.mxu0 %v7827
    %7994 = vmatmul.mubr.bf16.gmra.mxu0 %v7826
    %v7995 = vpop.f32.mrf.mxu0
    %v7996 = vadd.f32 0.0, %v7995
    %v7997 = vpop.f32.mrf.mxu0
    %v7998 = vadd.f32 0.0, %v7997
    %v7999 = vpop.f32.mrf.mxu0
    %v8000 = vpop.f32.mrf.mxu0
    %8001 = vdwg.mxu0
    %8002 = vmatprep.subr.bf16.mxu0 %v5947
    %8003 = vmatpush1.bf16.msra.mxu0 %v5946
    %8004 = vmatprep.subr.bf16.mxu0 %v5941
    %8005 = vmatpush1.bf16.msra.mxu0 %v5940
    %8006 = vmatprep.subr.bf16.mxu0 %v5935
    %8007 = vmatpush1.bf16.msra.mxu0 %v5934
    %8008 = vmatprep.subr.bf16.mxu0 %v5929
    %8009 = vmatpush1.bf16.msra.mxu0 %v5928
    %8010 = vmatprep.subr.bf16.mxu0 %v5923
    %8011 = vmatpush1.bf16.msra.mxu0 %v5922
    %8012 = vmatprep.subr.bf16.mxu0 %v5917
    %8013 = vmatpush1.bf16.msra.mxu0 %v5916
    %8014 = vmatprep.subr.bf16.mxu0 %v5911
    %8015 = vmatpush1.bf16.msra.mxu0 %v5910
    %8016 = vmatprep.subr.bf16.mxu0 %v5905
    %8017 = vmatpush1.bf16.msra.mxu0 %v5904
    %8018 = vmatprep.subr.bf16.mxu0 %v5995
    %8019 = vmatpush2.bf16.msra.mxu0 %v5994
    %8020 = vmatprep.subr.bf16.mxu0 %v5989
    %8021 = vmatpush2.bf16.msra.mxu0 %v5988
    %8022 = vmatprep.subr.bf16.mxu0 %v5983
    %8023 = vmatpush2.bf16.msra.mxu0 %v5982
    %8024 = vmatprep.subr.bf16.mxu0 %v5977
    %8025 = vmatpush2.bf16.msra.mxu0 %v5976
    %8026 = vmatprep.subr.bf16.mxu0 %v5971
    %8027 = vmatpush2.bf16.msra.mxu0 %v5970
    %8028 = vmatprep.subr.bf16.mxu0 %v5965
    %8029 = vmatpush2.bf16.msra.mxu0 %v5964
    %8030 = vmatprep.subr.bf16.mxu0 %v5959
    %8031 = vmatpush2.bf16.msra.mxu0 %v5958
    %8032 = vmatprep.subr.bf16.mxu0 %v5953
    %8033 = vmatpush2.bf16.msra.mxu0 %v5952
    %8034 = vmatprep.mubr.bf16.mxu0 %v7829
    %8035 = vmatmul.mubr.bf16.gmra.mxu0 %v7828
    %v8036 = vpop.f32.mrf.mxu0
    %v8037 = vadd.f32 %v7996, %v8036
    %v8038 = vpop.f32.mrf.mxu0
    %v8039 = vadd.f32 %v7998, %v8038
    %v8040 = vpop.f32.mrf.mxu0
    %v8041 = vpop.f32.mrf.mxu0
    %8042 = vdwg.mxu0
    %8043 = vmatprep.subr.bf16.mxu0 %v6043
    %8044 = vmatpush1.bf16.msra.mxu0 %v6042
    %8045 = vmatprep.subr.bf16.mxu0 %v6037
    %8046 = vmatpush1.bf16.msra.mxu0 %v6036
    %8047 = vmatprep.subr.bf16.mxu0 %v6031
    %8048 = vmatpush1.bf16.msra.mxu0 %v6030
    %8049 = vmatprep.subr.bf16.mxu0 %v6025
    %8050 = vmatpush1.bf16.msra.mxu0 %v6024
    %8051 = vmatprep.subr.bf16.mxu0 %v6019
    %8052 = vmatpush1.bf16.msra.mxu0 %v6018
    %8053 = vmatprep.subr.bf16.mxu0 %v6013
    %8054 = vmatpush1.bf16.msra.mxu0 %v6012
    %8055 = vmatprep.subr.bf16.mxu0 %v6007
    %8056 = vmatpush1.bf16.msra.mxu0 %v6006
    %8057 = vmatprep.subr.bf16.mxu0 %v6001
    %8058 = vmatpush1.bf16.msra.mxu0 %v6000
    %8059 = vmatprep.subr.bf16.mxu0 %v6091
    %8060 = vmatpush2.bf16.msra.mxu0 %v6090
    %8061 = vmatprep.subr.bf16.mxu0 %v6085
    %8062 = vmatpush2.bf16.msra.mxu0 %v6084
    %8063 = vmatprep.subr.bf16.mxu0 %v6079
    %8064 = vmatpush2.bf16.msra.mxu0 %v6078
    %8065 = vmatprep.subr.bf16.mxu0 %v6073
    %8066 = vmatpush2.bf16.msra.mxu0 %v6072
    %8067 = vmatprep.subr.bf16.mxu0 %v6067
    %8068 = vmatpush2.bf16.msra.mxu0 %v6066
    %8069 = vmatprep.subr.bf16.mxu0 %v6061
    %8070 = vmatpush2.bf16.msra.mxu0 %v6060
    %8071 = vmatprep.subr.bf16.mxu0 %v6055
    %8072 = vmatpush2.bf16.msra.mxu0 %v6054
    %8073 = vmatprep.subr.bf16.mxu0 %v6049
    %8074 = vmatpush2.bf16.msra.mxu0 %v6048
    %8075 = vmatprep.mubr.bf16.mxu0 %v7831
    %8076 = vmatmul.mubr.bf16.gmra.mxu0 %v7830
    %v8077 = vpop.f32.mrf.mxu0
    %v8078 = vadd.f32 %v8037, %v8077
    %v8079 = vpop.f32.mrf.mxu0
    %v8080 = vadd.f32 %v8039, %v8079
    %v8081 = vpop.f32.mrf.mxu0
    %v8082 = vpop.f32.mrf.mxu0
    %8083 = vdwg.mxu0
    %8084 = vmatprep.subr.bf16.mxu0 %v5853
    %8085 = vmatpush1.bf16.msra.mxu0 %v5852
    %8086 = vmatprep.subr.bf16.mxu0 %v5847
    %8087 = vmatpush1.bf16.msra.mxu0 %v5846
    %8088 = vmatprep.subr.bf16.mxu0 %v5841
    %8089 = vmatpush1.bf16.msra.mxu0 %v5840
    %8090 = vmatprep.subr.bf16.mxu0 %v5835
    %8091 = vmatpush1.bf16.msra.mxu0 %v5834
    %8092 = vmatprep.subr.bf16.mxu0 %v5829
    %8093 = vmatpush1.bf16.msra.mxu0 %v5828
    %8094 = vmatprep.subr.bf16.mxu0 %v5823
    %8095 = vmatpush1.bf16.msra.mxu0 %v5822
    %8096 = vmatprep.subr.bf16.mxu0 %v5817
    %8097 = vmatpush1.bf16.msra.mxu0 %v5816
    %8098 = vmatprep.subr.bf16.mxu0 %v5811
    %8099 = vmatpush1.bf16.msra.mxu0 %v5810
    %8100 = vmatprep.subr.bf16.mxu0 %v5901
    %8101 = vmatpush2.bf16.msra.mxu0 %v5900
    %8102 = vmatprep.subr.bf16.mxu0 %v5895
    %8103 = vmatpush2.bf16.msra.mxu0 %v5894
    %8104 = vmatprep.subr.bf16.mxu0 %v5889
    %8105 = vmatpush2.bf16.msra.mxu0 %v5888
    %8106 = vmatprep.subr.bf16.mxu0 %v5883
    %8107 = vmatpush2.bf16.msra.mxu0 %v5882
    %8108 = vmatprep.subr.bf16.mxu0 %v5877
    %8109 = vmatpush2.bf16.msra.mxu0 %v5876
    %8110 = vmatprep.subr.bf16.mxu0 %v5871
    %8111 = vmatpush2.bf16.msra.mxu0 %v5870
    %8112 = vmatprep.subr.bf16.mxu0 %v5865
    %8113 = vmatpush2.bf16.msra.mxu0 %v5864
    %8114 = vmatprep.subr.bf16.mxu0 %v5859
    %8115 = vmatpush2.bf16.msra.mxu0 %v5858
    %8116 = vmatprep.mubr.bf16.mxu0 %v7827
    %8117 = vmatmul.mubr.bf16.gmra.mxu0 %v7826
    %v8118 = vpop.f32.mrf.mxu0
    %v8119 = vadd.f32 0.0, %v8118
    %v8120 = vpop.f32.mrf.mxu0
    %v8121 = vadd.f32 0.0, %v8120
    %v8122 = vpop.f32.mrf.mxu0
    %v8123 = vpop.f32.mrf.mxu0
    %8124 = vdwg.mxu0
    %8125 = vmatprep.subr.bf16.mxu0 %v5949
    %8126 = vmatpush1.bf16.msra.mxu0 %v5948
    %8127 = vmatprep.subr.bf16.mxu0 %v5943
    %8128 = vmatpush1.bf16.msra.mxu0 %v5942
    %8129 = vmatprep.subr.bf16.mxu0 %v5937
    %8130 = vmatpush1.bf16.msra.mxu0 %v5936
    %8131 = vmatprep.subr.bf16.mxu0 %v5931
    %8132 = vmatpush1.bf16.msra.mxu0 %v5930
    %8133 = vmatprep.subr.bf16.mxu0 %v5925
    %8134 = vmatpush1.bf16.msra.mxu0 %v5924
    %8135 = vmatprep.subr.bf16.mxu0 %v5919
    %8136 = vmatpush1.bf16.msra.mxu0 %v5918
    %8137 = vmatprep.subr.bf16.mxu0 %v5913
    %8138 = vmatpush1.bf16.msra.mxu0 %v5912
    %8139 = vmatprep.subr.bf16.mxu0 %v5907
    %8140 = vmatpush1.bf16.msra.mxu0 %v5906
    %8141 = vmatprep.subr.bf16.mxu0 %v5997
    %8142 = vmatpush2.bf16.msra.mxu0 %v5996
    %8143 = vmatprep.subr.bf16.mxu0 %v5991
    %8144 = vmatpush2.bf16.msra.mxu0 %v5990
    %8145 = vmatprep.subr.bf16.mxu0 %v5985
    %8146 = vmatpush2.bf16.msra.mxu0 %v5984
    %8147 = vmatprep.subr.bf16.mxu0 %v5979
    %8148 = vmatpush2.bf16.msra.mxu0 %v5978
    %8149 = vmatprep.subr.bf16.mxu0 %v5973
    %8150 = vmatpush2.bf16.msra.mxu0 %v5972
    %8151 = vmatprep.subr.bf16.mxu0 %v5967
    %8152 = vmatpush2.bf16.msra.mxu0 %v5966
    %8153 = vmatprep.subr.bf16.mxu0 %v5961
    %8154 = vmatpush2.bf16.msra.mxu0 %v5960
    %8155 = vmatprep.subr.bf16.mxu0 %v5955
    %8156 = vmatpush2.bf16.msra.mxu0 %v5954
    %8157 = vmatprep.mubr.bf16.mxu0 %v7829
    %8158 = vmatmul.mubr.bf16.gmra.mxu0 %v7828
    %v8159 = vpop.f32.mrf.mxu0
    %v8160 = vadd.f32 %v8119, %v8159
    %v8161 = vpop.f32.mrf.mxu0
    %v8162 = vadd.f32 %v8121, %v8161
    %v8163 = vpop.f32.mrf.mxu0
    %v8164 = vpop.f32.mrf.mxu0
    %8165 = vdwg.mxu0
    %8166 = vmatprep.subr.bf16.mxu0 %v6045
    %8167 = vmatpush1.bf16.msra.mxu0 %v6044
    %8168 = vmatprep.subr.bf16.mxu0 %v6039
    %8169 = vmatpush1.bf16.msra.mxu0 %v6038
    %8170 = vmatprep.subr.bf16.mxu0 %v6033
    %8171 = vmatpush1.bf16.msra.mxu0 %v6032
    %8172 = vmatprep.subr.bf16.mxu0 %v6027
    %8173 = vmatpush1.bf16.msra.mxu0 %v6026
    %8174 = vmatprep.subr.bf16.mxu0 %v6021
    %8175 = vmatpush1.bf16.msra.mxu0 %v6020
    %8176 = vmatprep.subr.bf16.mxu0 %v6015
    %8177 = vmatpush1.bf16.msra.mxu0 %v6014
    %8178 = vmatprep.subr.bf16.mxu0 %v6009
    %8179 = vmatpush1.bf16.msra.mxu0 %v6008
    %8180 = vmatprep.subr.bf16.mxu0 %v6003
    %8181 = vmatpush1.bf16.msra.mxu0 %v6002
    %8182 = vmatprep.subr.bf16.mxu0 %v6093
    %8183 = vmatpush2.bf16.msra.mxu0 %v6092
    %8184 = vmatprep.subr.bf16.mxu0 %v6087
    %8185 = vmatpush2.bf16.msra.mxu0 %v6086
    %8186 = vmatprep.subr.bf16.mxu0 %v6081
    %8187 = vmatpush2.bf16.msra.mxu0 %v6080
    %8188 = vmatprep.subr.bf16.mxu0 %v6075
    %8189 = vmatpush2.bf16.msra.mxu0 %v6074
    %8190 = vmatprep.subr.bf16.mxu0 %v6069
    %8191 = vmatpush2.bf16.msra.mxu0 %v6068
    %8192 = vmatprep.subr.bf16.mxu0 %v6063
    %8193 = vmatpush2.bf16.msra.mxu0 %v6062
    %8194 = vmatprep.subr.bf16.mxu0 %v6057
    %8195 = vmatpush2.bf16.msra.mxu0 %v6056
    %8196 = vmatprep.subr.bf16.mxu0 %v6051
    %8197 = vmatpush2.bf16.msra.mxu0 %v6050
    %8198 = vmatprep.mubr.bf16.mxu0 %v7831
    %8199 = vmatmul.mubr.bf16.gmra.mxu0 %v7830
    %v8200 = vpop.f32.mrf.mxu0
    %v8201 = vadd.f32 %v8160, %v8200
    %v8202 = vpop.f32.mrf.mxu0
    %v8203 = vadd.f32 %v8162, %v8202
    %v8204 = vpop.f32.mrf.mxu0
    %v8205 = vpop.f32.mrf.mxu0
    %8206 = vdwg.mxu0
    %v8213 = vrot.slane %v7955, 4
    %v8214 = vrot.slane %v7957, 4
    %v8215 = vrot.slane %v8078, 4
    %v8216 = vrot.slane %v8080, 4
    %v8217 = vrot.slane %v8201, 4
    %v8218 = vrot.slane %v8203, 4
    %v8219 = vrot.slane %v7955, 5
    %v8220 = vrot.slane %v7957, 5
    %v8221 = vrot.slane %v8078, 5
    %v8222 = vrot.slane %v8080, 5
    %v8223 = vrot.slane %v8201, 5
    %v8224 = vrot.slane %v8203, 5
    %v8237 = vadd.f32 %v1969, %v8213
    %v8238 = vadd.f32 %v1971, %v8214
    %v8239 = vadd.f32 %v2098, %v8215
    %v8240 = vadd.f32 %v2100, %v8216
    %v8241 = vadd.f32 %v2227, %v8217
    %v8242 = vadd.f32 %v2229, %v8218
    %v8243 = vadd.f32 %v1973, %v8219
    %v8244 = vadd.f32 %v1975, %v8220
    %v8245 = vadd.f32 %v2102, %v8221
    %v8246 = vadd.f32 %v2104, %v8222
    %v8247 = vadd.f32 %v2231, %v8223
    %v8248 = vadd.f32 %v2233, %v8224
    %v8249 = vmax.f32 %v8237, 0.0
    %v8250 = vmax.f32 %v8238, 0.0
    %v8251 = vmax.f32 %v8239, 0.0
    %v8252 = vmax.f32 %v8240, 0.0
    %v8253 = vmax.f32 %v8241, 0.0
    %v8254 = vmax.f32 %v8242, 0.0
    %v8255 = vmax.f32 %v8243, 0.0
    %v8256 = vmax.f32 %v8244, 0.0
    %v8257 = vmax.f32 %v8245, 0.0
    %v8258 = vmax.f32 %v8246, 0.0
    %v8259 = vmax.f32 %v8247, 0.0
    %v8260 = vmax.f32 %v8248, 0.0
    %v8261 = vpack.c.bf16 %v8249, %v8249
    %v8262 = vpack.c.bf16 %v8250, %v8250
    %v8263 = vpack.c.bf16 %v8251, %v8251
    %v8264 = vpack.c.bf16 %v8252, %v8252
    %v8265 = vpack.c.bf16 %v8253, %v8253
    %v8266 = vpack.c.bf16 %v8254, %v8254
    %v8267 = vpack.c.bf16 %v8255, %v8255
    %v8268 = vpack.c.bf16 %v8256, %v8256
    %v8269 = vpack.c.bf16 %v8257, %v8257
    %v8270 = vpack.c.bf16 %v8258, %v8258
    %v8271 = vpack.c.bf16 %v8259, %v8259
    %v8272 = vpack.c.bf16 %v8260, %v8260
    %v8285 = vunpack.c.l.b16 %v8261
    %v8286 = vunpack.c.l.b16 %v8262
    %v8287 = vunpack.c.l.b16 %v8263
    %v8288 = vunpack.c.l.b16 %v8264
    %v8289 = vunpack.c.l.b16 %v8265
    %v8290 = vunpack.c.l.b16 %v8266
    %v8291 = vunpack.c.l.b16 %v8267
    %v8292 = vunpack.c.l.b16 %v8268
    %v8293 = vunpack.c.l.b16 %v8269
    %v8294 = vunpack.c.l.b16 %v8270
    %v8295 = vunpack.c.l.b16 %v8271
    %v8296 = vunpack.c.l.b16 %v8272
    %v8297 = vrot.slane %v8285, 4
    %v8298 = vrot.slane %v8291, 3
    %v8299 = vsel %vm6836, %v8298, %v8297
    %v8300 = vrot.slane %v8286, 4
    %v8301 = vrot.slane %v8292, 3
    %v8302 = vsel %vm6836, %v8301, %v8300
    %v8303 = vrot.slane %v8287, 4
    %v8304 = vrot.slane %v8293, 3
    %v8305 = vsel %vm6836, %v8304, %v8303
    %v8306 = vrot.slane %v8288, 4
    %v8307 = vrot.slane %v8294, 3
    %v8308 = vsel %vm6836, %v8307, %v8306
    %v8309 = vrot.slane %v8289, 4
    %v8310 = vrot.slane %v8295, 3
    %v8311 = vsel %vm6836, %v8310, %v8309
    %v8312 = vrot.slane %v8290, 4
    %v8313 = vrot.slane %v8296, 3
    %v8314 = vsel %vm6836, %v8313, %v8312
    %v8315 = vpack.c.b16 %v8299, %v8299
    %v8316 = vpack.c.b16 %v8302, %v8302
    %v8317 = vpack.c.b16 %v8305, %v8305
    %v8318 = vpack.c.b16 %v8308, %v8308
    %v8319 = vpack.c.b16 %v8311, %v8311
    %v8320 = vpack.c.b16 %v8314, %v8314
    %8327 = vmatprep.subr.bf16.mxu0 %v5849
    %8328 = vmatpush1.bf16.msra.mxu0 %v5848
    %8329 = vmatprep.subr.bf16.mxu0 %v5843
    %8330 = vmatpush1.bf16.msra.mxu0 %v5842
    %8331 = vmatprep.subr.bf16.mxu0 %v5837
    %8332 = vmatpush1.bf16.msra.mxu0 %v5836
    %8333 = vmatprep.subr.bf16.mxu0 %v5831
    %8334 = vmatpush1.bf16.msra.mxu0 %v5830
    %8335 = vmatprep.subr.bf16.mxu0 %v5825
    %8336 = vmatpush1.bf16.msra.mxu0 %v5824
    %8337 = vmatprep.subr.bf16.mxu0 %v5819
    %8338 = vmatpush1.bf16.msra.mxu0 %v5818
    %8339 = vmatprep.subr.bf16.mxu0 %v5813
    %8340 = vmatpush1.bf16.msra.mxu0 %v5812
    %8341 = vmatprep.subr.bf16.mxu0 %v5807
    %8342 = vmatpush1.bf16.msra.mxu0 %v5806
    %8343 = vmatprep.subr.bf16.mxu0 %v5897
    %8344 = vmatpush2.bf16.msra.mxu0 %v5896
    %8345 = vmatprep.subr.bf16.mxu0 %v5891
    %8346 = vmatpush2.bf16.msra.mxu0 %v5890
    %8347 = vmatprep.subr.bf16.mxu0 %v5885
    %8348 = vmatpush2.bf16.msra.mxu0 %v5884
    %8349 = vmatprep.subr.bf16.mxu0 %v5879
    %8350 = vmatpush2.bf16.msra.mxu0 %v5878
    %8351 = vmatprep.subr.bf16.mxu0 %v5873
    %8352 = vmatpush2.bf16.msra.mxu0 %v5872
    %8353 = vmatprep.subr.bf16.mxu0 %v5867
    %8354 = vmatpush2.bf16.msra.mxu0 %v5866
    %8355 = vmatprep.subr.bf16.mxu0 %v5861
    %8356 = vmatpush2.bf16.msra.mxu0 %v5860
    %8357 = vmatprep.subr.bf16.mxu0 %v5855
    %8358 = vmatpush2.bf16.msra.mxu0 %v5854
    %8359 = vmatprep.mubr.bf16.mxu0 %v8316
    %8360 = vmatmul.mubr.bf16.gmra.mxu0 %v8315
    %v8361 = vpop.f32.mrf.mxu0
    %v8362 = vadd.f32 0.0, %v8361
    %v8363 = vpop.f32.mrf.mxu0
    %v8364 = vadd.f32 0.0, %v8363
    %v8365 = vpop.f32.mrf.mxu0
    %v8366 = vpop.f32.mrf.mxu0
    %8367 = vdwg.mxu0
    %8368 = vmatprep.subr.bf16.mxu0 %v5945
    %8369 = vmatpush1.bf16.msra.mxu0 %v5944
    %8370 = vmatprep.subr.bf16.mxu0 %v5939
    %8371 = vmatpush1.bf16.msra.mxu0 %v5938
    %8372 = vmatprep.subr.bf16.mxu0 %v5933
    %8373 = vmatpush1.bf16.msra.mxu0 %v5932
    %8374 = vmatprep.subr.bf16.mxu0 %v5927
    %8375 = vmatpush1.bf16.msra.mxu0 %v5926
    %8376 = vmatprep.subr.bf16.mxu0 %v5921
    %8377 = vmatpush1.bf16.msra.mxu0 %v5920
    %8378 = vmatprep.subr.bf16.mxu0 %v5915
    %8379 = vmatpush1.bf16.msra.mxu0 %v5914
    %8380 = vmatprep.subr.bf16.mxu0 %v5909
    %8381 = vmatpush1.bf16.msra.mxu0 %v5908
    %8382 = vmatprep.subr.bf16.mxu0 %v5903
    %8383 = vmatpush1.bf16.msra.mxu0 %v5902
    %8384 = vmatprep.subr.bf16.mxu0 %v5993
    %8385 = vmatpush2.bf16.msra.mxu0 %v5992
    %8386 = vmatprep.subr.bf16.mxu0 %v5987
    %8387 = vmatpush2.bf16.msra.mxu0 %v5986
    %8388 = vmatprep.subr.bf16.mxu0 %v5981
    %8389 = vmatpush2.bf16.msra.mxu0 %v5980
    %8390 = vmatprep.subr.bf16.mxu0 %v5975
    %8391 = vmatpush2.bf16.msra.mxu0 %v5974
    %8392 = vmatprep.subr.bf16.mxu0 %v5969
    %8393 = vmatpush2.bf16.msra.mxu0 %v5968
    %8394 = vmatprep.subr.bf16.mxu0 %v5963
    %8395 = vmatpush2.bf16.msra.mxu0 %v5962
    %8396 = vmatprep.subr.bf16.mxu0 %v5957
    %8397 = vmatpush2.bf16.msra.mxu0 %v5956
    %8398 = vmatprep.subr.bf16.mxu0 %v5951
    %8399 = vmatpush2.bf16.msra.mxu0 %v5950
    %8400 = vmatprep.mubr.bf16.mxu0 %v8318
    %8401 = vmatmul.mubr.bf16.gmra.mxu0 %v8317
    %v8402 = vpop.f32.mrf.mxu0
    %v8403 = vadd.f32 %v8362, %v8402
    %v8404 = vpop.f32.mrf.mxu0
    %v8405 = vadd.f32 %v8364, %v8404
    %v8406 = vpop.f32.mrf.mxu0
    %v8407 = vpop.f32.mrf.mxu0
    %8408 = vdwg.mxu0
    %8409 = vmatprep.subr.bf16.mxu0 %v6041
    %8410 = vmatpush1.bf16.msra.mxu0 %v6040
    %8411 = vmatprep.subr.bf16.mxu0 %v6035
    %8412 = vmatpush1.bf16.msra.mxu0 %v6034
    %8413 = vmatprep.subr.bf16.mxu0 %v6029
    %8414 = vmatpush1.bf16.msra.mxu0 %v6028
    %8415 = vmatprep.subr.bf16.mxu0 %v6023
    %8416 = vmatpush1.bf16.msra.mxu0 %v6022
    %8417 = vmatprep.subr.bf16.mxu0 %v6017
    %8418 = vmatpush1.bf16.msra.mxu0 %v6016
    %8419 = vmatprep.subr.bf16.mxu0 %v6011
    %8420 = vmatpush1.bf16.msra.mxu0 %v6010
    %8421 = vmatprep.subr.bf16.mxu0 %v6005
    %8422 = vmatpush1.bf16.msra.mxu0 %v6004
    %8423 = vmatprep.subr.bf16.mxu0 %v5999
    %8424 = vmatpush1.bf16.msra.mxu0 %v5998
    %8425 = vmatprep.subr.bf16.mxu0 %v6089
    %8426 = vmatpush2.bf16.msra.mxu0 %v6088
    %8427 = vmatprep.subr.bf16.mxu0 %v6083
    %8428 = vmatpush2.bf16.msra.mxu0 %v6082
    %8429 = vmatprep.subr.bf16.mxu0 %v6077
    %8430 = vmatpush2.bf16.msra.mxu0 %v6076
    %8431 = vmatprep.subr.bf16.mxu0 %v6071
    %8432 = vmatpush2.bf16.msra.mxu0 %v6070
    %8433 = vmatprep.subr.bf16.mxu0 %v6065
    %8434 = vmatpush2.bf16.msra.mxu0 %v6064
    %8435 = vmatprep.subr.bf16.mxu0 %v6059
    %8436 = vmatpush2.bf16.msra.mxu0 %v6058
    %8437 = vmatprep.subr.bf16.mxu0 %v6053
    %8438 = vmatpush2.bf16.msra.mxu0 %v6052
    %8439 = vmatprep.subr.bf16.mxu0 %v6047
    %8440 = vmatpush2.bf16.msra.mxu0 %v6046
    %8441 = vmatprep.mubr.bf16.mxu0 %v8320
    %8442 = vmatmul.mubr.bf16.gmra.mxu0 %v8319
    %v8443 = vpop.f32.mrf.mxu0
    %v8444 = vadd.f32 %v8403, %v8443
    %v8445 = vpop.f32.mrf.mxu0
    %v8446 = vadd.f32 %v8405, %v8445
    %v8447 = vpop.f32.mrf.mxu0
    %v8448 = vpop.f32.mrf.mxu0
    %8449 = vdwg.mxu0
    %8450 = vmatprep.subr.bf16.mxu0 %v5851
    %8451 = vmatpush1.bf16.msra.mxu0 %v5850
    %8452 = vmatprep.subr.bf16.mxu0 %v5845
    %8453 = vmatpush1.bf16.msra.mxu0 %v5844
    %8454 = vmatprep.subr.bf16.mxu0 %v5839
    %8455 = vmatpush1.bf16.msra.mxu0 %v5838
    %8456 = vmatprep.subr.bf16.mxu0 %v5833
    %8457 = vmatpush1.bf16.msra.mxu0 %v5832
    %8458 = vmatprep.subr.bf16.mxu0 %v5827
    %8459 = vmatpush1.bf16.msra.mxu0 %v5826
    %8460 = vmatprep.subr.bf16.mxu0 %v5821
    %8461 = vmatpush1.bf16.msra.mxu0 %v5820
    %8462 = vmatprep.subr.bf16.mxu0 %v5815
    %8463 = vmatpush1.bf16.msra.mxu0 %v5814
    %8464 = vmatprep.subr.bf16.mxu0 %v5809
    %8465 = vmatpush1.bf16.msra.mxu0 %v5808
    %8466 = vmatprep.subr.bf16.mxu0 %v5899
    %8467 = vmatpush2.bf16.msra.mxu0 %v5898
    %8468 = vmatprep.subr.bf16.mxu0 %v5893
    %8469 = vmatpush2.bf16.msra.mxu0 %v5892
    %8470 = vmatprep.subr.bf16.mxu0 %v5887
    %8471 = vmatpush2.bf16.msra.mxu0 %v5886
    %8472 = vmatprep.subr.bf16.mxu0 %v5881
    %8473 = vmatpush2.bf16.msra.mxu0 %v5880
    %8474 = vmatprep.subr.bf16.mxu0 %v5875
    %8475 = vmatpush2.bf16.msra.mxu0 %v5874
    %8476 = vmatprep.subr.bf16.mxu0 %v5869
    %8477 = vmatpush2.bf16.msra.mxu0 %v5868
    %8478 = vmatprep.subr.bf16.mxu0 %v5863
    %8479 = vmatpush2.bf16.msra.mxu0 %v5862
    %8480 = vmatprep.subr.bf16.mxu0 %v5857
    %8481 = vmatpush2.bf16.msra.mxu0 %v5856
    %8482 = vmatprep.mubr.bf16.mxu0 %v8316
    %8483 = vmatmul.mubr.bf16.gmra.mxu0 %v8315
    %v8484 = vpop.f32.mrf.mxu0
    %v8485 = vadd.f32 0.0, %v8484
    %v8486 = vpop.f32.mrf.mxu0
    %v8487 = vadd.f32 0.0, %v8486
    %v8488 = vpop.f32.mrf.mxu0
    %v8489 = vpop.f32.mrf.mxu0
    %8490 = vdwg.mxu0
    %8491 = vmatprep.subr.bf16.mxu0 %v5947
    %8492 = vmatpush1.bf16.msra.mxu0 %v5946
    %8493 = vmatprep.subr.bf16.mxu0 %v5941
    %8494 = vmatpush1.bf16.msra.mxu0 %v5940
    %8495 = vmatprep.subr.bf16.mxu0 %v5935
    %8496 = vmatpush1.bf16.msra.mxu0 %v5934
    %8497 = vmatprep.subr.bf16.mxu0 %v5929
    %8498 = vmatpush1.bf16.msra.mxu0 %v5928
    %8499 = vmatprep.subr.bf16.mxu0 %v5923
    %8500 = vmatpush1.bf16.msra.mxu0 %v5922
    %8501 = vmatprep.subr.bf16.mxu0 %v5917
    %8502 = vmatpush1.bf16.msra.mxu0 %v5916
    %8503 = vmatprep.subr.bf16.mxu0 %v5911
    %8504 = vmatpush1.bf16.msra.mxu0 %v5910
    %8505 = vmatprep.subr.bf16.mxu0 %v5905
    %8506 = vmatpush1.bf16.msra.mxu0 %v5904
    %8507 = vmatprep.subr.bf16.mxu0 %v5995
    %8508 = vmatpush2.bf16.msra.mxu0 %v5994
    %8509 = vmatprep.subr.bf16.mxu0 %v5989
    %8510 = vmatpush2.bf16.msra.mxu0 %v5988
    %8511 = vmatprep.subr.bf16.mxu0 %v5983
    %8512 = vmatpush2.bf16.msra.mxu0 %v5982
    %8513 = vmatprep.subr.bf16.mxu0 %v5977
    %8514 = vmatpush2.bf16.msra.mxu0 %v5976
    %8515 = vmatprep.subr.bf16.mxu0 %v5971
    %8516 = vmatpush2.bf16.msra.mxu0 %v5970
    %8517 = vmatprep.subr.bf16.mxu0 %v5965
    %8518 = vmatpush2.bf16.msra.mxu0 %v5964
    %8519 = vmatprep.subr.bf16.mxu0 %v5959
    %8520 = vmatpush2.bf16.msra.mxu0 %v5958
    %8521 = vmatprep.subr.bf16.mxu0 %v5953
    %8522 = vmatpush2.bf16.msra.mxu0 %v5952
    %8523 = vmatprep.mubr.bf16.mxu0 %v8318
    %8524 = vmatmul.mubr.bf16.gmra.mxu0 %v8317
    %v8525 = vpop.f32.mrf.mxu0
    %v8526 = vadd.f32 %v8485, %v8525
    %v8527 = vpop.f32.mrf.mxu0
    %v8528 = vadd.f32 %v8487, %v8527
    %v8529 = vpop.f32.mrf.mxu0
    %v8530 = vpop.f32.mrf.mxu0
    %8531 = vdwg.mxu0
    %8532 = vmatprep.subr.bf16.mxu0 %v6043
    %8533 = vmatpush1.bf16.msra.mxu0 %v6042
    %8534 = vmatprep.subr.bf16.mxu0 %v6037
    %8535 = vmatpush1.bf16.msra.mxu0 %v6036
    %8536 = vmatprep.subr.bf16.mxu0 %v6031
    %8537 = vmatpush1.bf16.msra.mxu0 %v6030
    %8538 = vmatprep.subr.bf16.mxu0 %v6025
    %8539 = vmatpush1.bf16.msra.mxu0 %v6024
    %8540 = vmatprep.subr.bf16.mxu0 %v6019
    %8541 = vmatpush1.bf16.msra.mxu0 %v6018
    %8542 = vmatprep.subr.bf16.mxu0 %v6013
    %8543 = vmatpush1.bf16.msra.mxu0 %v6012
    %8544 = vmatprep.subr.bf16.mxu0 %v6007
    %8545 = vmatpush1.bf16.msra.mxu0 %v6006
    %8546 = vmatprep.subr.bf16.mxu0 %v6001
    %8547 = vmatpush1.bf16.msra.mxu0 %v6000
    %8548 = vmatprep.subr.bf16.mxu0 %v6091
    %8549 = vmatpush2.bf16.msra.mxu0 %v6090
    %8550 = vmatprep.subr.bf16.mxu0 %v6085
    %8551 = vmatpush2.bf16.msra.mxu0 %v6084
    %8552 = vmatprep.subr.bf16.mxu0 %v6079
    %8553 = vmatpush2.bf16.msra.mxu0 %v6078
    %8554 = vmatprep.subr.bf16.mxu0 %v6073
    %8555 = vmatpush2.bf16.msra.mxu0 %v6072
    %8556 = vmatprep.subr.bf16.mxu0 %v6067
    %8557 = vmatpush2.bf16.msra.mxu0 %v6066
    %8558 = vmatprep.subr.bf16.mxu0 %v6061
    %8559 = vmatpush2.bf16.msra.mxu0 %v6060
    %8560 = vmatprep.subr.bf16.mxu0 %v6055
    %8561 = vmatpush2.bf16.msra.mxu0 %v6054
    %8562 = vmatprep.subr.bf16.mxu0 %v6049
    %8563 = vmatpush2.bf16.msra.mxu0 %v6048
    %8564 = vmatprep.mubr.bf16.mxu0 %v8320
    %8565 = vmatmul.mubr.bf16.gmra.mxu0 %v8319
    %v8566 = vpop.f32.mrf.mxu0
    %v8567 = vadd.f32 %v8526, %v8566
    %v8568 = vpop.f32.mrf.mxu0
    %v8569 = vadd.f32 %v8528, %v8568
    %v8570 = vpop.f32.mrf.mxu0
    %v8571 = vpop.f32.mrf.mxu0
    %8572 = vdwg.mxu0
    %8573 = vmatprep.subr.bf16.mxu0 %v5853
    %8574 = vmatpush1.bf16.msra.mxu0 %v5852
    %8575 = vmatprep.subr.bf16.mxu0 %v5847
    %8576 = vmatpush1.bf16.msra.mxu0 %v5846
    %8577 = vmatprep.subr.bf16.mxu0 %v5841
    %8578 = vmatpush1.bf16.msra.mxu0 %v5840
    %8579 = vmatprep.subr.bf16.mxu0 %v5835
    %8580 = vmatpush1.bf16.msra.mxu0 %v5834
    %8581 = vmatprep.subr.bf16.mxu0 %v5829
    %8582 = vmatpush1.bf16.msra.mxu0 %v5828
    %8583 = vmatprep.subr.bf16.mxu0 %v5823
    %8584 = vmatpush1.bf16.msra.mxu0 %v5822
    %8585 = vmatprep.subr.bf16.mxu0 %v5817
    %8586 = vmatpush1.bf16.msra.mxu0 %v5816
    %8587 = vmatprep.subr.bf16.mxu0 %v5811
    %8588 = vmatpush1.bf16.msra.mxu0 %v5810
    %8589 = vmatprep.subr.bf16.mxu0 %v5901
    %8590 = vmatpush2.bf16.msra.mxu0 %v5900
    %8591 = vmatprep.subr.bf16.mxu0 %v5895
    %8592 = vmatpush2.bf16.msra.mxu0 %v5894
    %8593 = vmatprep.subr.bf16.mxu0 %v5889
    %8594 = vmatpush2.bf16.msra.mxu0 %v5888
    %8595 = vmatprep.subr.bf16.mxu0 %v5883
    %8596 = vmatpush2.bf16.msra.mxu0 %v5882
    %8597 = vmatprep.subr.bf16.mxu0 %v5877
    %8598 = vmatpush2.bf16.msra.mxu0 %v5876
    %8599 = vmatprep.subr.bf16.mxu0 %v5871
    %8600 = vmatpush2.bf16.msra.mxu0 %v5870
    %8601 = vmatprep.subr.bf16.mxu0 %v5865
    %8602 = vmatpush2.bf16.msra.mxu0 %v5864
    %8603 = vmatprep.subr.bf16.mxu0 %v5859
    %8604 = vmatpush2.bf16.msra.mxu0 %v5858
    %8605 = vmatprep.mubr.bf16.mxu0 %v8316
    %8606 = vmatmul.mubr.bf16.gmra.mxu0 %v8315
    %v8607 = vpop.f32.mrf.mxu0
    %v8608 = vadd.f32 0.0, %v8607
    %v8609 = vpop.f32.mrf.mxu0
    %v8610 = vadd.f32 0.0, %v8609
    %v8611 = vpop.f32.mrf.mxu0
    %v8612 = vpop.f32.mrf.mxu0
    %8613 = vdwg.mxu0
    %8614 = vmatprep.subr.bf16.mxu0 %v5949
    %8615 = vmatpush1.bf16.msra.mxu0 %v5948
    %8616 = vmatprep.subr.bf16.mxu0 %v5943
    %8617 = vmatpush1.bf16.msra.mxu0 %v5942
    %8618 = vmatprep.subr.bf16.mxu0 %v5937
    %8619 = vmatpush1.bf16.msra.mxu0 %v5936
    %8620 = vmatprep.subr.bf16.mxu0 %v5931
    %8621 = vmatpush1.bf16.msra.mxu0 %v5930
    %8622 = vmatprep.subr.bf16.mxu0 %v5925
    %8623 = vmatpush1.bf16.msra.mxu0 %v5924
    %8624 = vmatprep.subr.bf16.mxu0 %v5919
    %8625 = vmatpush1.bf16.msra.mxu0 %v5918
    %8626 = vmatprep.subr.bf16.mxu0 %v5913
    %8627 = vmatpush1.bf16.msra.mxu0 %v5912
    %8628 = vmatprep.subr.bf16.mxu0 %v5907
    %8629 = vmatpush1.bf16.msra.mxu0 %v5906
    %8630 = vmatprep.subr.bf16.mxu0 %v5997
    %8631 = vmatpush2.bf16.msra.mxu0 %v5996
    %8632 = vmatprep.subr.bf16.mxu0 %v5991
    %8633 = vmatpush2.bf16.msra.mxu0 %v5990
    %8634 = vmatprep.subr.bf16.mxu0 %v5985
    %8635 = vmatpush2.bf16.msra.mxu0 %v5984
    %8636 = vmatprep.subr.bf16.mxu0 %v5979
    %8637 = vmatpush2.bf16.msra.mxu0 %v5978
    %8638 = vmatprep.subr.bf16.mxu0 %v5973
    %8639 = vmatpush2.bf16.msra.mxu0 %v5972
    %8640 = vmatprep.subr.bf16.mxu0 %v5967
    %8641 = vmatpush2.bf16.msra.mxu0 %v5966
    %8642 = vmatprep.subr.bf16.mxu0 %v5961
    %8643 = vmatpush2.bf16.msra.mxu0 %v5960
    %8644 = vmatprep.subr.bf16.mxu0 %v5955
    %8645 = vmatpush2.bf16.msra.mxu0 %v5954
    %8646 = vmatprep.mubr.bf16.mxu0 %v8318
    %8647 = vmatmul.mubr.bf16.gmra.mxu0 %v8317
    %v8648 = vpop.f32.mrf.mxu0
    %v8649 = vadd.f32 %v8608, %v8648
    %v8650 = vpop.f32.mrf.mxu0
    %v8651 = vadd.f32 %v8610, %v8650
    %v8652 = vpop.f32.mrf.mxu0
    %v8653 = vpop.f32.mrf.mxu0
    %8654 = vdwg.mxu0
    %8655 = vmatprep.subr.bf16.mxu0 %v6045
    %8656 = vmatpush1.bf16.msra.mxu0 %v6044
    %8657 = vmatprep.subr.bf16.mxu0 %v6039
    %8658 = vmatpush1.bf16.msra.mxu0 %v6038
    %8659 = vmatprep.subr.bf16.mxu0 %v6033
    %8660 = vmatpush1.bf16.msra.mxu0 %v6032
    %8661 = vmatprep.subr.bf16.mxu0 %v6027
    %8662 = vmatpush1.bf16.msra.mxu0 %v6026
    %8663 = vmatprep.subr.bf16.mxu0 %v6021
    %8664 = vmatpush1.bf16.msra.mxu0 %v6020
    %8665 = vmatprep.subr.bf16.mxu0 %v6015
    %8666 = vmatpush1.bf16.msra.mxu0 %v6014
    %8667 = vmatprep.subr.bf16.mxu0 %v6009
    %8668 = vmatpush1.bf16.msra.mxu0 %v6008
    %8669 = vmatprep.subr.bf16.mxu0 %v6003
    %8670 = vmatpush1.bf16.msra.mxu0 %v6002
    %8671 = vmatprep.subr.bf16.mxu0 %v6093
    %8672 = vmatpush2.bf16.msra.mxu0 %v6092
    %8673 = vmatprep.subr.bf16.mxu0 %v6087
    %8674 = vmatpush2.bf16.msra.mxu0 %v6086
    %8675 = vmatprep.subr.bf16.mxu0 %v6081
    %8676 = vmatpush2.bf16.msra.mxu0 %v6080
    %8677 = vmatprep.subr.bf16.mxu0 %v6075
    %8678 = vmatpush2.bf16.msra.mxu0 %v6074
    %8679 = vmatprep.subr.bf16.mxu0 %v6069
    %8680 = vmatpush2.bf16.msra.mxu0 %v6068
    %8681 = vmatprep.subr.bf16.mxu0 %v6063
    %8682 = vmatpush2.bf16.msra.mxu0 %v6062
    %8683 = vmatprep.subr.bf16.mxu0 %v6057
    %8684 = vmatpush2.bf16.msra.mxu0 %v6056
    %8685 = vmatprep.subr.bf16.mxu0 %v6051
    %8686 = vmatpush2.bf16.msra.mxu0 %v6050
    %8687 = vmatprep.mubr.bf16.mxu0 %v8320
    %8688 = vmatmul.mubr.bf16.gmra.mxu0 %v8319
    %v8689 = vpop.f32.mrf.mxu0
    %v8690 = vadd.f32 %v8649, %v8689
    %v8691 = vpop.f32.mrf.mxu0
    %v8692 = vadd.f32 %v8651, %v8691
    %v8693 = vpop.f32.mrf.mxu0
    %v8694 = vpop.f32.mrf.mxu0
    %8695 = vdwg.mxu0
    %v8702 = vrot.slane %v8444, 3
    %v8703 = vrot.slane %v8446, 3
    %v8704 = vrot.slane %v8567, 3
    %v8705 = vrot.slane %v8569, 3
    %v8706 = vrot.slane %v8690, 3
    %v8707 = vrot.slane %v8692, 3
    %v8708 = vrot.slane %v8444, 4
    %v8709 = vrot.slane %v8446, 4
    %v8710 = vrot.slane %v8567, 4
    %v8711 = vrot.slane %v8569, 4
    %v8712 = vrot.slane %v8690, 4
    %v8713 = vrot.slane %v8692, 4
    %v8726 = vadd.f32 %v1969, %v8702
    %v8727 = vadd.f32 %v1971, %v8703
    %v8728 = vadd.f32 %v2098, %v8704
    %v8729 = vadd.f32 %v2100, %v8705
    %v8730 = vadd.f32 %v2227, %v8706
    %v8731 = vadd.f32 %v2229, %v8707
    %v8732 = vadd.f32 %v1973, %v8708
    %v8733 = vadd.f32 %v1975, %v8709
    %v8734 = vadd.f32 %v2102, %v8710
    %v8735 = vadd.f32 %v2104, %v8711
    %v8736 = vadd.f32 %v2231, %v8712
    %v8737 = vadd.f32 %v2233, %v8713
    %v8738 = vmax.f32 %v8726, 0.0
    %v8739 = vmax.f32 %v8727, 0.0
    %v8740 = vmax.f32 %v8728, 0.0
    %v8741 = vmax.f32 %v8729, 0.0
    %v8742 = vmax.f32 %v8730, 0.0
    %v8743 = vmax.f32 %v8731, 0.0
    %v8744 = vmax.f32 %v8732, 0.0
    %v8745 = vmax.f32 %v8733, 0.0
    %v8746 = vmax.f32 %v8734, 0.0
    %v8747 = vmax.f32 %v8735, 0.0
    %v8748 = vmax.f32 %v8736, 0.0
    %v8749 = vmax.f32 %v8737, 0.0
    %v8750 = vpack.c.bf16 %v8738, %v8738
    %v8751 = vpack.c.bf16 %v8739, %v8739
    %v8752 = vpack.c.bf16 %v8740, %v8740
    %v8753 = vpack.c.bf16 %v8741, %v8741
    %v8754 = vpack.c.bf16 %v8742, %v8742
    %v8755 = vpack.c.bf16 %v8743, %v8743
    %v8756 = vpack.c.bf16 %v8744, %v8744
    %v8757 = vpack.c.bf16 %v8745, %v8745
    %v8758 = vpack.c.bf16 %v8746, %v8746
    %v8759 = vpack.c.bf16 %v8747, %v8747
    %v8760 = vpack.c.bf16 %v8748, %v8748
    %v8761 = vpack.c.bf16 %v8749, %v8749
    %v8774 = vunpack.c.l.b16 %v8750
    %v8775 = vunpack.c.l.b16 %v8751
    %v8776 = vunpack.c.l.b16 %v8752
    %v8777 = vunpack.c.l.b16 %v8753
    %v8778 = vunpack.c.l.b16 %v8754
    %v8779 = vunpack.c.l.b16 %v8755
    %v8780 = vunpack.c.l.b16 %v8756
    %v8781 = vunpack.c.l.b16 %v8757
    %v8782 = vunpack.c.l.b16 %v8758
    %v8783 = vunpack.c.l.b16 %v8759
    %v8784 = vunpack.c.l.b16 %v8760
    %v8785 = vunpack.c.l.b16 %v8761
    %v8786 = vrot.slane %v8774, 5
    %v8787 = vrot.slane %v8780, 4
    %v8788 = vsel %vm6836, %v8787, %v8786
    %v8789 = vrot.slane %v8775, 5
    %v8790 = vrot.slane %v8781, 4
    %v8791 = vsel %vm6836, %v8790, %v8789
    %v8792 = vrot.slane %v8776, 5
    %v8793 = vrot.slane %v8782, 4
    %v8794 = vsel %vm6836, %v8793, %v8792
    %v8795 = vrot.slane %v8777, 5
    %v8796 = vrot.slane %v8783, 4
    %v8797 = vsel %vm6836, %v8796, %v8795
    %v8798 = vrot.slane %v8778, 5
    %v8799 = vrot.slane %v8784, 4
    %v8800 = vsel %vm6836, %v8799, %v8798
    %v8801 = vrot.slane %v8779, 5
    %v8802 = vrot.slane %v8785, 4
    %v8803 = vsel %vm6836, %v8802, %v8801
    %v8804 = vpack.c.b16 %v8788, %v8788
    %v8805 = vpack.c.b16 %v8791, %v8791
    %v8806 = vpack.c.b16 %v8794, %v8794
    %v8807 = vpack.c.b16 %v8797, %v8797
    %v8808 = vpack.c.b16 %v8800, %v8800
    %v8809 = vpack.c.b16 %v8803, %v8803
    %8816 = vmatprep.subr.bf16.mxu0 %v5849
    %8817 = vmatpush1.bf16.msra.mxu0 %v5848
    %8818 = vmatprep.subr.bf16.mxu0 %v5843
    %8819 = vmatpush1.bf16.msra.mxu0 %v5842
    %8820 = vmatprep.subr.bf16.mxu0 %v5837
    %8821 = vmatpush1.bf16.msra.mxu0 %v5836
    %8822 = vmatprep.subr.bf16.mxu0 %v5831
    %8823 = vmatpush1.bf16.msra.mxu0 %v5830
    %8824 = vmatprep.subr.bf16.mxu0 %v5825
    %8825 = vmatpush1.bf16.msra.mxu0 %v5824
    %8826 = vmatprep.subr.bf16.mxu0 %v5819
    %8827 = vmatpush1.bf16.msra.mxu0 %v5818
    %8828 = vmatprep.subr.bf16.mxu0 %v5813
    %8829 = vmatpush1.bf16.msra.mxu0 %v5812
    %8830 = vmatprep.subr.bf16.mxu0 %v5807
    %8831 = vmatpush1.bf16.msra.mxu0 %v5806
    %8832 = vmatprep.subr.bf16.mxu0 %v5897
    %8833 = vmatpush2.bf16.msra.mxu0 %v5896
    %8834 = vmatprep.subr.bf16.mxu0 %v5891
    %8835 = vmatpush2.bf16.msra.mxu0 %v5890
    %8836 = vmatprep.subr.bf16.mxu0 %v5885
    %8837 = vmatpush2.bf16.msra.mxu0 %v5884
    %8838 = vmatprep.subr.bf16.mxu0 %v5879
    %8839 = vmatpush2.bf16.msra.mxu0 %v5878
    %8840 = vmatprep.subr.bf16.mxu0 %v5873
    %8841 = vmatpush2.bf16.msra.mxu0 %v5872
    %8842 = vmatprep.subr.bf16.mxu0 %v5867
    %8843 = vmatpush2.bf16.msra.mxu0 %v5866
    %8844 = vmatprep.subr.bf16.mxu0 %v5861
    %8845 = vmatpush2.bf16.msra.mxu0 %v5860
    %8846 = vmatprep.subr.bf16.mxu0 %v5855
    %8847 = vmatpush2.bf16.msra.mxu0 %v5854
    %8848 = vmatprep.mubr.bf16.mxu0 %v8805
    %8849 = vmatmul.mubr.bf16.gmra.mxu0 %v8804
    %v8850 = vpop.f32.mrf.mxu0
    %v8851 = vadd.f32 0.0, %v8850
    %v8852 = vpop.f32.mrf.mxu0
    %v8853 = vadd.f32 0.0, %v8852
    %v8854 = vpop.f32.mrf.mxu0
    %v8855 = vpop.f32.mrf.mxu0
    %8856 = vdwg.mxu0
    %8857 = vmatprep.subr.bf16.mxu0 %v5945
    %8858 = vmatpush1.bf16.msra.mxu0 %v5944
    %8859 = vmatprep.subr.bf16.mxu0 %v5939
    %8860 = vmatpush1.bf16.msra.mxu0 %v5938
    %8861 = vmatprep.subr.bf16.mxu0 %v5933
    %8862 = vmatpush1.bf16.msra.mxu0 %v5932
    %8863 = vmatprep.subr.bf16.mxu0 %v5927
    %8864 = vmatpush1.bf16.msra.mxu0 %v5926
    %8865 = vmatprep.subr.bf16.mxu0 %v5921
    %8866 = vmatpush1.bf16.msra.mxu0 %v5920
    %8867 = vmatprep.subr.bf16.mxu0 %v5915
    %8868 = vmatpush1.bf16.msra.mxu0 %v5914
    %8869 = vmatprep.subr.bf16.mxu0 %v5909
    %8870 = vmatpush1.bf16.msra.mxu0 %v5908
    %8871 = vmatprep.subr.bf16.mxu0 %v5903
    %8872 = vmatpush1.bf16.msra.mxu0 %v5902
    %8873 = vmatprep.subr.bf16.mxu0 %v5993
    %8874 = vmatpush2.bf16.msra.mxu0 %v5992
    %8875 = vmatprep.subr.bf16.mxu0 %v5987
    %8876 = vmatpush2.bf16.msra.mxu0 %v5986
    %8877 = vmatprep.subr.bf16.mxu0 %v5981
    %8878 = vmatpush2.bf16.msra.mxu0 %v5980
    %8879 = vmatprep.subr.bf16.mxu0 %v5975
    %8880 = vmatpush2.bf16.msra.mxu0 %v5974
    %8881 = vmatprep.subr.bf16.mxu0 %v5969
    %8882 = vmatpush2.bf16.msra.mxu0 %v5968
    %8883 = vmatprep.subr.bf16.mxu0 %v5963
    %8884 = vmatpush2.bf16.msra.mxu0 %v5962
    %8885 = vmatprep.subr.bf16.mxu0 %v5957
    %8886 = vmatpush2.bf16.msra.mxu0 %v5956
    %8887 = vmatprep.subr.bf16.mxu0 %v5951
    %8888 = vmatpush2.bf16.msra.mxu0 %v5950
    %8889 = vmatprep.mubr.bf16.mxu0 %v8807
    %8890 = vmatmul.mubr.bf16.gmra.mxu0 %v8806
    %v8891 = vpop.f32.mrf.mxu0
    %v8892 = vadd.f32 %v8851, %v8891
    %v8893 = vpop.f32.mrf.mxu0
    %v8894 = vadd.f32 %v8853, %v8893
    %v8895 = vpop.f32.mrf.mxu0
    %v8896 = vpop.f32.mrf.mxu0
    %8897 = vdwg.mxu0
    %8898 = vmatprep.subr.bf16.mxu0 %v6041
    %8899 = vmatpush1.bf16.msra.mxu0 %v6040
    %8900 = vmatprep.subr.bf16.mxu0 %v6035
    %8901 = vmatpush1.bf16.msra.mxu0 %v6034
    %8902 = vmatprep.subr.bf16.mxu0 %v6029
    %8903 = vmatpush1.bf16.msra.mxu0 %v6028
    %8904 = vmatprep.subr.bf16.mxu0 %v6023
    %8905 = vmatpush1.bf16.msra.mxu0 %v6022
    %8906 = vmatprep.subr.bf16.mxu0 %v6017
    %8907 = vmatpush1.bf16.msra.mxu0 %v6016
    %8908 = vmatprep.subr.bf16.mxu0 %v6011
    %8909 = vmatpush1.bf16.msra.mxu0 %v6010
    %8910 = vmatprep.subr.bf16.mxu0 %v6005
    %8911 = vmatpush1.bf16.msra.mxu0 %v6004
    %8912 = vmatprep.subr.bf16.mxu0 %v5999
    %8913 = vmatpush1.bf16.msra.mxu0 %v5998
    %8914 = vmatprep.subr.bf16.mxu0 %v6089
    %8915 = vmatpush2.bf16.msra.mxu0 %v6088
    %8916 = vmatprep.subr.bf16.mxu0 %v6083
    %8917 = vmatpush2.bf16.msra.mxu0 %v6082
    %8918 = vmatprep.subr.bf16.mxu0 %v6077
    %8919 = vmatpush2.bf16.msra.mxu0 %v6076
    %8920 = vmatprep.subr.bf16.mxu0 %v6071
    %8921 = vmatpush2.bf16.msra.mxu0 %v6070
    %8922 = vmatprep.subr.bf16.mxu0 %v6065
    %8923 = vmatpush2.bf16.msra.mxu0 %v6064
    %8924 = vmatprep.subr.bf16.mxu0 %v6059
    %8925 = vmatpush2.bf16.msra.mxu0 %v6058
    %8926 = vmatprep.subr.bf16.mxu0 %v6053
    %8927 = vmatpush2.bf16.msra.mxu0 %v6052
    %8928 = vmatprep.subr.bf16.mxu0 %v6047
    %8929 = vmatpush2.bf16.msra.mxu0 %v6046
    %8930 = vmatprep.mubr.bf16.mxu0 %v8809
    %8931 = vmatmul.mubr.bf16.gmra.mxu0 %v8808
    %v8932 = vpop.f32.mrf.mxu0
    %v8933 = vadd.f32 %v8892, %v8932
    %v8934 = vpop.f32.mrf.mxu0
    %v8935 = vadd.f32 %v8894, %v8934
    %v8936 = vpop.f32.mrf.mxu0
    %v8937 = vpop.f32.mrf.mxu0
    %8938 = vdwg.mxu0
    %8939 = vmatprep.subr.bf16.mxu0 %v5851
    %8940 = vmatpush1.bf16.msra.mxu0 %v5850
    %8941 = vmatprep.subr.bf16.mxu0 %v5845
    %8942 = vmatpush1.bf16.msra.mxu0 %v5844
    %8943 = vmatprep.subr.bf16.mxu0 %v5839
    %8944 = vmatpush1.bf16.msra.mxu0 %v5838
    %8945 = vmatprep.subr.bf16.mxu0 %v5833
    %8946 = vmatpush1.bf16.msra.mxu0 %v5832
    %8947 = vmatprep.subr.bf16.mxu0 %v5827
    %8948 = vmatpush1.bf16.msra.mxu0 %v5826
    %8949 = vmatprep.subr.bf16.mxu0 %v5821
    %8950 = vmatpush1.bf16.msra.mxu0 %v5820
    %8951 = vmatprep.subr.bf16.mxu0 %v5815
    %8952 = vmatpush1.bf16.msra.mxu0 %v5814
    %8953 = vmatprep.subr.bf16.mxu0 %v5809
    %8954 = vmatpush1.bf16.msra.mxu0 %v5808
    %8955 = vmatprep.subr.bf16.mxu0 %v5899
    %8956 = vmatpush2.bf16.msra.mxu0 %v5898
    %8957 = vmatprep.subr.bf16.mxu0 %v5893
    %8958 = vmatpush2.bf16.msra.mxu0 %v5892
    %8959 = vmatprep.subr.bf16.mxu0 %v5887
    %8960 = vmatpush2.bf16.msra.mxu0 %v5886
    %8961 = vmatprep.subr.bf16.mxu0 %v5881
    %8962 = vmatpush2.bf16.msra.mxu0 %v5880
    %8963 = vmatprep.subr.bf16.mxu0 %v5875
    %8964 = vmatpush2.bf16.msra.mxu0 %v5874
    %8965 = vmatprep.subr.bf16.mxu0 %v5869
    %8966 = vmatpush2.bf16.msra.mxu0 %v5868
    %8967 = vmatprep.subr.bf16.mxu0 %v5863
    %8968 = vmatpush2.bf16.msra.mxu0 %v5862
    %8969 = vmatprep.subr.bf16.mxu0 %v5857
    %8970 = vmatpush2.bf16.msra.mxu0 %v5856
    %8971 = vmatprep.mubr.bf16.mxu0 %v8805
    %8972 = vmatmul.mubr.bf16.gmra.mxu0 %v8804
    %v8973 = vpop.f32.mrf.mxu0
    %v8974 = vadd.f32 0.0, %v8973
    %v8975 = vpop.f32.mrf.mxu0
    %v8976 = vadd.f32 0.0, %v8975
    %v8977 = vpop.f32.mrf.mxu0
    %v8978 = vpop.f32.mrf.mxu0
    %8979 = vdwg.mxu0
    %8980 = vmatprep.subr.bf16.mxu0 %v5947
    %8981 = vmatpush1.bf16.msra.mxu0 %v5946
    %8982 = vmatprep.subr.bf16.mxu0 %v5941
    %8983 = vmatpush1.bf16.msra.mxu0 %v5940
    %8984 = vmatprep.subr.bf16.mxu0 %v5935
    %8985 = vmatpush1.bf16.msra.mxu0 %v5934
    %8986 = vmatprep.subr.bf16.mxu0 %v5929
    %8987 = vmatpush1.bf16.msra.mxu0 %v5928
    %8988 = vmatprep.subr.bf16.mxu0 %v5923
    %8989 = vmatpush1.bf16.msra.mxu0 %v5922
    %8990 = vmatprep.subr.bf16.mxu0 %v5917
    %8991 = vmatpush1.bf16.msra.mxu0 %v5916
    %8992 = vmatprep.subr.bf16.mxu0 %v5911
    %8993 = vmatpush1.bf16.msra.mxu0 %v5910
    %8994 = vmatprep.subr.bf16.mxu0 %v5905
    %8995 = vmatpush1.bf16.msra.mxu0 %v5904
    %8996 = vmatprep.subr.bf16.mxu0 %v5995
    %8997 = vmatpush2.bf16.msra.mxu0 %v5994
    %8998 = vmatprep.subr.bf16.mxu0 %v5989
    %8999 = vmatpush2.bf16.msra.mxu0 %v5988
    %9000 = vmatprep.subr.bf16.mxu0 %v5983
    %9001 = vmatpush2.bf16.msra.mxu0 %v5982
    %9002 = vmatprep.subr.bf16.mxu0 %v5977
    %9003 = vmatpush2.bf16.msra.mxu0 %v5976
    %9004 = vmatprep.subr.bf16.mxu0 %v5971
    %9005 = vmatpush2.bf16.msra.mxu0 %v5970
    %9006 = vmatprep.subr.bf16.mxu0 %v5965
    %9007 = vmatpush2.bf16.msra.mxu0 %v5964
    %9008 = vmatprep.subr.bf16.mxu0 %v5959
    %9009 = vmatpush2.bf16.msra.mxu0 %v5958
    %9010 = vmatprep.subr.bf16.mxu0 %v5953
    %9011 = vmatpush2.bf16.msra.mxu0 %v5952
    %9012 = vmatprep.mubr.bf16.mxu0 %v8807
    %9013 = vmatmul.mubr.bf16.gmra.mxu0 %v8806
    %v9014 = vpop.f32.mrf.mxu0
    %v9015 = vadd.f32 %v8974, %v9014
    %v9016 = vpop.f32.mrf.mxu0
    %v9017 = vadd.f32 %v8976, %v9016
    %v9018 = vpop.f32.mrf.mxu0
    %v9019 = vpop.f32.mrf.mxu0
    %9020 = vdwg.mxu0
    %9021 = vmatprep.subr.bf16.mxu0 %v6043
    %9022 = vmatpush1.bf16.msra.mxu0 %v6042
    %9023 = vmatprep.subr.bf16.mxu0 %v6037
    %9024 = vmatpush1.bf16.msra.mxu0 %v6036
    %9025 = vmatprep.subr.bf16.mxu0 %v6031
    %9026 = vmatpush1.bf16.msra.mxu0 %v6030
    %9027 = vmatprep.subr.bf16.mxu0 %v6025
    %9028 = vmatpush1.bf16.msra.mxu0 %v6024
    %9029 = vmatprep.subr.bf16.mxu0 %v6019
    %9030 = vmatpush1.bf16.msra.mxu0 %v6018
    %9031 = vmatprep.subr.bf16.mxu0 %v6013
    %9032 = vmatpush1.bf16.msra.mxu0 %v6012
    %9033 = vmatprep.subr.bf16.mxu0 %v6007
    %9034 = vmatpush1.bf16.msra.mxu0 %v6006
    %9035 = vmatprep.subr.bf16.mxu0 %v6001
    %9036 = vmatpush1.bf16.msra.mxu0 %v6000
    %9037 = vmatprep.subr.bf16.mxu0 %v6091
    %9038 = vmatpush2.bf16.msra.mxu0 %v6090
    %9039 = vmatprep.subr.bf16.mxu0 %v6085
    %9040 = vmatpush2.bf16.msra.mxu0 %v6084
    %9041 = vmatprep.subr.bf16.mxu0 %v6079
    %9042 = vmatpush2.bf16.msra.mxu0 %v6078
    %9043 = vmatprep.subr.bf16.mxu0 %v6073
    %9044 = vmatpush2.bf16.msra.mxu0 %v6072
    %9045 = vmatprep.subr.bf16.mxu0 %v6067
    %9046 = vmatpush2.bf16.msra.mxu0 %v6066
    %9047 = vmatprep.subr.bf16.mxu0 %v6061
    %9048 = vmatpush2.bf16.msra.mxu0 %v6060
    %9049 = vmatprep.subr.bf16.mxu0 %v6055
    %9050 = vmatpush2.bf16.msra.mxu0 %v6054
    %9051 = vmatprep.subr.bf16.mxu0 %v6049
    %9052 = vmatpush2.bf16.msra.mxu0 %v6048
    %9053 = vmatprep.mubr.bf16.mxu0 %v8809
    %9054 = vmatmul.mubr.bf16.gmra.mxu0 %v8808
    %v9055 = vpop.f32.mrf.mxu0
    %v9056 = vadd.f32 %v9015, %v9055
    %v9057 = vpop.f32.mrf.mxu0
    %v9058 = vadd.f32 %v9017, %v9057
    %v9059 = vpop.f32.mrf.mxu0
    %v9060 = vpop.f32.mrf.mxu0
    %9061 = vdwg.mxu0
    %9062 = vmatprep.subr.bf16.mxu0 %v5853
    %9063 = vmatpush1.bf16.msra.mxu0 %v5852
    %9064 = vmatprep.subr.bf16.mxu0 %v5847
    %9065 = vmatpush1.bf16.msra.mxu0 %v5846
    %9066 = vmatprep.subr.bf16.mxu0 %v5841
    %9067 = vmatpush1.bf16.msra.mxu0 %v5840
    %9068 = vmatprep.subr.bf16.mxu0 %v5835
    %9069 = vmatpush1.bf16.msra.mxu0 %v5834
    %9070 = vmatprep.subr.bf16.mxu0 %v5829
    %9071 = vmatpush1.bf16.msra.mxu0 %v5828
    %9072 = vmatprep.subr.bf16.mxu0 %v5823
    %9073 = vmatpush1.bf16.msra.mxu0 %v5822
    %9074 = vmatprep.subr.bf16.mxu0 %v5817
    %9075 = vmatpush1.bf16.msra.mxu0 %v5816
    %9076 = vmatprep.subr.bf16.mxu0 %v5811
    %9077 = vmatpush1.bf16.msra.mxu0 %v5810
    %9078 = vmatprep.subr.bf16.mxu0 %v5901
    %9079 = vmatpush2.bf16.msra.mxu0 %v5900
    %9080 = vmatprep.subr.bf16.mxu0 %v5895
    %9081 = vmatpush2.bf16.msra.mxu0 %v5894
    %9082 = vmatprep.subr.bf16.mxu0 %v5889
    %9083 = vmatpush2.bf16.msra.mxu0 %v5888
    %9084 = vmatprep.subr.bf16.mxu0 %v5883
    %9085 = vmatpush2.bf16.msra.mxu0 %v5882
    %9086 = vmatprep.subr.bf16.mxu0 %v5877
    %9087 = vmatpush2.bf16.msra.mxu0 %v5876
    %9088 = vmatprep.subr.bf16.mxu0 %v5871
    %9089 = vmatpush2.bf16.msra.mxu0 %v5870
    %9090 = vmatprep.subr.bf16.mxu0 %v5865
    %9091 = vmatpush2.bf16.msra.mxu0 %v5864
    %9092 = vmatprep.subr.bf16.mxu0 %v5859
    %9093 = vmatpush2.bf16.msra.mxu0 %v5858
    %9094 = vmatprep.mubr.bf16.mxu0 %v8805
    %9095 = vmatmul.mubr.bf16.gmra.mxu0 %v8804
    %v9096 = vpop.f32.mrf.mxu0
    %v9097 = vadd.f32 0.0, %v9096
    %v9098 = vpop.f32.mrf.mxu0
    %v9099 = vadd.f32 0.0, %v9098
    %v9100 = vpop.f32.mrf.mxu0
    %v9101 = vpop.f32.mrf.mxu0
    %9102 = vdwg.mxu0
    %9103 = vmatprep.subr.bf16.mxu0 %v5949
    %9104 = vmatpush1.bf16.msra.mxu0 %v5948
    %9105 = vmatprep.subr.bf16.mxu0 %v5943
    %9106 = vmatpush1.bf16.msra.mxu0 %v5942
    %9107 = vmatprep.subr.bf16.mxu0 %v5937
    %9108 = vmatpush1.bf16.msra.mxu0 %v5936
    %9109 = vmatprep.subr.bf16.mxu0 %v5931
    %9110 = vmatpush1.bf16.msra.mxu0 %v5930
    %9111 = vmatprep.subr.bf16.mxu0 %v5925
    %9112 = vmatpush1.bf16.msra.mxu0 %v5924
    %9113 = vmatprep.subr.bf16.mxu0 %v5919
    %9114 = vmatpush1.bf16.msra.mxu0 %v5918
    %9115 = vmatprep.subr.bf16.mxu0 %v5913
    %9116 = vmatpush1.bf16.msra.mxu0 %v5912
    %9117 = vmatprep.subr.bf16.mxu0 %v5907
    %9118 = vmatpush1.bf16.msra.mxu0 %v5906
    %9119 = vmatprep.subr.bf16.mxu0 %v5997
    %9120 = vmatpush2.bf16.msra.mxu0 %v5996
    %9121 = vmatprep.subr.bf16.mxu0 %v5991
    %9122 = vmatpush2.bf16.msra.mxu0 %v5990
    %9123 = vmatprep.subr.bf16.mxu0 %v5985
    %9124 = vmatpush2.bf16.msra.mxu0 %v5984
    %9125 = vmatprep.subr.bf16.mxu0 %v5979
    %9126 = vmatpush2.bf16.msra.mxu0 %v5978
    %9127 = vmatprep.subr.bf16.mxu0 %v5973
    %9128 = vmatpush2.bf16.msra.mxu0 %v5972
    %9129 = vmatprep.subr.bf16.mxu0 %v5967
    %9130 = vmatpush2.bf16.msra.mxu0 %v5966
    %9131 = vmatprep.subr.bf16.mxu0 %v5961
    %9132 = vmatpush2.bf16.msra.mxu0 %v5960
    %9133 = vmatprep.subr.bf16.mxu0 %v5955
    %9134 = vmatpush2.bf16.msra.mxu0 %v5954
    %9135 = vmatprep.mubr.bf16.mxu0 %v8807
    %9136 = vmatmul.mubr.bf16.gmra.mxu0 %v8806
    %v9137 = vpop.f32.mrf.mxu0
    %v9138 = vadd.f32 %v9097, %v9137
    %v9139 = vpop.f32.mrf.mxu0
    %v9140 = vadd.f32 %v9099, %v9139
    %v9141 = vpop.f32.mrf.mxu0
    %v9142 = vpop.f32.mrf.mxu0
    %9143 = vdwg.mxu0
    %9144 = vmatprep.subr.bf16.mxu0 %v6045
    %9145 = vmatpush1.bf16.msra.mxu0 %v6044
    %9146 = vmatprep.subr.bf16.mxu0 %v6039
    %9147 = vmatpush1.bf16.msra.mxu0 %v6038
    %9148 = vmatprep.subr.bf16.mxu0 %v6033
    %9149 = vmatpush1.bf16.msra.mxu0 %v6032
    %9150 = vmatprep.subr.bf16.mxu0 %v6027
    %9151 = vmatpush1.bf16.msra.mxu0 %v6026
    %9152 = vmatprep.subr.bf16.mxu0 %v6021
    %9153 = vmatpush1.bf16.msra.mxu0 %v6020
    %9154 = vmatprep.subr.bf16.mxu0 %v6015
    %9155 = vmatpush1.bf16.msra.mxu0 %v6014
    %9156 = vmatprep.subr.bf16.mxu0 %v6009
    %9157 = vmatpush1.bf16.msra.mxu0 %v6008
    %9158 = vmatprep.subr.bf16.mxu0 %v6003
    %9159 = vmatpush1.bf16.msra.mxu0 %v6002
    %9160 = vmatprep.subr.bf16.mxu0 %v6093
    %9161 = vmatpush2.bf16.msra.mxu0 %v6092
    %9162 = vmatprep.subr.bf16.mxu0 %v6087
    %9163 = vmatpush2.bf16.msra.mxu0 %v6086
    %9164 = vmatprep.subr.bf16.mxu0 %v6081
    %9165 = vmatpush2.bf16.msra.mxu0 %v6080
    %9166 = vmatprep.subr.bf16.mxu0 %v6075
    %9167 = vmatpush2.bf16.msra.mxu0 %v6074
    %9168 = vmatprep.subr.bf16.mxu0 %v6069
    %9169 = vmatpush2.bf16.msra.mxu0 %v6068
    %9170 = vmatprep.subr.bf16.mxu0 %v6063
    %9171 = vmatpush2.bf16.msra.mxu0 %v6062
    %9172 = vmatprep.subr.bf16.mxu0 %v6057
    %9173 = vmatpush2.bf16.msra.mxu0 %v6056
    %9174 = vmatprep.subr.bf16.mxu0 %v6051
    %9175 = vmatpush2.bf16.msra.mxu0 %v6050
    %9176 = vmatprep.mubr.bf16.mxu0 %v8809
    %9177 = vmatmul.mubr.bf16.gmra.mxu0 %v8808
    %v9178 = vpop.f32.mrf.mxu0
    %v9179 = vadd.f32 %v9138, %v9178
    %v9180 = vpop.f32.mrf.mxu0
    %v9181 = vadd.f32 %v9140, %v9180
    %v9182 = vpop.f32.mrf.mxu0
    %v9183 = vpop.f32.mrf.mxu0
    %9184 = vdwg.mxu0
    %v9191 = vrot.slane %v8933, 2
    %v9192 = vrot.slane %v8935, 2
    %v9193 = vrot.slane %v9056, 2
    %v9194 = vrot.slane %v9058, 2
    %v9195 = vrot.slane %v9179, 2
    %v9196 = vrot.slane %v9181, 2
    %v9197 = vrot.slane %v8933, 3
    %v9198 = vrot.slane %v8935, 3
    %v9199 = vrot.slane %v9056, 3
    %v9200 = vrot.slane %v9058, 3
    %v9201 = vrot.slane %v9179, 3
    %v9202 = vrot.slane %v9181, 3
    %v9215 = vadd.f32 %v1969, %v9191
    %v9216 = vadd.f32 %v1971, %v9192
    %v9217 = vadd.f32 %v2098, %v9193
    %v9218 = vadd.f32 %v2100, %v9194
    %v9219 = vadd.f32 %v2227, %v9195
    %v9220 = vadd.f32 %v2229, %v9196
    %v9221 = vadd.f32 %v1973, %v9197
    %v9222 = vadd.f32 %v1975, %v9198
    %v9223 = vadd.f32 %v2102, %v9199
    %v9224 = vadd.f32 %v2104, %v9200
    %v9225 = vadd.f32 %v2231, %v9201
    %v9226 = vadd.f32 %v2233, %v9202
    %v9227 = vmax.f32 %v9215, 0.0
    %v9228 = vmax.f32 %v9216, 0.0
    %v9229 = vmax.f32 %v9217, 0.0
    %v9230 = vmax.f32 %v9218, 0.0
    %v9231 = vmax.f32 %v9219, 0.0
    %v9232 = vmax.f32 %v9220, 0.0
    %v9233 = vmax.f32 %v9221, 0.0
    %v9234 = vmax.f32 %v9222, 0.0
    %v9235 = vmax.f32 %v9223, 0.0
    %v9236 = vmax.f32 %v9224, 0.0
    %v9237 = vmax.f32 %v9225, 0.0
    %v9238 = vmax.f32 %v9226, 0.0
    %v9239 = vpack.c.bf16 %v9227, %v9227
    %v9240 = vpack.c.bf16 %v9228, %v9228
    %v9241 = vpack.c.bf16 %v9229, %v9229
    %v9242 = vpack.c.bf16 %v9230, %v9230
    %v9243 = vpack.c.bf16 %v9231, %v9231
    %v9244 = vpack.c.bf16 %v9232, %v9232
    %v9245 = vpack.c.bf16 %v9233, %v9233
    %v9246 = vpack.c.bf16 %v9234, %v9234
    %v9247 = vpack.c.bf16 %v9235, %v9235
    %v9248 = vpack.c.bf16 %v9236, %v9236
    %v9249 = vpack.c.bf16 %v9237, %v9237
    %v9250 = vpack.c.bf16 %v9238, %v9238
    %v9263 = vunpack.c.l.b16 %v9239
    %v9264 = vunpack.c.l.b16 %v9240
    %v9265 = vunpack.c.l.b16 %v9241
    %v9266 = vunpack.c.l.b16 %v9242
    %v9267 = vunpack.c.l.b16 %v9243
    %v9268 = vunpack.c.l.b16 %v9244
    %v9269 = vunpack.c.l.b16 %v9245
    %v9270 = vunpack.c.l.b16 %v9246
    %v9271 = vunpack.c.l.b16 %v9247
    %v9272 = vunpack.c.l.b16 %v9248
    %v9273 = vunpack.c.l.b16 %v9249
    %v9274 = vunpack.c.l.b16 %v9250
    %v9275 = vrot.slane %v9263, 6
    %v9276 = vrot.slane %v9269, 5
    %v9277 = vsel %vm6836, %v9276, %v9275
    %v9278 = vrot.slane %v9264, 6
    %v9279 = vrot.slane %v9270, 5
    %v9280 = vsel %vm6836, %v9279, %v9278
    %v9281 = vrot.slane %v9265, 6
    %v9282 = vrot.slane %v9271, 5
    %v9283 = vsel %vm6836, %v9282, %v9281
    %v9284 = vrot.slane %v9266, 6
    %v9285 = vrot.slane %v9272, 5
    %v9286 = vsel %vm6836, %v9285, %v9284
    %v9287 = vrot.slane %v9267, 6
    %v9288 = vrot.slane %v9273, 5
    %v9289 = vsel %vm6836, %v9288, %v9287
    %v9290 = vrot.slane %v9268, 6
    %v9291 = vrot.slane %v9274, 5
    %v9292 = vsel %vm6836, %v9291, %v9290
    %v9293 = vpack.c.b16 %v9277, %v9277
    %v9294 = vpack.c.b16 %v9280, %v9280
    %v9295 = vpack.c.b16 %v9283, %v9283
    %v9296 = vpack.c.b16 %v9286, %v9286
    %v9297 = vpack.c.b16 %v9289, %v9289
    %v9298 = vpack.c.b16 %v9292, %v9292
    %9305 = vmatprep.subr.bf16.mxu0 %v5849
    %9306 = vmatpush1.bf16.msra.mxu0 %v5848
    %9307 = vmatprep.subr.bf16.mxu0 %v5843
    %9308 = vmatpush1.bf16.msra.mxu0 %v5842
    %9309 = vmatprep.subr.bf16.mxu0 %v5837
    %9310 = vmatpush1.bf16.msra.mxu0 %v5836
    %9311 = vmatprep.subr.bf16.mxu0 %v5831
    %9312 = vmatpush1.bf16.msra.mxu0 %v5830
    %9313 = vmatprep.subr.bf16.mxu0 %v5825
    %9314 = vmatpush1.bf16.msra.mxu0 %v5824
    %9315 = vmatprep.subr.bf16.mxu0 %v5819
    %9316 = vmatpush1.bf16.msra.mxu0 %v5818
    %9317 = vmatprep.subr.bf16.mxu0 %v5813
    %9318 = vmatpush1.bf16.msra.mxu0 %v5812
    %9319 = vmatprep.subr.bf16.mxu0 %v5807
    %9320 = vmatpush1.bf16.msra.mxu0 %v5806
    %9321 = vmatprep.subr.bf16.mxu0 %v5897
    %9322 = vmatpush2.bf16.msra.mxu0 %v5896
    %9323 = vmatprep.subr.bf16.mxu0 %v5891
    %9324 = vmatpush2.bf16.msra.mxu0 %v5890
    %9325 = vmatprep.subr.bf16.mxu0 %v5885
    %9326 = vmatpush2.bf16.msra.mxu0 %v5884
    %9327 = vmatprep.subr.bf16.mxu0 %v5879
    %9328 = vmatpush2.bf16.msra.mxu0 %v5878
    %9329 = vmatprep.subr.bf16.mxu0 %v5873
    %9330 = vmatpush2.bf16.msra.mxu0 %v5872
    %9331 = vmatprep.subr.bf16.mxu0 %v5867
    %9332 = vmatpush2.bf16.msra.mxu0 %v5866
    %9333 = vmatprep.subr.bf16.mxu0 %v5861
    %9334 = vmatpush2.bf16.msra.mxu0 %v5860
    %9335 = vmatprep.subr.bf16.mxu0 %v5855
    %9336 = vmatpush2.bf16.msra.mxu0 %v5854
    %9337 = vmatprep.mubr.bf16.mxu0 %v9294
    %9338 = vmatmul.mubr.bf16.gmra.mxu0 %v9293
    %v9339 = vpop.f32.mrf.mxu0
    %v9340 = vadd.f32 0.0, %v9339
    %v9341 = vpop.f32.mrf.mxu0
    %v9342 = vadd.f32 0.0, %v9341
    %v9343 = vpop.f32.mrf.mxu0
    %v9344 = vpop.f32.mrf.mxu0
    %9345 = vdwg.mxu0
    %9346 = vmatprep.subr.bf16.mxu0 %v5945
    %9347 = vmatpush1.bf16.msra.mxu0 %v5944
    %9348 = vmatprep.subr.bf16.mxu0 %v5939
    %9349 = vmatpush1.bf16.msra.mxu0 %v5938
    %9350 = vmatprep.subr.bf16.mxu0 %v5933
    %9351 = vmatpush1.bf16.msra.mxu0 %v5932
    %9352 = vmatprep.subr.bf16.mxu0 %v5927
    %9353 = vmatpush1.bf16.msra.mxu0 %v5926
    %9354 = vmatprep.subr.bf16.mxu0 %v5921
    %9355 = vmatpush1.bf16.msra.mxu0 %v5920
    %9356 = vmatprep.subr.bf16.mxu0 %v5915
    %9357 = vmatpush1.bf16.msra.mxu0 %v5914
    %9358 = vmatprep.subr.bf16.mxu0 %v5909
    %9359 = vmatpush1.bf16.msra.mxu0 %v5908
    %9360 = vmatprep.subr.bf16.mxu0 %v5903
    %9361 = vmatpush1.bf16.msra.mxu0 %v5902
    %9362 = vmatprep.subr.bf16.mxu0 %v5993
    %9363 = vmatpush2.bf16.msra.mxu0 %v5992
    %9364 = vmatprep.subr.bf16.mxu0 %v5987
    %9365 = vmatpush2.bf16.msra.mxu0 %v5986
    %9366 = vmatprep.subr.bf16.mxu0 %v5981
    %9367 = vmatpush2.bf16.msra.mxu0 %v5980
    %9368 = vmatprep.subr.bf16.mxu0 %v5975
    %9369 = vmatpush2.bf16.msra.mxu0 %v5974
    %9370 = vmatprep.subr.bf16.mxu0 %v5969
    %9371 = vmatpush2.bf16.msra.mxu0 %v5968
    %9372 = vmatprep.subr.bf16.mxu0 %v5963
    %9373 = vmatpush2.bf16.msra.mxu0 %v5962
    %9374 = vmatprep.subr.bf16.mxu0 %v5957
    %9375 = vmatpush2.bf16.msra.mxu0 %v5956
    %9376 = vmatprep.subr.bf16.mxu0 %v5951
    %9377 = vmatpush2.bf16.msra.mxu0 %v5950
    %9378 = vmatprep.mubr.bf16.mxu0 %v9296
    %9379 = vmatmul.mubr.bf16.gmra.mxu0 %v9295
    %v9380 = vpop.f32.mrf.mxu0
    %v9381 = vadd.f32 %v9340, %v9380
    %v9382 = vpop.f32.mrf.mxu0
    %v9383 = vadd.f32 %v9342, %v9382
    %v9384 = vpop.f32.mrf.mxu0
    %v9385 = vpop.f32.mrf.mxu0
    %9386 = vdwg.mxu0
    %9387 = vmatprep.subr.bf16.mxu0 %v6041
    %9388 = vmatpush1.bf16.msra.mxu0 %v6040
    %9389 = vmatprep.subr.bf16.mxu0 %v6035
    %9390 = vmatpush1.bf16.msra.mxu0 %v6034
    %9391 = vmatprep.subr.bf16.mxu0 %v6029
    %9392 = vmatpush1.bf16.msra.mxu0 %v6028
    %9393 = vmatprep.subr.bf16.mxu0 %v6023
    %9394 = vmatpush1.bf16.msra.mxu0 %v6022
    %9395 = vmatprep.subr.bf16.mxu0 %v6017
    %9396 = vmatpush1.bf16.msra.mxu0 %v6016
    %9397 = vmatprep.subr.bf16.mxu0 %v6011
    %9398 = vmatpush1.bf16.msra.mxu0 %v6010
    %9399 = vmatprep.subr.bf16.mxu0 %v6005
    %9400 = vmatpush1.bf16.msra.mxu0 %v6004
    %9401 = vmatprep.subr.bf16.mxu0 %v5999
    %9402 = vmatpush1.bf16.msra.mxu0 %v5998
    %9403 = vmatprep.subr.bf16.mxu0 %v6089
    %9404 = vmatpush2.bf16.msra.mxu0 %v6088
    %9405 = vmatprep.subr.bf16.mxu0 %v6083
    %9406 = vmatpush2.bf16.msra.mxu0 %v6082
    %9407 = vmatprep.subr.bf16.mxu0 %v6077
    %9408 = vmatpush2.bf16.msra.mxu0 %v6076
    %9409 = vmatprep.subr.bf16.mxu0 %v6071
    %9410 = vmatpush2.bf16.msra.mxu0 %v6070
    %9411 = vmatprep.subr.bf16.mxu0 %v6065
    %9412 = vmatpush2.bf16.msra.mxu0 %v6064
    %9413 = vmatprep.subr.bf16.mxu0 %v6059
    %9414 = vmatpush2.bf16.msra.mxu0 %v6058
    %9415 = vmatprep.subr.bf16.mxu0 %v6053
    %9416 = vmatpush2.bf16.msra.mxu0 %v6052
    %9417 = vmatprep.subr.bf16.mxu0 %v6047
    %9418 = vmatpush2.bf16.msra.mxu0 %v6046
    %9419 = vmatprep.mubr.bf16.mxu0 %v9298
    %9420 = vmatmul.mubr.bf16.gmra.mxu0 %v9297
    %v9421 = vpop.f32.mrf.mxu0
    %v9422 = vadd.f32 %v9381, %v9421
    %v9423 = vpop.f32.mrf.mxu0
    %v9424 = vadd.f32 %v9383, %v9423
    %v9425 = vpop.f32.mrf.mxu0
    %v9426 = vpop.f32.mrf.mxu0
    %9427 = vdwg.mxu0
    %9428 = vmatprep.subr.bf16.mxu0 %v5851
    %9429 = vmatpush1.bf16.msra.mxu0 %v5850
    %9430 = vmatprep.subr.bf16.mxu0 %v5845
    %9431 = vmatpush1.bf16.msra.mxu0 %v5844
    %9432 = vmatprep.subr.bf16.mxu0 %v5839
    %9433 = vmatpush1.bf16.msra.mxu0 %v5838
    %9434 = vmatprep.subr.bf16.mxu0 %v5833
    %9435 = vmatpush1.bf16.msra.mxu0 %v5832
    %9436 = vmatprep.subr.bf16.mxu0 %v5827
    %9437 = vmatpush1.bf16.msra.mxu0 %v5826
    %9438 = vmatprep.subr.bf16.mxu0 %v5821
    %9439 = vmatpush1.bf16.msra.mxu0 %v5820
    %9440 = vmatprep.subr.bf16.mxu0 %v5815
    %9441 = vmatpush1.bf16.msra.mxu0 %v5814
    %9442 = vmatprep.subr.bf16.mxu0 %v5809
    %9443 = vmatpush1.bf16.msra.mxu0 %v5808
    %9444 = vmatprep.subr.bf16.mxu0 %v5899
    %9445 = vmatpush2.bf16.msra.mxu0 %v5898
    %9446 = vmatprep.subr.bf16.mxu0 %v5893
    %9447 = vmatpush2.bf16.msra.mxu0 %v5892
    %9448 = vmatprep.subr.bf16.mxu0 %v5887
    %9449 = vmatpush2.bf16.msra.mxu0 %v5886
    %9450 = vmatprep.subr.bf16.mxu0 %v5881
    %9451 = vmatpush2.bf16.msra.mxu0 %v5880
    %9452 = vmatprep.subr.bf16.mxu0 %v5875
    %9453 = vmatpush2.bf16.msra.mxu0 %v5874
    %9454 = vmatprep.subr.bf16.mxu0 %v5869
    %9455 = vmatpush2.bf16.msra.mxu0 %v5868
    %9456 = vmatprep.subr.bf16.mxu0 %v5863
    %9457 = vmatpush2.bf16.msra.mxu0 %v5862
    %9458 = vmatprep.subr.bf16.mxu0 %v5857
    %9459 = vmatpush2.bf16.msra.mxu0 %v5856
    %9460 = vmatprep.mubr.bf16.mxu0 %v9294
    %9461 = vmatmul.mubr.bf16.gmra.mxu0 %v9293
    %v9462 = vpop.f32.mrf.mxu0
    %v9463 = vadd.f32 0.0, %v9462
    %v9464 = vpop.f32.mrf.mxu0
    %v9465 = vadd.f32 0.0, %v9464
    %v9466 = vpop.f32.mrf.mxu0
    %v9467 = vpop.f32.mrf.mxu0
    %9468 = vdwg.mxu0
    %9469 = vmatprep.subr.bf16.mxu0 %v5947
    %9470 = vmatpush1.bf16.msra.mxu0 %v5946
    %9471 = vmatprep.subr.bf16.mxu0 %v5941
    %9472 = vmatpush1.bf16.msra.mxu0 %v5940
    %9473 = vmatprep.subr.bf16.mxu0 %v5935
    %9474 = vmatpush1.bf16.msra.mxu0 %v5934
    %9475 = vmatprep.subr.bf16.mxu0 %v5929
    %9476 = vmatpush1.bf16.msra.mxu0 %v5928
    %9477 = vmatprep.subr.bf16.mxu0 %v5923
    %9478 = vmatpush1.bf16.msra.mxu0 %v5922
    %9479 = vmatprep.subr.bf16.mxu0 %v5917
    %9480 = vmatpush1.bf16.msra.mxu0 %v5916
    %9481 = vmatprep.subr.bf16.mxu0 %v5911
    %9482 = vmatpush1.bf16.msra.mxu0 %v5910
    %9483 = vmatprep.subr.bf16.mxu0 %v5905
    %9484 = vmatpush1.bf16.msra.mxu0 %v5904
    %9485 = vmatprep.subr.bf16.mxu0 %v5995
    %9486 = vmatpush2.bf16.msra.mxu0 %v5994
    %9487 = vmatprep.subr.bf16.mxu0 %v5989
    %9488 = vmatpush2.bf16.msra.mxu0 %v5988
    %9489 = vmatprep.subr.bf16.mxu0 %v5983
    %9490 = vmatpush2.bf16.msra.mxu0 %v5982
    %9491 = vmatprep.subr.bf16.mxu0 %v5977
    %9492 = vmatpush2.bf16.msra.mxu0 %v5976
    %9493 = vmatprep.subr.bf16.mxu0 %v5971
    %9494 = vmatpush2.bf16.msra.mxu0 %v5970
    %9495 = vmatprep.subr.bf16.mxu0 %v5965
    %9496 = vmatpush2.bf16.msra.mxu0 %v5964
    %9497 = vmatprep.subr.bf16.mxu0 %v5959
    %9498 = vmatpush2.bf16.msra.mxu0 %v5958
    %9499 = vmatprep.subr.bf16.mxu0 %v5953
    %9500 = vmatpush2.bf16.msra.mxu0 %v5952
    %9501 = vmatprep.mubr.bf16.mxu0 %v9296
    %9502 = vmatmul.mubr.bf16.gmra.mxu0 %v9295
    %v9503 = vpop.f32.mrf.mxu0
    %v9504 = vadd.f32 %v9463, %v9503
    %v9505 = vpop.f32.mrf.mxu0
    %v9506 = vadd.f32 %v9465, %v9505
    %v9507 = vpop.f32.mrf.mxu0
    %v9508 = vpop.f32.mrf.mxu0
    %9509 = vdwg.mxu0
    %9510 = vmatprep.subr.bf16.mxu0 %v6043
    %9511 = vmatpush1.bf16.msra.mxu0 %v6042
    %9512 = vmatprep.subr.bf16.mxu0 %v6037
    %9513 = vmatpush1.bf16.msra.mxu0 %v6036
    %9514 = vmatprep.subr.bf16.mxu0 %v6031
    %9515 = vmatpush1.bf16.msra.mxu0 %v6030
    %9516 = vmatprep.subr.bf16.mxu0 %v6025
    %9517 = vmatpush1.bf16.msra.mxu0 %v6024
    %9518 = vmatprep.subr.bf16.mxu0 %v6019
    %9519 = vmatpush1.bf16.msra.mxu0 %v6018
    %9520 = vmatprep.subr.bf16.mxu0 %v6013
    %9521 = vmatpush1.bf16.msra.mxu0 %v6012
    %9522 = vmatprep.subr.bf16.mxu0 %v6007
    %9523 = vmatpush1.bf16.msra.mxu0 %v6006
    %9524 = vmatprep.subr.bf16.mxu0 %v6001
    %9525 = vmatpush1.bf16.msra.mxu0 %v6000
    %9526 = vmatprep.subr.bf16.mxu0 %v6091
    %9527 = vmatpush2.bf16.msra.mxu0 %v6090
    %9528 = vmatprep.subr.bf16.mxu0 %v6085
    %9529 = vmatpush2.bf16.msra.mxu0 %v6084
    %9530 = vmatprep.subr.bf16.mxu0 %v6079
    %9531 = vmatpush2.bf16.msra.mxu0 %v6078
    %9532 = vmatprep.subr.bf16.mxu0 %v6073
    %9533 = vmatpush2.bf16.msra.mxu0 %v6072
    %9534 = vmatprep.subr.bf16.mxu0 %v6067
    %9535 = vmatpush2.bf16.msra.mxu0 %v6066
    %9536 = vmatprep.subr.bf16.mxu0 %v6061
    %9537 = vmatpush2.bf16.msra.mxu0 %v6060
    %9538 = vmatprep.subr.bf16.mxu0 %v6055
    %9539 = vmatpush2.bf16.msra.mxu0 %v6054
    %9540 = vmatprep.subr.bf16.mxu0 %v6049
    %9541 = vmatpush2.bf16.msra.mxu0 %v6048
    %9542 = vmatprep.mubr.bf16.mxu0 %v9298
    %9543 = vmatmul.mubr.bf16.gmra.mxu0 %v9297
    %v9544 = vpop.f32.mrf.mxu0
    %v9545 = vadd.f32 %v9504, %v9544
    %v9546 = vpop.f32.mrf.mxu0
    %v9547 = vadd.f32 %v9506, %v9546
    %v9548 = vpop.f32.mrf.mxu0
    %v9549 = vpop.f32.mrf.mxu0
    %9550 = vdwg.mxu0
    %9551 = vmatprep.subr.bf16.mxu0 %v5853
    %9552 = vmatpush1.bf16.msra.mxu0 %v5852
    %9553 = vmatprep.subr.bf16.mxu0 %v5847
    %9554 = vmatpush1.bf16.msra.mxu0 %v5846
    %9555 = vmatprep.subr.bf16.mxu0 %v5841
    %9556 = vmatpush1.bf16.msra.mxu0 %v5840
    %9557 = vmatprep.subr.bf16.mxu0 %v5835
    %9558 = vmatpush1.bf16.msra.mxu0 %v5834
    %9559 = vmatprep.subr.bf16.mxu0 %v5829
    %9560 = vmatpush1.bf16.msra.mxu0 %v5828
    %9561 = vmatprep.subr.bf16.mxu0 %v5823
    %9562 = vmatpush1.bf16.msra.mxu0 %v5822
    %9563 = vmatprep.subr.bf16.mxu0 %v5817
    %9564 = vmatpush1.bf16.msra.mxu0 %v5816
    %9565 = vmatprep.subr.bf16.mxu0 %v5811
    %9566 = vmatpush1.bf16.msra.mxu0 %v5810
    %9567 = vmatprep.subr.bf16.mxu0 %v5901
    %9568 = vmatpush2.bf16.msra.mxu0 %v5900
    %9569 = vmatprep.subr.bf16.mxu0 %v5895
    %9570 = vmatpush2.bf16.msra.mxu0 %v5894
    %9571 = vmatprep.subr.bf16.mxu0 %v5889
    %9572 = vmatpush2.bf16.msra.mxu0 %v5888
    %9573 = vmatprep.subr.bf16.mxu0 %v5883
    %9574 = vmatpush2.bf16.msra.mxu0 %v5882
    %9575 = vmatprep.subr.bf16.mxu0 %v5877
    %9576 = vmatpush2.bf16.msra.mxu0 %v5876
    %9577 = vmatprep.subr.bf16.mxu0 %v5871
    %9578 = vmatpush2.bf16.msra.mxu0 %v5870
    %9579 = vmatprep.subr.bf16.mxu0 %v5865
    %9580 = vmatpush2.bf16.msra.mxu0 %v5864
    %9581 = vmatprep.subr.bf16.mxu0 %v5859
    %9582 = vmatpush2.bf16.msra.mxu0 %v5858
    %9583 = vmatprep.mubr.bf16.mxu0 %v9294
    %9584 = vmatmul.mubr.bf16.gmra.mxu0 %v9293
    %v9585 = vpop.f32.mrf.mxu0
    %v9586 = vadd.f32 0.0, %v9585
    %v9587 = vpop.f32.mrf.mxu0
    %v9588 = vadd.f32 0.0, %v9587
    %v9589 = vpop.f32.mrf.mxu0
    %v9590 = vpop.f32.mrf.mxu0
    %9591 = vdwg.mxu0
    %9592 = vmatprep.subr.bf16.mxu0 %v5949
    %9593 = vmatpush1.bf16.msra.mxu0 %v5948
    %9594 = vmatprep.subr.bf16.mxu0 %v5943
    %9595 = vmatpush1.bf16.msra.mxu0 %v5942
    %9596 = vmatprep.subr.bf16.mxu0 %v5937
    %9597 = vmatpush1.bf16.msra.mxu0 %v5936
    %9598 = vmatprep.subr.bf16.mxu0 %v5931
    %9599 = vmatpush1.bf16.msra.mxu0 %v5930
    %9600 = vmatprep.subr.bf16.mxu0 %v5925
    %9601 = vmatpush1.bf16.msra.mxu0 %v5924
    %9602 = vmatprep.subr.bf16.mxu0 %v5919
    %9603 = vmatpush1.bf16.msra.mxu0 %v5918
    %9604 = vmatprep.subr.bf16.mxu0 %v5913
    %9605 = vmatpush1.bf16.msra.mxu0 %v5912
    %9606 = vmatprep.subr.bf16.mxu0 %v5907
    %9607 = vmatpush1.bf16.msra.mxu0 %v5906
    %9608 = vmatprep.subr.bf16.mxu0 %v5997
    %9609 = vmatpush2.bf16.msra.mxu0 %v5996
    %9610 = vmatprep.subr.bf16.mxu0 %v5991
    %9611 = vmatpush2.bf16.msra.mxu0 %v5990
    %9612 = vmatprep.subr.bf16.mxu0 %v5985
    %9613 = vmatpush2.bf16.msra.mxu0 %v5984
    %9614 = vmatprep.subr.bf16.mxu0 %v5979
    %9615 = vmatpush2.bf16.msra.mxu0 %v5978
    %9616 = vmatprep.subr.bf16.mxu0 %v5973
    %9617 = vmatpush2.bf16.msra.mxu0 %v5972
    %9618 = vmatprep.subr.bf16.mxu0 %v5967
    %9619 = vmatpush2.bf16.msra.mxu0 %v5966
    %9620 = vmatprep.subr.bf16.mxu0 %v5961
    %9621 = vmatpush2.bf16.msra.mxu0 %v5960
    %9622 = vmatprep.subr.bf16.mxu0 %v5955
    %9623 = vmatpush2.bf16.msra.mxu0 %v5954
    %9624 = vmatprep.mubr.bf16.mxu0 %v9296
    %9625 = vmatmul.mubr.bf16.gmra.mxu0 %v9295
    %v9626 = vpop.f32.mrf.mxu0
    %v9627 = vadd.f32 %v9586, %v9626
    %v9628 = vpop.f32.mrf.mxu0
    %v9629 = vadd.f32 %v9588, %v9628
    %v9630 = vpop.f32.mrf.mxu0
    %v9631 = vpop.f32.mrf.mxu0
    %9632 = vdwg.mxu0
    %9633 = vmatprep.subr.bf16.mxu0 %v6045
    %9634 = vmatpush1.bf16.msra.mxu0 %v6044
    %9635 = vmatprep.subr.bf16.mxu0 %v6039
    %9636 = vmatpush1.bf16.msra.mxu0 %v6038
    %9637 = vmatprep.subr.bf16.mxu0 %v6033
    %9638 = vmatpush1.bf16.msra.mxu0 %v6032
    %9639 = vmatprep.subr.bf16.mxu0 %v6027
    %9640 = vmatpush1.bf16.msra.mxu0 %v6026
    %9641 = vmatprep.subr.bf16.mxu0 %v6021
    %9642 = vmatpush1.bf16.msra.mxu0 %v6020
    %9643 = vmatprep.subr.bf16.mxu0 %v6015
    %9644 = vmatpush1.bf16.msra.mxu0 %v6014
    %9645 = vmatprep.subr.bf16.mxu0 %v6009
    %9646 = vmatpush1.bf16.msra.mxu0 %v6008
    %9647 = vmatprep.subr.bf16.mxu0 %v6003
    %9648 = vmatpush1.bf16.msra.mxu0 %v6002
    %9649 = vmatprep.subr.bf16.mxu0 %v6093
    %9650 = vmatpush2.bf16.msra.mxu0 %v6092
    %9651 = vmatprep.subr.bf16.mxu0 %v6087
    %9652 = vmatpush2.bf16.msra.mxu0 %v6086
    %9653 = vmatprep.subr.bf16.mxu0 %v6081
    %9654 = vmatpush2.bf16.msra.mxu0 %v6080
    %9655 = vmatprep.subr.bf16.mxu0 %v6075
    %9656 = vmatpush2.bf16.msra.mxu0 %v6074
    %9657 = vmatprep.subr.bf16.mxu0 %v6069
    %9658 = vmatpush2.bf16.msra.mxu0 %v6068
    %9659 = vmatprep.subr.bf16.mxu0 %v6063
    %9660 = vmatpush2.bf16.msra.mxu0 %v6062
    %9661 = vmatprep.subr.bf16.mxu0 %v6057
    %9662 = vmatpush2.bf16.msra.mxu0 %v6056
    %9663 = vmatprep.subr.bf16.mxu0 %v6051
    %9664 = vmatpush2.bf16.msra.mxu0 %v6050
    %9665 = vmatprep.mubr.bf16.mxu0 %v9298
    %9666 = vmatmul.mubr.bf16.gmra.mxu0 %v9297
    %v9667 = vpop.f32.mrf.mxu0
    %v9668 = vadd.f32 %v9627, %v9667
    %v9669 = vpop.f32.mrf.mxu0
    %v9670 = vadd.f32 %v9629, %v9669
    %v9671 = vpop.f32.mrf.mxu0
    %v9672 = vpop.f32.mrf.mxu0
    %9673 = vdwg.mxu0
    %v9680 = vrot.slane %v9422, 1
    %v9681 = vrot.slane %v9424, 1
    %v9682 = vrot.slane %v9545, 1
    %v9683 = vrot.slane %v9547, 1
    %v9684 = vrot.slane %v9668, 1
    %v9685 = vrot.slane %v9670, 1
    %v9686 = vrot.slane %v9422, 2
    %v9687 = vrot.slane %v9424, 2
    %v9688 = vrot.slane %v9545, 2
    %v9689 = vrot.slane %v9547, 2
    %v9690 = vrot.slane %v9668, 2
    %v9691 = vrot.slane %v9670, 2
    %v9704 = vadd.f32 %v1969, %v9680
    %v9705 = vadd.f32 %v1971, %v9681
    %v9706 = vadd.f32 %v2098, %v9682
    %v9707 = vadd.f32 %v2100, %v9683
    %v9708 = vadd.f32 %v2227, %v9684
    %v9709 = vadd.f32 %v2229, %v9685
    %v9710 = vadd.f32 %v1973, %v9686
    %v9711 = vadd.f32 %v1975, %v9687
    %v9712 = vadd.f32 %v2102, %v9688
    %v9713 = vadd.f32 %v2104, %v9689
    %v9714 = vadd.f32 %v2231, %v9690
    %v9715 = vadd.f32 %v2233, %v9691
    %v9716 = vmax.f32 %v9704, 0.0
    %v9717 = vmax.f32 %v9705, 0.0
    %v9718 = vmax.f32 %v9706, 0.0
    %v9719 = vmax.f32 %v9707, 0.0
    %v9720 = vmax.f32 %v9708, 0.0
    %v9721 = vmax.f32 %v9709, 0.0
    %v9722 = vmax.f32 %v9710, 0.0
    %v9723 = vmax.f32 %v9711, 0.0
    %v9724 = vmax.f32 %v9712, 0.0
    %v9725 = vmax.f32 %v9713, 0.0
    %v9726 = vmax.f32 %v9714, 0.0
    %v9727 = vmax.f32 %v9715, 0.0
    %v9740 = vcombine.high %v9716, %v9717
    %v9741 = vcombine.high %v9718, %v9719
    %v9743 = vunpack.c.l.s4 1983009808
    %v9744 = vunpack.c.0.s8 %v9743
    %v9745 = vlaneseq
    %v9746 = vshrl.u32 %v9745, 7
    %v9747 = vsub.s32 %v9744, %v9746
    %v9748 = vrot.slane %v9740, %v9747
    %v9750 = vunpack.c.l.s4 1983009808
    %v9751 = vunpack.c.0.s8 %v9750
    %v9752 = vlaneseq
    %v9753 = vshrl.u32 %v9752, 7
    %v9754 = vsub.s32 %v9751, %v9753
    %v9755 = vrot.slane %v9741, %v9754
    %v9756 = vcombine.high %v9748, %v9755
    %v9757 = vcombine.high %v9720, %v9721
    %v9759 = vunpack.c.l.s4 1983009808
    %v9760 = vunpack.c.0.s8 %v9759
    %v9761 = vlaneseq
    %v9762 = vshrl.u32 %v9761, 7
    %v9763 = vsub.s32 %v9760, %v9762
    %v9764 = vrot.slane %v9757, %v9763
    %v9765 = vcombine.high %v9764, %v9764
    %v9766 = vcombine.high %v9722, %v9723
    %v9767 = vcombine.high %v9724, %v9725
    %v9769 = vunpack.c.l.s4 1983009808
    %v9770 = vunpack.c.0.s8 %v9769
    %v9771 = vlaneseq
    %v9772 = vshrl.u32 %v9771, 7
    %v9773 = vsub.s32 %v9770, %v9772
    %v9774 = vrot.slane %v9766, %v9773
    %v9776 = vunpack.c.l.s4 1983009808
    %v9777 = vunpack.c.0.s8 %v9776
    %v9778 = vlaneseq
    %v9779 = vshrl.u32 %v9778, 7
    %v9780 = vsub.s32 %v9777, %v9779
    %v9781 = vrot.slane %v9767, %v9780
    %v9782 = vcombine.high %v9774, %v9781
    %v9783 = vcombine.high %v9726, %v9727
    %v9785 = vunpack.c.l.s4 1983009808
    %v9786 = vunpack.c.0.s8 %v9785
    %v9787 = vlaneseq
    %v9788 = vshrl.u32 %v9787, 7
    %v9789 = vsub.s32 %v9786, %v9788
    %v9790 = vrot.slane %v9783, %v9789
    %v9791 = vcombine.high %v9790, %v9790
    %v9792 = vrot.slane %v9756, 1
    %vm9793 = vcmask 1044484
    %v9794 = vsel %vm9793, %v9792, %v9792
    %vm9795 = vcmask 1046534
    %v9796 = vsel %vm9795, %v9792, %v9794
    %v9797 = vsel %vm6836, %v9782, %v9796
    %vm9798 = vcmask 1043459
    %v9799 = vsel %vm9798, %v9782, %v9797
    %vm9800 = vcmask 1045509
    %v9801 = vsel %vm9800, %v9782, %v9799
    %vm9802 = vcmask 1047559
    %v9803 = vsel %vm9802, %v9782, %v9801
    %v9804 = vrot.slane %v9765, 1
    %v9805 = vsel %vm9793, %v9804, %v9804
    %v9806 = vsel %vm9795, %v9804, %v9805
    %v9807 = vsel %vm6836, %v9791, %v9806
    %v9808 = vsel %vm9798, %v9791, %v9807
    %v9809 = vsel %vm9800, %v9791, %v9808
    %v9810 = vsel %vm9802, %v9791, %v9809
    %9813 = vst [vmem:[%s4] sm:$0xff] %v9803
    %9814 = vst [vmem:[%s4 + $0x8] sm:$0xf] %v9810
    // Predicated region
    $region42: #{_lambda_.2} parent=1 // pred_check
      _
    $region43: #{_lambda_.2} parent=1 // pred_check_branch
      %9816 = sbr.rel (0) target = $region45
    $region44: #{_lambda_.2} parent=1 // pred_region
      _
    $region45: #{_lambda_.2} parent=1 // pred_fallthru
      _
    // Predicated region
    $region46: #{_lambda_.2} parent=1 // pred_check
      _
    $region47: #{_lambda_.2} parent=1 // pred_check_branch
      %9818 = sbr.rel (0) target = $region49
    $region48: #{_lambda_.2} parent=1 // pred_region
      _
    $region49: #{_lambda_.2} parent=1 // pred_fallthru
      _
    %9819 = vsyncpa [#allocation3], 1
    %9820 = vsyncpa [#allocation5], 1
    %9821 = vsyncpa [#allocation8], 1

</llo_original>
